<compile_context>
chip_gen: v6e
topology: v6e:2x2x1
jax: 0.10.0
libtpu: 0.0.40
codegen_flags: <defaults>
</compile_context>

<pallas_src>
import functools
import math

import jax
import jax.numpy as jnp
from jax.experimental import pallas as pl
from jax.experimental.pallas import tpu as pltpu


# --------------------------------------------------------------------------- #
# Kernel 1: fused LightGCN propagation layer.
#   mm      = A_norm @ cur        (bf16 operands, f32 accumulation on the MXU)
#   acc_out = acc_in + mm         (running layer-sum, stays f32)
#   cur_out = bf16(mm)            (next layer's streaming matmul operand)
# --------------------------------------------------------------------------- #
def propagate_layer_kernel(a_ref, x_ref, acc_in_ref, acc_out_ref, cur_ref, mm_ref):
    k = pl.program_id(1)

    @pl.when(k == 0)
    def _():
        mm_ref[...] = jnp.zeros_like(mm_ref)

    mm_ref[...] += jnp.dot(a_ref[...], x_ref[...],
                           preferred_element_type=jnp.float32)

    @pl.when(k == pl.num_programs(1) - 1)
    def _():
        mm = mm_ref[...]
        acc_out_ref[...] = acc_in_ref[...] + mm       # fused running layer-sum
        cur_ref[...] = mm.astype(cur_ref.dtype)       # fused bf16 cast for next layer


# --------------------------------------------------------------------------- #
# Kernel 2: BPR + L2-reg loss.
# Indices live in SMEM; the acc (layer-sum) table and ego-E table stay in HBM and
# only the 3*B needed rows of each are DMA-gathered into small VMEM scratch.
# The 1/(num_layers+1) layer-mean is folded into the dot-product scale.
# --------------------------------------------------------------------------- #
def bpr_loss_kernel(u_ref, p_ref, n_ref, acc_hbm, ego_hbm, loss_ref,
                    all_buf, ego_buf, sem, *,
                    batch, batch_pad, inv_layers, cf_weight, weight_decay):
    # Padding rows (if any) must contribute nothing; zero the scratch first.
    if batch_pad > batch:
        all_buf[...] = jnp.zeros_like(all_buf)
        ego_buf[...] = jnp.zeros_like(ego_buf)

    # Issue all per-row gathers (3 roles x B rows x 2 tables), then wait.
    copies = []
    for role, idx_ref in enumerate((u_ref, p_ref, n_ref)):
        for b in range(batch):
            idx = idx_ref[b]
            c_all = pltpu.make_async_copy(acc_hbm.at[pl.ds(idx, 1), :],
                                          all_buf.at[role, pl.ds(b, 1), :],
                                          sem.at[0, role, b])
            c_ego = pltpu.make_async_copy(ego_hbm.at[pl.ds(idx, 1), :],
                                          ego_buf.at[role, pl.ds(b, 1), :],
                                          sem.at[1, role, b])
            c_all.start()
            c_ego.start()
            copies += [c_all, c_ego]
    for c in copies:
        c.wait()

    u_all, p_all, n_all = all_buf[0], all_buf[1], all_buf[2]     # (B_pad, D_pad)
    u_ego, p_ego, n_ego = ego_buf[0], ego_buf[1], ego_buf[2]

    # all_layer = acc / (L+1): fold the mean into the scores (scale^2 on the dots).
    scale2 = inv_layers * inv_layers
    pos = jnp.sum(u_all * p_all, axis=1, keepdims=True) * scale2   # (B_pad, 1)
    neg = jnp.sum(u_all * n_all, axis=1, keepdims=True) * scale2

    sp = jax.nn.softplus(neg - pos)                                # (B_pad, 1)
    if batch_pad > batch:
        row = jax.lax.broadcasted_iota(jnp.int32, (batch_pad, 1), 0)
        sp = jnp.where(row < batch, sp, 0.0)
    cf = jnp.sum(sp, axis=0, keepdims=True)                        # (1, 1)

    reg = 0.5 * (jnp.sum(u_ego * u_ego, keepdims=True)
                 + jnp.sum(p_ego * p_ego, keepdims=True)
                 + jnp.sum(n_ego * n_ego, keepdims=True))          # (1, 1)

    inv_b = 1.0 / float(batch)
    loss_ref[...] = (cf_weight * inv_b) * cf + (weight_decay * inv_b) * reg


# --------------------------------------------------------------------------- #
# Wrapper
# --------------------------------------------------------------------------- #
def _round_up(x, m):
    return ((x + m - 1) // m) * m


def _choose_tiles(n):
    # Large tiles cut the cur restream ((N/tile_m) re-reads of cur) and amortize the
    # ~0.35 us/grid-step overhead; cap tile_m so the "parallel" row axis keeps >= 2
    # tiles for v7x's two TensorCores. tile_k multiple of 256 fills the 256-wide
    # v6e/v7x MXU contraction. Both powers of two, so lcm = max.
    tile_m = 1024
    while tile_m > 128 and _round_up(n, tile_m) // tile_m < 2:
        tile_m //= 2
    tile_k = 512
    while tile_k > 128 and _round_up(n, tile_k) // tile_k < 2:
        tile_k //= 2
    return tile_m, tile_k


def prepare_graph(A, E, *, tile_m, tile_k):
    """One-off pad/cast of the static graph operands (call outside the jitted step)."""
    N, D = E.shape
    lcm = tile_m * tile_k // math.gcd(tile_m, tile_k)
    N_pad = _round_up(N, lcm)
    D_pad = _round_up(D, 128)                 # lane-dense output columns
    # Cast-then-pad: never materializes an N_pad^2 float32 intermediate.
    A_bf16 = jnp.pad(A.astype(jnp.bfloat16), ((0, N_pad - N), (0, N_pad - N)))
    E_f32 = jnp.pad(E.astype(jnp.float32), ((0, N_pad - N), (0, D_pad - D)))
    E_bf16 = E_f32.astype(jnp.bfloat16)       # first layer's streaming operand
    return A_bf16, E_f32, E_bf16


def cikgrec_forward(A_bf16, E_f32, E_bf16, user_idx, pos_item, neg_item, *,
                    num_layers, cf_weight, weight_decay, tile_m, tile_k):
    N_pad, D_pad = E_f32.shape
    B = int(user_idx.shape[0])
    B_pad = _round_up(B, 8)

    grid = (N_pad // tile_m, N_pad // tile_k)
    bytes_per_layer = (N_pad * N_pad * 2                            # A bf16 stream
                       + (N_pad // tile_m) * N_pad * D_pad * 2      # cur restream (bf16)
                       + N_pad * D_pad * 4                          # acc read
                       + N_pad * D_pad * 4                          # acc write
                       + N_pad * D_pad * 2)                         # cur bf16 write

    layer_step = pl.pallas_call(
        propagate_layer_kernel,
        out_shape=(jax.ShapeDtypeStruct((N_pad, D_pad), jnp.float32),    # acc_out
                   jax.ShapeDtypeStruct((N_pad, D_pad), jnp.bfloat16)),  # cur_out
        grid_spec=pltpu.PrefetchScalarGridSpec(
            num_scalar_prefetch=0,
            grid=grid,
            in_specs=[pl.BlockSpec((tile_m, tile_k), lambda i, k: (i, k)),   # A
                      pl.BlockSpec((tile_k, D_pad), lambda i, k: (k, 0)),    # cur
                      pl.BlockSpec((tile_m, D_pad), lambda i, k: (i, 0))],   # acc_in
            out_specs=[pl.BlockSpec((tile_m, D_pad), lambda i, k: (i, 0)),   # acc_out
                       pl.BlockSpec((tile_m, D_pad), lambda i, k: (i, 0))],  # cur_out
            scratch_shapes=[pltpu.VMEM((tile_m, D_pad), jnp.float32)]),
        input_output_aliases={2: 0},        # reuse the acc HBM buffer across layers
        compiler_params=pltpu.CompilerParams(
            dimension_semantics=("parallel", "arbitrary"),
            vmem_limit_bytes=48 * 1024 * 1024),       # v7x-safe (< 64 MiB physical)
        cost_estimate=pl.CostEstimate(
            flops=2 * N_pad * N_pad * D_pad,
            transcendentals=0,
            bytes_accessed=bytes_per_layer),
    )

    # Layers are sequential grid passes; acc (f32) and cur (bf16) round-trip HBM.
    acc = E_f32
    cur = E_bf16
    for _ in range(num_layers):
        acc, cur = layer_step(A_bf16, cur, acc)

    smem = pl.BlockSpec(memory_space=pltpu.MemorySpace.SMEM)
    hbm = pl.BlockSpec(memory_space=pl.ANY)
    loss = pl.pallas_call(
        functools.partial(bpr_loss_kernel, batch=B, batch_pad=B_pad,
                          inv_layers=1.0 / float(num_layers + 1),
                          cf_weight=float(cf_weight),
                          weight_decay=float(weight_decay)),
        out_shape=jax.ShapeDtypeStruct((1, 1), jnp.float32),
        in_specs=[smem, smem, smem, hbm, hbm],
        out_specs=pl.BlockSpec(memory_space=pltpu.MemorySpace.VMEM),
        scratch_shapes=[pltpu.VMEM((3, B_pad, D_pad), jnp.float32),   # gathered acc rows
                        pltpu.VMEM((3, B_pad, D_pad), jnp.float32),   # gathered ego rows
                        pltpu.SemaphoreType.DMA((2, 3, B))],
    )(user_idx.reshape(B).astype(jnp.int32),
      pos_item.reshape(B).astype(jnp.int32),
      neg_item.reshape(B).astype(jnp.int32),
      acc, E_f32)
    return loss[0, 0]


# --------------------------------------------------------------------------- #
# Pure-JAX reference mirroring the PyTorch forward (eval mode)
# --------------------------------------------------------------------------- #
def _reference_forward(A, E, user_idx, pos_item, neg_item, *,
                       num_layers, cf_weight, weight_decay,
                       matmul_dtype=jnp.float32):
    A_m = A.astype(matmul_dtype)
    acc = E.astype(jnp.float32)
    cur = E.astype(matmul_dtype)
    for _ in range(num_layers):
        cur_f32 = jnp.dot(A_m, cur, preferred_element_type=jnp.float32)
        acc = acc + cur_f32
        cur = cur_f32.astype(matmul_dtype)
    all_layer = acc / (num_layers + 1)
    u, p, n = all_layer[user_idx], all_layer[pos_item], all_layer[neg_item]
    ue, pe, ne = E[user_idx], E[pos_item], E[neg_item]
    pos_score = jnp.sum(u * p, axis=-1)
    neg_score = jnp.sum(u * n, axis=-1)
    cf_loss = jnp.mean(jax.nn.softplus(neg_score - pos_score))
    reg = 0.5 * (jnp.sum(ue ** 2) + jnp.sum(pe ** 2) + jnp.sum(ne ** 2)) / user_idx.shape[0]
    return cf_weight * cf_loss + weight_decay * reg


if __name__ == "__main__":
    # ----- small synthetic config -----
    users = 90
    items = 60
    entities = 150          # items + other KG entities + interests
    N = users + entities    # 240 nodes (padded to 256 inside prepare_graph)
    dim = 32
    num_layers = 2
    cf_weight = 1.0
    weight_decay = 1e-4
    batch = 8

    key = jax.random.PRNGKey(0)
    k_emb, k_edge, k_u, k_p, k_n = jax.random.split(key, 5)

    # Xavier-uniform embedding init (deterministic).
    bound = (6.0 / (N + dim)) ** 0.5
    E = jax.random.uniform(k_emb, (N, dim), jnp.float32, minval=-bound, maxval=bound)

    # Random user-item interaction edges, made undirected.
    num_edges = 400
    src_u = jax.random.randint(k_edge, (num_edges,), 0, users)
    dst_i = jax.random.randint(jax.random.fold_in(k_edge, 1), (num_edges,),
                               users, users + items)
    src = jnp.concatenate([src_u, dst_i])
    dst = jnp.concatenate([dst_i, src_u])

    # Dense symmetric normalization D^{-1/2} A D^{-1/2} (LGConv, no self loops).
    adj = jnp.zeros((N, N), jnp.float32).at[src, dst].set(1.0)
    deg = adj.sum(axis=1)
    dinv = jnp.where(deg > 0, 1.0 / jnp.sqrt(jnp.maximum(deg, 1e-12)), 0.0)
    A = adj * dinv[:, None] * dinv[None, :]

    user_idx = jax.random.randint(k_u, (batch,), 0, users)
    pos_item = jax.random.randint(k_p, (batch,), users, users + items)
    neg_item = jax.random.randint(k_n, (batch,), users, users + items)

    # One-off graph prep outside the jitted step (A is static across steps).
    tile_m, tile_k = _choose_tiles(N)
    A_bf16, E_f32, E_bf16 = prepare_graph(A, E, tile_m=tile_m, tile_k=tile_k)

    forward = jax.jit(functools.partial(
        cikgrec_forward, num_layers=num_layers,
        cf_weight=cf_weight, weight_decay=weight_decay,
        tile_m=tile_m, tile_k=tile_k))

    loss = forward(A_bf16, E_f32, E_bf16, user_idx, pos_item, neg_item)
    loss = jax.block_until_ready(loss)

    # Precision-matched reference (bf16 matmul operands, f32 accumulation).
    ref_bf16 = _reference_forward(A, E, user_idx, pos_item, neg_item,
                                  num_layers=num_layers, cf_weight=cf_weight,
                                  weight_decay=weight_decay,
                                  matmul_dtype=jnp.bfloat16)
    # Full-f32 reference (looser tolerance because A/cur are streamed as bf16).
    ref_f32 = _reference_forward(A, E, user_idx, pos_item, neg_item,
                                 num_layers=num_layers, cf_weight=cf_weight,
                                 weight_decay=weight_decay,
                                 matmul_dtype=jnp.float32)

    assert jnp.allclose(loss, ref_bf16, rtol=5e-3, atol=1e-3), (loss, ref_bf16)
    assert jnp.allclose(loss, ref_f32, rtol=5e-2, atol=5e-2), (loss, ref_f32)

    print("KERNEL_OK")
</pallas_src>

<mosaic_0001>
module attributes {stable_mosaic.version = 11 : i64} {
  func.func @propagate_layer_kernel(%arg0: i32, %arg1: i32, %arg2: memref<128x128xbf16, #tpu.memory_space<vmem>>, %arg3: memref<128x128xbf16, #tpu.memory_space<vmem>>, %arg4: memref<128x128xf32, #tpu.memory_space<vmem>>, %arg5: memref<128x128xf32, #tpu.memory_space<vmem>>, %arg6: memref<128x128xbf16, #tpu.memory_space<vmem>>, %arg7: memref<128x128xf32, #tpu.memory_space<vmem>>) attributes {dimension_semantics = [#tpu.dimension_semantics<parallel>, #tpu.dimension_semantics<arbitrary>], iteration_bounds = array<i64: 2, 2>, scalar_prefetch = 0 : i64, scratch_operands = 1 : i64, tpu.core_type = #tpu.core_type<tc>, window_params = [{transform_indices = @transform_0, window_bounds = array<i64: 128, 128>}, {transform_indices = @transform_1, window_bounds = array<i64: 128, 128>}, {transform_indices = @transform_2, window_bounds = array<i64: 128, 128>}, {transform_indices = @transform_3, window_bounds = array<i64: 128, 128>}, {transform_indices = @transform_4, window_bounds = array<i64: 128, 128>}]} {
    %c0_i32 = arith.constant 0 : i32
    %0 = arith.cmpi eq, %arg1, %c0_i32 : i32
    %1 = arith.extui %0 : i1 to i32
    %c0_i32_0 = arith.constant 0 : i32
    %2 = arith.cmpi ne, %1, %c0_i32_0 : i32
    scf.if %2 {
      %cst_9 = arith.constant 0.000000e+00 : f32
      %12 = vector.broadcast %cst_9 : f32 to vector<128x128xf32>
      %c0_10 = arith.constant 0 : index
      %c0_11 = arith.constant 0 : index
      %13 = vector.load %arg7[%c0_10, %c0_11] : memref<128x128xf32, #tpu.memory_space<vmem>>, vector<128x128xf32>
      tpu.vector_store %arg7[%c0_10, %c0_11], %12 {strides = array<i32>} : memref<128x128xf32, #tpu.memory_space<vmem>>, vector<128x128xf32>,
    } else {
    }
    %c0 = arith.constant 0 : index
    %c0_1 = arith.constant 0 : index
    %3 = vector.load %arg7[%c0, %c0_1] : memref<128x128xf32, #tpu.memory_space<vmem>>, vector<128x128xf32>
    %c0_2 = arith.constant 0 : index
    %c0_3 = arith.constant 0 : index
    %4 = vector.load %arg2[%c0_2, %c0_3] : memref<128x128xbf16, #tpu.memory_space<vmem>>, vector<128x128xbf16>
    %c0_4 = arith.constant 0 : index
    %c0_5 = arith.constant 0 : index
    %5 = vector.load %arg3[%c0_4, %c0_5] : memref<128x128xbf16, #tpu.memory_space<vmem>>, vector<128x128xbf16>
    %cst = arith.constant dense<0.000000e+00> : vector<128x128xf32>
    %6 = tpu.matmul %4, %5, %cst {dimension_numbers = #tpu.dot_dimension_numbers<[1], [0], [0], [1], [0, 0, 1, 1], [], []>} : vector<128x128xbf16>, vector<128x128xbf16>, vector<128x128xf32> -> vector<128x128xf32>
    %7 = arith.addf %3, %6 : vector<128x128xf32>
    %c0_6 = arith.constant 0 : index
    %c0_7 = arith.constant 0 : index
    %8 = vector.load %arg7[%c0_6, %c0_7] : memref<128x128xf32, #tpu.memory_space<vmem>>, vector<128x128xf32>
    tpu.vector_store %arg7[%c0_6, %c0_7], %7 {strides = array<i32>} : memref<128x128xf32, #tpu.memory_space<vmem>>, vector<128x128xf32>,
    %c1_i32 = arith.constant 1 : i32
    %9 = arith.cmpi eq, %arg1, %c1_i32 : i32
    %10 = arith.extui %9 : i1 to i32
    %c0_i32_8 = arith.constant 0 : i32
    %11 = arith.cmpi ne, %10, %c0_i32_8 : i32
    scf.if %11 {
      %c0_9 = arith.constant 0 : index
      %c0_10 = arith.constant 0 : index
      %12 = vector.load %arg7[%c0_9, %c0_10] : memref<128x128xf32, #tpu.memory_space<vmem>>, vector<128x128xf32>
      %c0_11 = arith.constant 0 : index
      %c0_12 = arith.constant 0 : index
      %13 = vector.load %arg4[%c0_11, %c0_12] : memref<128x128xf32, #tpu.memory_space<vmem>>, vector<128x128xf32>
      %14 = arith.addf %13, %12 : vector<128x128xf32>
      %c0_13 = arith.constant 0 : index
      %c0_14 = arith.constant 0 : index
      %15 = vector.load %arg5[%c0_13, %c0_14] : memref<128x128xf32, #tpu.memory_space<vmem>>, vector<128x128xf32>
      tpu.vector_store %arg5[%c0_13, %c0_14], %14 {strides = array<i32>} : memref<128x128xf32, #tpu.memory_space<vmem>>, vector<128x128xf32>,
      %16 = arith.truncf %12 : vector<128x128xf32> to vector<128x128xbf16>
      %c0_15 = arith.constant 0 : index
      %c0_16 = arith.constant 0 : index
      %17 = vector.load %arg6[%c0_15, %c0_16] : memref<128x128xbf16, #tpu.memory_space<vmem>>, vector<128x128xbf16>
      tpu.vector_store %arg6[%c0_15, %c0_16], %16 {strides = array<i32>} : memref<128x128xbf16, #tpu.memory_space<vmem>>, vector<128x128xbf16>,
    } else {
    }
    return
  }
  func.func @transform_0(%arg0: i32, %arg1: i32) -> (i32, i32) {
    %c0_i32 = arith.constant 0 : i32
    return %arg0, %arg1 : i32, i32
  }
  func.func @transform_1(%arg0: i32, %arg1: i32) -> (i32, i32) {
    %c0_i32 = arith.constant 0 : i32
    %c0_i32_0 = arith.constant 0 : i32
    return %arg1, %c0_i32 : i32, i32
  }
  func.func @transform_2(%arg0: i32, %arg1: i32) -> (i32, i32) {
    %c0_i32 = arith.constant 0 : i32
    %c0_i32_0 = arith.constant 0 : i32
    return %arg0, %c0_i32 : i32, i32
  }
  func.func @transform_3(%arg0: i32, %arg1: i32) -> (i32, i32) {
    %c0_i32 = arith.constant 0 : i32
    %c0_i32_0 = arith.constant 0 : i32
    return %arg0, %c0_i32 : i32, i32
  }
  func.func @transform_4(%arg0: i32, %arg1: i32) -> (i32, i32) {
    %c0_i32 = arith.constant 0 : i32
    %c0_i32_0 = arith.constant 0 : i32
    return %arg0, %c0_i32 : i32, i32
  }
}

module attributes {stable_mosaic.version = 11 : i64} {
  func.func @propagate_layer_kernel(%arg0: i32, %arg1: i32, %arg2: memref<128x128xbf16, #tpu.memory_space<vmem>>, %arg3: memref<128x128xbf16, #tpu.memory_space<vmem>>, %arg4: memref<128x128xf32, #tpu.memory_space<vmem>>, %arg5: memref<128x128xf32, #tpu.memory_space<vmem>>, %arg6: memref<128x128xbf16, #tpu.memory_space<vmem>>, %arg7: memref<128x128xf32, #tpu.memory_space<vmem>>) attributes {dimension_semantics = [#tpu.dimension_semantics<parallel>, #tpu.dimension_semantics<arbitrary>], iteration_bounds = array<i64: 2, 2>, scalar_prefetch = 0 : i64, scratch_operands = 1 : i64, tpu.core_type = #tpu.core_type<tc>, window_params = [{transform_indices = @transform_0, window_bounds = array<i64: 128, 128>}, {transform_indices = @transform_1, window_bounds = array<i64: 128, 128>}, {transform_indices = @transform_2, window_bounds = array<i64: 128, 128>}, {transform_indices = @transform_3, window_bounds = array<i64: 128, 128>}, {transform_indices = @transform_4, window_bounds = array<i64: 128, 128>}]} {
    %c0_i32 = arith.constant 0 : i32
    %0 = arith.cmpi eq, %arg1, %c0_i32 : i32
    %1 = arith.extui %0 : i1 to i32
    %c0_i32_0 = arith.constant 0 : i32
    %2 = arith.cmpi ne, %1, %c0_i32_0 : i32
    scf.if %2 {
      %cst_9 = arith.constant 0.000000e+00 : f32
      %12 = vector.broadcast %cst_9 : f32 to vector<128x128xf32>
      %c0_10 = arith.constant 0 : index
      %c0_11 = arith.constant 0 : index
      %13 = vector.load %arg7[%c0_10, %c0_11] : memref<128x128xf32, #tpu.memory_space<vmem>>, vector<128x128xf32>
      tpu.vector_store %arg7[%c0_10, %c0_11], %12 {strides = array<i32>} : memref<128x128xf32, #tpu.memory_space<vmem>>, vector<128x128xf32>,
    } else {
    }
    %c0 = arith.constant 0 : index
    %c0_1 = arith.constant 0 : index
    %3 = vector.load %arg7[%c0, %c0_1] : memref<128x128xf32, #tpu.memory_space<vmem>>, vector<128x128xf32>
    %c0_2 = arith.constant 0 : index
    %c0_3 = arith.constant 0 : index
    %4 = vector.load %arg2[%c0_2, %c0_3] : memref<128x128xbf16, #tpu.memory_space<vmem>>, vector<128x128xbf16>
    %c0_4 = arith.constant 0 : index
    %c0_5 = arith.constant 0 : index
    %5 = vector.load %arg3[%c0_4, %c0_5] : memref<128x128xbf16, #tpu.memory_space<vmem>>, vector<128x128xbf16>
    %cst = arith.constant dense<0.000000e+00> : vector<128x128xf32>
    %6 = tpu.matmul %4, %5, %cst {dimension_numbers = #tpu.dot_dimension_numbers<[1], [0], [0], [1], [0, 0, 1, 1], [], []>} : vector<128x128xbf16>, vector<128x128xbf16>, vector<128x128xf32> -> vector<128x128xf32>
    %7 = arith.addf %3, %6 : vector<128x128xf32>
    %c0_6 = arith.constant 0 : index
    %c0_7 = arith.constant 0 : index
    %8 = vector.load %arg7[%c0_6, %c0_7] : memref<128x128xf32, #tpu.memory_space<vmem>>, vector<128x128xf32>
    tpu.vector_store %arg7[%c0_6, %c0_7], %7 {strides = array<i32>} : memref<128x128xf32, #tpu.memory_space<vmem>>, vector<128x128xf32>,
    %c1_i32 = arith.constant 1 : i32
    %9 = arith.cmpi eq, %arg1, %c1_i32 : i32
    %10 = arith.extui %9 : i1 to i32
    %c0_i32_8 = arith.constant 0 : i32
    %11 = arith.cmpi ne, %10, %c0_i32_8 : i32
    scf.if %11 {
      %c0_9 = arith.constant 0 : index
      %c0_10 = arith.constant 0 : index
      %12 = vector.load %arg7[%c0_9, %c0_10] : memref<128x128xf32, #tpu.memory_space<vmem>>, vector<128x128xf32>
      %c0_11 = arith.constant 0 : index
      %c0_12 = arith.constant 0 : index
      %13 = vector.load %arg4[%c0_11, %c0_12] : memref<128x128xf32, #tpu.memory_space<vmem>>, vector<128x128xf32>
      %14 = arith.addf %13, %12 : vector<128x128xf32>
      %c0_13 = arith.constant 0 : index
      %c0_14 = arith.constant 0 : index
      %15 = vector.load %arg5[%c0_13, %c0_14] : memref<128x128xf32, #tpu.memory_space<vmem>>, vector<128x128xf32>
      tpu.vector_store %arg5[%c0_13, %c0_14], %14 {strides = array<i32>} : memref<128x128xf32, #tpu.memory_space<vmem>>, vector<128x128xf32>,
      %16 = arith.truncf %12 : vector<128x128xf32> to vector<128x128xbf16>
      %c0_15 = arith.constant 0 : index
      %c0_16 = arith.constant 0 : index
      %17 = vector.load %arg6[%c0_15, %c0_16] : memref<128x128xbf16, #tpu.memory_space<vmem>>, vector<128x128xbf16>
      tpu.vector_store %arg6[%c0_15, %c0_16], %16 {strides = array<i32>} : memref<128x128xbf16, #tpu.memory_space<vmem>>, vector<128x128xbf16>,
    } else {
    }
    return
  }
  func.func @transform_0(%arg0: i32, %arg1: i32) -> (i32, i32) {
    %c0_i32 = arith.constant 0 : i32
    return %arg0, %arg1 : i32, i32
  }
  func.func @transform_1(%arg0: i32, %arg1: i32) -> (i32, i32) {
    %c0_i32 = arith.constant 0 : i32
    %c0_i32_0 = arith.constant 0 : i32
    return %arg1, %c0_i32 : i32, i32
  }
  func.func @transform_2(%arg0: i32, %arg1: i32) -> (i32, i32) {
    %c0_i32 = arith.constant 0 : i32
    %c0_i32_0 = arith.constant 0 : i32
    return %arg0, %c0_i32 : i32, i32
  }
  func.func @transform_3(%arg0: i32, %arg1: i32) -> (i32, i32) {
    %c0_i32 = arith.constant 0 : i32
    %c0_i32_0 = arith.constant 0 : i32
    return %arg0, %c0_i32 : i32, i32
  }
  func.func @transform_4(%arg0: i32, %arg1: i32) -> (i32, i32) {
    %c0_i32 = arith.constant 0 : i32
    %c0_i32_0 = arith.constant 0 : i32
    return %arg0, %c0_i32 : i32, i32
  }
}

module attributes {stable_mosaic.version = 11 : i64} {
  func.func @bpr_loss_kernel(%arg0: memref<8xi32, #tpu.memory_space<smem>>, %arg1: memref<8xi32, #tpu.memory_space<smem>>, %arg2: memref<8xi32, #tpu.memory_space<smem>>, %arg3: memref<256x128xf32, #tpu.memory_space<any>>, %arg4: memref<256x128xf32, #tpu.memory_space<any>>, %arg5: memref<1x1xf32, #tpu.memory_space<vmem>>, %arg6: memref<3x8x128xf32, #tpu.memory_space<vmem>>, %arg7: memref<3x8x128xf32, #tpu.memory_space<vmem>>, %arg8: memref<2x3x8x!tpu.dma_semaphore, #tpu.memory_space<semaphore_mem>>) attributes {dimension_semantics = [], scalar_prefetch = 0 : i64, scratch_operands = 3 : i64, tpu.core_type = #tpu.core_type<tc>} {
    %c0 = arith.constant 0 : index
    %0 = memref.load %arg0[%c0] : memref<8xi32, #tpu.memory_space<smem>>
    %c0_i32 = arith.constant 0 : i32
    %c0_i32_0 = arith.constant 0 : i32
    %c0_i32_1 = arith.constant 0 : i32
    %c0_i32_2 = arith.constant 0 : i32
    %c0_i32_3 = arith.constant 0 : i32
    %1 = tpu.memref_slice %arg3[%0, %c0_i32_3] : memref<256x128xf32, #tpu.memory_space<any>> -> memref<1x128xf32, #tpu.memory_space<any>>
    %c0_i32_4 = arith.constant 0 : i32
    %c0_i32_5 = arith.constant 0 : i32
    %2 = tpu.memref_slice %arg6[%c0_i32, %c0_i32_4, %c0_i32_5] : memref<3x8x128xf32, #tpu.memory_space<vmem>> -> memref<1x1x128xf32, #tpu.memory_space<vmem>>
    %3 = tpu.memref_squeeze %2 : memref<1x1x128xf32, #tpu.memory_space<vmem>> -> memref<1x128xf32, #tpu.memory_space<vmem>>
    %4 = tpu.memref_slice %arg8[%c0_i32_0, %c0_i32_1, %c0_i32_2] : memref<2x3x8x!tpu.dma_semaphore, #tpu.memory_space<semaphore_mem>> -> memref<1x1x1x!tpu.dma_semaphore, #tpu.memory_space<semaphore_mem>>
    %5 = tpu.memref_squeeze %4 : memref<1x1x1x!tpu.dma_semaphore, #tpu.memory_space<semaphore_mem>> -> memref<!tpu.dma_semaphore, #tpu.memory_space<semaphore_mem>>
    tpu.enqueue_dma source(%1 : memref<1x128xf32, #tpu.memory_space<any>>) target(%3 : memref<1x128xf32, #tpu.memory_space<vmem>>) target_semaphore(%5 : memref<!tpu.dma_semaphore, #tpu.memory_space<semaphore_mem>>)
    %c0_i32_6 = arith.constant 0 : i32
    %c1_i32 = arith.constant 1 : i32
    %c0_i32_7 = arith.constant 0 : i32
    %c0_i32_8 = arith.constant 0 : i32
    %c0_i32_9 = arith.constant 0 : i32
    %6 = tpu.memref_slice %arg4[%0, %c0_i32_9] : memref<256x128xf32, #tpu.memory_space<any>> -> memref<1x128xf32, #tpu.memory_space<any>>
    %c0_i32_10 = arith.constant 0 : i32
    %c0_i32_11 = arith.constant 0 : i32
    %7 = tpu.memref_slice %arg7[%c0_i32_6, %c0_i32_10, %c0_i32_11] : memref<3x8x128xf32, #tpu.memory_space<vmem>> -> memref<1x1x128xf32, #tpu.memory_space<vmem>>
    %8 = tpu.memref_squeeze %7 : memref<1x1x128xf32, #tpu.memory_space<vmem>> -> memref<1x128xf32, #tpu.memory_space<vmem>>
    %9 = tpu.memref_slice %arg8[%c1_i32, %c0_i32_7, %c0_i32_8] : memref<2x3x8x!tpu.dma_semaphore, #tpu.memory_space<semaphore_mem>> -> memref<1x1x1x!tpu.dma_semaphore, #tpu.memory_space<semaphore_mem>>
    %10 = tpu.memref_squeeze %9 : memref<1x1x1x!tpu.dma_semaphore, #tpu.memory_space<semaphore_mem>> -> memref<!tpu.dma_semaphore, #tpu.memory_space<semaphore_mem>>
    tpu.enqueue_dma source(%6 : memref<1x128xf32, #tpu.memory_space<any>>) target(%8 : memref<1x128xf32, #tpu.memory_space<vmem>>) target_semaphore(%10 : memref<!tpu.dma_semaphore, #tpu.memory_space<semaphore_mem>>)
    %c1 = arith.constant 1 : index
    %11 = memref.load %arg0[%c1] : memref<8xi32, #tpu.memory_space<smem>>
    %c0_i32_12 = arith.constant 0 : i32
    %c0_i32_13 = arith.constant 0 : i32
    %c0_i32_14 = arith.constant 0 : i32
    %c1_i32_15 = arith.constant 1 : i32
    %c0_i32_16 = arith.constant 0 : i32
    %12 = tpu.memref_slice %arg3[%11, %c0_i32_16] : memref<256x128xf32, #tpu.memory_space<any>> -> memref<1x128xf32, #tpu.memory_space<any>>
    %c1_i32_17 = arith.constant 1 : i32
    %c0_i32_18 = arith.constant 0 : i32
    %13 = tpu.memref_slice %arg6[%c0_i32_12, %c1_i32_17, %c0_i32_18] : memref<3x8x128xf32, #tpu.memory_space<vmem>> -> memref<1x1x128xf32, #tpu.memory_space<vmem>>
    %14 = tpu.memref_squeeze %13 : memref<1x1x128xf32, #tpu.memory_space<vmem>> -> memref<1x128xf32, #tpu.memory_space<vmem>>
    %15 = tpu.memref_slice %arg8[%c0_i32_13, %c0_i32_14, %c1_i32_15] : memref<2x3x8x!tpu.dma_semaphore, #tpu.memory_space<semaphore_mem>> -> memref<1x1x1x!tpu.dma_semaphore, #tpu.memory_space<semaphore_mem>>
    %16 = tpu.memref_squeeze %15 : memref<1x1x1x!tpu.dma_semaphore, #tpu.memory_space<semaphore_mem>> -> memref<!tpu.dma_semaphore, #tpu.memory_space<semaphore_mem>>
    tpu.enqueue_dma source(%12 : memref<1x128xf32, #tpu.memory_space<any>>) target(%14 : memref<1x128xf32, #tpu.memory_space<vmem>>) target_semaphore(%16 : memref<!tpu.dma_semaphore, #tpu.memory_space<semaphore_mem>>)
    %c0_i32_19 = arith.constant 0 : i32
    %c1_i32_20 = arith.constant 1 : i32
    %c0_i32_21 = arith.constant 0 : i32
    %c1_i32_22 = arith.constant 1 : i32
    %c0_i32_23 = arith.constant 0 : i32
    %17 = tpu.memref_slice %arg4[%11, %c0_i32_23] : memref<256x128xf32, #tpu.memory_space<any>> -> memref<1x128xf32, #tpu.memory_space<any>>
    %c1_i32_24 = arith.constant 1 : i32
    %c0_i32_25 = arith.constant 0 : i32
    %18 = tpu.memref_slice %arg7[%c0_i32_19, %c1_i32_24, %c0_i32_25] : memref<3x8x128xf32, #tpu.memory_space<vmem>> -> memref<1x1x128xf32, #tpu.memory_space<vmem>>
    %19 = tpu.memref_squeeze %18 : memref<1x1x128xf32, #tpu.memory_space<vmem>> -> memref<1x128xf32, #tpu.memory_space<vmem>>
    %20 = tpu.memref_slice %arg8[%c1_i32_20, %c0_i32_21, %c1_i32_22] : memref<2x3x8x!tpu.dma_semaphore, #tpu.memory_space<semaphore_mem>> -> memref<1x1x1x!tpu.dma_semaphore, #tpu.memory_space<semaphore_mem>>
    %21 = tpu.memref_squeeze %20 : memref<1x1x1x!tpu.dma_semaphore, #tpu.memory_space<semaphore_mem>> -> memref<!tpu.dma_semaphore, #tpu.memory_space<semaphore_mem>>
    tpu.enqueue_dma source(%17 : memref<1x128xf32, #tpu.memory_space<any>>) target(%19 : memref<1x128xf32, #tpu.memory_space<vmem>>) target_semaphore(%21 : memref<!tpu.dma_semaphore, #tpu.memory_space<semaphore_mem>>)
    %c2 = arith.constant 2 : index
    %22 = memref.load %arg0[%c2] : memref<8xi32, #tpu.memory_space<smem>>
    %c0_i32_26 = arith.constant 0 : i32
    %c0_i32_27 = arith.constant 0 : i32
    %c0_i32_28 = arith.constant 0 : i32
    %c2_i32 = arith.constant 2 : i32
    %c0_i32_29 = arith.constant 0 : i32
    %23 = tpu.memref_slice %arg3[%22, %c0_i32_29] : memref<256x128xf32, #tpu.memory_space<any>> -> memref<1x128xf32, #tpu.memory_space<any>>
    %c2_i32_30 = arith.constant 2 : i32
    %c0_i32_31 = arith.constant 0 : i32
    %24 = tpu.memref_slice %arg6[%c0_i32_26, %c2_i32_30, %c0_i32_31] : memref<3x8x128xf32, #tpu.memory_space<vmem>> -> memref<1x1x128xf32, #tpu.memory_space<vmem>>
    %25 = tpu.memref_squeeze %24 : memref<1x1x128xf32, #tpu.memory_space<vmem>> -> memref<1x128xf32, #tpu.memory_space<vmem>>
    %26 = tpu.memref_slice %arg8[%c0_i32_27, %c0_i32_28, %c2_i32] : memref<2x3x8x!tpu.dma_semaphore, #tpu.memory_space<semaphore_mem>> -> memref<1x1x1x!tpu.dma_semaphore, #tpu.memory_space<semaphore_mem>>
    %27 = tpu.memref_squeeze %26 : memref<1x1x1x!tpu.dma_semaphore, #tpu.memory_space<semaphore_mem>> -> memref<!tpu.dma_semaphore, #tpu.memory_space<semaphore_mem>>
    tpu.enqueue_dma source(%23 : memref<1x128xf32, #tpu.memory_space<any>>) target(%25 : memref<1x128xf32, #tpu.memory_space<vmem>>) target_semaphore(%27 : memref<!tpu.dma_semaphore, #tpu.memory_space<semaphore_mem>>)
    %c0_i32_32 = arith.constant 0 : i32
    %c1_i32_33 = arith.constant 1 : i32
    %c0_i32_34 = arith.constant 0 : i32
    %c2_i32_35 = arith.constant 2 : i32
    %c0_i32_36 = arith.constant 0 : i32
    %28 = tpu.memref_slice %arg4[%22, %c0_i32_36] : memref<256x128xf32, #tpu.memory_space<any>> -> memref<1x128xf32, #tpu.memory_space<any>>
    %c2_i32_37 = arith.constant 2 : i32
    %c0_i32_38 = arith.constant 0 : i32
    %29 = tpu.memref_slice %arg7[%c0_i32_32, %c2_i32_37, %c0_i32_38] : memref<3x8x128xf32, #tpu.memory_space<vmem>> -> memref<1x1x128xf32, #tpu.memory_space<vmem>>
    %30 = tpu.memref_squeeze %29 : memref<1x1x128xf32, #tpu.memory_space<vmem>> -> memref<1x128xf32, #tpu.memory_space<vmem>>
    %31 = tpu.memref_slice %arg8[%c1_i32_33, %c0_i32_34, %c2_i32_35] : memref<2x3x8x!tpu.dma_semaphore, #tpu.memory_space<semaphore_mem>> -> memref<1x1x1x!tpu.dma_semaphore, #tpu.memory_space<semaphore_mem>>
    %32 = tpu.memref_squeeze %31 : memref<1x1x1x!tpu.dma_semaphore, #tpu.memory_space<semaphore_mem>> -> memref<!tpu.dma_semaphore, #tpu.memory_space<semaphore_mem>>
    tpu.enqueue_dma source(%28 : memref<1x128xf32, #tpu.memory_space<any>>) target(%30 : memref<1x128xf32, #tpu.memory_space<vmem>>) target_semaphore(%32 : memref<!tpu.dma_semaphore, #tpu.memory_space<semaphore_mem>>)
    %c3 = arith.constant 3 : index
    %33 = memref.load %arg0[%c3] : memref<8xi32, #tpu.memory_space<smem>>
    %c0_i32_39 = arith.constant 0 : i32
    %c0_i32_40 = arith.constant 0 : i32
    %c0_i32_41 = arith.constant 0 : i32
    %c3_i32 = arith.constant 3 : i32
    %c0_i32_42 = arith.constant 0 : i32
    %34 = tpu.memref_slice %arg3[%33, %c0_i32_42] : memref<256x128xf32, #tpu.memory_space<any>> -> memref<1x128xf32, #tpu.memory_space<any>>
    %c3_i32_43 = arith.constant 3 : i32
    %c0_i32_44 = arith.constant 0 : i32
    %35 = tpu.memref_slice %arg6[%c0_i32_39, %c3_i32_43, %c0_i32_44] : memref<3x8x128xf32, #tpu.memory_space<vmem>> -> memref<1x1x128xf32, #tpu.memory_space<vmem>>
    %36 = tpu.memref_squeeze %35 : memref<1x1x128xf32, #tpu.memory_space<vmem>> -> memref<1x128xf32, #tpu.memory_space<vmem>>
    %37 = tpu.memref_slice %arg8[%c0_i32_40, %c0_i32_41, %c3_i32] : memref<2x3x8x!tpu.dma_semaphore, #tpu.memory_space<semaphore_mem>> -> memref<1x1x1x!tpu.dma_semaphore, #tpu.memory_space<semaphore_mem>>
    %38 = tpu.memref_squeeze %37 : memref<1x1x1x!tpu.dma_semaphore, #tpu.memory_space<semaphore_mem>> -> memref<!tpu.dma_semaphore, #tpu.memory_space<semaphore_mem>>
    tpu.enqueue_dma source(%34 : memref<1x128xf32, #tpu.memory_space<any>>) target(%36 : memref<1x128xf32, #tpu.memory_space<vmem>>) target_semaphore(%38 : memref<!tpu.dma_semaphore, #tpu.memory_space<semaphore_mem>>)
    %c0_i32_45 = arith.constant 0 : i32
    %c1_i32_46 = arith.constant 1 : i32
    %c0_i32_47 = arith.constant 0 : i32
    %c3_i32_48 = arith.constant 3 : i32
    %c0_i32_49 = arith.constant 0 : i32
    %39 = tpu.memref_slice %arg4[%33, %c0_i32_49] : memref<256x128xf32, #tpu.memory_space<any>> -> memref<1x128xf32, #tpu.memory_space<any>>
    %c3_i32_50 = arith.constant 3 : i32
    %c0_i32_51 = arith.constant 0 : i32
    %40 = tpu.memref_slice %arg7[%c0_i32_45, %c3_i32_50, %c0_i32_51] : memref<3x8x128xf32, #tpu.memory_space<vmem>> -> memref<1x1x128xf32, #tpu.memory_space<vmem>>
    %41 = tpu.memref_squeeze %40 : memref<1x1x128xf32, #tpu.memory_space<vmem>> -> memref<1x128xf32, #tpu.memory_space<vmem>>
    %42 = tpu.memref_slice %arg8[%c1_i32_46, %c0_i32_47, %c3_i32_48] : memref<2x3x8x!tpu.dma_semaphore, #tpu.memory_space<semaphore_mem>> -> memref<1x1x1x!tpu.dma_semaphore, #tpu.memory_space<semaphore_mem>>
    %43 = tpu.memref_squeeze %42 : memref<1x1x1x!tpu.dma_semaphore, #tpu.memory_space<semaphore_mem>> -> memref<!tpu.dma_semaphore, #tpu.memory_space<semaphore_mem>>
    tpu.enqueue_dma source(%39 : memref<1x128xf32, #tpu.memory_space<any>>) target(%41 : memref<1x128xf32, #tpu.memory_space<vmem>>) target_semaphore(%43 : memref<!tpu.dma_semaphore, #tpu.memory_space<semaphore_mem>>)
    %c4 = arith.constant 4 : index
    %44 = memref.load %arg0[%c4] : memref<8xi32, #tpu.memory_space<smem>>
    %c0_i32_52 = arith.constant 0 : i32
    %c0_i32_53 = arith.constant 0 : i32
    %c0_i32_54 = arith.constant 0 : i32
    %c4_i32 = arith.constant 4 : i32
    %c0_i32_55 = arith.constant 0 : i32
    %45 = tpu.memref_slice %arg3[%44, %c0_i32_55] : memref<256x128xf32, #tpu.memory_space<any>> -> memref<1x128xf32, #tpu.memory_space<any>>
    %c4_i32_56 = arith.constant 4 : i32
    %c0_i32_57 = arith.constant 0 : i32
    %46 = tpu.memref_slice %arg6[%c0_i32_52, %c4_i32_56, %c0_i32_57] : memref<3x8x128xf32, #tpu.memory_space<vmem>> -> memref<1x1x128xf32, #tpu.memory_space<vmem>>
    %47 = tpu.memref_squeeze %46 : memref<1x1x128xf32, #tpu.memory_space<vmem>> -> memref<1x128xf32, #tpu.memory_space<vmem>>
    %48 = tpu.memref_slice %arg8[%c0_i32_53, %c0_i32_54, %c4_i32] : memref<2x3x8x!tpu.dma_semaphore, #tpu.memory_space<semaphore_mem>> -> memref<1x1x1x!tpu.dma_semaphore, #tpu.memory_space<semaphore_mem>>
    %49 = tpu.memref_squeeze %48 : memref<1x1x1x!tpu.dma_semaphore, #tpu.memory_space<semaphore_mem>> -> memref<!tpu.dma_semaphore, #tpu.memory_space<semaphore_mem>>
    tpu.enqueue_dma source(%45 : memref<1x128xf32, #tpu.memory_space<any>>) target(%47 : memref<1x128xf32, #tpu.memory_space<vmem>>) target_semaphore(%49 : memref<!tpu.dma_semaphore, #tpu.memory_space<semaphore_mem>>)
    %c0_i32_58 = arith.constant 0 : i32
    %c1_i32_59 = arith.constant 1 : i32
    %c0_i32_60 = arith.constant 0 : i32
    %c4_i32_61 = arith.constant 4 : i32
    %c0_i32_62 = arith.constant 0 : i32
    %50 = tpu.memref_slice %arg4[%44, %c0_i32_62] : memref<256x128xf32, #tpu.memory_space<any>> -> memref<1x128xf32, #tpu.memory_space<any>>
    %c4_i32_63 = arith.constant 4 : i32
    %c0_i32_64 = arith.constant 0 : i32
    %51 = tpu.memref_slice %arg7[%c0_i32_58, %c4_i32_63, %c0_i32_64] : memref<3x8x128xf32, #tpu.memory_space<vmem>> -> memref<1x1x128xf32, #tpu.memory_space<vmem>>
    %52 = tpu.memref_squeeze %51 : memref<1x1x128xf32, #tpu.memory_space<vmem>> -> memref<1x128xf32, #tpu.memory_space<vmem>>
    %53 = tpu.memref_slice %arg8[%c1_i32_59, %c0_i32_60, %c4_i32_61] : memref<2x3x8x!tpu.dma_semaphore, #tpu.memory_space<semaphore_mem>> -> memref<1x1x1x!tpu.dma_semaphore, #tpu.memory_space<semaphore_mem>>
    %54 = tpu.memref_squeeze %53 : memref<1x1x1x!tpu.dma_semaphore, #tpu.memory_space<semaphore_mem>> -> memref<!tpu.dma_semaphore, #tpu.memory_space<semaphore_mem>>
    tpu.enqueue_dma source(%50 : memref<1x128xf32, #tpu.memory_space<any>>) target(%52 : memref<1x128xf32, #tpu.memory_space<vmem>>) target_semaphore(%54 : memref<!tpu.dma_semaphore, #tpu.memory_space<semaphore_mem>>)
    %c5 = arith.constant 5 : index
    %55 = memref.load %arg0[%c5] : memref<8xi32, #tpu.memory_space<smem>>
    %c0_i32_65 = arith.constant 0 : i32
    %c0_i32_66 = arith.constant 0 : i32
    %c0_i32_67 = arith.constant 0 : i32
    %c5_i32 = arith.constant 5 : i32
    %c0_i32_68 = arith.constant 0 : i32
    %56 = tpu.memref_slice %arg3[%55, %c0_i32_68] : memref<256x128xf32, #tpu.memory_space<any>> -> memref<1x128xf32, #tpu.memory_space<any>>
    %c5_i32_69 = arith.constant 5 : i32
    %c0_i32_70 = arith.constant 0 : i32
    %57 = tpu.memref_slice %arg6[%c0_i32_65, %c5_i32_69, %c0_i32_70] : memref<3x8x128xf32, #tpu.memory_space<vmem>> -> memref<1x1x128xf32, #tpu.memory_space<vmem>>
    %58 = tpu.memref_squeeze %57 : memref<1x1x128xf32, #tpu.memory_space<vmem>> -> memref<1x128xf32, #tpu.memory_space<vmem>>
    %59 = tpu.memref_slice %arg8[%c0_i32_66, %c0_i32_67, %c5_i32] : memref<2x3x8x!tpu.dma_semaphore, #tpu.memory_space<semaphore_mem>> -> memref<1x1x1x!tpu.dma_semaphore, #tpu.memory_space<semaphore_mem>>
    %60 = tpu.memref_squeeze %59 : memref<1x1x1x!tpu.dma_semaphore, #tpu.memory_space<semaphore_mem>> -> memref<!tpu.dma_semaphore, #tpu.memory_space<semaphore_mem>>
    tpu.enqueue_dma source(%56 : memref<1x128xf32, #tpu.memory_space<any>>) target(%58 : memref<1x128xf32, #tpu.memory_space<vmem>>) target_semaphore(%60 : memref<!tpu.dma_semaphore, #tpu.memory_space<semaphore_mem>>)
    %c0_i32_71 = arith.constant 0 : i32
    %c1_i32_72 = arith.constant 1 : i32
    %c0_i32_73 = arith.constant 0 : i32
    %c5_i32_74 = arith.constant 5 : i32
    %c0_i32_75 = arith.constant 0 : i32
    %61 = tpu.memref_slice %arg4[%55, %c0_i32_75] : memref<256x128xf32, #tpu.memory_space<any>> -> memref<1x128xf32, #tpu.memory_space<any>>
    %c5_i32_76 = arith.constant 5 : i32
    %c0_i32_77 = arith.constant 0 : i32
    %62 = tpu.memref_slice %arg7[%c0_i32_71, %c5_i32_76, %c0_i32_77] : memref<3x8x128xf32, #tpu.memory_space<vmem>> -> memref<1x1x128xf32, #tpu.memory_space<vmem>>
    %63 = tpu.memref_squeeze %62 : memref<1x1x128xf32, #tpu.memory_space<vmem>> -> memref<1x128xf32, #tpu.memory_space<vmem>>
    %64 = tpu.memref_slice %arg8[%c1_i32_72, %c0_i32_73, %c5_i32_74] : memref<2x3x8x!tpu.dma_semaphore, #tpu.memory_space<semaphore_mem>> -> memref<1x1x1x!tpu.dma_semaphore, #tpu.memory_space<semaphore_mem>>
    %65 = tpu.memref_squeeze %64 : memref<1x1x1x!tpu.dma_semaphore, #tpu.memory_space<semaphore_mem>> -> memref<!tpu.dma_semaphore, #tpu.memory_space<semaphore_mem>>
    tpu.enqueue_dma source(%61 : memref<1x128xf32, #tpu.memory_space<any>>) target(%63 : memref<1x128xf32, #tpu.memory_space<vmem>>) target_semaphore(%65 : memref<!tpu.dma_semaphore, #tpu.memory_space<semaphore_mem>>)
    %c6 = arith.constant 6 : index
    %66 = memref.load %arg0[%c6] : memref<8xi32, #tpu.memory_space<smem>>
    %c0_i32_78 = arith.constant 0 : i32
    %c0_i32_79 = arith.constant 0 : i32
    %c0_i32_80 = arith.constant 0 : i32
    %c6_i32 = arith.constant 6 : i32
    %c0_i32_81 = arith.constant 0 : i32
    %67 = tpu.memref_slice %arg3[%66, %c0_i32_81] : memref<256x128xf32, #tpu.memory_space<any>> -> memref<1x128xf32, #tpu.memory_space<any>>
    %c6_i32_82 = arith.constant 6 : i32
    %c0_i32_83 = arith.constant 0 : i32
    %68 = tpu.memref_slice %arg6[%c0_i32_78, %c6_i32_82, %c0_i32_83] : memref<3x8x128xf32, #tpu.memory_space<vmem>> -> memref<1x1x128xf32, #tpu.memory_space<vmem>>
    %69 = tpu.memref_squeeze %68 : memref<1x1x128xf32, #tpu.memory_space<vmem>> -> memref<1x128xf32, #tpu.memory_space<vmem>>
    %70 = tpu.memref_slice %arg8[%c0_i32_79, %c0_i32_80, %c6_i32] : memref<2x3x8x!tpu.dma_semaphore, #tpu.memory_space<semaphore_mem>> -> memref<1x1x1x!tpu.dma_semaphore, #tpu.memory_space<semaphore_mem>>
    %71 = tpu.memref_squeeze %70 : memref<1x1x1x!tpu.dma_semaphore, #tpu.memory_space<semaphore_mem>> -> memref<!tpu.dma_semaphore, #tpu.memory_space<semaphore_mem>>
    tpu.enqueue_dma source(%67 : memref<1x128xf32, #tpu.memory_space<any>>) target(%69 : memref<1x128xf32, #tpu.memory_space<vmem>>) target_semaphore(%71 : memref<!tpu.dma_semaphore, #tpu.memory_space<semaphore_mem>>)
    %c0_i32_84 = arith.constant 0 : i32
    %c1_i32_85 = arith.constant 1 : i32
    %c0_i32_86 = arith.constant 0 : i32
    %c6_i32_87 = arith.constant 6 : i32
    %c0_i32_88 = arith.constant 0 : i32
    %72 = tpu.memref_slice %arg4[%66, %c0_i32_88] : memref<256x128xf32, #tpu.memory_space<any>> -> memref<1x128xf32, #tpu.memory_space<any>>
    %c6_i32_89 = arith.constant 6 : i32
    %c0_i32_90 = arith.constant 0 : i32
    %73 = tpu.memref_slice %arg7[%c0_i32_84, %c6_i32_89, %c0_i32_90] : memref<3x8x128xf32, #tpu.memory_space<vmem>> -> memref<1x1x128xf32, #tpu.memory_space<vmem>>
    %74 = tpu.memref_squeeze %73 : memref<1x1x128xf32, #tpu.memory_space<vmem>> -> memref<1x128xf32, #tpu.memory_space<vmem>>
    %75 = tpu.memref_slice %arg8[%c1_i32_85, %c0_i32_86, %c6_i32_87] : memref<2x3x8x!tpu.dma_semaphore, #tpu.memory_space<semaphore_mem>> -> memref<1x1x1x!tpu.dma_semaphore, #tpu.memory_space<semaphore_mem>>
    %76 = tpu.memref_squeeze %75 : memref<1x1x1x!tpu.dma_semaphore, #tpu.memory_space<semaphore_mem>> -> memref<!tpu.dma_semaphore, #tpu.memory_space<semaphore_mem>>
    tpu.enqueue_dma source(%72 : memref<1x128xf32, #tpu.memory_space<any>>) target(%74 : memref<1x128xf32, #tpu.memory_space<vmem>>) target_semaphore(%76 : memref<!tpu.dma_semaphore, #tpu.memory_space<semaphore_mem>>)
    %c7 = arith.constant 7 : index
    %77 = memref.load %arg0[%c7] : memref<8xi32, #tpu.memory_space<smem>>
    %c0_i32_91 = arith.constant 0 : i32
    %c0_i32_92 = arith.constant 0 : i32
    %c0_i32_93 = arith.constant 0 : i32
    %c7_i32 = arith.constant 7 : i32
    %c0_i32_94 = arith.constant 0 : i32
    %78 = tpu.memref_slice %arg3[%77, %c0_i32_94] : memref<256x128xf32, #tpu.memory_space<any>> -> memref<1x128xf32, #tpu.memory_space<any>>
    %c7_i32_95 = arith.constant 7 : i32
    %c0_i32_96 = arith.constant 0 : i32
    %79 = tpu.memref_slice %arg6[%c0_i32_91, %c7_i32_95, %c0_i32_96] : memref<3x8x128xf32, #tpu.memory_space<vmem>> -> memref<1x1x128xf32, #tpu.memory_space<vmem>>
    %80 = tpu.memref_squeeze %79 : memref<1x1x128xf32, #tpu.memory_space<vmem>> -> memref<1x128xf32, #tpu.memory_space<vmem>>
    %81 = tpu.memref_slice %arg8[%c0_i32_92, %c0_i32_93, %c7_i32] : memref<2x3x8x!tpu.dma_semaphore, #tpu.memory_space<semaphore_mem>> -> memref<1x1x1x!tpu.dma_semaphore, #tpu.memory_space<semaphore_mem>>
    %82 = tpu.memref_squeeze %81 : memref<1x1x1x!tpu.dma_semaphore, #tpu.memory_space<semaphore_mem>> -> memref<!tpu.dma_semaphore, #tpu.memory_space<semaphore_mem>>
    tpu.enqueue_dma source(%78 : memref<1x128xf32, #tpu.memory_space<any>>) target(%80 : memref<1x128xf32, #tpu.memory_space<vmem>>) target_semaphore(%82 : memref<!tpu.dma_semaphore, #tpu.memory_space<semaphore_mem>>)
    %c0_i32_97 = arith.constant 0 : i32
    %c1_i32_98 = arith.constant 1 : i32
    %c0_i32_99 = arith.constant 0 : i32
    %c7_i32_100 = arith.constant 7 : i32
    %c0_i32_101 = arith.constant 0 : i32
    %83 = tpu.memref_slice %arg4[%77, %c0_i32_101] : memref<256x128xf32, #tpu.memory_space<any>> -> memref<1x128xf32, #tpu.memory_space<any>>
    %c7_i32_102 = arith.constant 7 : i32
    %c0_i32_103 = arith.constant 0 : i32
    %84 = tpu.memref_slice %arg7[%c0_i32_97, %c7_i32_102, %c0_i32_103] : memref<3x8x128xf32, #tpu.memory_space<vmem>> -> memref<1x1x128xf32, #tpu.memory_space<vmem>>
    %85 = tpu.memref_squeeze %84 : memref<1x1x128xf32, #tpu.memory_space<vmem>> -> memref<1x128xf32, #tpu.memory_space<vmem>>
    %86 = tpu.memref_slice %arg8[%c1_i32_98, %c0_i32_99, %c7_i32_100] : memref<2x3x8x!tpu.dma_semaphore, #tpu.memory_space<semaphore_mem>> -> memref<1x1x1x!tpu.dma_semaphore, #tpu.memory_space<semaphore_mem>>
    %87 = tpu.memref_squeeze %86 : memref<1x1x1x!tpu.dma_semaphore, #tpu.memory_space<semaphore_mem>> -> memref<!tpu.dma_semaphore, #tpu.memory_space<semaphore_mem>>
    tpu.enqueue_dma source(%83 : memref<1x128xf32, #tpu.memory_space<any>>) target(%85 : memref<1x128xf32, #tpu.memory_space<vmem>>) target_semaphore(%87 : memref<!tpu.dma_semaphore, #tpu.memory_space<semaphore_mem>>)
    %c0_104 = arith.constant 0 : index
    %88 = memref.load %arg1[%c0_104] : memref<8xi32, #tpu.memory_space<smem>>
    %c1_i32_105 = arith.constant 1 : i32
    %c0_i32_106 = arith.constant 0 : i32
    %c1_i32_107 = arith.constant 1 : i32
    %c0_i32_108 = arith.constant 0 : i32
    %c0_i32_109 = arith.constant 0 : i32
    %89 = tpu.memref_slice %arg3[%88, %c0_i32_109] : memref<256x128xf32, #tpu.memory_space<any>> -> memref<1x128xf32, #tpu.memory_space<any>>
    %c0_i32_110 = arith.constant 0 : i32
    %c0_i32_111 = arith.constant 0 : i32
    %90 = tpu.memref_slice %arg6[%c1_i32_105, %c0_i32_110, %c0_i32_111] : memref<3x8x128xf32, #tpu.memory_space<vmem>> -> memref<1x1x128xf32, #tpu.memory_space<vmem>>
    %91 = tpu.memref_squeeze %90 : memref<1x1x128xf32, #tpu.memory_space<vmem>> -> memref<1x128xf32, #tpu.memory_space<vmem>>
    %92 = tpu.memref_slice %arg8[%c0_i32_106, %c1_i32_107, %c0_i32_108] : memref<2x3x8x!tpu.dma_semaphore, #tpu.memory_space<semaphore_mem>> -> memref<1x1x1x!tpu.dma_semaphore, #tpu.memory_space<semaphore_mem>>
    %93 = tpu.memref_squeeze %92 : memref<1x1x1x!tpu.dma_semaphore, #tpu.memory_space<semaphore_mem>> -> memref<!tpu.dma_semaphore, #tpu.memory_space<semaphore_mem>>
    tpu.enqueue_dma source(%89 : memref<1x128xf32, #tpu.memory_space<any>>) target(%91 : memref<1x128xf32, #tpu.memory_space<vmem>>) target_semaphore(%93 : memref<!tpu.dma_semaphore, #tpu.memory_space<semaphore_mem>>)
    %c1_i32_112 = arith.constant 1 : i32
    %c1_i32_113 = arith.constant 1 : i32
    %c1_i32_114 = arith.constant 1 : i32
    %c0_i32_115 = arith.constant 0 : i32
    %c0_i32_116 = arith.constant 0 : i32
    %94 = tpu.memref_slice %arg4[%88, %c0_i32_116] : memref<256x128xf32, #tpu.memory_space<any>> -> memref<1x128xf32, #tpu.memory_space<any>>
    %c0_i32_117 = arith.constant 0 : i32
    %c0_i32_118 = arith.constant 0 : i32
    %95 = tpu.memref_slice %arg7[%c1_i32_112, %c0_i32_117, %c0_i32_118] : memref<3x8x128xf32, #tpu.memory_space<vmem>> -> memref<1x1x128xf32, #tpu.memory_space<vmem>>
    %96 = tpu.memref_squeeze %95 : memref<1x1x128xf32, #tpu.memory_space<vmem>> -> memref<1x128xf32, #tpu.memory_space<vmem>>
    %97 = tpu.memref_slice %arg8[%c1_i32_113, %c1_i32_114, %c0_i32_115] : memref<2x3x8x!tpu.dma_semaphore, #tpu.memory_space<semaphore_mem>> -> memref<1x1x1x!tpu.dma_semaphore, #tpu.memory_space<semaphore_mem>>
    %98 = tpu.memref_squeeze %97 : memref<1x1x1x!tpu.dma_semaphore, #tpu.memory_space<semaphore_mem>> -> memref<!tpu.dma_semaphore, #tpu.memory_space<semaphore_mem>>
    tpu.enqueue_dma source(%94 : memref<1x128xf32, #tpu.memory_space<any>>) target(%96 : memref<1x128xf32, #tpu.memory_space<vmem>>) target_semaphore(%98 : memref<!tpu.dma_semaphore, #tpu.memory_space<semaphore_mem>>)
    %c1_119 = arith.constant 1 : index
    %99 = memref.load %arg1[%c1_119] : memref<8xi32, #tpu.memory_space<smem>>
    %c1_i32_120 = arith.constant 1 : i32
    %c0_i32_121 = arith.constant 0 : i32
    %c1_i32_122 = arith.constant 1 : i32
    %c1_i32_123 = arith.constant 1 : i32
    %c0_i32_124 = arith.constant 0 : i32
    %100 = tpu.memref_slice %arg3[%99, %c0_i32_124] : memref<256x128xf32, #tpu.memory_space<any>> -> memref<1x128xf32, #tpu.memory_space<any>>
    %c1_i32_125 = arith.constant 1 : i32
    %c0_i32_126 = arith.constant 0 : i32
    %101 = tpu.memref_slice %arg6[%c1_i32_120, %c1_i32_125, %c0_i32_126] : memref<3x8x128xf32, #tpu.memory_space<vmem>> -> memref<1x1x128xf32, #tpu.memory_space<vmem>>
    %102 = tpu.memref_squeeze %101 : memref<1x1x128xf32, #tpu.memory_space<vmem>> -> memref<1x128xf32, #tpu.memory_space<vmem>>
    %103 = tpu.memref_slice %arg8[%c0_i32_121, %c1_i32_122, %c1_i32_123] : memref<2x3x8x!tpu.dma_semaphore, #tpu.memory_space<semaphore_mem>> -> memref<1x1x1x!tpu.dma_semaphore, #tpu.memory_space<semaphore_mem>>
    %104 = tpu.memref_squeeze %103 : memref<1x1x1x!tpu.dma_semaphore, #tpu.memory_space<semaphore_mem>> -> memref<!tpu.dma_semaphore, #tpu.memory_space<semaphore_mem>>
    tpu.enqueue_dma source(%100 : memref<1x128xf32, #tpu.memory_space<any>>) target(%102 : memref<1x128xf32, #tpu.memory_space<vmem>>) target_semaphore(%104 : memref<!tpu.dma_semaphore, #tpu.memory_space<semaphore_mem>>)
    %c1_i32_127 = arith.constant 1 : i32
    %c1_i32_128 = arith.constant 1 : i32
    %c1_i32_129 = arith.constant 1 : i32
    %c1_i32_130 = arith.constant 1 : i32
    %c0_i32_131 = arith.constant 0 : i32
    %105 = tpu.memref_slice %arg4[%99, %c0_i32_131] : memref<256x128xf32, #tpu.memory_space<any>> -> memref<1x128xf32, #tpu.memory_space<any>>
    %c1_i32_132 = arith.constant 1 : i32
    %c0_i32_133 = arith.constant 0 : i32
    %106 = tpu.memref_slice %arg7[%c1_i32_127, %c1_i32_132, %c0_i32_133] : memref<3x8x128xf32, #tpu.memory_space<vmem>> -> memref<1x1x128xf32, #tpu.memory_space<vmem>>
    %107 = tpu.memref_squeeze %106 : memref<1x1x128xf32, #tpu.memory_space<vmem>> -> memref<1x128xf32, #tpu.memory_space<vmem>>
    %108 = tpu.memref_slice %arg8[%c1_i32_128, %c1_i32_129, %c1_i32_130] : memref<2x3x8x!tpu.dma_semaphore, #tpu.memory_space<semaphore_mem>> -> memref<1x1x1x!tpu.dma_semaphore, #tpu.memory_space<semaphore_mem>>
    %109 = tpu.memref_squeeze %108 : memref<1x1x1x!tpu.dma_semaphore, #tpu.memory_space<semaphore_mem>> -> memref<!tpu.dma_semaphore, #tpu.memory_space<semaphore_mem>>
    tpu.enqueue_dma source(%105 : memref<1x128xf32, #tpu.memory_space<any>>) target(%107 : memref<1x128xf32, #tpu.memory_space<vmem>>) target_semaphore(%109 : memref<!tpu.dma_semaphore, #tpu.memory_space<semaphore_mem>>)
    %c2_134 = arith.constant 2 : index
    %110 = memref.load %arg1[%c2_134] : memref<8xi32, #tpu.memory_space<smem>>
    %c1_i32_135 = arith.constant 1 : i32
    %c0_i32_136 = arith.constant 0 : i32
    %c1_i32_137 = arith.constant 1 : i32
    %c2_i32_138 = arith.constant 2 : i32
    %c0_i32_139 = arith.constant 0 : i32
    %111 = tpu.memref_slice %arg3[%110, %c0_i32_139] : memref<256x128xf32, #tpu.memory_space<any>> -> memref<1x128xf32, #tpu.memory_space<any>>
    %c2_i32_140 = arith.constant 2 : i32
    %c0_i32_141 = arith.constant 0 : i32
    %112 = tpu.memref_slice %arg6[%c1_i32_135, %c2_i32_140, %c0_i32_141] : memref<3x8x128xf32, #tpu.memory_space<vmem>> -> memref<1x1x128xf32, #tpu.memory_space<vmem>>
    %113 = tpu.memref_squeeze %112 : memref<1x1x128xf32, #tpu.memory_space<vmem>> -> memref<1x128xf32, #tpu.memory_space<vmem>>
    %114 = tpu.memref_slice %arg8[%c0_i32_136, %c1_i32_137, %c2_i32_138] : memref<2x3x8x!tpu.dma_semaphore, #tpu.memory_space<semaphore_mem>> -> memref<1x1x1x!tpu.dma_semaphore, #tpu.memory_space<semaphore_mem>>
    %115 = tpu.memref_squeeze %114 : memref<1x1x1x!tpu.dma_semaphore, #tpu.memory_space<semaphore_mem>> -> memref<!tpu.dma_semaphore, #tpu.memory_space<semaphore_mem>>
    tpu.enqueue_dma source(%111 : memref<1x128xf32, #tpu.memory_space<any>>) target(%113 : memref<1x128xf32, #tpu.memory_space<vmem>>) target_semaphore(%115 : memref<!tpu.dma_semaphore, #tpu.memory_space<semaphore_mem>>)
    %c1_i32_142 = arith.constant 1 : i32
    %c1_i32_143 = arith.constant 1 : i32
    %c1_i32_144 = arith.constant 1 : i32
    %c2_i32_145 = arith.constant 2 : i32
    %c0_i32_146 = arith.constant 0 : i32
    %116 = tpu.memref_slice %arg4[%110, %c0_i32_146] : memref<256x128xf32, #tpu.memory_space<any>> -> memref<1x128xf32, #tpu.memory_space<any>>
    %c2_i32_147 = arith.constant 2 : i32
    %c0_i32_148 = arith.constant 0 : i32
    %117 = tpu.memref_slice %arg7[%c1_i32_142, %c2_i32_147, %c0_i32_148] : memref<3x8x128xf32, #tpu.memory_space<vmem>> -> memref<1x1x128xf32, #tpu.memory_space<vmem>>
    %118 = tpu.memref_squeeze %117 : memref<1x1x128xf32, #tpu.memory_space<vmem>> -> memref<1x128xf32, #tpu.memory_space<vmem>>
    %119 = tpu.memref_slice %arg8[%c1_i32_143, %c1_i32_144, %c2_i32_145] : memref<2x3x8x!tpu.dma_semaphore, #tpu.memory_space<semaphore_mem>> -> memref<1x1x1x!tpu.dma_semaphore, #tpu.memory_space<semaphore_mem>>
    %120 = tpu.memref_squeeze %119 : memref<1x1x1x!tpu.dma_semaphore, #tpu.memory_space<semaphore_mem>> -> memref<!tpu.dma_semaphore, #tpu.memory_space<semaphore_mem>>
    tpu.enqueue_dma source(%116 : memref<1x128xf32, #tpu.memory_space<any>>) target(%118 : memref<1x128xf32, #tpu.memory_space<vmem>>) target_semaphore(%120 : memref<!tpu.dma_semaphore, #tpu.memory_space<semaphore_mem>>)
    %c3_149 = arith.constant 3 : index
    %121 = memref.load %arg1[%c3_149] : memref<8xi32, #tpu.memory_space<smem>>
    %c1_i32_150 = arith.constant 1 : i32
    %c0_i32_151 = arith.constant 0 : i32
    %c1_i32_152 = arith.constant 1 : i32
    %c3_i32_153 = arith.constant 3 : i32
    %c0_i32_154 = arith.constant 0 : i32
    %122 = tpu.memref_slice %arg3[%121, %c0_i32_154] : memref<256x128xf32, #tpu.memory_space<any>> -> memref<1x128xf32, #tpu.memory_space<any>>
    %c3_i32_155 = arith.constant 3 : i32
    %c0_i32_156 = arith.constant 0 : i32
    %123 = tpu.memref_slice %arg6[%c1_i32_150, %c3_i32_155, %c0_i32_156] : memref<3x8x128xf32, #tpu.memory_space<vmem>> -> memref<1x1x128xf32, #tpu.memory_space<vmem>>
    %124 = tpu.memref_squeeze %123 : memref<1x1x128xf32, #tpu.memory_space<vmem>> -> memref<1x128xf32, #tpu.memory_space<vmem>>
    %125 = tpu.memref_slice %arg8[%c0_i32_151, %c1_i32_152, %c3_i32_153] : memref<2x3x8x!tpu.dma_semaphore, #tpu.memory_space<semaphore_mem>> -> memref<1x1x1x!tpu.dma_semaphore, #tpu.memory_space<semaphore_mem>>
    %126 = tpu.memref_squeeze %125 : memref<1x1x1x!tpu.dma_semaphore, #tpu.memory_space<semaphore_mem>> -> memref<!tpu.dma_semaphore, #tpu.memory_space<semaphore_mem>>
    tpu.enqueue_dma source(%122 : memref<1x128xf32, #tpu.memory_space<any>>) target(%124 : memref<1x128xf32, #tpu.memory_space<vmem>>) target_semaphore(%126 : memref<!tpu.dma_semaphore, #tpu.memory_space<semaphore_mem>>)
    %c1_i32_157 = arith.constant 1 : i32
    %c1_i32_158 = arith.constant 1 : i32
    %c1_i32_159 = arith.constant 1 : i32
    %c3_i32_160 = arith.constant 3 : i32
    %c0_i32_161 = arith.constant 0 : i32
    %127 = tpu.memref_slice %arg4[%121, %c0_i32_161] : memref<256x128xf32, #tpu.memory_space<any>> -> memref<1x128xf32, #tpu.memory_space<any>>
    %c3_i32_162 = arith.constant 3 : i32
    %c0_i32_163 = arith.constant 0 : i32
    %128 = tpu.memref_slice %arg7[%c1_i32_157, %c3_i32_162, %c0_i32_163] : memref<3x8x128xf32, #tpu.memory_space<vmem>> -> memref<1x1x128xf32, #tpu.memory_space<vmem>>
    %129 = tpu.memref_squeeze %128 : memref<1x1x128xf32, #tpu.memory_space<vmem>> -> memref<1x128xf32, #tpu.memory_space<vmem>>
    %130 = tpu.memref_slice %arg8[%c1_i32_158, %c1_i32_159, %c3_i32_160] : memref<2x3x8x!tpu.dma_semaphore, #tpu.memory_space<semaphore_mem>> -> memref<1x1x1x!tpu.dma_semaphore, #tpu.memory_space<semaphore_mem>>
    %131 = tpu.memref_squeeze %130 : memref<1x1x1x!tpu.dma_semaphore, #tpu.memory_space<semaphore_mem>> -> memref<!tpu.dma_semaphore, #tpu.memory_space<semaphore_mem>>
    tpu.enqueue_dma source(%127 : memref<1x128xf32, #tpu.memory_space<any>>) target(%129 : memref<1x128xf32, #tpu.memory_space<vmem>>) target_semaphore(%131 : memref<!tpu.dma_semaphore, #tpu.memory_space<semaphore_mem>>)
    %c4_164 = arith.constant 4 : index
    %132 = memref.load %arg1[%c4_164] : memref<8xi32, #tpu.memory_space<smem>>
    %c1_i32_165 = arith.constant 1 : i32
    %c0_i32_166 = arith.constant 0 : i32
    %c1_i32_167 = arith.constant 1 : i32
    %c4_i32_168 = arith.constant 4 : i32
    %c0_i32_169 = arith.constant 0 : i32
    %133 = tpu.memref_slice %arg3[%132, %c0_i32_169] : memref<256x128xf32, #tpu.memory_space<any>> -> memref<1x128xf32, #tpu.memory_space<any>>
    %c4_i32_170 = arith.constant 4 : i32
    %c0_i32_171 = arith.constant 0 : i32
    %134 = tpu.memref_slice %arg6[%c1_i32_165, %c4_i32_170, %c0_i32_171] : memref<3x8x128xf32, #tpu.memory_space<vmem>> -> memref<1x1x128xf32, #tpu.memory_space<vmem>>
    %135 = tpu.memref_squeeze %134 : memref<1x1x128xf32, #tpu.memory_space<vmem>> -> memref<1x128xf32, #tpu.memory_space<vmem>>
    %136 = tpu.memref_slice %arg8[%c0_i32_166, %c1_i32_167, %c4_i32_168] : memref<2x3x8x!tpu.dma_semaphore, #tpu.memory_space<semaphore_mem>> -> memref<1x1x1x!tpu.dma_semaphore, #tpu.memory_space<semaphore_mem>>
    %137 = tpu.memref_squeeze %136 : memref<1x1x1x!tpu.dma_semaphore, #tpu.memory_space<semaphore_mem>> -> memref<!tpu.dma_semaphore, #tpu.memory_space<semaphore_mem>>
    tpu.enqueue_dma source(%133 : memref<1x128xf32, #tpu.memory_space<any>>) target(%135 : memref<1x128xf32, #tpu.memory_space<vmem>>) target_semaphore(%137 : memref<!tpu.dma_semaphore, #tpu.memory_space<semaphore_mem>>)
    %c1_i32_172 = arith.constant 1 : i32
    %c1_i32_173 = arith.constant 1 : i32
    %c1_i32_174 = arith.constant 1 : i32
    %c4_i32_175 = arith.constant 4 : i32
    %c0_i32_176 = arith.constant 0 : i32
    %138 = tpu.memref_slice %arg4[%132, %c0_i32_176] : memref<256x128xf32, #tpu.memory_space<any>> -> memref<1x128xf32, #tpu.memory_space<any>>
    %c4_i32_177 = arith.constant 4 : i32
    %c0_i32_178 = arith.constant 0 : i32
    %139 = tpu.memref_slice %arg7[%c1_i32_172, %c4_i32_177, %c0_i32_178] : memref<3x8x128xf32, #tpu.memory_space<vmem>> -> memref<1x1x128xf32, #tpu.memory_space<vmem>>
    %140 = tpu.memref_squeeze %139 : memref<1x1x128xf32, #tpu.memory_space<vmem>> -> memref<1x128xf32, #tpu.memory_space<vmem>>
    %141 = tpu.memref_slice %arg8[%c1_i32_173, %c1_i32_174, %c4_i32_175] : memref<2x3x8x!tpu.dma_semaphore, #tpu.memory_space<semaphore_mem>> -> memref<1x1x1x!tpu.dma_semaphore, #tpu.memory_space<semaphore_mem>>
    %142 = tpu.memref_squeeze %141 : memref<1x1x1x!tpu.dma_semaphore, #tpu.memory_space<semaphore_mem>> -> memref<!tpu.dma_semaphore, #tpu.memory_space<semaphore_mem>>
    tpu.enqueue_dma source(%138 : memref<1x128xf32, #tpu.memory_space<any>>) target(%140 : memref<1x128xf32, #tpu.memory_space<vmem>>) target_semaphore(%142 : memref<!tpu.dma_semaphore, #tpu.memory_space<semaphore_mem>>)
    %c5_179 = arith.constant 5 : index
    %143 = memref.load %arg1[%c5_179] : memref<8xi32, #tpu.memory_space<smem>>
    %c1_i32_180 = arith.constant 1 : i32
    %c0_i32_181 = arith.constant 0 : i32
    %c1_i32_182 = arith.constant 1 : i32
    %c5_i32_183 = arith.constant 5 : i32
    %c0_i32_184 = arith.constant 0 : i32
    %144 = tpu.memref_slice %arg3[%143, %c0_i32_184] : memref<256x128xf32, #tpu.memory_space<any>> -> memref<1x128xf32, #tpu.memory_space<any>>
    %c5_i32_185 = arith.constant 5 : i32
    %c0_i32_186 = arith.constant 0 : i32
    %145 = tpu.memref_slice %arg6[%c1_i32_180, %c5_i32_185, %c0_i32_186] : memref<3x8x128xf32, #tpu.memory_space<vmem>> -> memref<1x1x128xf32, #tpu.memory_space<vmem>>
    %146 = tpu.memref_squeeze %145 : memref<1x1x128xf32, #tpu.memory_space<vmem>> -> memref<1x128xf32, #tpu.memory_space<vmem>>
    %147 = tpu.memref_slice %arg8[%c0_i32_181, %c1_i32_182, %c5_i32_183] : memref<2x3x8x!tpu.dma_semaphore, #tpu.memory_space<semaphore_mem>> -> memref<1x1x1x!tpu.dma_semaphore, #tpu.memory_space<semaphore_mem>>
    %148 = tpu.memref_squeeze %147 : memref<1x1x1x!tpu.dma_semaphore, #tpu.memory_space<semaphore_mem>> -> memref<!tpu.dma_semaphore, #tpu.memory_space<semaphore_mem>>
    tpu.enqueue_dma source(%144 : memref<1x128xf32, #tpu.memory_space<any>>) target(%146 : memref<1x128xf32, #tpu.memory_space<vmem>>) target_semaphore(%148 : memref<!tpu.dma_semaphore, #tpu.memory_space<semaphore_mem>>)
    %c1_i32_187 = arith.constant 1 : i32
    %c1_i32_188 = arith.constant 1 : i32
    %c1_i32_189 = arith.constant 1 : i32
    %c5_i32_190 = arith.constant 5 : i32
    %c0_i32_191 = arith.constant 0 : i32
    %149 = tpu.memref_slice %arg4[%143, %c0_i32_191] : memref<256x128xf32, #tpu.memory_space<any>> -> memref<1x128xf32, #tpu.memory_space<any>>
    %c5_i32_192 = arith.constant 5 : i32
    %c0_i32_193 = arith.constant 0 : i32
    %150 = tpu.memref_slice %arg7[%c1_i32_187, %c5_i32_192, %c0_i32_193] : memref<3x8x128xf32, #tpu.memory_space<vmem>> -> memref<1x1x128xf32, #tpu.memory_space<vmem>>
    %151 = tpu.memref_squeeze %150 : memref<1x1x128xf32, #tpu.memory_space<vmem>> -> memref<1x128xf32, #tpu.memory_space<vmem>>
    %152 = tpu.memref_slice %arg8[%c1_i32_188, %c1_i32_189, %c5_i32_190] : memref<2x3x8x!tpu.dma_semaphore, #tpu.memory_space<semaphore_mem>> -> memref<1x1x1x!tpu.dma_semaphore, #tpu.memory_space<semaphore_mem>>
    %153 = tpu.memref_squeeze %152 : memref<1x1x1x!tpu.dma_semaphore, #tpu.memory_space<semaphore_mem>> -> memref<!tpu.dma_semaphore, #tpu.memory_space<semaphore_mem>>
    tpu.enqueue_dma source(%149 : memref<1x128xf32, #tpu.memory_space<any>>) target(%151 : memref<1x128xf32, #tpu.memory_space<vmem>>) target_semaphore(%153 : memref<!tpu.dma_semaphore, #tpu.memory_space<semaphore_mem>>)
    %c6_194 = arith.constant 6 : index
    %154 = memref.load %arg1[%c6_194] : memref<8xi32, #tpu.memory_space<smem>>
    %c1_i32_195 = arith.constant 1 : i32
    %c0_i32_196 = arith.constant 0 : i32
    %c1_i32_197 = arith.constant 1 : i32
    %c6_i32_198 = arith.constant 6 : i32
    %c0_i32_199 = arith.constant 0 : i32
    %155 = tpu.memref_slice %arg3[%154, %c0_i32_199] : memref<256x128xf32, #tpu.memory_space<any>> -> memref<1x128xf32, #tpu.memory_space<any>>
    %c6_i32_200 = arith.constant 6 : i32
    %c0_i32_201 = arith.constant 0 : i32
    %156 = tpu.memref_slice %arg6[%c1_i32_195, %c6_i32_200, %c0_i32_201] : memref<3x8x128xf32, #tpu.memory_space<vmem>> -> memref<1x1x128xf32, #tpu.memory_space<vmem>>
    %157 = tpu.memref_squeeze %156 : memref<1x1x128xf32, #tpu.memory_space<vmem>> -> memref<1x128xf32, #tpu.memory_space<vmem>>
    %158 = tpu.memref_slice %arg8[%c0_i32_196, %c1_i32_197, %c6_i32_198] : memref<2x3x8x!tpu.dma_semaphore, #tpu.memory_space<semaphore_mem>> -> memref<1x1x1x!tpu.dma_semaphore, #tpu.memory_space<semaphore_mem>>
    %159 = tpu.memref_squeeze %158 : memref<1x1x1x!tpu.dma_semaphore, #tpu.memory_space<semaphore_mem>> -> memref<!tpu.dma_semaphore, #tpu.memory_space<semaphore_mem>>
    tpu.enqueue_dma source(%155 : memref<1x128xf32, #tpu.memory_space<any>>) target(%157 : memref<1x128xf32, #tpu.memory_space<vmem>>) target_semaphore(%159 : memref<!tpu.dma_semaphore, #tpu.memory_space<semaphore_mem>>)
    %c1_i32_202 = arith.constant 1 : i32
    %c1_i32_203 = arith.constant 1 : i32
    %c1_i32_204 = arith.constant 1 : i32
    %c6_i32_205 = arith.constant 6 : i32
    %c0_i32_206 = arith.constant 0 : i32
    %160 = tpu.memref_slice %arg4[%154, %c0_i32_206] : memref<256x128xf32, #tpu.memory_space<any>> -> memref<1x128xf32, #tpu.memory_space<any>>
    %c6_i32_207 = arith.constant 6 : i32
    %c0_i32_208 = arith.constant 0 : i32
    %161 = tpu.memref_slice %arg7[%c1_i32_202, %c6_i32_207, %c0_i32_208] : memref<3x8x128xf32, #tpu.memory_space<vmem>> -> memref<1x1x128xf32, #tpu.memory_space<vmem>>
    %162 = tpu.memref_squeeze %161 : memref<1x1x128xf32, #tpu.memory_space<vmem>> -> memref<1x128xf32, #tpu.memory_space<vmem>>
    %163 = tpu.memref_slice %arg8[%c1_i32_203, %c1_i32_204, %c6_i32_205] : memref<2x3x8x!tpu.dma_semaphore, #tpu.memory_space<semaphore_mem>> -> memref<1x1x1x!tpu.dma_semaphore, #tpu.memory_space<semaphore_mem>>
    %164 = tpu.memref_squeeze %163 : memref<1x1x1x!tpu.dma_semaphore, #tpu.memory_space<semaphore_mem>> -> memref<!tpu.dma_semaphore, #tpu.memory_space<semaphore_mem>>
    tpu.enqueue_dma source(%160 : memref<1x128xf32, #tpu.memory_space<any>>) target(%162 : memref<1x128xf32, #tpu.memory_space<vmem>>) target_semaphore(%164 : memref<!tpu.dma_semaphore, #tpu.memory_space<semaphore_mem>>)
    %c7_209 = arith.constant 7 : index
    %165 = memref.load %arg1[%c7_209] : memref<8xi32, #tpu.memory_space<smem>>
    %c1_i32_210 = arith.constant 1 : i32
    %c0_i32_211 = arith.constant 0 : i32
    %c1_i32_212 = arith.constant 1 : i32
    %c7_i32_213 = arith.constant 7 : i32
    %c0_i32_214 = arith.constant 0 : i32
    %166 = tpu.memref_slice %arg3[%165, %c0_i32_214] : memref<256x128xf32, #tpu.memory_space<any>> -> memref<1x128xf32, #tpu.memory_space<any>>
    %c7_i32_215 = arith.constant 7 : i32
    %c0_i32_216 = arith.constant 0 : i32
    %167 = tpu.memref_slice %arg6[%c1_i32_210, %c7_i32_215, %c0_i32_216] : memref<3x8x128xf32, #tpu.memory_space<vmem>> -> memref<1x1x128xf32, #tpu.memory_space<vmem>>
    %168 = tpu.memref_squeeze %167 : memref<1x1x128xf32, #tpu.memory_space<vmem>> -> memref<1x128xf32, #tpu.memory_space<vmem>>
    %169 = tpu.memref_slice %arg8[%c0_i32_211, %c1_i32_212, %c7_i32_213] : memref<2x3x8x!tpu.dma_semaphore, #tpu.memory_space<semaphore_mem>> -> memref<1x1x1x!tpu.dma_semaphore, #tpu.memory_space<semaphore_mem>>
    %170 = tpu.memref_squeeze %169 : memref<1x1x1x!tpu.dma_semaphore, #tpu.memory_space<semaphore_mem>> -> memref<!tpu.dma_semaphore, #tpu.memory_space<semaphore_mem>>
    tpu.enqueue_dma source(%166 : memref<1x128xf32, #tpu.memory_space<any>>) target(%168 : memref<1x128xf32, #tpu.memory_space<vmem>>) target_semaphore(%170 : memref<!tpu.dma_semaphore, #tpu.memory_space<semaphore_mem>>)
    %c1_i32_217 = arith.constant 1 : i32
    %c1_i32_218 = arith.constant 1 : i32
    %c1_i32_219 = arith.constant 1 : i32
    %c7_i32_220 = arith.constant 7 : i32
    %c0_i32_221 = arith.constant 0 : i32
    %171 = tpu.memref_slice %arg4[%165, %c0_i32_221] : memref<256x128xf32, #tpu.memory_space<any>> -> memref<1x128xf32, #tpu.memory_space<any>>
    %c7_i32_222 = arith.constant 7 : i32
    %c0_i32_223 = arith.constant 0 : i32
    %172 = tpu.memref_slice %arg7[%c1_i32_217, %c7_i32_222, %c0_i32_223] : memref<3x8x128xf32, #tpu.memory_space<vmem>> -> memref<1x1x128xf32, #tpu.memory_space<vmem>>
    %173 = tpu.memref_squeeze %172 : memref<1x1x128xf32, #tpu.memory_space<vmem>> -> memref<1x128xf32, #tpu.memory_space<vmem>>
    %174 = tpu.memref_slice %arg8[%c1_i32_218, %c1_i32_219, %c7_i32_220] : memref<2x3x8x!tpu.dma_semaphore, #tpu.memory_space<semaphore_mem>> -> memref<1x1x1x!tpu.dma_semaphore, #tpu.memory_space<semaphore_mem>>
    %175 = tpu.memref_squeeze %174 : memref<1x1x1x!tpu.dma_semaphore, #tpu.memory_space<semaphore_mem>> -> memref<!tpu.dma_semaphore, #tpu.memory_space<semaphore_mem>>
    tpu.enqueue_dma source(%171 : memref<1x128xf32, #tpu.memory_space<any>>) target(%173 : memref<1x128xf32, #tpu.memory_space<vmem>>) target_semaphore(%175 : memref<!tpu.dma_semaphore, #tpu.memory_space<semaphore_mem>>)
    %c0_224 = arith.constant 0 : index
    %176 = memref.load %arg2[%c0_224] : memref<8xi32, #tpu.memory_space<smem>>
    %c2_i32_225 = arith.constant 2 : i32
    %c0_i32_226 = arith.constant 0 : i32
    %c2_i32_227 = arith.constant 2 : i32
    %c0_i32_228 = arith.constant 0 : i32
    %c0_i32_229 = arith.constant 0 : i32
    %177 = tpu.memref_slice %arg3[%176, %c0_i32_229] : memref<256x128xf32, #tpu.memory_space<any>> -> memref<1x128xf32, #tpu.memory_space<any>>
    %c0_i32_230 = arith.constant 0 : i32
    %c0_i32_231 = arith.constant 0 : i32
    %178 = tpu.memref_slice %arg6[%c2_i32_225, %c0_i32_230, %c0_i32_231] : memref<3x8x128xf32, #tpu.memory_space<vmem>> -> memref<1x1x128xf32, #tpu.memory_space<vmem>>
    %179 = tpu.memref_squeeze %178 : memref<1x1x128xf32, #tpu.memory_space<vmem>> -> memref<1x128xf32, #tpu.memory_space<vmem>>
    %180 = tpu.memref_slice %arg8[%c0_i32_226, %c2_i32_227, %c0_i32_228] : memref<2x3x8x!tpu.dma_semaphore, #tpu.memory_space<semaphore_mem>> -> memref<1x1x1x!tpu.dma_semaphore, #tpu.memory_space<semaphore_mem>>
    %181 = tpu.memref_squeeze %180 : memref<1x1x1x!tpu.dma_semaphore, #tpu.memory_space<semaphore_mem>> -> memref<!tpu.dma_semaphore, #tpu.memory_space<semaphore_mem>>
    tpu.enqueue_dma source(%177 : memref<1x128xf32, #tpu.memory_space<any>>) target(%179 : memref<1x128xf32, #tpu.memory_space<vmem>>) target_semaphore(%181 : memref<!tpu.dma_semaphore, #tpu.memory_space<semaphore_mem>>)
    %c2_i32_232 = arith.constant 2 : i32
    %c1_i32_233 = arith.constant 1 : i32
    %c2_i32_234 = arith.constant 2 : i32
    %c0_i32_235 = arith.constant 0 : i32
    %c0_i32_236 = arith.constant 0 : i32
    %182 = tpu.memref_slice %arg4[%176, %c0_i32_236] : memref<256x128xf32, #tpu.memory_space<any>> -> memref<1x128xf32, #tpu.memory_space<any>>
    %c0_i32_237 = arith.constant 0 : i32
    %c0_i32_238 = arith.constant 0 : i32
    %183 = tpu.memref_slice %arg7[%c2_i32_232, %c0_i32_237, %c0_i32_238] : memref<3x8x128xf32, #tpu.memory_space<vmem>> -> memref<1x1x128xf32, #tpu.memory_space<vmem>>
    %184 = tpu.memref_squeeze %183 : memref<1x1x128xf32, #tpu.memory_space<vmem>> -> memref<1x128xf32, #tpu.memory_space<vmem>>
    %185 = tpu.memref_slice %arg8[%c1_i32_233, %c2_i32_234, %c0_i32_235] : memref<2x3x8x!tpu.dma_semaphore, #tpu.memory_space<semaphore_mem>> -> memref<1x1x1x!tpu.dma_semaphore, #tpu.memory_space<semaphore_mem>>
    %186 = tpu.memref_squeeze %185 : memref<1x1x1x!tpu.dma_semaphore, #tpu.memory_space<semaphore_mem>> -> memref<!tpu.dma_semaphore, #tpu.memory_space<semaphore_mem>>
    tpu.enqueue_dma source(%182 : memref<1x128xf32, #tpu.memory_space<any>>) target(%184 : memref<1x128xf32, #tpu.memory_space<vmem>>) target_semaphore(%186 : memref<!tpu.dma_semaphore, #tpu.memory_space<semaphore_mem>>)
    %c1_239 = arith.constant 1 : index
    %187 = memref.load %arg2[%c1_239] : memref<8xi32, #tpu.memory_space<smem>>
    %c2_i32_240 = arith.constant 2 : i32
    %c0_i32_241 = arith.constant 0 : i32
    %c2_i32_242 = arith.constant 2 : i32
    %c1_i32_243 = arith.constant 1 : i32
    %c0_i32_244 = arith.constant 0 : i32
    %188 = tpu.memref_slice %arg3[%187, %c0_i32_244] : memref<256x128xf32, #tpu.memory_space<any>> -> memref<1x128xf32, #tpu.memory_space<any>>
    %c1_i32_245 = arith.constant 1 : i32
    %c0_i32_246 = arith.constant 0 : i32
    %189 = tpu.memref_slice %arg6[%c2_i32_240, %c1_i32_245, %c0_i32_246] : memref<3x8x128xf32, #tpu.memory_space<vmem>> -> memref<1x1x128xf32, #tpu.memory_space<vmem>>
    %190 = tpu.memref_squeeze %189 : memref<1x1x128xf32, #tpu.memory_space<vmem>> -> memref<1x128xf32, #tpu.memory_space<vmem>>
    %191 = tpu.memref_slice %arg8[%c0_i32_241, %c2_i32_242, %c1_i32_243] : memref<2x3x8x!tpu.dma_semaphore, #tpu.memory_space<semaphore_mem>> -> memref<1x1x1x!tpu.dma_semaphore, #tpu.memory_space<semaphore_mem>>
    %192 = tpu.memref_squeeze %191 : memref<1x1x1x!tpu.dma_semaphore, #tpu.memory_space<semaphore_mem>> -> memref<!tpu.dma_semaphore, #tpu.memory_space<semaphore_mem>>
    tpu.enqueue_dma source(%188 : memref<1x128xf32, #tpu.memory_space<any>>) target(%190 : memref<1x128xf32, #tpu.memory_space<vmem>>) target_semaphore(%192 : memref<!tpu.dma_semaphore, #tpu.memory_space<semaphore_mem>>)
    %c2_i32_247 = arith.constant 2 : i32
    %c1_i32_248 = arith.constant 1 : i32
    %c2_i32_249 = arith.constant 2 : i32
    %c1_i32_250 = arith.constant 1 : i32
    %c0_i32_251 = arith.constant 0 : i32
    %193 = tpu.memref_slice %arg4[%187, %c0_i32_251] : memref<256x128xf32, #tpu.memory_space<any>> -> memref<1x128xf32, #tpu.memory_space<any>>
    %c1_i32_252 = arith.constant 1 : i32
    %c0_i32_253 = arith.constant 0 : i32
    %194 = tpu.memref_slice %arg7[%c2_i32_247, %c1_i32_252, %c0_i32_253] : memref<3x8x128xf32, #tpu.memory_space<vmem>> -> memref<1x1x128xf32, #tpu.memory_space<vmem>>
    %195 = tpu.memref_squeeze %194 : memref<1x1x128xf32, #tpu.memory_space<vmem>> -> memref<1x128xf32, #tpu.memory_space<vmem>>
    %196 = tpu.memref_slice %arg8[%c1_i32_248, %c2_i32_249, %c1_i32_250] : memref<2x3x8x!tpu.dma_semaphore, #tpu.memory_space<semaphore_mem>> -> memref<1x1x1x!tpu.dma_semaphore, #tpu.memory_space<semaphore_mem>>
    %197 = tpu.memref_squeeze %196 : memref<1x1x1x!tpu.dma_semaphore, #tpu.memory_space<semaphore_mem>> -> memref<!tpu.dma_semaphore, #tpu.memory_space<semaphore_mem>>
    tpu.enqueue_dma source(%193 : memref<1x128xf32, #tpu.memory_space<any>>) target(%195 : memref<1x128xf32, #tpu.memory_space<vmem>>) target_semaphore(%197 : memref<!tpu.dma_semaphore, #tpu.memory_space<semaphore_mem>>)
    %c2_254 = arith.constant 2 : index
    %198 = memref.load %arg2[%c2_254] : memref<8xi32, #tpu.memory_space<smem>>
    %c2_i32_255 = arith.constant 2 : i32
    %c0_i32_256 = arith.constant 0 : i32
    %c2_i32_257 = arith.constant 2 : i32
    %c2_i32_258 = arith.constant 2 : i32
    %c0_i32_259 = arith.constant 0 : i32
    %199 = tpu.memref_slice %arg3[%198, %c0_i32_259] : memref<256x128xf32, #tpu.memory_space<any>> -> memref<1x128xf32, #tpu.memory_space<any>>
    %c2_i32_260 = arith.constant 2 : i32
    %c0_i32_261 = arith.constant 0 : i32
    %200 = tpu.memref_slice %arg6[%c2_i32_255, %c2_i32_260, %c0_i32_261] : memref<3x8x128xf32, #tpu.memory_space<vmem>> -> memref<1x1x128xf32, #tpu.memory_space<vmem>>
    %201 = tpu.memref_squeeze %200 : memref<1x1x128xf32, #tpu.memory_space<vmem>> -> memref<1x128xf32, #tpu.memory_space<vmem>>
    %202 = tpu.memref_slice %arg8[%c0_i32_256, %c2_i32_257, %c2_i32_258] : memref<2x3x8x!tpu.dma_semaphore, #tpu.memory_space<semaphore_mem>> -> memref<1x1x1x!tpu.dma_semaphore, #tpu.memory_space<semaphore_mem>>
    %203 = tpu.memref_squeeze %202 : memref<1x1x1x!tpu.dma_semaphore, #tpu.memory_space<semaphore_mem>> -> memref<!tpu.dma_semaphore, #tpu.memory_space<semaphore_mem>>
    tpu.enqueue_dma source(%199 : memref<1x128xf32, #tpu.memory_space<any>>) target(%201 : memref<1x128xf32, #tpu.memory_space<vmem>>) target_semaphore(%203 : memref<!tpu.dma_semaphore, #tpu.memory_space<semaphore_mem>>)
    %c2_i32_262 = arith.constant 2 : i32
    %c1_i32_263 = arith.constant 1 : i32
    %c2_i32_264 = arith.constant 2 : i32
    %c2_i32_265 = arith.constant 2 : i32
    %c0_i32_266 = arith.constant 0 : i32
    %204 = tpu.memref_slice %arg4[%198, %c0_i32_266] : memref<256x128xf32, #tpu.memory_space<any>> -> memref<1x128xf32, #tpu.memory_space<any>>
    %c2_i32_267 = arith.constant 2 : i32
    %c0_i32_268 = arith.constant 0 : i32
    %205 = tpu.memref_slice %arg7[%c2_i32_262, %c2_i32_267, %c0_i32_268] : memref<3x8x128xf32, #tpu.memory_space<vmem>> -> memref<1x1x128xf32, #tpu.memory_space<vmem>>
    %206 = tpu.memref_squeeze %205 : memref<1x1x128xf32, #tpu.memory_space<vmem>> -> memref<1x128xf32, #tpu.memory_space<vmem>>
    %207 = tpu.memref_slice %arg8[%c1_i32_263, %c2_i32_264, %c2_i32_265] : memref<2x3x8x!tpu.dma_semaphore, #tpu.memory_space<semaphore_mem>> -> memref<1x1x1x!tpu.dma_semaphore, #tpu.memory_space<semaphore_mem>>
    %208 = tpu.memref_squeeze %207 : memref<1x1x1x!tpu.dma_semaphore, #tpu.memory_space<semaphore_mem>> -> memref<!tpu.dma_semaphore, #tpu.memory_space<semaphore_mem>>
    tpu.enqueue_dma source(%204 : memref<1x128xf32, #tpu.memory_space<any>>) target(%206 : memref<1x128xf32, #tpu.memory_space<vmem>>) target_semaphore(%208 : memref<!tpu.dma_semaphore, #tpu.memory_space<semaphore_mem>>)
    %c3_269 = arith.constant 3 : index
    %209 = memref.load %arg2[%c3_269] : memref<8xi32, #tpu.memory_space<smem>>
    %c2_i32_270 = arith.constant 2 : i32
    %c0_i32_271 = arith.constant 0 : i32
    %c2_i32_272 = arith.constant 2 : i32
    %c3_i32_273 = arith.constant 3 : i32
    %c0_i32_274 = arith.constant 0 : i32
    %210 = tpu.memref_slice %arg3[%209, %c0_i32_274] : memref<256x128xf32, #tpu.memory_space<any>> -> memref<1x128xf32, #tpu.memory_space<any>>
    %c3_i32_275 = arith.constant 3 : i32
    %c0_i32_276 = arith.constant 0 : i32
    %211 = tpu.memref_slice %arg6[%c2_i32_270, %c3_i32_275, %c0_i32_276] : memref<3x8x128xf32, #tpu.memory_space<vmem>> -> memref<1x1x128xf32, #tpu.memory_space<vmem>>
    %212 = tpu.memref_squeeze %211 : memref<1x1x128xf32, #tpu.memory_space<vmem>> -> memref<1x128xf32, #tpu.memory_space<vmem>>
    %213 = tpu.memref_slice %arg8[%c0_i32_271, %c2_i32_272, %c3_i32_273] : memref<2x3x8x!tpu.dma_semaphore, #tpu.memory_space<semaphore_mem>> -> memref<1x1x1x!tpu.dma_semaphore, #tpu.memory_space<semaphore_mem>>
    %214 = tpu.memref_squeeze %213 : memref<1x1x1x!tpu.dma_semaphore, #tpu.memory_space<semaphore_mem>> -> memref<!tpu.dma_semaphore, #tpu.memory_space<semaphore_mem>>
    tpu.enqueue_dma source(%210 : memref<1x128xf32, #tpu.memory_space<any>>) target(%212 : memref<1x128xf32, #tpu.memory_space<vmem>>) target_semaphore(%214 : memref<!tpu.dma_semaphore, #tpu.memory_space<semaphore_mem>>)
    %c2_i32_277 = arith.constant 2 : i32
    %c1_i32_278 = arith.constant 1 : i32
    %c2_i32_279 = arith.constant 2 : i32
    %c3_i32_280 = arith.constant 3 : i32
    %c0_i32_281 = arith.constant 0 : i32
    %215 = tpu.memref_slice %arg4[%209, %c0_i32_281] : memref<256x128xf32, #tpu.memory_space<any>> -> memref<1x128xf32, #tpu.memory_space<any>>
    %c3_i32_282 = arith.constant 3 : i32
    %c0_i32_283 = arith.constant 0 : i32
    %216 = tpu.memref_slice %arg7[%c2_i32_277, %c3_i32_282, %c0_i32_283] : memref<3x8x128xf32, #tpu.memory_space<vmem>> -> memref<1x1x128xf32, #tpu.memory_space<vmem>>
    %217 = tpu.memref_squeeze %216 : memref<1x1x128xf32, #tpu.memory_space<vmem>> -> memref<1x128xf32, #tpu.memory_space<vmem>>
    %218 = tpu.memref_slice %arg8[%c1_i32_278, %c2_i32_279, %c3_i32_280] : memref<2x3x8x!tpu.dma_semaphore, #tpu.memory_space<semaphore_mem>> -> memref<1x1x1x!tpu.dma_semaphore, #tpu.memory_space<semaphore_mem>>
    %219 = tpu.memref_squeeze %218 : memref<1x1x1x!tpu.dma_semaphore, #tpu.memory_space<semaphore_mem>> -> memref<!tpu.dma_semaphore, #tpu.memory_space<semaphore_mem>>
    tpu.enqueue_dma source(%215 : memref<1x128xf32, #tpu.memory_space<any>>) target(%217 : memref<1x128xf32, #tpu.memory_space<vmem>>) target_semaphore(%219 : memref<!tpu.dma_semaphore, #tpu.memory_space<semaphore_mem>>)
    %c4_284 = arith.constant 4 : index
    %220 = memref.load %arg2[%c4_284] : memref<8xi32, #tpu.memory_space<smem>>
    %c2_i32_285 = arith.constant 2 : i32
    %c0_i32_286 = arith.constant 0 : i32
    %c2_i32_287 = arith.constant 2 : i32
    %c4_i32_288 = arith.constant 4 : i32
    %c0_i32_289 = arith.constant 0 : i32
    %221 = tpu.memref_slice %arg3[%220, %c0_i32_289] : memref<256x128xf32, #tpu.memory_space<any>> -> memref<1x128xf32, #tpu.memory_space<any>>
    %c4_i32_290 = arith.constant 4 : i32
    %c0_i32_291 = arith.constant 0 : i32
    %222 = tpu.memref_slice %arg6[%c2_i32_285, %c4_i32_290, %c0_i32_291] : memref<3x8x128xf32, #tpu.memory_space<vmem>> -> memref<1x1x128xf32, #tpu.memory_space<vmem>>
    %223 = tpu.memref_squeeze %222 : memref<1x1x128xf32, #tpu.memory_space<vmem>> -> memref<1x128xf32, #tpu.memory_space<vmem>>
    %224 = tpu.memref_slice %arg8[%c0_i32_286, %c2_i32_287, %c4_i32_288] : memref<2x3x8x!tpu.dma_semaphore, #tpu.memory_space<semaphore_mem>> -> memref<1x1x1x!tpu.dma_semaphore, #tpu.memory_space<semaphore_mem>>
    %225 = tpu.memref_squeeze %224 : memref<1x1x1x!tpu.dma_semaphore, #tpu.memory_space<semaphore_mem>> -> memref<!tpu.dma_semaphore, #tpu.memory_space<semaphore_mem>>
    tpu.enqueue_dma source(%221 : memref<1x128xf32, #tpu.memory_space<any>>) target(%223 : memref<1x128xf32, #tpu.memory_space<vmem>>) target_semaphore(%225 : memref<!tpu.dma_semaphore, #tpu.memory_space<semaphore_mem>>)
    %c2_i32_292 = arith.constant 2 : i32
    %c1_i32_293 = arith.constant 1 : i32
    %c2_i32_294 = arith.constant 2 : i32
    %c4_i32_295 = arith.constant 4 : i32
    %c0_i32_296 = arith.constant 0 : i32
    %226 = tpu.memref_slice %arg4[%220, %c0_i32_296] : memref<256x128xf32, #tpu.memory_space<any>> -> memref<1x128xf32, #tpu.memory_space<any>>
    %c4_i32_297 = arith.constant 4 : i32
    %c0_i32_298 = arith.constant 0 : i32
    %227 = tpu.memref_slice %arg7[%c2_i32_292, %c4_i32_297, %c0_i32_298] : memref<3x8x128xf32, #tpu.memory_space<vmem>> -> memref<1x1x128xf32, #tpu.memory_space<vmem>>
    %228 = tpu.memref_squeeze %227 : memref<1x1x128xf32, #tpu.memory_space<vmem>> -> memref<1x128xf32, #tpu.memory_space<vmem>>
    %229 = tpu.memref_slice %arg8[%c1_i32_293, %c2_i32_294, %c4_i32_295] : memref<2x3x8x!tpu.dma_semaphore, #tpu.memory_space<semaphore_mem>> -> memref<1x1x1x!tpu.dma_semaphore, #tpu.memory_space<semaphore_mem>>
    %230 = tpu.memref_squeeze %229 : memref<1x1x1x!tpu.dma_semaphore, #tpu.memory_space<semaphore_mem>> -> memref<!tpu.dma_semaphore, #tpu.memory_space<semaphore_mem>>
    tpu.enqueue_dma source(%226 : memref<1x128xf32, #tpu.memory_space<any>>) target(%228 : memref<1x128xf32, #tpu.memory_space<vmem>>) target_semaphore(%230 : memref<!tpu.dma_semaphore, #tpu.memory_space<semaphore_mem>>)
    %c5_299 = arith.constant 5 : index
    %231 = memref.load %arg2[%c5_299] : memref<8xi32, #tpu.memory_space<smem>>
    %c2_i32_300 = arith.constant 2 : i32
    %c0_i32_301 = arith.constant 0 : i32
    %c2_i32_302 = arith.constant 2 : i32
    %c5_i32_303 = arith.constant 5 : i32
    %c0_i32_304 = arith.constant 0 : i32
    %232 = tpu.memref_slice %arg3[%231, %c0_i32_304] : memref<256x128xf32, #tpu.memory_space<any>> -> memref<1x128xf32, #tpu.memory_space<any>>
    %c5_i32_305 = arith.constant 5 : i32
    %c0_i32_306 = arith.constant 0 : i32
    %233 = tpu.memref_slice %arg6[%c2_i32_300, %c5_i32_305, %c0_i32_306] : memref<3x8x128xf32, #tpu.memory_space<vmem>> -> memref<1x1x128xf32, #tpu.memory_space<vmem>>
    %234 = tpu.memref_squeeze %233 : memref<1x1x128xf32, #tpu.memory_space<vmem>> -> memref<1x128xf32, #tpu.memory_space<vmem>>
    %235 = tpu.memref_slice %arg8[%c0_i32_301, %c2_i32_302, %c5_i32_303] : memref<2x3x8x!tpu.dma_semaphore, #tpu.memory_space<semaphore_mem>> -> memref<1x1x1x!tpu.dma_semaphore, #tpu.memory_space<semaphore_mem>>
    %236 = tpu.memref_squeeze %235 : memref<1x1x1x!tpu.dma_semaphore, #tpu.memory_space<semaphore_mem>> -> memref<!tpu.dma_semaphore, #tpu.memory_space<semaphore_mem>>
    tpu.enqueue_dma source(%232 : memref<1x128xf32, #tpu.memory_space<any>>) target(%234 : memref<1x128xf32, #tpu.memory_space<vmem>>) target_semaphore(%236 : memref<!tpu.dma_semaphore, #tpu.memory_space<semaphore_mem>>)
    %c2_i32_307 = arith.constant 2 : i32
    %c1_i32_308 = arith.constant 1 : i32
    %c2_i32_309 = arith.constant 2 : i32
    %c5_i32_310 = arith.constant 5 : i32
    %c0_i32_311 = arith.constant 0 : i32
    %237 = tpu.memref_slice %arg4[%231, %c0_i32_311] : memref<256x128xf32, #tpu.memory_space<any>> -> memref<1x128xf32, #tpu.memory_space<any>>
    %c5_i32_312 = arith.constant 5 : i32
    %c0_i32_313 = arith.constant 0 : i32
    %238 = tpu.memref_slice %arg7[%c2_i32_307, %c5_i32_312, %c0_i32_313] : memref<3x8x128xf32, #tpu.memory_space<vmem>> -> memref<1x1x128xf32, #tpu.memory_space<vmem>>
    %239 = tpu.memref_squeeze %238 : memref<1x1x128xf32, #tpu.memory_space<vmem>> -> memref<1x128xf32, #tpu.memory_space<vmem>>
    %240 = tpu.memref_slice %arg8[%c1_i32_308, %c2_i32_309, %c5_i32_310] : memref<2x3x8x!tpu.dma_semaphore, #tpu.memory_space<semaphore_mem>> -> memref<1x1x1x!tpu.dma_semaphore, #tpu.memory_space<semaphore_mem>>
    %241 = tpu.memref_squeeze %240 : memref<1x1x1x!tpu.dma_semaphore, #tpu.memory_space<semaphore_mem>> -> memref<!tpu.dma_semaphore, #tpu.memory_space<semaphore_mem>>
    tpu.enqueue_dma source(%237 : memref<1x128xf32, #tpu.memory_space<any>>) target(%239 : memref<1x128xf32, #tpu.memory_space<vmem>>) target_semaphore(%241 : memref<!tpu.dma_semaphore, #tpu.memory_space<semaphore_mem>>)
    %c6_314 = arith.constant 6 : index
    %242 = memref.load %arg2[%c6_314] : memref<8xi32, #tpu.memory_space<smem>>
    %c2_i32_315 = arith.constant 2 : i32
    %c0_i32_316 = arith.constant 0 : i32
    %c2_i32_317 = arith.constant 2 : i32
    %c6_i32_318 = arith.constant 6 : i32
    %c0_i32_319 = arith.constant 0 : i32
    %243 = tpu.memref_slice %arg3[%242, %c0_i32_319] : memref<256x128xf32, #tpu.memory_space<any>> -> memref<1x128xf32, #tpu.memory_space<any>>
    %c6_i32_320 = arith.constant 6 : i32
    %c0_i32_321 = arith.constant 0 : i32
    %244 = tpu.memref_slice %arg6[%c2_i32_315, %c6_i32_320, %c0_i32_321] : memref<3x8x128xf32, #tpu.memory_space<vmem>> -> memref<1x1x128xf32, #tpu.memory_space<vmem>>
    %245 = tpu.memref_squeeze %244 : memref<1x1x128xf32, #tpu.memory_space<vmem>> -> memref<1x128xf32, #tpu.memory_space<vmem>>
    %246 = tpu.memref_slice %arg8[%c0_i32_316, %c2_i32_317, %c6_i32_318] : memref<2x3x8x!tpu.dma_semaphore, #tpu.memory_space<semaphore_mem>> -> memref<1x1x1x!tpu.dma_semaphore, #tpu.memory_space<semaphore_mem>>
    %247 = tpu.memref_squeeze %246 : memref<1x1x1x!tpu.dma_semaphore, #tpu.memory_space<semaphore_mem>> -> memref<!tpu.dma_semaphore, #tpu.memory_space<semaphore_mem>>
    tpu.enqueue_dma source(%243 : memref<1x128xf32, #tpu.memory_space<any>>) target(%245 : memref<1x128xf32, #tpu.memory_space<vmem>>) target_semaphore(%247 : memref<!tpu.dma_semaphore, #tpu.memory_space<semaphore_mem>>)
    %c2_i32_322 = arith.constant 2 : i32
    %c1_i32_323 = arith.constant 1 : i32
    %c2_i32_324 = arith.constant 2 : i32
    %c6_i32_325 = arith.constant 6 : i32
    %c0_i32_326 = arith.constant 0 : i32
    %248 = tpu.memref_slice %arg4[%242, %c0_i32_326] : memref<256x128xf32, #tpu.memory_space<any>> -> memref<1x128xf32, #tpu.memory_space<any>>
    %c6_i32_327 = arith.constant 6 : i32
    %c0_i32_328 = arith.constant 0 : i32
    %249 = tpu.memref_slice %arg7[%c2_i32_322, %c6_i32_327, %c0_i32_328] : memref<3x8x128xf32, #tpu.memory_space<vmem>> -> memref<1x1x128xf32, #tpu.memory_space<vmem>>
    %250 = tpu.memref_squeeze %249 : memref<1x1x128xf32, #tpu.memory_space<vmem>> -> memref<1x128xf32, #tpu.memory_space<vmem>>
    %251 = tpu.memref_slice %arg8[%c1_i32_323, %c2_i32_324, %c6_i32_325] : memref<2x3x8x!tpu.dma_semaphore, #tpu.memory_space<semaphore_mem>> -> memref<1x1x1x!tpu.dma_semaphore, #tpu.memory_space<semaphore_mem>>
    %252 = tpu.memref_squeeze %251 : memref<1x1x1x!tpu.dma_semaphore, #tpu.memory_space<semaphore_mem>> -> memref<!tpu.dma_semaphore, #tpu.memory_space<semaphore_mem>>
    tpu.enqueue_dma source(%248 : memref<1x128xf32, #tpu.memory_space<any>>) target(%250 : memref<1x128xf32, #tpu.memory_space<vmem>>) target_semaphore(%252 : memref<!tpu.dma_semaphore, #tpu.memory_space<semaphore_mem>>)
    %c7_329 = arith.constant 7 : index
    %253 = memref.load %arg2[%c7_329] : memref<8xi32, #tpu.memory_space<smem>>
    %c2_i32_330 = arith.constant 2 : i32
    %c0_i32_331 = arith.constant 0 : i32
    %c2_i32_332 = arith.constant 2 : i32
    %c7_i32_333 = arith.constant 7 : i32
    %c0_i32_334 = arith.constant 0 : i32
    %254 = tpu.memref_slice %arg3[%253, %c0_i32_334] : memref<256x128xf32, #tpu.memory_space<any>> -> memref<1x128xf32, #tpu.memory_space<any>>
    %c7_i32_335 = arith.constant 7 : i32
    %c0_i32_336 = arith.constant 0 : i32
    %255 = tpu.memref_slice %arg6[%c2_i32_330, %c7_i32_335, %c0_i32_336] : memref<3x8x128xf32, #tpu.memory_space<vmem>> -> memref<1x1x128xf32, #tpu.memory_space<vmem>>
    %256 = tpu.memref_squeeze %255 : memref<1x1x128xf32, #tpu.memory_space<vmem>> -> memref<1x128xf32, #tpu.memory_space<vmem>>
    %257 = tpu.memref_slice %arg8[%c0_i32_331, %c2_i32_332, %c7_i32_333] : memref<2x3x8x!tpu.dma_semaphore, #tpu.memory_space<semaphore_mem>> -> memref<1x1x1x!tpu.dma_semaphore, #tpu.memory_space<semaphore_mem>>
    %258 = tpu.memref_squeeze %257 : memref<1x1x1x!tpu.dma_semaphore, #tpu.memory_space<semaphore_mem>> -> memref<!tpu.dma_semaphore, #tpu.memory_space<semaphore_mem>>
    tpu.enqueue_dma source(%254 : memref<1x128xf32, #tpu.memory_space<any>>) target(%256 : memref<1x128xf32, #tpu.memory_space<vmem>>) target_semaphore(%258 : memref<!tpu.dma_semaphore, #tpu.memory_space<semaphore_mem>>)
    %c2_i32_337 = arith.constant 2 : i32
    %c1_i32_338 = arith.constant 1 : i32
    %c2_i32_339 = arith.constant 2 : i32
    %c7_i32_340 = arith.constant 7 : i32
    %c0_i32_341 = arith.constant 0 : i32
    %259 = tpu.memref_slice %arg4[%253, %c0_i32_341] : memref<256x128xf32, #tpu.memory_space<any>> -> memref<1x128xf32, #tpu.memory_space<any>>
    %c7_i32_342 = arith.constant 7 : i32
    %c0_i32_343 = arith.constant 0 : i32
    %260 = tpu.memref_slice %arg7[%c2_i32_337, %c7_i32_342, %c0_i32_343] : memref<3x8x128xf32, #tpu.memory_space<vmem>> -> memref<1x1x128xf32, #tpu.memory_space<vmem>>
    %261 = tpu.memref_squeeze %260 : memref<1x1x128xf32, #tpu.memory_space<vmem>> -> memref<1x128xf32, #tpu.memory_space<vmem>>
    %262 = tpu.memref_slice %arg8[%c1_i32_338, %c2_i32_339, %c7_i32_340] : memref<2x3x8x!tpu.dma_semaphore, #tpu.memory_space<semaphore_mem>> -> memref<1x1x1x!tpu.dma_semaphore, #tpu.memory_space<semaphore_mem>>
    %263 = tpu.memref_squeeze %262 : memref<1x1x1x!tpu.dma_semaphore, #tpu.memory_space<semaphore_mem>> -> memref<!tpu.dma_semaphore, #tpu.memory_space<semaphore_mem>>
    tpu.enqueue_dma source(%259 : memref<1x128xf32, #tpu.memory_space<any>>) target(%261 : memref<1x128xf32, #tpu.memory_space<vmem>>) target_semaphore(%263 : memref<!tpu.dma_semaphore, #tpu.memory_space<semaphore_mem>>)
    %c0_i32_344 = arith.constant 0 : i32
    %c0_i32_345 = arith.constant 0 : i32
    %c0_i32_346 = arith.constant 0 : i32
    %c0_i32_347 = arith.constant 0 : i32
    %c0_i32_348 = arith.constant 0 : i32
    %264 = tpu.memref_slice %arg3[%0, %c0_i32_348] : memref<256x128xf32, #tpu.memory_space<any>> -> memref<1x128xf32, #tpu.memory_space<any>>
    %c0_i32_349 = arith.constant 0 : i32
    %c0_i32_350 = arith.constant 0 : i32
    %265 = tpu.memref_slice %arg6[%c0_i32_344, %c0_i32_349, %c0_i32_350] : memref<3x8x128xf32, #tpu.memory_space<vmem>> -> memref<1x1x128xf32, #tpu.memory_space<vmem>>
    %266 = tpu.memref_squeeze %265 : memref<1x1x128xf32, #tpu.memory_space<vmem>> -> memref<1x128xf32, #tpu.memory_space<vmem>>
    %267 = tpu.memref_slice %arg8[%c0_i32_345, %c0_i32_346, %c0_i32_347] : memref<2x3x8x!tpu.dma_semaphore, #tpu.memory_space<semaphore_mem>> -> memref<1x1x1x!tpu.dma_semaphore, #tpu.memory_space<semaphore_mem>>
    %268 = tpu.memref_squeeze %267 : memref<1x1x1x!tpu.dma_semaphore, #tpu.memory_space<semaphore_mem>> -> memref<!tpu.dma_semaphore, #tpu.memory_space<semaphore_mem>>
    tpu.wait_dma2 semaphore(%268 : memref<!tpu.dma_semaphore, #tpu.memory_space<semaphore_mem>>) src(%264 : memref<1x128xf32, #tpu.memory_space<any>>) dst(%266 : memref<1x128xf32, #tpu.memory_space<vmem>>)
    %c0_i32_351 = arith.constant 0 : i32
    %c1_i32_352 = arith.constant 1 : i32
    %c0_i32_353 = arith.constant 0 : i32
    %c0_i32_354 = arith.constant 0 : i32
    %c0_i32_355 = arith.constant 0 : i32
    %269 = tpu.memref_slice %arg4[%0, %c0_i32_355] : memref<256x128xf32, #tpu.memory_space<any>> -> memref<1x128xf32, #tpu.memory_space<any>>
    %c0_i32_356 = arith.constant 0 : i32
    %c0_i32_357 = arith.constant 0 : i32
    %270 = tpu.memref_slice %arg7[%c0_i32_351, %c0_i32_356, %c0_i32_357] : memref<3x8x128xf32, #tpu.memory_space<vmem>> -> memref<1x1x128xf32, #tpu.memory_space<vmem>>
    %271 = tpu.memref_squeeze %270 : memref<1x1x128xf32, #tpu.memory_space<vmem>> -> memref<1x128xf32, #tpu.memory_space<vmem>>
    %272 = tpu.memref_slice %arg8[%c1_i32_352, %c0_i32_353, %c0_i32_354] : memref<2x3x8x!tpu.dma_semaphore, #tpu.memory_space<semaphore_mem>> -> memref<1x1x1x!tpu.dma_semaphore, #tpu.memory_space<semaphore_mem>>
    %273 = tpu.memref_squeeze %272 : memref<1x1x1x!tpu.dma_semaphore, #tpu.memory_space<semaphore_mem>> -> memref<!tpu.dma_semaphore, #tpu.memory_space<semaphore_mem>>
    tpu.wait_dma2 semaphore(%273 : memref<!tpu.dma_semaphore, #tpu.memory_space<semaphore_mem>>) src(%269 : memref<1x128xf32, #tpu.memory_space<any>>) dst(%271 : memref<1x128xf32, #tpu.memory_space<vmem>>)
    %c0_i32_358 = arith.constant 0 : i32
    %c0_i32_359 = arith.constant 0 : i32
    %c0_i32_360 = arith.constant 0 : i32
    %c1_i32_361 = arith.constant 1 : i32
    %c0_i32_362 = arith.constant 0 : i32
    %274 = tpu.memref_slice %arg3[%11, %c0_i32_362] : memref<256x128xf32, #tpu.memory_space<any>> -> memref<1x128xf32, #tpu.memory_space<any>>
    %c1_i32_363 = arith.constant 1 : i32
    %c0_i32_364 = arith.constant 0 : i32
    %275 = tpu.memref_slice %arg6[%c0_i32_358, %c1_i32_363, %c0_i32_364] : memref<3x8x128xf32, #tpu.memory_space<vmem>> -> memref<1x1x128xf32, #tpu.memory_space<vmem>>
    %276 = tpu.memref_squeeze %275 : memref<1x1x128xf32, #tpu.memory_space<vmem>> -> memref<1x128xf32, #tpu.memory_space<vmem>>
    %277 = tpu.memref_slice %arg8[%c0_i32_359, %c0_i32_360, %c1_i32_361] : memref<2x3x8x!tpu.dma_semaphore, #tpu.memory_space<semaphore_mem>> -> memref<1x1x1x!tpu.dma_semaphore, #tpu.memory_space<semaphore_mem>>
    %278 = tpu.memref_squeeze %277 : memref<1x1x1x!tpu.dma_semaphore, #tpu.memory_space<semaphore_mem>> -> memref<!tpu.dma_semaphore, #tpu.memory_space<semaphore_mem>>
    tpu.wait_dma2 semaphore(%278 : memref<!tpu.dma_semaphore, #tpu.memory_space<semaphore_mem>>) src(%274 : memref<1x128xf32, #tpu.memory_space<any>>) dst(%276 : memref<1x128xf32, #tpu.memory_space<vmem>>)
    %c0_i32_365 = arith.constant 0 : i32
    %c1_i32_366 = arith.constant 1 : i32
    %c0_i32_367 = arith.constant 0 : i32
    %c1_i32_368 = arith.constant 1 : i32
    %c0_i32_369 = arith.constant 0 : i32
    %279 = tpu.memref_slice %arg4[%11, %c0_i32_369] : memref<256x128xf32, #tpu.memory_space<any>> -> memref<1x128xf32, #tpu.memory_space<any>>
    %c1_i32_370 = arith.constant 1 : i32
    %c0_i32_371 = arith.constant 0 : i32
    %280 = tpu.memref_slice %arg7[%c0_i32_365, %c1_i32_370, %c0_i32_371] : memref<3x8x128xf32, #tpu.memory_space<vmem>> -> memref<1x1x128xf32, #tpu.memory_space<vmem>>
    %281 = tpu.memref_squeeze %280 : memref<1x1x128xf32, #tpu.memory_space<vmem>> -> memref<1x128xf32, #tpu.memory_space<vmem>>
    %282 = tpu.memref_slice %arg8[%c1_i32_366, %c0_i32_367, %c1_i32_368] : memref<2x3x8x!tpu.dma_semaphore, #tpu.memory_space<semaphore_mem>> -> memref<1x1x1x!tpu.dma_semaphore, #tpu.memory_space<semaphore_mem>>
    %283 = tpu.memref_squeeze %282 : memref<1x1x1x!tpu.dma_semaphore, #tpu.memory_space<semaphore_mem>> -> memref<!tpu.dma_semaphore, #tpu.memory_space<semaphore_mem>>
    tpu.wait_dma2 semaphore(%283 : memref<!tpu.dma_semaphore, #tpu.memory_space<semaphore_mem>>) src(%279 : memref<1x128xf32, #tpu.memory_space<any>>) dst(%281 : memref<1x128xf32, #tpu.memory_space<vmem>>)
    %c0_i32_372 = arith.constant 0 : i32
    %c0_i32_373 = arith.constant 0 : i32
    %c0_i32_374 = arith.constant 0 : i32
    %c2_i32_375 = arith.constant 2 : i32
    %c0_i32_376 = arith.constant 0 : i32
    %284 = tpu.memref_slice %arg3[%22, %c0_i32_376] : memref<256x128xf32, #tpu.memory_space<any>> -> memref<1x128xf32, #tpu.memory_space<any>>
    %c2_i32_377 = arith.constant 2 : i32
    %c0_i32_378 = arith.constant 0 : i32
    %285 = tpu.memref_slice %arg6[%c0_i32_372, %c2_i32_377, %c0_i32_378] : memref<3x8x128xf32, #tpu.memory_space<vmem>> -> memref<1x1x128xf32, #tpu.memory_space<vmem>>
    %286 = tpu.memref_squeeze %285 : memref<1x1x128xf32, #tpu.memory_space<vmem>> -> memref<1x128xf32, #tpu.memory_space<vmem>>
    %287 = tpu.memref_slice %arg8[%c0_i32_373, %c0_i32_374, %c2_i32_375] : memref<2x3x8x!tpu.dma_semaphore, #tpu.memory_space<semaphore_mem>> -> memref<1x1x1x!tpu.dma_semaphore, #tpu.memory_space<semaphore_mem>>
    %288 = tpu.memref_squeeze %287 : memref<1x1x1x!tpu.dma_semaphore, #tpu.memory_space<semaphore_mem>> -> memref<!tpu.dma_semaphore, #tpu.memory_space<semaphore_mem>>
    tpu.wait_dma2 semaphore(%288 : memref<!tpu.dma_semaphore, #tpu.memory_space<semaphore_mem>>) src(%284 : memref<1x128xf32, #tpu.memory_space<any>>) dst(%286 : memref<1x128xf32, #tpu.memory_space<vmem>>)
    %c0_i32_379 = arith.constant 0 : i32
    %c1_i32_380 = arith.constant 1 : i32
    %c0_i32_381 = arith.constant 0 : i32
    %c2_i32_382 = arith.constant 2 : i32
    %c0_i32_383 = arith.constant 0 : i32
    %289 = tpu.memref_slice %arg4[%22, %c0_i32_383] : memref<256x128xf32, #tpu.memory_space<any>> -> memref<1x128xf32, #tpu.memory_space<any>>
    %c2_i32_384 = arith.constant 2 : i32
    %c0_i32_385 = arith.constant 0 : i32
    %290 = tpu.memref_slice %arg7[%c0_i32_379, %c2_i32_384, %c0_i32_385] : memref<3x8x128xf32, #tpu.memory_space<vmem>> -> memref<1x1x128xf32, #tpu.memory_space<vmem>>
    %291 = tpu.memref_squeeze %290 : memref<1x1x128xf32, #tpu.memory_space<vmem>> -> memref<1x128xf32, #tpu.memory_space<vmem>>
    %292 = tpu.memref_slice %arg8[%c1_i32_380, %c0_i32_381, %c2_i32_382] : memref<2x3x8x!tpu.dma_semaphore, #tpu.memory_space<semaphore_mem>> -> memref<1x1x1x!tpu.dma_semaphore, #tpu.memory_space<semaphore_mem>>
    %293 = tpu.memref_squeeze %292 : memref<1x1x1x!tpu.dma_semaphore, #tpu.memory_space<semaphore_mem>> -> memref<!tpu.dma_semaphore, #tpu.memory_space<semaphore_mem>>
    tpu.wait_dma2 semaphore(%293 : memref<!tpu.dma_semaphore, #tpu.memory_space<semaphore_mem>>) src(%289 : memref<1x128xf32, #tpu.memory_space<any>>) dst(%291 : memref<1x128xf32, #tpu.memory_space<vmem>>)
    %c0_i32_386 = arith.constant 0 : i32
    %c0_i32_387 = arith.constant 0 : i32
    %c0_i32_388 = arith.constant 0 : i32
    %c3_i32_389 = arith.constant 3 : i32
    %c0_i32_390 = arith.constant 0 : i32
    %294 = tpu.memref_slice %arg3[%33, %c0_i32_390] : memref<256x128xf32, #tpu.memory_space<any>> -> memref<1x128xf32, #tpu.memory_space<any>>
    %c3_i32_391 = arith.constant 3 : i32
    %c0_i32_392 = arith.constant 0 : i32
    %295 = tpu.memref_slice %arg6[%c0_i32_386, %c3_i32_391, %c0_i32_392] : memref<3x8x128xf32, #tpu.memory_space<vmem>> -> memref<1x1x128xf32, #tpu.memory_space<vmem>>
    %296 = tpu.memref_squeeze %295 : memref<1x1x128xf32, #tpu.memory_space<vmem>> -> memref<1x128xf32, #tpu.memory_space<vmem>>
    %297 = tpu.memref_slice %arg8[%c0_i32_387, %c0_i32_388, %c3_i32_389] : memref<2x3x8x!tpu.dma_semaphore, #tpu.memory_space<semaphore_mem>> -> memref<1x1x1x!tpu.dma_semaphore, #tpu.memory_space<semaphore_mem>>
    %298 = tpu.memref_squeeze %297 : memref<1x1x1x!tpu.dma_semaphore, #tpu.memory_space<semaphore_mem>> -> memref<!tpu.dma_semaphore, #tpu.memory_space<semaphore_mem>>
    tpu.wait_dma2 semaphore(%298 : memref<!tpu.dma_semaphore, #tpu.memory_space<semaphore_mem>>) src(%294 : memref<1x128xf32, #tpu.memory_space<any>>) dst(%296 : memref<1x128xf32, #tpu.memory_space<vmem>>)
    %c0_i32_393 = arith.constant 0 : i32
    %c1_i32_394 = arith.constant 1 : i32
    %c0_i32_395 = arith.constant 0 : i32
    %c3_i32_396 = arith.constant 3 : i32
    %c0_i32_397 = arith.constant 0 : i32
    %299 = tpu.memref_slice %arg4[%33, %c0_i32_397] : memref<256x128xf32, #tpu.memory_space<any>> -> memref<1x128xf32, #tpu.memory_space<any>>
    %c3_i32_398 = arith.constant 3 : i32
    %c0_i32_399 = arith.constant 0 : i32
    %300 = tpu.memref_slice %arg7[%c0_i32_393, %c3_i32_398, %c0_i32_399] : memref<3x8x128xf32, #tpu.memory_space<vmem>> -> memref<1x1x128xf32, #tpu.memory_space<vmem>>
    %301 = tpu.memref_squeeze %300 : memref<1x1x128xf32, #tpu.memory_space<vmem>> -> memref<1x128xf32, #tpu.memory_space<vmem>>
    %302 = tpu.memref_slice %arg8[%c1_i32_394, %c0_i32_395, %c3_i32_396] : memref<2x3x8x!tpu.dma_semaphore, #tpu.memory_space<semaphore_mem>> -> memref<1x1x1x!tpu.dma_semaphore, #tpu.memory_space<semaphore_mem>>
    %303 = tpu.memref_squeeze %302 : memref<1x1x1x!tpu.dma_semaphore, #tpu.memory_space<semaphore_mem>> -> memref<!tpu.dma_semaphore, #tpu.memory_space<semaphore_mem>>
    tpu.wait_dma2 semaphore(%303 : memref<!tpu.dma_semaphore, #tpu.memory_space<semaphore_mem>>) src(%299 : memref<1x128xf32, #tpu.memory_space<any>>) dst(%301 : memref<1x128xf32, #tpu.memory_space<vmem>>)
    %c0_i32_400 = arith.constant 0 : i32
    %c0_i32_401 = arith.constant 0 : i32
    %c0_i32_402 = arith.constant 0 : i32
    %c4_i32_403 = arith.constant 4 : i32
    %c0_i32_404 = arith.constant 0 : i32
    %304 = tpu.memref_slice %arg3[%44, %c0_i32_404] : memref<256x128xf32, #tpu.memory_space<any>> -> memref<1x128xf32, #tpu.memory_space<any>>
    %c4_i32_405 = arith.constant 4 : i32
    %c0_i32_406 = arith.constant 0 : i32
    %305 = tpu.memref_slice %arg6[%c0_i32_400, %c4_i32_405, %c0_i32_406] : memref<3x8x128xf32, #tpu.memory_space<vmem>> -> memref<1x1x128xf32, #tpu.memory_space<vmem>>
    %306 = tpu.memref_squeeze %305 : memref<1x1x128xf32, #tpu.memory_space<vmem>> -> memref<1x128xf32, #tpu.memory_space<vmem>>
    %307 = tpu.memref_slice %arg8[%c0_i32_401, %c0_i32_402, %c4_i32_403] : memref<2x3x8x!tpu.dma_semaphore, #tpu.memory_space<semaphore_mem>> -> memref<1x1x1x!tpu.dma_semaphore, #tpu.memory_space<semaphore_mem>>
    %308 = tpu.memref_squeeze %307 : memref<1x1x1x!tpu.dma_semaphore, #tpu.memory_space<semaphore_mem>> -> memref<!tpu.dma_semaphore, #tpu.memory_space<semaphore_mem>>
    tpu.wait_dma2 semaphore(%308 : memref<!tpu.dma_semaphore, #tpu.memory_space<semaphore_mem>>) src(%304 : memref<1x128xf32, #tpu.memory_space<any>>) dst(%306 : memref<1x128xf32, #tpu.memory_space<vmem>>)
    %c0_i32_407 = arith.constant 0 : i32
    %c1_i32_408 = arith.constant 1 : i32
    %c0_i32_409 = arith.constant 0 : i32
    %c4_i32_410 = arith.constant 4 : i32
    %c0_i32_411 = arith.constant 0 : i32
    %309 = tpu.memref_slice %arg4[%44, %c0_i32_411] : memref<256x128xf32, #tpu.memory_space<any>> -> memref<1x128xf32, #tpu.memory_space<any>>
    %c4_i32_412 = arith.constant 4 : i32
    %c0_i32_413 = arith.constant 0 : i32
    %310 = tpu.memref_slice %arg7[%c0_i32_407, %c4_i32_412, %c0_i32_413] : memref<3x8x128xf32, #tpu.memory_space<vmem>> -> memref<1x1x128xf32, #tpu.memory_space<vmem>>
    %311 = tpu.memref_squeeze %310 : memref<1x1x128xf32, #tpu.memory_space<vmem>> -> memref<1x128xf32, #tpu.memory_space<vmem>>
    %312 = tpu.memref_slice %arg8[%c1_i32_408, %c0_i32_409, %c4_i32_410] : memref<2x3x8x!tpu.dma_semaphore, #tpu.memory_space<semaphore_mem>> -> memref<1x1x1x!tpu.dma_semaphore, #tpu.memory_space<semaphore_mem>>
    %313 = tpu.memref_squeeze %312 : memref<1x1x1x!tpu.dma_semaphore, #tpu.memory_space<semaphore_mem>> -> memref<!tpu.dma_semaphore, #tpu.memory_space<semaphore_mem>>
    tpu.wait_dma2 semaphore(%313 : memref<!tpu.dma_semaphore, #tpu.memory_space<semaphore_mem>>) src(%309 : memref<1x128xf32, #tpu.memory_space<any>>) dst(%311 : memref<1x128xf32, #tpu.memory_space<vmem>>)
    %c0_i32_414 = arith.constant 0 : i32
    %c0_i32_415 = arith.constant 0 : i32
    %c0_i32_416 = arith.constant 0 : i32
    %c5_i32_417 = arith.constant 5 : i32
    %c0_i32_418 = arith.constant 0 : i32
    %314 = tpu.memref_slice %arg3[%55, %c0_i32_418] : memref<256x128xf32, #tpu.memory_space<any>> -> memref<1x128xf32, #tpu.memory_space<any>>
    %c5_i32_419 = arith.constant 5 : i32
    %c0_i32_420 = arith.constant 0 : i32
    %315 = tpu.memref_slice %arg6[%c0_i32_414, %c5_i32_419, %c0_i32_420] : memref<3x8x128xf32, #tpu.memory_space<vmem>> -> memref<1x1x128xf32, #tpu.memory_space<vmem>>
    %316 = tpu.memref_squeeze %315 : memref<1x1x128xf32, #tpu.memory_space<vmem>> -> memref<1x128xf32, #tpu.memory_space<vmem>>
    %317 = tpu.memref_slice %arg8[%c0_i32_415, %c0_i32_416, %c5_i32_417] : memref<2x3x8x!tpu.dma_semaphore, #tpu.memory_space<semaphore_mem>> -> memref<1x1x1x!tpu.dma_semaphore, #tpu.memory_space<semaphore_mem>>
    %318 = tpu.memref_squeeze %317 : memref<1x1x1x!tpu.dma_semaphore, #tpu.memory_space<semaphore_mem>> -> memref<!tpu.dma_semaphore, #tpu.memory_space<semaphore_mem>>
    tpu.wait_dma2 semaphore(%318 : memref<!tpu.dma_semaphore, #tpu.memory_space<semaphore_mem>>) src(%314 : memref<1x128xf32, #tpu.memory_space<any>>) dst(%316 : memref<1x128xf32, #tpu.memory_space<vmem>>)
    %c0_i32_421 = arith.constant 0 : i32
    %c1_i32_422 = arith.constant 1 : i32
    %c0_i32_423 = arith.constant 0 : i32
    %c5_i32_424 = arith.constant 5 : i32
    %c0_i32_425 = arith.constant 0 : i32
    %319 = tpu.memref_slice %arg4[%55, %c0_i32_425] : memref<256x128xf32, #tpu.memory_space<any>> -> memref<1x128xf32, #tpu.memory_space<any>>
    %c5_i32_426 = arith.constant 5 : i32
    %c0_i32_427 = arith.constant 0 : i32
    %320 = tpu.memref_slice %arg7[%c0_i32_421, %c5_i32_426, %c0_i32_427] : memref<3x8x128xf32, #tpu.memory_space<vmem>> -> memref<1x1x128xf32, #tpu.memory_space<vmem>>
    %321 = tpu.memref_squeeze %320 : memref<1x1x128xf32, #tpu.memory_space<vmem>> -> memref<1x128xf32, #tpu.memory_space<vmem>>
    %322 = tpu.memref_slice %arg8[%c1_i32_422, %c0_i32_423, %c5_i32_424] : memref<2x3x8x!tpu.dma_semaphore, #tpu.memory_space<semaphore_mem>> -> memref<1x1x1x!tpu.dma_semaphore, #tpu.memory_space<semaphore_mem>>
    %323 = tpu.memref_squeeze %322 : memref<1x1x1x!tpu.dma_semaphore, #tpu.memory_space<semaphore_mem>> -> memref<!tpu.dma_semaphore, #tpu.memory_space<semaphore_mem>>
    tpu.wait_dma2 semaphore(%323 : memref<!tpu.dma_semaphore, #tpu.memory_space<semaphore_mem>>) src(%319 : memref<1x128xf32, #tpu.memory_space<any>>) dst(%321 : memref<1x128xf32, #tpu.memory_space<vmem>>)
    %c0_i32_428 = arith.constant 0 : i32
    %c0_i32_429 = arith.constant 0 : i32
    %c0_i32_430 = arith.constant 0 : i32
    %c6_i32_431 = arith.constant 6 : i32
    %c0_i32_432 = arith.constant 0 : i32
    %324 = tpu.memref_slice %arg3[%66, %c0_i32_432] : memref<256x128xf32, #tpu.memory_space<any>> -> memref<1x128xf32, #tpu.memory_space<any>>
    %c6_i32_433 = arith.constant 6 : i32
    %c0_i32_434 = arith.constant 0 : i32
    %325 = tpu.memref_slice %arg6[%c0_i32_428, %c6_i32_433, %c0_i32_434] : memref<3x8x128xf32, #tpu.memory_space<vmem>> -> memref<1x1x128xf32, #tpu.memory_space<vmem>>
    %326 = tpu.memref_squeeze %325 : memref<1x1x128xf32, #tpu.memory_space<vmem>> -> memref<1x128xf32, #tpu.memory_space<vmem>>
    %327 = tpu.memref_slice %arg8[%c0_i32_429, %c0_i32_430, %c6_i32_431] : memref<2x3x8x!tpu.dma_semaphore, #tpu.memory_space<semaphore_mem>> -> memref<1x1x1x!tpu.dma_semaphore, #tpu.memory_space<semaphore_mem>>
    %328 = tpu.memref_squeeze %327 : memref<1x1x1x!tpu.dma_semaphore, #tpu.memory_space<semaphore_mem>> -> memref<!tpu.dma_semaphore, #tpu.memory_space<semaphore_mem>>
    tpu.wait_dma2 semaphore(%328 : memref<!tpu.dma_semaphore, #tpu.memory_space<semaphore_mem>>) src(%324 : memref<1x128xf32, #tpu.memory_space<any>>) dst(%326 : memref<1x128xf32, #tpu.memory_space<vmem>>)
    %c0_i32_435 = arith.constant 0 : i32
    %c1_i32_436 = arith.constant 1 : i32
    %c0_i32_437 = arith.constant 0 : i32
    %c6_i32_438 = arith.constant 6 : i32
    %c0_i32_439 = arith.constant 0 : i32
    %329 = tpu.memref_slice %arg4[%66, %c0_i32_439] : memref<256x128xf32, #tpu.memory_space<any>> -> memref<1x128xf32, #tpu.memory_space<any>>
    %c6_i32_440 = arith.constant 6 : i32
    %c0_i32_441 = arith.constant 0 : i32
    %330 = tpu.memref_slice %arg7[%c0_i32_435, %c6_i32_440, %c0_i32_441] : memref<3x8x128xf32, #tpu.memory_space<vmem>> -> memref<1x1x128xf32, #tpu.memory_space<vmem>>
    %331 = tpu.memref_squeeze %330 : memref<1x1x128xf32, #tpu.memory_space<vmem>> -> memref<1x128xf32, #tpu.memory_space<vmem>>
    %332 = tpu.memref_slice %arg8[%c1_i32_436, %c0_i32_437, %c6_i32_438] : memref<2x3x8x!tpu.dma_semaphore, #tpu.memory_space<semaphore_mem>> -> memref<1x1x1x!tpu.dma_semaphore, #tpu.memory_space<semaphore_mem>>
    %333 = tpu.memref_squeeze %332 : memref<1x1x1x!tpu.dma_semaphore, #tpu.memory_space<semaphore_mem>> -> memref<!tpu.dma_semaphore, #tpu.memory_space<semaphore_mem>>
    tpu.wait_dma2 semaphore(%333 : memref<!tpu.dma_semaphore, #tpu.memory_space<semaphore_mem>>) src(%329 : memref<1x128xf32, #tpu.memory_space<any>>) dst(%331 : memref<1x128xf32, #tpu.memory_space<vmem>>)
    %c0_i32_442 = arith.constant 0 : i32
    %c0_i32_443 = arith.constant 0 : i32
    %c0_i32_444 = arith.constant 0 : i32
    %c7_i32_445 = arith.constant 7 : i32
    %c0_i32_446 = arith.constant 0 : i32
    %334 = tpu.memref_slice %arg3[%77, %c0_i32_446] : memref<256x128xf32, #tpu.memory_space<any>> -> memref<1x128xf32, #tpu.memory_space<any>>
    %c7_i32_447 = arith.constant 7 : i32
    %c0_i32_448 = arith.constant 0 : i32
    %335 = tpu.memref_slice %arg6[%c0_i32_442, %c7_i32_447, %c0_i32_448] : memref<3x8x128xf32, #tpu.memory_space<vmem>> -> memref<1x1x128xf32, #tpu.memory_space<vmem>>
    %336 = tpu.memref_squeeze %335 : memref<1x1x128xf32, #tpu.memory_space<vmem>> -> memref<1x128xf32, #tpu.memory_space<vmem>>
    %337 = tpu.memref_slice %arg8[%c0_i32_443, %c0_i32_444, %c7_i32_445] : memref<2x3x8x!tpu.dma_semaphore, #tpu.memory_space<semaphore_mem>> -> memref<1x1x1x!tpu.dma_semaphore, #tpu.memory_space<semaphore_mem>>
    %338 = tpu.memref_squeeze %337 : memref<1x1x1x!tpu.dma_semaphore, #tpu.memory_space<semaphore_mem>> -> memref<!tpu.dma_semaphore, #tpu.memory_space<semaphore_mem>>
    tpu.wait_dma2 semaphore(%338 : memref<!tpu.dma_semaphore, #tpu.memory_space<semaphore_mem>>) src(%334 : memref<1x128xf32, #tpu.memory_space<any>>) dst(%336 : memref<1x128xf32, #tpu.memory_space<vmem>>)
    %c0_i32_449 = arith.constant 0 : i32
    %c1_i32_450 = arith.constant 1 : i32
    %c0_i32_451 = arith.constant 0 : i32
    %c7_i32_452 = arith.constant 7 : i32
    %c0_i32_453 = arith.constant 0 : i32
    %339 = tpu.memref_slice %arg4[%77, %c0_i32_453] : memref<256x128xf32, #tpu.memory_space<any>> -> memref<1x128xf32, #tpu.memory_space<any>>
    %c7_i32_454 = arith.constant 7 : i32
    %c0_i32_455 = arith.constant 0 : i32
    %340 = tpu.memref_slice %arg7[%c0_i32_449, %c7_i32_454, %c0_i32_455] : memref<3x8x128xf32, #tpu.memory_space<vmem>> -> memref<1x1x128xf32, #tpu.memory_space<vmem>>
    %341 = tpu.memref_squeeze %340 : memref<1x1x128xf32, #tpu.memory_space<vmem>> -> memref<1x128xf32, #tpu.memory_space<vmem>>
    %342 = tpu.memref_slice %arg8[%c1_i32_450, %c0_i32_451, %c7_i32_452] : memref<2x3x8x!tpu.dma_semaphore, #tpu.memory_space<semaphore_mem>> -> memref<1x1x1x!tpu.dma_semaphore, #tpu.memory_space<semaphore_mem>>
    %343 = tpu.memref_squeeze %342 : memref<1x1x1x!tpu.dma_semaphore, #tpu.memory_space<semaphore_mem>> -> memref<!tpu.dma_semaphore, #tpu.memory_space<semaphore_mem>>
    tpu.wait_dma2 semaphore(%343 : memref<!tpu.dma_semaphore, #tpu.memory_space<semaphore_mem>>) src(%339 : memref<1x128xf32, #tpu.memory_space<any>>) dst(%341 : memref<1x128xf32, #tpu.memory_space<vmem>>)
    %c1_i32_456 = arith.constant 1 : i32
    %c0_i32_457 = arith.constant 0 : i32
    %c1_i32_458 = arith.constant 1 : i32
    %c0_i32_459 = arith.constant 0 : i32
    %c0_i32_460 = arith.constant 0 : i32
    %344 = tpu.memref_slice %arg3[%88, %c0_i32_460] : memref<256x128xf32, #tpu.memory_space<any>> -> memref<1x128xf32, #tpu.memory_space<any>>
    %c0_i32_461 = arith.constant 0 : i32
    %c0_i32_462 = arith.constant 0 : i32
    %345 = tpu.memref_slice %arg6[%c1_i32_456, %c0_i32_461, %c0_i32_462] : memref<3x8x128xf32, #tpu.memory_space<vmem>> -> memref<1x1x128xf32, #tpu.memory_space<vmem>>
    %346 = tpu.memref_squeeze %345 : memref<1x1x128xf32, #tpu.memory_space<vmem>> -> memref<1x128xf32, #tpu.memory_space<vmem>>
    %347 = tpu.memref_slice %arg8[%c0_i32_457, %c1_i32_458, %c0_i32_459] : memref<2x3x8x!tpu.dma_semaphore, #tpu.memory_space<semaphore_mem>> -> memref<1x1x1x!tpu.dma_semaphore, #tpu.memory_space<semaphore_mem>>
    %348 = tpu.memref_squeeze %347 : memref<1x1x1x!tpu.dma_semaphore, #tpu.memory_space<semaphore_mem>> -> memref<!tpu.dma_semaphore, #tpu.memory_space<semaphore_mem>>
    tpu.wait_dma2 semaphore(%348 : memref<!tpu.dma_semaphore, #tpu.memory_space<semaphore_mem>>) src(%344 : memref<1x128xf32, #tpu.memory_space<any>>) dst(%346 : memref<1x128xf32, #tpu.memory_space<vmem>>)
    %c1_i32_463 = arith.constant 1 : i32
    %c1_i32_464 = arith.constant 1 : i32
    %c1_i32_465 = arith.constant 1 : i32
    %c0_i32_466 = arith.constant 0 : i32
    %c0_i32_467 = arith.constant 0 : i32
    %349 = tpu.memref_slice %arg4[%88, %c0_i32_467] : memref<256x128xf32, #tpu.memory_space<any>> -> memref<1x128xf32, #tpu.memory_space<any>>
    %c0_i32_468 = arith.constant 0 : i32
    %c0_i32_469 = arith.constant 0 : i32
    %350 = tpu.memref_slice %arg7[%c1_i32_463, %c0_i32_468, %c0_i32_469] : memref<3x8x128xf32, #tpu.memory_space<vmem>> -> memref<1x1x128xf32, #tpu.memory_space<vmem>>
    %351 = tpu.memref_squeeze %350 : memref<1x1x128xf32, #tpu.memory_space<vmem>> -> memref<1x128xf32, #tpu.memory_space<vmem>>
    %352 = tpu.memref_slice %arg8[%c1_i32_464, %c1_i32_465, %c0_i32_466] : memref<2x3x8x!tpu.dma_semaphore, #tpu.memory_space<semaphore_mem>> -> memref<1x1x1x!tpu.dma_semaphore, #tpu.memory_space<semaphore_mem>>
    %353 = tpu.memref_squeeze %352 : memref<1x1x1x!tpu.dma_semaphore, #tpu.memory_space<semaphore_mem>> -> memref<!tpu.dma_semaphore, #tpu.memory_space<semaphore_mem>>
    tpu.wait_dma2 semaphore(%353 : memref<!tpu.dma_semaphore, #tpu.memory_space<semaphore_mem>>) src(%349 : memref<1x128xf32, #tpu.memory_space<any>>) dst(%351 : memref<1x128xf32, #tpu.memory_space<vmem>>)
    %c1_i32_470 = arith.constant 1 : i32
    %c0_i32_471 = arith.constant 0 : i32
    %c1_i32_472 = arith.constant 1 : i32
    %c1_i32_473 = arith.constant 1 : i32
    %c0_i32_474 = arith.constant 0 : i32
    %354 = tpu.memref_slice %arg3[%99, %c0_i32_474] : memref<256x128xf32, #tpu.memory_space<any>> -> memref<1x128xf32, #tpu.memory_space<any>>
    %c1_i32_475 = arith.constant 1 : i32
    %c0_i32_476 = arith.constant 0 : i32
    %355 = tpu.memref_slice %arg6[%c1_i32_470, %c1_i32_475, %c0_i32_476] : memref<3x8x128xf32, #tpu.memory_space<vmem>> -> memref<1x1x128xf32, #tpu.memory_space<vmem>>
    %356 = tpu.memref_squeeze %355 : memref<1x1x128xf32, #tpu.memory_space<vmem>> -> memref<1x128xf32, #tpu.memory_space<vmem>>
    %357 = tpu.memref_slice %arg8[%c0_i32_471, %c1_i32_472, %c1_i32_473] : memref<2x3x8x!tpu.dma_semaphore, #tpu.memory_space<semaphore_mem>> -> memref<1x1x1x!tpu.dma_semaphore, #tpu.memory_space<semaphore_mem>>
    %358 = tpu.memref_squeeze %357 : memref<1x1x1x!tpu.dma_semaphore, #tpu.memory_space<semaphore_mem>> -> memref<!tpu.dma_semaphore, #tpu.memory_space<semaphore_mem>>
    tpu.wait_dma2 semaphore(%358 : memref<!tpu.dma_semaphore, #tpu.memory_space<semaphore_mem>>) src(%354 : memref<1x128xf32, #tpu.memory_space<any>>) dst(%356 : memref<1x128xf32, #tpu.memory_space<vmem>>)
    %c1_i32_477 = arith.constant 1 : i32
    %c1_i32_478 = arith.constant 1 : i32
    %c1_i32_479 = arith.constant 1 : i32
    %c1_i32_480 = arith.constant 1 : i32
    %c0_i32_481 = arith.constant 0 : i32
    %359 = tpu.memref_slice %arg4[%99, %c0_i32_481] : memref<256x128xf32, #tpu.memory_space<any>> -> memref<1x128xf32, #tpu.memory_space<any>>
    %c1_i32_482 = arith.constant 1 : i32
    %c0_i32_483 = arith.constant 0 : i32
    %360 = tpu.memref_slice %arg7[%c1_i32_477, %c1_i32_482, %c0_i32_483] : memref<3x8x128xf32, #tpu.memory_space<vmem>> -> memref<1x1x128xf32, #tpu.memory_space<vmem>>
    %361 = tpu.memref_squeeze %360 : memref<1x1x128xf32, #tpu.memory_space<vmem>> -> memref<1x128xf32, #tpu.memory_space<vmem>>
    %362 = tpu.memref_slice %arg8[%c1_i32_478, %c1_i32_479, %c1_i32_480] : memref<2x3x8x!tpu.dma_semaphore, #tpu.memory_space<semaphore_mem>> -> memref<1x1x1x!tpu.dma_semaphore, #tpu.memory_space<semaphore_mem>>
    %363 = tpu.memref_squeeze %362 : memref<1x1x1x!tpu.dma_semaphore, #tpu.memory_space<semaphore_mem>> -> memref<!tpu.dma_semaphore, #tpu.memory_space<semaphore_mem>>
    tpu.wait_dma2 semaphore(%363 : memref<!tpu.dma_semaphore, #tpu.memory_space<semaphore_mem>>) src(%359 : memref<1x128xf32, #tpu.memory_space<any>>) dst(%361 : memref<1x128xf32, #tpu.memory_space<vmem>>)
    %c1_i32_484 = arith.constant 1 : i32
    %c0_i32_485 = arith.constant 0 : i32
    %c1_i32_486 = arith.constant 1 : i32
    %c2_i32_487 = arith.constant 2 : i32
    %c0_i32_488 = arith.constant 0 : i32
    %364 = tpu.memref_slice %arg3[%110, %c0_i32_488] : memref<256x128xf32, #tpu.memory_space<any>> -> memref<1x128xf32, #tpu.memory_space<any>>
    %c2_i32_489 = arith.constant 2 : i32
    %c0_i32_490 = arith.constant 0 : i32
    %365 = tpu.memref_slice %arg6[%c1_i32_484, %c2_i32_489, %c0_i32_490] : memref<3x8x128xf32, #tpu.memory_space<vmem>> -> memref<1x1x128xf32, #tpu.memory_space<vmem>>
    %366 = tpu.memref_squeeze %365 : memref<1x1x128xf32, #tpu.memory_space<vmem>> -> memref<1x128xf32, #tpu.memory_space<vmem>>
    %367 = tpu.memref_slice %arg8[%c0_i32_485, %c1_i32_486, %c2_i32_487] : memref<2x3x8x!tpu.dma_semaphore, #tpu.memory_space<semaphore_mem>> -> memref<1x1x1x!tpu.dma_semaphore, #tpu.memory_space<semaphore_mem>>
    %368 = tpu.memref_squeeze %367 : memref<1x1x1x!tpu.dma_semaphore, #tpu.memory_space<semaphore_mem>> -> memref<!tpu.dma_semaphore, #tpu.memory_space<semaphore_mem>>
    tpu.wait_dma2 semaphore(%368 : memref<!tpu.dma_semaphore, #tpu.memory_space<semaphore_mem>>) src(%364 : memref<1x128xf32, #tpu.memory_space<any>>) dst(%366 : memref<1x128xf32, #tpu.memory_space<vmem>>)
    %c1_i32_491 = arith.constant 1 : i32
    %c1_i32_492 = arith.constant 1 : i32
    %c1_i32_493 = arith.constant 1 : i32
    %c2_i32_494 = arith.constant 2 : i32
    %c0_i32_495 = arith.constant 0 : i32
    %369 = tpu.memref_slice %arg4[%110, %c0_i32_495] : memref<256x128xf32, #tpu.memory_space<any>> -> memref<1x128xf32, #tpu.memory_space<any>>
    %c2_i32_496 = arith.constant 2 : i32
    %c0_i32_497 = arith.constant 0 : i32
    %370 = tpu.memref_slice %arg7[%c1_i32_491, %c2_i32_496, %c0_i32_497] : memref<3x8x128xf32, #tpu.memory_space<vmem>> -> memref<1x1x128xf32, #tpu.memory_space<vmem>>
    %371 = tpu.memref_squeeze %370 : memref<1x1x128xf32, #tpu.memory_space<vmem>> -> memref<1x128xf32, #tpu.memory_space<vmem>>
    %372 = tpu.memref_slice %arg8[%c1_i32_492, %c1_i32_493, %c2_i32_494] : memref<2x3x8x!tpu.dma_semaphore, #tpu.memory_space<semaphore_mem>> -> memref<1x1x1x!tpu.dma_semaphore, #tpu.memory_space<semaphore_mem>>
    %373 = tpu.memref_squeeze %372 : memref<1x1x1x!tpu.dma_semaphore, #tpu.memory_space<semaphore_mem>> -> memref<!tpu.dma_semaphore, #tpu.memory_space<semaphore_mem>>
    tpu.wait_dma2 semaphore(%373 : memref<!tpu.dma_semaphore, #tpu.memory_space<semaphore_mem>>) src(%369 : memref<1x128xf32, #tpu.memory_space<any>>) dst(%371 : memref<1x128xf32, #tpu.memory_space<vmem>>)
    %c1_i32_498 = arith.constant 1 : i32
    %c0_i32_499 = arith.constant 0 : i32
    %c1_i32_500 = arith.constant 1 : i32
    %c3_i32_501 = arith.constant 3 : i32
    %c0_i32_502 = arith.constant 0 : i32
    %374 = tpu.memref_slice %arg3[%121, %c0_i32_502] : memref<256x128xf32, #tpu.memory_space<any>> -> memref<1x128xf32, #tpu.memory_space<any>>
    %c3_i32_503 = arith.constant 3 : i32
    %c0_i32_504 = arith.constant 0 : i32
    %375 = tpu.memref_slice %arg6[%c1_i32_498, %c3_i32_503, %c0_i32_504] : memref<3x8x128xf32, #tpu.memory_space<vmem>> -> memref<1x1x128xf32, #tpu.memory_space<vmem>>
    %376 = tpu.memref_squeeze %375 : memref<1x1x128xf32, #tpu.memory_space<vmem>> -> memref<1x128xf32, #tpu.memory_space<vmem>>
    %377 = tpu.memref_slice %arg8[%c0_i32_499, %c1_i32_500, %c3_i32_501] : memref<2x3x8x!tpu.dma_semaphore, #tpu.memory_space<semaphore_mem>> -> memref<1x1x1x!tpu.dma_semaphore, #tpu.memory_space<semaphore_mem>>
    %378 = tpu.memref_squeeze %377 : memref<1x1x1x!tpu.dma_semaphore, #tpu.memory_space<semaphore_mem>> -> memref<!tpu.dma_semaphore, #tpu.memory_space<semaphore_mem>>
    tpu.wait_dma2 semaphore(%378 : memref<!tpu.dma_semaphore, #tpu.memory_space<semaphore_mem>>) src(%374 : memref<1x128xf32, #tpu.memory_space<any>>) dst(%376 : memref<1x128xf32, #tpu.memory_space<vmem>>)
    %c1_i32_505 = arith.constant 1 : i32
    %c1_i32_506 = arith.constant 1 : i32
    %c1_i32_507 = arith.constant 1 : i32
    %c3_i32_508 = arith.constant 3 : i32
    %c0_i32_509 = arith.constant 0 : i32
    %379 = tpu.memref_slice %arg4[%121, %c0_i32_509] : memref<256x128xf32, #tpu.memory_space<any>> -> memref<1x128xf32, #tpu.memory_space<any>>
    %c3_i32_510 = arith.constant 3 : i32
    %c0_i32_511 = arith.constant 0 : i32
    %380 = tpu.memref_slice %arg7[%c1_i32_505, %c3_i32_510, %c0_i32_511] : memref<3x8x128xf32, #tpu.memory_space<vmem>> -> memref<1x1x128xf32, #tpu.memory_space<vmem>>
    %381 = tpu.memref_squeeze %380 : memref<1x1x128xf32, #tpu.memory_space<vmem>> -> memref<1x128xf32, #tpu.memory_space<vmem>>
    %382 = tpu.memref_slice %arg8[%c1_i32_506, %c1_i32_507, %c3_i32_508] : memref<2x3x8x!tpu.dma_semaphore, #tpu.memory_space<semaphore_mem>> -> memref<1x1x1x!tpu.dma_semaphore, #tpu.memory_space<semaphore_mem>>
    %383 = tpu.memref_squeeze %382 : memref<1x1x1x!tpu.dma_semaphore, #tpu.memory_space<semaphore_mem>> -> memref<!tpu.dma_semaphore, #tpu.memory_space<semaphore_mem>>
    tpu.wait_dma2 semaphore(%383 : memref<!tpu.dma_semaphore, #tpu.memory_space<semaphore_mem>>) src(%379 : memref<1x128xf32, #tpu.memory_space<any>>) dst(%381 : memref<1x128xf32, #tpu.memory_space<vmem>>)
    %c1_i32_512 = arith.constant 1 : i32
    %c0_i32_513 = arith.constant 0 : i32
    %c1_i32_514 = arith.constant 1 : i32
    %c4_i32_515 = arith.constant 4 : i32
    %c0_i32_516 = arith.constant 0 : i32
    %384 = tpu.memref_slice %arg3[%132, %c0_i32_516] : memref<256x128xf32, #tpu.memory_space<any>> -> memref<1x128xf32, #tpu.memory_space<any>>
    %c4_i32_517 = arith.constant 4 : i32
    %c0_i32_518 = arith.constant 0 : i32
    %385 = tpu.memref_slice %arg6[%c1_i32_512, %c4_i32_517, %c0_i32_518] : memref<3x8x128xf32, #tpu.memory_space<vmem>> -> memref<1x1x128xf32, #tpu.memory_space<vmem>>
    %386 = tpu.memref_squeeze %385 : memref<1x1x128xf32, #tpu.memory_space<vmem>> -> memref<1x128xf32, #tpu.memory_space<vmem>>
    %387 = tpu.memref_slice %arg8[%c0_i32_513, %c1_i32_514, %c4_i32_515] : memref<2x3x8x!tpu.dma_semaphore, #tpu.memory_space<semaphore_mem>> -> memref<1x1x1x!tpu.dma_semaphore, #tpu.memory_space<semaphore_mem>>
    %388 = tpu.memref_squeeze %387 : memref<1x1x1x!tpu.dma_semaphore, #tpu.memory_space<semaphore_mem>> -> memref<!tpu.dma_semaphore, #tpu.memory_space<semaphore_mem>>
    tpu.wait_dma2 semaphore(%388 : memref<!tpu.dma_semaphore, #tpu.memory_space<semaphore_mem>>) src(%384 : memref<1x128xf32, #tpu.memory_space<any>>) dst(%386 : memref<1x128xf32, #tpu.memory_space<vmem>>)
    %c1_i32_519 = arith.constant 1 : i32
    %c1_i32_520 = arith.constant 1 : i32
    %c1_i32_521 = arith.constant 1 : i32
    %c4_i32_522 = arith.constant 4 : i32
    %c0_i32_523 = arith.constant 0 : i32
    %389 = tpu.memref_slice %arg4[%132, %c0_i32_523] : memref<256x128xf32, #tpu.memory_space<any>> -> memref<1x128xf32, #tpu.memory_space<any>>
    %c4_i32_524 = arith.constant 4 : i32
    %c0_i32_525 = arith.constant 0 : i32
    %390 = tpu.memref_slice %arg7[%c1_i32_519, %c4_i32_524, %c0_i32_525] : memref<3x8x128xf32, #tpu.memory_space<vmem>> -> memref<1x1x128xf32, #tpu.memory_space<vmem>>
    %391 = tpu.memref_squeeze %390 : memref<1x1x128xf32, #tpu.memory_space<vmem>> -> memref<1x128xf32, #tpu.memory_space<vmem>>
    %392 = tpu.memref_slice %arg8[%c1_i32_520, %c1_i32_521, %c4_i32_522] : memref<2x3x8x!tpu.dma_semaphore, #tpu.memory_space<semaphore_mem>> -> memref<1x1x1x!tpu.dma_semaphore, #tpu.memory_space<semaphore_mem>>
    %393 = tpu.memref_squeeze %392 : memref<1x1x1x!tpu.dma_semaphore, #tpu.memory_space<semaphore_mem>> -> memref<!tpu.dma_semaphore, #tpu.memory_space<semaphore_mem>>
    tpu.wait_dma2 semaphore(%393 : memref<!tpu.dma_semaphore, #tpu.memory_space<semaphore_mem>>) src(%389 : memref<1x128xf32, #tpu.memory_space<any>>) dst(%391 : memref<1x128xf32, #tpu.memory_space<vmem>>)
    %c1_i32_526 = arith.constant 1 : i32
    %c0_i32_527 = arith.constant 0 : i32
    %c1_i32_528 = arith.constant 1 : i32
    %c5_i32_529 = arith.constant 5 : i32
    %c0_i32_530 = arith.constant 0 : i32
    %394 = tpu.memref_slice %arg3[%143, %c0_i32_530] : memref<256x128xf32, #tpu.memory_space<any>> -> memref<1x128xf32, #tpu.memory_space<any>>
    %c5_i32_531 = arith.constant 5 : i32
    %c0_i32_532 = arith.constant 0 : i32
    %395 = tpu.memref_slice %arg6[%c1_i32_526, %c5_i32_531, %c0_i32_532] : memref<3x8x128xf32, #tpu.memory_space<vmem>> -> memref<1x1x128xf32, #tpu.memory_space<vmem>>
    %396 = tpu.memref_squeeze %395 : memref<1x1x128xf32, #tpu.memory_space<vmem>> -> memref<1x128xf32, #tpu.memory_space<vmem>>
    %397 = tpu.memref_slice %arg8[%c0_i32_527, %c1_i32_528, %c5_i32_529] : memref<2x3x8x!tpu.dma_semaphore, #tpu.memory_space<semaphore_mem>> -> memref<1x1x1x!tpu.dma_semaphore, #tpu.memory_space<semaphore_mem>>
    %398 = tpu.memref_squeeze %397 : memref<1x1x1x!tpu.dma_semaphore, #tpu.memory_space<semaphore_mem>> -> memref<!tpu.dma_semaphore, #tpu.memory_space<semaphore_mem>>
    tpu.wait_dma2 semaphore(%398 : memref<!tpu.dma_semaphore, #tpu.memory_space<semaphore_mem>>) src(%394 : memref<1x128xf32, #tpu.memory_space<any>>) dst(%396 : memref<1x128xf32, #tpu.memory_space<vmem>>)
    %c1_i32_533 = arith.constant 1 : i32
    %c1_i32_534 = arith.constant 1 : i32
    %c1_i32_535 = arith.constant 1 : i32
    %c5_i32_536 = arith.constant 5 : i32
    %c0_i32_537 = arith.constant 0 : i32
    %399 = tpu.memref_slice %arg4[%143, %c0_i32_537] : memref<256x128xf32, #tpu.memory_space<any>> -> memref<1x128xf32, #tpu.memory_space<any>>
    %c5_i32_538 = arith.constant 5 : i32
    %c0_i32_539 = arith.constant 0 : i32
    %400 = tpu.memref_slice %arg7[%c1_i32_533, %c5_i32_538, %c0_i32_539] : memref<3x8x128xf32, #tpu.memory_space<vmem>> -> memref<1x1x128xf32, #tpu.memory_space<vmem>>
    %401 = tpu.memref_squeeze %400 : memref<1x1x128xf32, #tpu.memory_space<vmem>> -> memref<1x128xf32, #tpu.memory_space<vmem>>
    %402 = tpu.memref_slice %arg8[%c1_i32_534, %c1_i32_535, %c5_i32_536] : memref<2x3x8x!tpu.dma_semaphore, #tpu.memory_space<semaphore_mem>> -> memref<1x1x1x!tpu.dma_semaphore, #tpu.memory_space<semaphore_mem>>
    %403 = tpu.memref_squeeze %402 : memref<1x1x1x!tpu.dma_semaphore, #tpu.memory_space<semaphore_mem>> -> memref<!tpu.dma_semaphore, #tpu.memory_space<semaphore_mem>>
    tpu.wait_dma2 semaphore(%403 : memref<!tpu.dma_semaphore, #tpu.memory_space<semaphore_mem>>) src(%399 : memref<1x128xf32, #tpu.memory_space<any>>) dst(%401 : memref<1x128xf32, #tpu.memory_space<vmem>>)
    %c1_i32_540 = arith.constant 1 : i32
    %c0_i32_541 = arith.constant 0 : i32
    %c1_i32_542 = arith.constant 1 : i32
    %c6_i32_543 = arith.constant 6 : i32
    %c0_i32_544 = arith.constant 0 : i32
    %404 = tpu.memref_slice %arg3[%154, %c0_i32_544] : memref<256x128xf32, #tpu.memory_space<any>> -> memref<1x128xf32, #tpu.memory_space<any>>
    %c6_i32_545 = arith.constant 6 : i32
    %c0_i32_546 = arith.constant 0 : i32
    %405 = tpu.memref_slice %arg6[%c1_i32_540, %c6_i32_545, %c0_i32_546] : memref<3x8x128xf32, #tpu.memory_space<vmem>> -> memref<1x1x128xf32, #tpu.memory_space<vmem>>
    %406 = tpu.memref_squeeze %405 : memref<1x1x128xf32, #tpu.memory_space<vmem>> -> memref<1x128xf32, #tpu.memory_space<vmem>>
    %407 = tpu.memref_slice %arg8[%c0_i32_541, %c1_i32_542, %c6_i32_543] : memref<2x3x8x!tpu.dma_semaphore, #tpu.memory_space<semaphore_mem>> -> memref<1x1x1x!tpu.dma_semaphore, #tpu.memory_space<semaphore_mem>>
    %408 = tpu.memref_squeeze %407 : memref<1x1x1x!tpu.dma_semaphore, #tpu.memory_space<semaphore_mem>> -> memref<!tpu.dma_semaphore, #tpu.memory_space<semaphore_mem>>
    tpu.wait_dma2 semaphore(%408 : memref<!tpu.dma_semaphore, #tpu.memory_space<semaphore_mem>>) src(%404 : memref<1x128xf32, #tpu.memory_space<any>>) dst(%406 : memref<1x128xf32, #tpu.memory_space<vmem>>)
    %c1_i32_547 = arith.constant 1 : i32
    %c1_i32_548 = arith.constant 1 : i32
    %c1_i32_549 = arith.constant 1 : i32
    %c6_i32_550 = arith.constant 6 : i32
    %c0_i32_551 = arith.constant 0 : i32
    %409 = tpu.memref_slice %arg4[%154, %c0_i32_551] : memref<256x128xf32, #tpu.memory_space<any>> -> memref<1x128xf32, #tpu.memory_space<any>>
    %c6_i32_552 = arith.constant 6 : i32
    %c0_i32_553 = arith.constant 0 : i32
    %410 = tpu.memref_slice %arg7[%c1_i32_547, %c6_i32_552, %c0_i32_553] : memref<3x8x128xf32, #tpu.memory_space<vmem>> -> memref<1x1x128xf32, #tpu.memory_space<vmem>>
    %411 = tpu.memref_squeeze %410 : memref<1x1x128xf32, #tpu.memory_space<vmem>> -> memref<1x128xf32, #tpu.memory_space<vmem>>
    %412 = tpu.memref_slice %arg8[%c1_i32_548, %c1_i32_549, %c6_i32_550] : memref<2x3x8x!tpu.dma_semaphore, #tpu.memory_space<semaphore_mem>> -> memref<1x1x1x!tpu.dma_semaphore, #tpu.memory_space<semaphore_mem>>
    %413 = tpu.memref_squeeze %412 : memref<1x1x1x!tpu.dma_semaphore, #tpu.memory_space<semaphore_mem>> -> memref<!tpu.dma_semaphore, #tpu.memory_space<semaphore_mem>>
    tpu.wait_dma2 semaphore(%413 : memref<!tpu.dma_semaphore, #tpu.memory_space<semaphore_mem>>) src(%409 : memref<1x128xf32, #tpu.memory_space<any>>) dst(%411 : memref<1x128xf32, #tpu.memory_space<vmem>>)
    %c1_i32_554 = arith.constant 1 : i32
    %c0_i32_555 = arith.constant 0 : i32
    %c1_i32_556 = arith.constant 1 : i32
    %c7_i32_557 = arith.constant 7 : i32
    %c0_i32_558 = arith.constant 0 : i32
    %414 = tpu.memref_slice %arg3[%165, %c0_i32_558] : memref<256x128xf32, #tpu.memory_space<any>> -> memref<1x128xf32, #tpu.memory_space<any>>
    %c7_i32_559 = arith.constant 7 : i32
    %c0_i32_560 = arith.constant 0 : i32
    %415 = tpu.memref_slice %arg6[%c1_i32_554, %c7_i32_559, %c0_i32_560] : memref<3x8x128xf32, #tpu.memory_space<vmem>> -> memref<1x1x128xf32, #tpu.memory_space<vmem>>
    %416 = tpu.memref_squeeze %415 : memref<1x1x128xf32, #tpu.memory_space<vmem>> -> memref<1x128xf32, #tpu.memory_space<vmem>>
    %417 = tpu.memref_slice %arg8[%c0_i32_555, %c1_i32_556, %c7_i32_557] : memref<2x3x8x!tpu.dma_semaphore, #tpu.memory_space<semaphore_mem>> -> memref<1x1x1x!tpu.dma_semaphore, #tpu.memory_space<semaphore_mem>>
    %418 = tpu.memref_squeeze %417 : memref<1x1x1x!tpu.dma_semaphore, #tpu.memory_space<semaphore_mem>> -> memref<!tpu.dma_semaphore, #tpu.memory_space<semaphore_mem>>
    tpu.wait_dma2 semaphore(%418 : memref<!tpu.dma_semaphore, #tpu.memory_space<semaphore_mem>>) src(%414 : memref<1x128xf32, #tpu.memory_space<any>>) dst(%416 : memref<1x128xf32, #tpu.memory_space<vmem>>)
    %c1_i32_561 = arith.constant 1 : i32
    %c1_i32_562 = arith.constant 1 : i32
    %c1_i32_563 = arith.constant 1 : i32
    %c7_i32_564 = arith.constant 7 : i32
    %c0_i32_565 = arith.constant 0 : i32
    %419 = tpu.memref_slice %arg4[%165, %c0_i32_565] : memref<256x128xf32, #tpu.memory_space<any>> -> memref<1x128xf32, #tpu.memory_space<any>>
    %c7_i32_566 = arith.constant 7 : i32
    %c0_i32_567 = arith.constant 0 : i32
    %420 = tpu.memref_slice %arg7[%c1_i32_561, %c7_i32_566, %c0_i32_567] : memref<3x8x128xf32, #tpu.memory_space<vmem>> -> memref<1x1x128xf32, #tpu.memory_space<vmem>>
    %421 = tpu.memref_squeeze %420 : memref<1x1x128xf32, #tpu.memory_space<vmem>> -> memref<1x128xf32, #tpu.memory_space<vmem>>
    %422 = tpu.memref_slice %arg8[%c1_i32_562, %c1_i32_563, %c7_i32_564] : memref<2x3x8x!tpu.dma_semaphore, #tpu.memory_space<semaphore_mem>> -> memref<1x1x1x!tpu.dma_semaphore, #tpu.memory_space<semaphore_mem>>
    %423 = tpu.memref_squeeze %422 : memref<1x1x1x!tpu.dma_semaphore, #tpu.memory_space<semaphore_mem>> -> memref<!tpu.dma_semaphore, #tpu.memory_space<semaphore_mem>>
    tpu.wait_dma2 semaphore(%423 : memref<!tpu.dma_semaphore, #tpu.memory_space<semaphore_mem>>) src(%419 : memref<1x128xf32, #tpu.memory_space<any>>) dst(%421 : memref<1x128xf32, #tpu.memory_space<vmem>>)
    %c2_i32_568 = arith.constant 2 : i32
    %c0_i32_569 = arith.constant 0 : i32
    %c2_i32_570 = arith.constant 2 : i32
    %c0_i32_571 = arith.constant 0 : i32
    %c0_i32_572 = arith.constant 0 : i32
    %424 = tpu.memref_slice %arg3[%176, %c0_i32_572] : memref<256x128xf32, #tpu.memory_space<any>> -> memref<1x128xf32, #tpu.memory_space<any>>
    %c0_i32_573 = arith.constant 0 : i32
    %c0_i32_574 = arith.constant 0 : i32
    %425 = tpu.memref_slice %arg6[%c2_i32_568, %c0_i32_573, %c0_i32_574] : memref<3x8x128xf32, #tpu.memory_space<vmem>> -> memref<1x1x128xf32, #tpu.memory_space<vmem>>
    %426 = tpu.memref_squeeze %425 : memref<1x1x128xf32, #tpu.memory_space<vmem>> -> memref<1x128xf32, #tpu.memory_space<vmem>>
    %427 = tpu.memref_slice %arg8[%c0_i32_569, %c2_i32_570, %c0_i32_571] : memref<2x3x8x!tpu.dma_semaphore, #tpu.memory_space<semaphore_mem>> -> memref<1x1x1x!tpu.dma_semaphore, #tpu.memory_space<semaphore_mem>>
    %428 = tpu.memref_squeeze %427 : memref<1x1x1x!tpu.dma_semaphore, #tpu.memory_space<semaphore_mem>> -> memref<!tpu.dma_semaphore, #tpu.memory_space<semaphore_mem>>
    tpu.wait_dma2 semaphore(%428 : memref<!tpu.dma_semaphore, #tpu.memory_space<semaphore_mem>>) src(%424 : memref<1x128xf32, #tpu.memory_space<any>>) dst(%426 : memref<1x128xf32, #tpu.memory_space<vmem>>)
    %c2_i32_575 = arith.constant 2 : i32
    %c1_i32_576 = arith.constant 1 : i32
    %c2_i32_577 = arith.constant 2 : i32
    %c0_i32_578 = arith.constant 0 : i32
    %c0_i32_579 = arith.constant 0 : i32
    %429 = tpu.memref_slice %arg4[%176, %c0_i32_579] : memref<256x128xf32, #tpu.memory_space<any>> -> memref<1x128xf32, #tpu.memory_space<any>>
    %c0_i32_580 = arith.constant 0 : i32
    %c0_i32_581 = arith.constant 0 : i32
    %430 = tpu.memref_slice %arg7[%c2_i32_575, %c0_i32_580, %c0_i32_581] : memref<3x8x128xf32, #tpu.memory_space<vmem>> -> memref<1x1x128xf32, #tpu.memory_space<vmem>>
    %431 = tpu.memref_squeeze %430 : memref<1x1x128xf32, #tpu.memory_space<vmem>> -> memref<1x128xf32, #tpu.memory_space<vmem>>
    %432 = tpu.memref_slice %arg8[%c1_i32_576, %c2_i32_577, %c0_i32_578] : memref<2x3x8x!tpu.dma_semaphore, #tpu.memory_space<semaphore_mem>> -> memref<1x1x1x!tpu.dma_semaphore, #tpu.memory_space<semaphore_mem>>
    %433 = tpu.memref_squeeze %432 : memref<1x1x1x!tpu.dma_semaphore, #tpu.memory_space<semaphore_mem>> -> memref<!tpu.dma_semaphore, #tpu.memory_space<semaphore_mem>>
    tpu.wait_dma2 semaphore(%433 : memref<!tpu.dma_semaphore, #tpu.memory_space<semaphore_mem>>) src(%429 : memref<1x128xf32, #tpu.memory_space<any>>) dst(%431 : memref<1x128xf32, #tpu.memory_space<vmem>>)
    %c2_i32_582 = arith.constant 2 : i32
    %c0_i32_583 = arith.constant 0 : i32
    %c2_i32_584 = arith.constant 2 : i32
    %c1_i32_585 = arith.constant 1 : i32
    %c0_i32_586 = arith.constant 0 : i32
    %434 = tpu.memref_slice %arg3[%187, %c0_i32_586] : memref<256x128xf32, #tpu.memory_space<any>> -> memref<1x128xf32, #tpu.memory_space<any>>
    %c1_i32_587 = arith.constant 1 : i32
    %c0_i32_588 = arith.constant 0 : i32
    %435 = tpu.memref_slice %arg6[%c2_i32_582, %c1_i32_587, %c0_i32_588] : memref<3x8x128xf32, #tpu.memory_space<vmem>> -> memref<1x1x128xf32, #tpu.memory_space<vmem>>
    %436 = tpu.memref_squeeze %435 : memref<1x1x128xf32, #tpu.memory_space<vmem>> -> memref<1x128xf32, #tpu.memory_space<vmem>>
    %437 = tpu.memref_slice %arg8[%c0_i32_583, %c2_i32_584, %c1_i32_585] : memref<2x3x8x!tpu.dma_semaphore, #tpu.memory_space<semaphore_mem>> -> memref<1x1x1x!tpu.dma_semaphore, #tpu.memory_space<semaphore_mem>>
    %438 = tpu.memref_squeeze %437 : memref<1x1x1x!tpu.dma_semaphore, #tpu.memory_space<semaphore_mem>> -> memref<!tpu.dma_semaphore, #tpu.memory_space<semaphore_mem>>
    tpu.wait_dma2 semaphore(%438 : memref<!tpu.dma_semaphore, #tpu.memory_space<semaphore_mem>>) src(%434 : memref<1x128xf32, #tpu.memory_space<any>>) dst(%436 : memref<1x128xf32, #tpu.memory_space<vmem>>)
    %c2_i32_589 = arith.constant 2 : i32
    %c1_i32_590 = arith.constant 1 : i32
    %c2_i32_591 = arith.constant 2 : i32
    %c1_i32_592 = arith.constant 1 : i32
    %c0_i32_593 = arith.constant 0 : i32
    %439 = tpu.memref_slice %arg4[%187, %c0_i32_593] : memref<256x128xf32, #tpu.memory_space<any>> -> memref<1x128xf32, #tpu.memory_space<any>>
    %c1_i32_594 = arith.constant 1 : i32
    %c0_i32_595 = arith.constant 0 : i32
    %440 = tpu.memref_slice %arg7[%c2_i32_589, %c1_i32_594, %c0_i32_595] : memref<3x8x128xf32, #tpu.memory_space<vmem>> -> memref<1x1x128xf32, #tpu.memory_space<vmem>>
    %441 = tpu.memref_squeeze %440 : memref<1x1x128xf32, #tpu.memory_space<vmem>> -> memref<1x128xf32, #tpu.memory_space<vmem>>
    %442 = tpu.memref_slice %arg8[%c1_i32_590, %c2_i32_591, %c1_i32_592] : memref<2x3x8x!tpu.dma_semaphore, #tpu.memory_space<semaphore_mem>> -> memref<1x1x1x!tpu.dma_semaphore, #tpu.memory_space<semaphore_mem>>
    %443 = tpu.memref_squeeze %442 : memref<1x1x1x!tpu.dma_semaphore, #tpu.memory_space<semaphore_mem>> -> memref<!tpu.dma_semaphore, #tpu.memory_space<semaphore_mem>>
    tpu.wait_dma2 semaphore(%443 : memref<!tpu.dma_semaphore, #tpu.memory_space<semaphore_mem>>) src(%439 : memref<1x128xf32, #tpu.memory_space<any>>) dst(%441 : memref<1x128xf32, #tpu.memory_space<vmem>>)
    %c2_i32_596 = arith.constant 2 : i32
    %c0_i32_597 = arith.constant 0 : i32
    %c2_i32_598 = arith.constant 2 : i32
    %c2_i32_599 = arith.constant 2 : i32
    %c0_i32_600 = arith.constant 0 : i32
    %444 = tpu.memref_slice %arg3[%198, %c0_i32_600] : memref<256x128xf32, #tpu.memory_space<any>> -> memref<1x128xf32, #tpu.memory_space<any>>
    %c2_i32_601 = arith.constant 2 : i32
    %c0_i32_602 = arith.constant 0 : i32
    %445 = tpu.memref_slice %arg6[%c2_i32_596, %c2_i32_601, %c0_i32_602] : memref<3x8x128xf32, #tpu.memory_space<vmem>> -> memref<1x1x128xf32, #tpu.memory_space<vmem>>
    %446 = tpu.memref_squeeze %445 : memref<1x1x128xf32, #tpu.memory_space<vmem>> -> memref<1x128xf32, #tpu.memory_space<vmem>>
    %447 = tpu.memref_slice %arg8[%c0_i32_597, %c2_i32_598, %c2_i32_599] : memref<2x3x8x!tpu.dma_semaphore, #tpu.memory_space<semaphore_mem>> -> memref<1x1x1x!tpu.dma_semaphore, #tpu.memory_space<semaphore_mem>>
    %448 = tpu.memref_squeeze %447 : memref<1x1x1x!tpu.dma_semaphore, #tpu.memory_space<semaphore_mem>> -> memref<!tpu.dma_semaphore, #tpu.memory_space<semaphore_mem>>
    tpu.wait_dma2 semaphore(%448 : memref<!tpu.dma_semaphore, #tpu.memory_space<semaphore_mem>>) src(%444 : memref<1x128xf32, #tpu.memory_space<any>>) dst(%446 : memref<1x128xf32, #tpu.memory_space<vmem>>)
    %c2_i32_603 = arith.constant 2 : i32
    %c1_i32_604 = arith.constant 1 : i32
    %c2_i32_605 = arith.constant 2 : i32
    %c2_i32_606 = arith.constant 2 : i32
    %c0_i32_607 = arith.constant 0 : i32
    %449 = tpu.memref_slice %arg4[%198, %c0_i32_607] : memref<256x128xf32, #tpu.memory_space<any>> -> memref<1x128xf32, #tpu.memory_space<any>>
    %c2_i32_608 = arith.constant 2 : i32
    %c0_i32_609 = arith.constant 0 : i32
    %450 = tpu.memref_slice %arg7[%c2_i32_603, %c2_i32_608, %c0_i32_609] : memref<3x8x128xf32, #tpu.memory_space<vmem>> -> memref<1x1x128xf32, #tpu.memory_space<vmem>>
    %451 = tpu.memref_squeeze %450 : memref<1x1x128xf32, #tpu.memory_space<vmem>> -> memref<1x128xf32, #tpu.memory_space<vmem>>
    %452 = tpu.memref_slice %arg8[%c1_i32_604, %c2_i32_605, %c2_i32_606] : memref<2x3x8x!tpu.dma_semaphore, #tpu.memory_space<semaphore_mem>> -> memref<1x1x1x!tpu.dma_semaphore, #tpu.memory_space<semaphore_mem>>
    %453 = tpu.memref_squeeze %452 : memref<1x1x1x!tpu.dma_semaphore, #tpu.memory_space<semaphore_mem>> -> memref<!tpu.dma_semaphore, #tpu.memory_space<semaphore_mem>>
    tpu.wait_dma2 semaphore(%453 : memref<!tpu.dma_semaphore, #tpu.memory_space<semaphore_mem>>) src(%449 : memref<1x128xf32, #tpu.memory_space<any>>) dst(%451 : memref<1x128xf32, #tpu.memory_space<vmem>>)
    %c2_i32_610 = arith.constant 2 : i32
    %c0_i32_611 = arith.constant 0 : i32
    %c2_i32_612 = arith.constant 2 : i32
    %c3_i32_613 = arith.constant 3 : i32
    %c0_i32_614 = arith.constant 0 : i32
    %454 = tpu.memref_slice %arg3[%209, %c0_i32_614] : memref<256x128xf32, #tpu.memory_space<any>> -> memref<1x128xf32, #tpu.memory_space<any>>
    %c3_i32_615 = arith.constant 3 : i32
    %c0_i32_616 = arith.constant 0 : i32
    %455 = tpu.memref_slice %arg6[%c2_i32_610, %c3_i32_615, %c0_i32_616] : memref<3x8x128xf32, #tpu.memory_space<vmem>> -> memref<1x1x128xf32, #tpu.memory_space<vmem>>
    %456 = tpu.memref_squeeze %455 : memref<1x1x128xf32, #tpu.memory_space<vmem>> -> memref<1x128xf32, #tpu.memory_space<vmem>>
    %457 = tpu.memref_slice %arg8[%c0_i32_611, %c2_i32_612, %c3_i32_613] : memref<2x3x8x!tpu.dma_semaphore, #tpu.memory_space<semaphore_mem>> -> memref<1x1x1x!tpu.dma_semaphore, #tpu.memory_space<semaphore_mem>>
    %458 = tpu.memref_squeeze %457 : memref<1x1x1x!tpu.dma_semaphore, #tpu.memory_space<semaphore_mem>> -> memref<!tpu.dma_semaphore, #tpu.memory_space<semaphore_mem>>
    tpu.wait_dma2 semaphore(%458 : memref<!tpu.dma_semaphore, #tpu.memory_space<semaphore_mem>>) src(%454 : memref<1x128xf32, #tpu.memory_space<any>>) dst(%456 : memref<1x128xf32, #tpu.memory_space<vmem>>)
    %c2_i32_617 = arith.constant 2 : i32
    %c1_i32_618 = arith.constant 1 : i32
    %c2_i32_619 = arith.constant 2 : i32
    %c3_i32_620 = arith.constant 3 : i32
    %c0_i32_621 = arith.constant 0 : i32
    %459 = tpu.memref_slice %arg4[%209, %c0_i32_621] : memref<256x128xf32, #tpu.memory_space<any>> -> memref<1x128xf32, #tpu.memory_space<any>>
    %c3_i32_622 = arith.constant 3 : i32
    %c0_i32_623 = arith.constant 0 : i32
    %460 = tpu.memref_slice %arg7[%c2_i32_617, %c3_i32_622, %c0_i32_623] : memref<3x8x128xf32, #tpu.memory_space<vmem>> -> memref<1x1x128xf32, #tpu.memory_space<vmem>>
    %461 = tpu.memref_squeeze %460 : memref<1x1x128xf32, #tpu.memory_space<vmem>> -> memref<1x128xf32, #tpu.memory_space<vmem>>
    %462 = tpu.memref_slice %arg8[%c1_i32_618, %c2_i32_619, %c3_i32_620] : memref<2x3x8x!tpu.dma_semaphore, #tpu.memory_space<semaphore_mem>> -> memref<1x1x1x!tpu.dma_semaphore, #tpu.memory_space<semaphore_mem>>
    %463 = tpu.memref_squeeze %462 : memref<1x1x1x!tpu.dma_semaphore, #tpu.memory_space<semaphore_mem>> -> memref<!tpu.dma_semaphore, #tpu.memory_space<semaphore_mem>>
    tpu.wait_dma2 semaphore(%463 : memref<!tpu.dma_semaphore, #tpu.memory_space<semaphore_mem>>) src(%459 : memref<1x128xf32, #tpu.memory_space<any>>) dst(%461 : memref<1x128xf32, #tpu.memory_space<vmem>>)
    %c2_i32_624 = arith.constant 2 : i32
    %c0_i32_625 = arith.constant 0 : i32
    %c2_i32_626 = arith.constant 2 : i32
    %c4_i32_627 = arith.constant 4 : i32
    %c0_i32_628 = arith.constant 0 : i32
    %464 = tpu.memref_slice %arg3[%220, %c0_i32_628] : memref<256x128xf32, #tpu.memory_space<any>> -> memref<1x128xf32, #tpu.memory_space<any>>
    %c4_i32_629 = arith.constant 4 : i32
    %c0_i32_630 = arith.constant 0 : i32
    %465 = tpu.memref_slice %arg6[%c2_i32_624, %c4_i32_629, %c0_i32_630] : memref<3x8x128xf32, #tpu.memory_space<vmem>> -> memref<1x1x128xf32, #tpu.memory_space<vmem>>
    %466 = tpu.memref_squeeze %465 : memref<1x1x128xf32, #tpu.memory_space<vmem>> -> memref<1x128xf32, #tpu.memory_space<vmem>>
    %467 = tpu.memref_slice %arg8[%c0_i32_625, %c2_i32_626, %c4_i32_627] : memref<2x3x8x!tpu.dma_semaphore, #tpu.memory_space<semaphore_mem>> -> memref<1x1x1x!tpu.dma_semaphore, #tpu.memory_space<semaphore_mem>>
    %468 = tpu.memref_squeeze %467 : memref<1x1x1x!tpu.dma_semaphore, #tpu.memory_space<semaphore_mem>> -> memref<!tpu.dma_semaphore, #tpu.memory_space<semaphore_mem>>
    tpu.wait_dma2 semaphore(%468 : memref<!tpu.dma_semaphore, #tpu.memory_space<semaphore_mem>>) src(%464 : memref<1x128xf32, #tpu.memory_space<any>>) dst(%466 : memref<1x128xf32, #tpu.memory_space<vmem>>)
    %c2_i32_631 = arith.constant 2 : i32
    %c1_i32_632 = arith.constant 1 : i32
    %c2_i32_633 = arith.constant 2 : i32
    %c4_i32_634 = arith.constant 4 : i32
    %c0_i32_635 = arith.constant 0 : i32
    %469 = tpu.memref_slice %arg4[%220, %c0_i32_635] : memref<256x128xf32, #tpu.memory_space<any>> -> memref<1x128xf32, #tpu.memory_space<any>>
    %c4_i32_636 = arith.constant 4 : i32
    %c0_i32_637 = arith.constant 0 : i32
    %470 = tpu.memref_slice %arg7[%c2_i32_631, %c4_i32_636, %c0_i32_637] : memref<3x8x128xf32, #tpu.memory_space<vmem>> -> memref<1x1x128xf32, #tpu.memory_space<vmem>>
    %471 = tpu.memref_squeeze %470 : memref<1x1x128xf32, #tpu.memory_space<vmem>> -> memref<1x128xf32, #tpu.memory_space<vmem>>
    %472 = tpu.memref_slice %arg8[%c1_i32_632, %c2_i32_633, %c4_i32_634] : memref<2x3x8x!tpu.dma_semaphore, #tpu.memory_space<semaphore_mem>> -> memref<1x1x1x!tpu.dma_semaphore, #tpu.memory_space<semaphore_mem>>
    %473 = tpu.memref_squeeze %472 : memref<1x1x1x!tpu.dma_semaphore, #tpu.memory_space<semaphore_mem>> -> memref<!tpu.dma_semaphore, #tpu.memory_space<semaphore_mem>>
    tpu.wait_dma2 semaphore(%473 : memref<!tpu.dma_semaphore, #tpu.memory_space<semaphore_mem>>) src(%469 : memref<1x128xf32, #tpu.memory_space<any>>) dst(%471 : memref<1x128xf32, #tpu.memory_space<vmem>>)
    %c2_i32_638 = arith.constant 2 : i32
    %c0_i32_639 = arith.constant 0 : i32
    %c2_i32_640 = arith.constant 2 : i32
    %c5_i32_641 = arith.constant 5 : i32
    %c0_i32_642 = arith.constant 0 : i32
    %474 = tpu.memref_slice %arg3[%231, %c0_i32_642] : memref<256x128xf32, #tpu.memory_space<any>> -> memref<1x128xf32, #tpu.memory_space<any>>
    %c5_i32_643 = arith.constant 5 : i32
    %c0_i32_644 = arith.constant 0 : i32
    %475 = tpu.memref_slice %arg6[%c2_i32_638, %c5_i32_643, %c0_i32_644] : memref<3x8x128xf32, #tpu.memory_space<vmem>> -> memref<1x1x128xf32, #tpu.memory_space<vmem>>
    %476 = tpu.memref_squeeze %475 : memref<1x1x128xf32, #tpu.memory_space<vmem>> -> memref<1x128xf32, #tpu.memory_space<vmem>>
    %477 = tpu.memref_slice %arg8[%c0_i32_639, %c2_i32_640, %c5_i32_641] : memref<2x3x8x!tpu.dma_semaphore, #tpu.memory_space<semaphore_mem>> -> memref<1x1x1x!tpu.dma_semaphore, #tpu.memory_space<semaphore_mem>>
    %478 = tpu.memref_squeeze %477 : memref<1x1x1x!tpu.dma_semaphore, #tpu.memory_space<semaphore_mem>> -> memref<!tpu.dma_semaphore, #tpu.memory_space<semaphore_mem>>
    tpu.wait_dma2 semaphore(%478 : memref<!tpu.dma_semaphore, #tpu.memory_space<semaphore_mem>>) src(%474 : memref<1x128xf32, #tpu.memory_space<any>>) dst(%476 : memref<1x128xf32, #tpu.memory_space<vmem>>)
    %c2_i32_645 = arith.constant 2 : i32
    %c1_i32_646 = arith.constant 1 : i32
    %c2_i32_647 = arith.constant 2 : i32
    %c5_i32_648 = arith.constant 5 : i32
    %c0_i32_649 = arith.constant 0 : i32
    %479 = tpu.memref_slice %arg4[%231, %c0_i32_649] : memref<256x128xf32, #tpu.memory_space<any>> -> memref<1x128xf32, #tpu.memory_space<any>>
    %c5_i32_650 = arith.constant 5 : i32
    %c0_i32_651 = arith.constant 0 : i32
    %480 = tpu.memref_slice %arg7[%c2_i32_645, %c5_i32_650, %c0_i32_651] : memref<3x8x128xf32, #tpu.memory_space<vmem>> -> memref<1x1x128xf32, #tpu.memory_space<vmem>>
    %481 = tpu.memref_squeeze %480 : memref<1x1x128xf32, #tpu.memory_space<vmem>> -> memref<1x128xf32, #tpu.memory_space<vmem>>
    %482 = tpu.memref_slice %arg8[%c1_i32_646, %c2_i32_647, %c5_i32_648] : memref<2x3x8x!tpu.dma_semaphore, #tpu.memory_space<semaphore_mem>> -> memref<1x1x1x!tpu.dma_semaphore, #tpu.memory_space<semaphore_mem>>
    %483 = tpu.memref_squeeze %482 : memref<1x1x1x!tpu.dma_semaphore, #tpu.memory_space<semaphore_mem>> -> memref<!tpu.dma_semaphore, #tpu.memory_space<semaphore_mem>>
    tpu.wait_dma2 semaphore(%483 : memref<!tpu.dma_semaphore, #tpu.memory_space<semaphore_mem>>) src(%479 : memref<1x128xf32, #tpu.memory_space<any>>) dst(%481 : memref<1x128xf32, #tpu.memory_space<vmem>>)
    %c2_i32_652 = arith.constant 2 : i32
    %c0_i32_653 = arith.constant 0 : i32
    %c2_i32_654 = arith.constant 2 : i32
    %c6_i32_655 = arith.constant 6 : i32
    %c0_i32_656 = arith.constant 0 : i32
    %484 = tpu.memref_slice %arg3[%242, %c0_i32_656] : memref<256x128xf32, #tpu.memory_space<any>> -> memref<1x128xf32, #tpu.memory_space<any>>
    %c6_i32_657 = arith.constant 6 : i32
    %c0_i32_658 = arith.constant 0 : i32
    %485 = tpu.memref_slice %arg6[%c2_i32_652, %c6_i32_657, %c0_i32_658] : memref<3x8x128xf32, #tpu.memory_space<vmem>> -> memref<1x1x128xf32, #tpu.memory_space<vmem>>
    %486 = tpu.memref_squeeze %485 : memref<1x1x128xf32, #tpu.memory_space<vmem>> -> memref<1x128xf32, #tpu.memory_space<vmem>>
    %487 = tpu.memref_slice %arg8[%c0_i32_653, %c2_i32_654, %c6_i32_655] : memref<2x3x8x!tpu.dma_semaphore, #tpu.memory_space<semaphore_mem>> -> memref<1x1x1x!tpu.dma_semaphore, #tpu.memory_space<semaphore_mem>>
    %488 = tpu.memref_squeeze %487 : memref<1x1x1x!tpu.dma_semaphore, #tpu.memory_space<semaphore_mem>> -> memref<!tpu.dma_semaphore, #tpu.memory_space<semaphore_mem>>
    tpu.wait_dma2 semaphore(%488 : memref<!tpu.dma_semaphore, #tpu.memory_space<semaphore_mem>>) src(%484 : memref<1x128xf32, #tpu.memory_space<any>>) dst(%486 : memref<1x128xf32, #tpu.memory_space<vmem>>)
    %c2_i32_659 = arith.constant 2 : i32
    %c1_i32_660 = arith.constant 1 : i32
    %c2_i32_661 = arith.constant 2 : i32
    %c6_i32_662 = arith.constant 6 : i32
    %c0_i32_663 = arith.constant 0 : i32
    %489 = tpu.memref_slice %arg4[%242, %c0_i32_663] : memref<256x128xf32, #tpu.memory_space<any>> -> memref<1x128xf32, #tpu.memory_space<any>>
    %c6_i32_664 = arith.constant 6 : i32
    %c0_i32_665 = arith.constant 0 : i32
    %490 = tpu.memref_slice %arg7[%c2_i32_659, %c6_i32_664, %c0_i32_665] : memref<3x8x128xf32, #tpu.memory_space<vmem>> -> memref<1x1x128xf32, #tpu.memory_space<vmem>>
    %491 = tpu.memref_squeeze %490 : memref<1x1x128xf32, #tpu.memory_space<vmem>> -> memref<1x128xf32, #tpu.memory_space<vmem>>
    %492 = tpu.memref_slice %arg8[%c1_i32_660, %c2_i32_661, %c6_i32_662] : memref<2x3x8x!tpu.dma_semaphore, #tpu.memory_space<semaphore_mem>> -> memref<1x1x1x!tpu.dma_semaphore, #tpu.memory_space<semaphore_mem>>
    %493 = tpu.memref_squeeze %492 : memref<1x1x1x!tpu.dma_semaphore, #tpu.memory_space<semaphore_mem>> -> memref<!tpu.dma_semaphore, #tpu.memory_space<semaphore_mem>>
    tpu.wait_dma2 semaphore(%493 : memref<!tpu.dma_semaphore, #tpu.memory_space<semaphore_mem>>) src(%489 : memref<1x128xf32, #tpu.memory_space<any>>) dst(%491 : memref<1x128xf32, #tpu.memory_space<vmem>>)
    %c2_i32_666 = arith.constant 2 : i32
    %c0_i32_667 = arith.constant 0 : i32
    %c2_i32_668 = arith.constant 2 : i32
    %c7_i32_669 = arith.constant 7 : i32
    %c0_i32_670 = arith.constant 0 : i32
    %494 = tpu.memref_slice %arg3[%253, %c0_i32_670] : memref<256x128xf32, #tpu.memory_space<any>> -> memref<1x128xf32, #tpu.memory_space<any>>
    %c7_i32_671 = arith.constant 7 : i32
    %c0_i32_672 = arith.constant 0 : i32
    %495 = tpu.memref_slice %arg6[%c2_i32_666, %c7_i32_671, %c0_i32_672] : memref<3x8x128xf32, #tpu.memory_space<vmem>> -> memref<1x1x128xf32, #tpu.memory_space<vmem>>
    %496 = tpu.memref_squeeze %495 : memref<1x1x128xf32, #tpu.memory_space<vmem>> -> memref<1x128xf32, #tpu.memory_space<vmem>>
    %497 = tpu.memref_slice %arg8[%c0_i32_667, %c2_i32_668, %c7_i32_669] : memref<2x3x8x!tpu.dma_semaphore, #tpu.memory_space<semaphore_mem>> -> memref<1x1x1x!tpu.dma_semaphore, #tpu.memory_space<semaphore_mem>>
    %498 = tpu.memref_squeeze %497 : memref<1x1x1x!tpu.dma_semaphore, #tpu.memory_space<semaphore_mem>> -> memref<!tpu.dma_semaphore, #tpu.memory_space<semaphore_mem>>
    tpu.wait_dma2 semaphore(%498 : memref<!tpu.dma_semaphore, #tpu.memory_space<semaphore_mem>>) src(%494 : memref<1x128xf32, #tpu.memory_space<any>>) dst(%496 : memref<1x128xf32, #tpu.memory_space<vmem>>)
    %c2_i32_673 = arith.constant 2 : i32
    %c1_i32_674 = arith.constant 1 : i32
    %c2_i32_675 = arith.constant 2 : i32
    %c7_i32_676 = arith.constant 7 : i32
    %c0_i32_677 = arith.constant 0 : i32
    %499 = tpu.memref_slice %arg4[%253, %c0_i32_677] : memref<256x128xf32, #tpu.memory_space<any>> -> memref<1x128xf32, #tpu.memory_space<any>>
    %c7_i32_678 = arith.constant 7 : i32
    %c0_i32_679 = arith.constant 0 : i32
    %500 = tpu.memref_slice %arg7[%c2_i32_673, %c7_i32_678, %c0_i32_679] : memref<3x8x128xf32, #tpu.memory_space<vmem>> -> memref<1x1x128xf32, #tpu.memory_space<vmem>>
    %501 = tpu.memref_squeeze %500 : memref<1x1x128xf32, #tpu.memory_space<vmem>> -> memref<1x128xf32, #tpu.memory_space<vmem>>
    %502 = tpu.memref_slice %arg8[%c1_i32_674, %c2_i32_675, %c7_i32_676] : memref<2x3x8x!tpu.dma_semaphore, #tpu.memory_space<semaphore_mem>> -> memref<1x1x1x!tpu.dma_semaphore, #tpu.memory_space<semaphore_mem>>
    %503 = tpu.memref_squeeze %502 : memref<1x1x1x!tpu.dma_semaphore, #tpu.memory_space<semaphore_mem>> -> memref<!tpu.dma_semaphore, #tpu.memory_space<semaphore_mem>>
    tpu.wait_dma2 semaphore(%503 : memref<!tpu.dma_semaphore, #tpu.memory_space<semaphore_mem>>) src(%499 : memref<1x128xf32, #tpu.memory_space<any>>) dst(%501 : memref<1x128xf32, #tpu.memory_space<vmem>>)
    %c0_680 = arith.constant 0 : index
    %c0_681 = arith.constant 0 : index
    %c0_682 = arith.constant 0 : index
    %504 = vector.load %arg6[%c0_680, %c0_681, %c0_682] : memref<3x8x128xf32, #tpu.memory_space<vmem>>, vector<1x8x128xf32>
    %505 = vector.shape_cast %504 : vector<1x8x128xf32> to vector<8x128xf32>
    %c1_683 = arith.constant 1 : index
    %c0_684 = arith.constant 0 : index
    %c0_685 = arith.constant 0 : index
    %506 = vector.load %arg6[%c1_683, %c0_684, %c0_685] : memref<3x8x128xf32, #tpu.memory_space<vmem>>, vector<1x8x128xf32>
    %507 = vector.shape_cast %506 : vector<1x8x128xf32> to vector<8x128xf32>
    %c2_686 = arith.constant 2 : index
    %c0_687 = arith.constant 0 : index
    %c0_688 = arith.constant 0 : index
    %508 = vector.load %arg6[%c2_686, %c0_687, %c0_688] : memref<3x8x128xf32, #tpu.memory_space<vmem>>, vector<1x8x128xf32>
    %509 = vector.shape_cast %508 : vector<1x8x128xf32> to vector<8x128xf32>
    %c0_689 = arith.constant 0 : index
    %c0_690 = arith.constant 0 : index
    %c0_691 = arith.constant 0 : index
    %510 = vector.load %arg7[%c0_689, %c0_690, %c0_691] : memref<3x8x128xf32, #tpu.memory_space<vmem>>, vector<1x8x128xf32>
    %511 = vector.shape_cast %510 : vector<1x8x128xf32> to vector<8x128xf32>
    %c1_692 = arith.constant 1 : index
    %c0_693 = arith.constant 0 : index
    %c0_694 = arith.constant 0 : index
    %512 = vector.load %arg7[%c1_692, %c0_693, %c0_694] : memref<3x8x128xf32, #tpu.memory_space<vmem>>, vector<1x8x128xf32>
    %513 = vector.shape_cast %512 : vector<1x8x128xf32> to vector<8x128xf32>
    %c2_695 = arith.constant 2 : index
    %c0_696 = arith.constant 0 : index
    %c0_697 = arith.constant 0 : index
    %514 = vector.load %arg7[%c2_695, %c0_696, %c0_697] : memref<3x8x128xf32, #tpu.memory_space<vmem>>, vector<1x8x128xf32>
    %515 = vector.shape_cast %514 : vector<1x8x128xf32> to vector<8x128xf32>
    %516 = arith.mulf %505, %507 : vector<8x128xf32>
    %cst = arith.constant dense<0.000000e+00> : vector<8xf32>
    %517 = vector.multi_reduction <add>, %516, %cst [1] : vector<8x128xf32> to vector<8xf32>
    %518 = vector.shape_cast %517 : vector<8xf32> to vector<8x1xf32>
    %cst_698 = arith.constant 0.111111112 : f32
    %519 = vector.broadcast %cst_698 : f32 to vector<8x1xf32>
    %520 = arith.mulf %518, %519 : vector<8x1xf32>
    %521 = arith.mulf %505, %509 : vector<8x128xf32>
    %cst_699 = arith.constant dense<0.000000e+00> : vector<8xf32>
    %522 = vector.multi_reduction <add>, %521, %cst_699 [1] : vector<8x128xf32> to vector<8xf32>
    %523 = vector.shape_cast %522 : vector<8xf32> to vector<8x1xf32>
    %cst_700 = arith.constant 0.111111112 : f32
    %524 = vector.broadcast %cst_700 : f32 to vector<8x1xf32>
    %525 = arith.mulf %523, %524 : vector<8x1xf32>
    %526 = arith.subf %525, %520 : vector<8x1xf32>
    %cst_701 = arith.constant 0.000000e+00 : f32
    %527 = vector.broadcast %cst_701 : f32 to vector<8x1xf32>
    %528 = arith.maximumf %526, %527 : vector<8x1xf32>
    %529 = vector.broadcast %cst_701 : f32 to vector<8x1xf32>
    %530 = arith.subf %526, %529 : vector<8x1xf32>
    %531 = arith.cmpf one, %530, %530 : vector<8x1xf32>
    %532 = vector.broadcast %cst_701 : f32 to vector<8x1xf32>
    %533 = arith.addf %526, %532 : vector<8x1xf32>
    %534 = math.absf %530 : vector<8x1xf32>
    %cst_702 = arith.constant 0.000000e+00 : f32
    %535 = vector.broadcast %cst_702 : f32 to vector<8x1xf32>
    %536 = arith.subf %535, %534 : vector<8x1xf32>
    %537 = math.exp %536 : vector<8x1xf32>
    %538 = math.log1p %537 : vector<8x1xf32>
    %539 = arith.addf %528, %538 : vector<8x1xf32>
    %540 = arith.select %531, %533, %539 : vector<8x1xi1>, vector<8x1xf32>
    %cst_703 = arith.constant dense<0.000000e+00> : vector<1xf32>
    %541 = vector.multi_reduction <add>, %540, %cst_703 [0] : vector<8x1xf32> to vector<1xf32>
    %542 = vector.shape_cast %541 : vector<1xf32> to vector<1x1xf32>
    %543 = arith.mulf %511, %511 : vector<8x128xf32>
    %544 = vector.shape_cast %543 : vector<8x128xf32> to vector<1x8x128xf32>
    %cst_704 = arith.constant dense<0.000000e+00> : vector<1xf32>
    %545 = vector.multi_reduction <add>, %544, %cst_704 [1, 2] : vector<1x8x128xf32> to vector<1xf32>
    %546 = vector.shape_cast %545 : vector<1xf32> to vector<1x1x1xf32>
    %547 = vector.extract %546[0, 0, 0] : f32 from vector<1x1x1xf32>
    %548 = vector.broadcast %547 : f32 to vector<1x1xf32>
    %549 = arith.mulf %513, %513 : vector<8x128xf32>
    %550 = vector.shape_cast %549 : vector<8x128xf32> to vector<1x8x128xf32>
    %cst_705 = arith.constant dense<0.000000e+00> : vector<1xf32>
    %551 = vector.multi_reduction <add>, %550, %cst_705 [1, 2] : vector<1x8x128xf32> to vector<1xf32>
    %552 = vector.shape_cast %551 : vector<1xf32> to vector<1x1x1xf32>
    %553 = vector.extract %552[0, 0, 0] : f32 from vector<1x1x1xf32>
    %554 = vector.broadcast %553 : f32 to vector<1x1xf32>
    %555 = arith.addf %548, %554 : vector<1x1xf32>
    %556 = arith.mulf %515, %515 : vector<8x128xf32>
    %557 = vector.shape_cast %556 : vector<8x128xf32> to vector<1x8x128xf32>
    %cst_706 = arith.constant dense<0.000000e+00> : vector<1xf32>
    %558 = vector.multi_reduction <add>, %557, %cst_706 [1, 2] : vector<1x8x128xf32> to vector<1xf32>
    %559 = vector.shape_cast %558 : vector<1xf32> to vector<1x1x1xf32>
    %560 = vector.extract %559[0, 0, 0] : f32 from vector<1x1x1xf32>
    %561 = vector.broadcast %560 : f32 to vector<1x1xf32>
    %562 = arith.addf %555, %561 : vector<1x1xf32>
    %cst_707 = arith.constant 5.000000e-01 : f32
    %563 = vector.broadcast %cst_707 : f32 to vector<1x1xf32>
    %564 = arith.mulf %563, %562 : vector<1x1xf32>
    %cst_708 = arith.constant 1.250000e-01 : f32
    %565 = vector.broadcast %cst_708 : f32 to vector<1x1xf32>
    %566 = arith.mulf %565, %542 : vector<1x1xf32>
    %cst_709 = arith.constant 1.250000e-05 : f32
    %567 = vector.broadcast %cst_709 : f32 to vector<1x1xf32>
    %568 = arith.mulf %567, %564 : vector<1x1xf32>
    %569 = arith.addf %566, %568 : vector<1x1xf32>
    %c0_710 = arith.constant 0 : index
    %c0_711 = arith.constant 0 : index
    %570 = vector.load %arg5[%c0_710, %c0_711] : memref<1x1xf32, #tpu.memory_space<vmem>>, vector<1x1xf32>
    tpu.vector_store %arg5[%c0_710, %c0_711], %569 {strides = array<i32>} : memref<1x1xf32, #tpu.memory_space<vmem>>, vector<1x1xf32>,
    return
  }
}

</mosaic_0001>

<llo_original>
// kernel: cikgrec_forward.3
$region0: #{cikgrec_forward.3}
  #allocation0 [shape = 'u32[]', space=smem, size = 0x4, offset = 0x4, fixed_abs, tag = 'smem constant byte address 0x4 - core index']
  #allocation1 [shape = 'u32[144,128]{1,0:T(1,128)}', space=vmem, size = 0x12000, scoped, tag = 'internal scratch']
  #allocation2 [shape = 'f32[128,128]{1,0:T(8,128)}', space=vmem, size = 0x10000, scoped, tag = 'scratch operand']
  %s0 = inlined_call_operand.vmem [shape: bf16[256,256], index: 0, kind: input, shape index: {}]
  %s1 = inlined_call_operand.vmem [shape: bf16[256,128], index: 1, kind: input, shape index: {}]
  %s2 = inlined_call_operand.vmem [shape: f32[256,128], index: 2, kind: input, shape index: {}, may-alias: {2,3}]
  %s3 = inlined_call_operand.vmem [shape: f32[256,128], index: 3, kind: output, shape index: {0}, may-alias: {2,3}]
  %s4 = inlined_call_operand.vmem [shape: bf16[256,128], index: 4, kind: output, shape index: {1}]
  %5 = xla_tuple %s3, %s4
  %s6 = sld [smem:[#allocation0]]
  $region102: #{cikgrec_forward.3} parent=0
    _
  %s8 = ssub.s32 1, %s6
  %s9 = scalar_select 0, %s8, %s6
  $region1: #{cikgrec_forward.3} parent=0
    #allocation3 [shape = 'u8[65536]{0}', space=vmem, size = 0x10000, scoped, tag = 'input window, operand 0']
    loop: start=0, step=1, limit=6
    $region2: #{cikgrec_forward.3} parent=1 // loop_pre_header
      _
    $region3: #{cikgrec_forward.3} parent=1 // loop_header
      %s11 = sphi 0, %s15
      %p12 = scmp.ge.s32.totalorder %s11, 6
      %s18 = sphi 0, %s30
      %s19 = sphi 0, %s26
      %s20 = sphi 0, %s18
      %s21 = sphi 0, %s19
      %s22 = sphi 0, %s20
      %s23 = sphi 0, %s21
      %s35 = sphi 0, %s37
      %s38 = sphi 0, %s35
      %s39 = sphi 0, %s38
      %s55 = sphi 0, %s39
      %s61 = sphi 0, %s63
      %s64 = sphi 0, %s61
      %s65 = sphi 0, %s64
      %s81 = sphi 0, %s65
      %s87 = sphi 0, %s89
      %s90 = sphi 0, %s87
      %s91 = sphi 0, %s90
      %s107 = sphi 0, %s91
      %s113 = sphi 0, %s115
      %s116 = sphi 0, %s113
      %s117 = sphi 0, %s116
      %s133 = sphi 0, %s117
      %s139 = sphi 0, %s141
      %s142 = sphi 0, %s139
      %s143 = sphi 0, %s142
      %s159 = sphi 0, %s143
    $region4: #{cikgrec_forward.3} parent=1 // loop_header_branch
      %14 = sbr.rel (%p12) target = $region8
    $region5: #{cikgrec_forward.3} parent=1 // loop_body
      %s16 = ssub.s32 %s11, 1
      %s17 = ssub.s32 %s11, 2
      %s24 = sadd.s32 1, %s19
      %p25 = scmp.ge.s32.totalorder %s24, 2
      %s26 = scalar_select %p25, 0, %s24
      %s27 = sadd.s32 1, %s18
      %s28 = scalar_select %p25, %s27, %s18
      %p29 = scmp.ge.s32.totalorder %s28, 2
      %s30 = scalar_select %p29, 0, %s28
      %s31 = ssub.s32 %s18, %s30
      %s32 = ssub.s32 %s19, %s26
      %s33 = sor.u32 %s31, %s32
      %p34 = scmp.eq.s32.totalorder %s33, 0
      %s36 = sadd.s32 %s35, 1
      %s37 = scalar_select %p34, %s35, %s36
      %p40 = pneg %p34
      %p41 = scmp.eq.s32.totalorder %s11, 3
      %p42 = por %p40, %p41
      %p43 = scmp.ne.s32.totalorder %s35, %s38
      %p44 = scmp.eq.s32.totalorder %s11, 0
      %p45 = por %p43, %p44
      %p46 = scmp.ne.s32.totalorder %s35, %s38
      %p47 = scmp.eq.s32.totalorder %s16, 3
      %p48 = por %p46, %p47
      %p49 = scmp.ne.s32.totalorder %s38, %s39
      %p50 = scmp.eq.s32.totalorder %s16, 0
      %p51 = por %p49, %p50
      %p52 = scmp.ne.s32.totalorder %s38, %s39
      %p53 = scmp.eq.s32.totalorder %s17, 3
      %p54 = por %p52, %p53
      %p56 = scmp.ne.s32.totalorder %s39, %s55
      %p57 = scmp.eq.s32.totalorder %s17, 0
      %p58 = por %p56, %p57
      %s59 = ssub.s32 %s19, %s26
      %p60 = scmp.eq.s32.totalorder %s59, 0
      %s62 = sadd.s32 %s61, 1
      %s63 = scalar_select %p60, %s61, %s62
      %p66 = pneg %p60
      %p67 = scmp.eq.s32.totalorder %s11, 3
      %p68 = por %p66, %p67
      %p69 = scmp.ne.s32.totalorder %s61, %s64
      %p70 = scmp.eq.s32.totalorder %s11, 0
      %p71 = por %p69, %p70
      %p72 = scmp.ne.s32.totalorder %s61, %s64
      %p73 = scmp.eq.s32.totalorder %s16, 3
      %p74 = por %p72, %p73
      %p75 = scmp.ne.s32.totalorder %s64, %s65
      %p76 = scmp.eq.s32.totalorder %s16, 0
      %p77 = por %p75, %p76
      %p78 = scmp.ne.s32.totalorder %s64, %s65
      %p79 = scmp.eq.s32.totalorder %s17, 3
      %p80 = por %p78, %p79
      %p82 = scmp.ne.s32.totalorder %s65, %s81
      %p83 = scmp.eq.s32.totalorder %s17, 0
      %p84 = por %p82, %p83
      %s85 = ssub.s32 %s18, %s30
      %p86 = scmp.eq.s32.totalorder %s85, 0
      %s88 = sadd.s32 %s87, 1
      %s89 = scalar_select %p86, %s87, %s88
      %p92 = pneg %p86
      %p93 = scmp.eq.s32.totalorder %s11, 3
      %p94 = por %p92, %p93
      %p95 = scmp.ne.s32.totalorder %s87, %s90
      %p96 = scmp.eq.s32.totalorder %s11, 0
      %p97 = por %p95, %p96
      %p98 = scmp.ne.s32.totalorder %s87, %s90
      %p99 = scmp.eq.s32.totalorder %s16, 3
      %p100 = por %p98, %p99
      %p101 = scmp.ne.s32.totalorder %s90, %s91
      %p102 = scmp.eq.s32.totalorder %s16, 0
      %p103 = por %p101, %p102
      %p104 = scmp.ne.s32.totalorder %s90, %s91
      %p105 = scmp.eq.s32.totalorder %s17, 3
      %p106 = por %p104, %p105
      %p108 = scmp.ne.s32.totalorder %s91, %s107
      %p109 = scmp.eq.s32.totalorder %s17, 0
      %p110 = por %p108, %p109
      %s111 = ssub.s32 %s18, %s30
      %p112 = scmp.eq.s32.totalorder %s111, 0
      %s114 = sadd.s32 %s113, 1
      %s115 = scalar_select %p112, %s113, %s114
      %p118 = pneg %p112
      %p119 = scmp.eq.s32.totalorder %s11, 3
      %p120 = por %p118, %p119
      %p121 = scmp.ne.s32.totalorder %s113, %s116
      %p122 = scmp.eq.s32.totalorder %s11, 0
      %p123 = por %p121, %p122
      %p124 = scmp.ne.s32.totalorder %s113, %s116
      %p125 = scmp.eq.s32.totalorder %s16, 3
      %p126 = por %p124, %p125
      %p127 = scmp.ne.s32.totalorder %s116, %s117
      %p128 = scmp.eq.s32.totalorder %s16, 0
      %p129 = por %p127, %p128
      %p130 = scmp.ne.s32.totalorder %s116, %s117
      %p131 = scmp.eq.s32.totalorder %s17, 3
      %p132 = por %p130, %p131
      %p134 = scmp.ne.s32.totalorder %s117, %s133
      %p135 = scmp.eq.s32.totalorder %s17, 0
      %p136 = por %p134, %p135
      %s137 = ssub.s32 %s18, %s30
      %p138 = scmp.eq.s32.totalorder %s137, 0
      %s140 = sadd.s32 %s139, 1
      %s141 = scalar_select %p138, %s139, %s140
      %p144 = pneg %p138
      %p145 = scmp.eq.s32.totalorder %s11, 3
      %p146 = por %p144, %p145
      %p147 = scmp.ne.s32.totalorder %s139, %s142
      %p148 = scmp.eq.s32.totalorder %s11, 0
      %p149 = por %p147, %p148
      %p150 = scmp.ne.s32.totalorder %s139, %s142
      %p151 = scmp.eq.s32.totalorder %s16, 3
      %p152 = por %p150, %p151
      %p153 = scmp.ne.s32.totalorder %s142, %s143
      %p154 = scmp.eq.s32.totalorder %s16, 0
      %p155 = por %p153, %p154
      %p156 = scmp.ne.s32.totalorder %s142, %s143
      %p157 = scmp.eq.s32.totalorder %s17, 3
      %p158 = por %p156, %p157
      %p160 = scmp.ne.s32.totalorder %s143, %s159
      %p161 = scmp.eq.s32.totalorder %s17, 0
      %p162 = por %p160, %p161
      %p163 = scmp.le.s32.totalorder 1, %s11
      %p164 = scmp.lt.s32.totalorder %s11, 5
      %p165 = pnand %p163, %p164
      %p166 = pneg %p165
      // Predicated region
      $region9: #{cikgrec_forward.3} parent=5 // pred_check
        _
      $region10: #{cikgrec_forward.3} parent=5 // pred_check_branch
        %168 = sbr.rel (%p165) target = $region12
      $region11: #{cikgrec_forward.3} parent=5 // pred_region
        %s169 = ssub.s32 %s11, 1
      $region12: #{cikgrec_forward.3} parent=5 // pred_fallthru
        _
      %p170 = scmp.lt.s32.totalorder %s11, 4
      // Predicated region
      $region13: #{cikgrec_forward.3} parent=5 // pred_check
        %p171 = pneg %p170
      $region14: #{cikgrec_forward.3} parent=5 // pred_check_branch
        %173 = sbr.rel (%p171) target = $region16
      $region15: #{cikgrec_forward.3} parent=5 // pred_region
        // Predicated region
        $region17: #{cikgrec_forward.3} parent=15 // pred_check
          %p174 = pneg %p45
        $region18: #{cikgrec_forward.3} parent=15 // pred_check_branch
          %176 = sbr.rel (%p174) target = $region20
        $region19: #{cikgrec_forward.3} parent=15 // pred_region
          %s177 = sand.u32 %s35, 1
          %s178 = sand.u32 %s35, 1
          %s179 = smul.addr %s178, 64
          %s180 = scalar_lea.vmem [#allocation3], %s179
          %s181 = smul.u32 16, %s18
          %s182 = smul.addr %s181, 2
          %s183 = sadd.s32 %s19, %s182
          %s184 = smul.addr %s183, 4
          %s185 = scalar_lea.vmem %s0, %s184
          // Predicated region
          $region21: #{cikgrec_forward.3} parent=19 // pred_check
            _
          $region22: #{cikgrec_forward.3} parent=19 // pred_check_branch
            %187 = sbr.rel (0) target = $region24
          $region23: #{cikgrec_forward.3} parent=19 // pred_region
            // Predicated region
            $region25: #{cikgrec_forward.3} parent=23 // pred_check
              _
            $region26: #{cikgrec_forward.3} parent=23 // pred_check_branch
              %189 = sbr.rel target = $region28
            $region27: #{cikgrec_forward.3} parent=23 // pred_region
              // Predicated region
              $region40: #{cikgrec_forward.3} parent=27 // pred_check
                _
              $region41: #{cikgrec_forward.3} parent=27 // pred_check_branch
                %235 = sbr.rel (0) target = $region43
              $region42: #{cikgrec_forward.3} parent=27 // pred_region
                loop: start=0, step=1, limit=1
                $region44: #{cikgrec_forward.3} parent=42 // loop_pre_header
                  _
                $region45: #{cikgrec_forward.3} parent=42 // loop_header
                  %s237 = sphi 0, %s241
                  %p238 = scmp.ge.s32.totalorder %s237, 1
                  %s242 = sphi %s185, %s185
                  %s243 = sphi %s180, %s180
                $region46: #{cikgrec_forward.3} parent=42 // loop_header_branch
                  %240 = sbr.rel (%p238) target = $region50
                $region47: #{cikgrec_forward.3} parent=42 // loop_body
                  _
                $region48: #{cikgrec_forward.3} parent=42 // loop_footer
                  %s241 = sadd.s32 1, %s237
                $region49: #{cikgrec_forward.3} parent=42 // loop_footer_branch
                  %236 = sbr.rel target = $region45
                $region50: #{cikgrec_forward.3} parent=42 // loop_exit
                  _
                %s245 = ssub.s32 16, 1
                loop: start=0, step=1, limit=1
                $region51: #{cikgrec_forward.3} parent=42 // loop_pre_header
                  _
                $region52: #{cikgrec_forward.3} parent=42 // loop_header
                  %s247 = sphi 0, %s251
                  %p248 = scmp.ge.s32.totalorder %s247, 1
                  %s252 = sphi %s185, %s185
                  %s253 = sphi %s180, %s180
                $region53: #{cikgrec_forward.3} parent=42 // loop_header_branch
                  %250 = sbr.rel (%p248) target = $region57
                $region54: #{cikgrec_forward.3} parent=42 // loop_body
                  %v254 = vld [vmem:[%s252] sm:%s245]
                  %255 = vst [vmem:[%s253] sm:%s245] %v254
                  %v256 = vld [vmem:[%s252 + $0x8] sm:%s245]
                  %257 = vst [vmem:[%s253 + $0x4] sm:%s245] %v256
                  %v258 = vld [vmem:[%s252 + $0x10] sm:%s245]
                  %259 = vst [vmem:[%s253 + $0x8] sm:%s245] %v258
                  %v260 = vld [vmem:[%s252 + $0x18] sm:%s245]
                  %261 = vst [vmem:[%s253 + $0xc] sm:%s245] %v260
                  %v262 = vld [vmem:[%s252 + $0x20] sm:%s245]
                  %263 = vst [vmem:[%s253 + $0x10] sm:%s245] %v262
                  %v264 = vld [vmem:[%s252 + $0x28] sm:%s245]
                  %265 = vst [vmem:[%s253 + $0x14] sm:%s245] %v264
                  %v266 = vld [vmem:[%s252 + $0x30] sm:%s245]
                  %267 = vst [vmem:[%s253 + $0x18] sm:%s245] %v266
                  %v268 = vld [vmem:[%s252 + $0x38] sm:%s245]
                  %269 = vst [vmem:[%s253 + $0x1c] sm:%s245] %v268
                  %v270 = vld [vmem:[%s252 + $0x40] sm:%s245]
                  %271 = vst [vmem:[%s253 + $0x20] sm:%s245] %v270
                  %v272 = vld [vmem:[%s252 + $0x48] sm:%s245]
                  %273 = vst [vmem:[%s253 + $0x24] sm:%s245] %v272
                  %v274 = vld [vmem:[%s252 + $0x50] sm:%s245]
                  %275 = vst [vmem:[%s253 + $0x28] sm:%s245] %v274
                  %v276 = vld [vmem:[%s252 + $0x58] sm:%s245]
                  %277 = vst [vmem:[%s253 + $0x2c] sm:%s245] %v276
                  %v278 = vld [vmem:[%s252 + $0x60] sm:%s245]
                  %279 = vst [vmem:[%s253 + $0x30] sm:%s245] %v278
                  %v280 = vld [vmem:[%s252 + $0x68] sm:%s245]
                  %281 = vst [vmem:[%s253 + $0x34] sm:%s245] %v280
                  %v282 = vld [vmem:[%s252 + $0x70] sm:%s245]
                  %283 = vst [vmem:[%s253 + $0x38] sm:%s245] %v282
                  %v284 = vld [vmem:[%s252 + $0x78] sm:%s245]
                  %285 = vst [vmem:[%s253 + $0x3c] sm:%s245] %v284
                $region55: #{cikgrec_forward.3} parent=42 // loop_footer
                  %s251 = sadd.s32 1, %s247
                $region56: #{cikgrec_forward.3} parent=42 // loop_footer_branch
                  %246 = sbr.rel target = $region52
                $region57: #{cikgrec_forward.3} parent=42 // loop_exit
                  _
              $region43: #{cikgrec_forward.3} parent=27 // pred_fallthru
                _
            $region28: #{cikgrec_forward.3} parent=23 // pred_fallthru
              _
            // Predicated region
            $region29: #{cikgrec_forward.3} parent=23 // pred_check
              _
            $region30: #{cikgrec_forward.3} parent=23 // pred_check_branch
              %191 = sbr.rel (0) target = $region32
            $region31: #{cikgrec_forward.3} parent=23 // pred_region
              %s193 = ssub.s32 16, 1
              loop: start=0, step=1, limit=1
              $region33: #{cikgrec_forward.3} parent=31 // loop_pre_header
                _
              $region34: #{cikgrec_forward.3} parent=31 // loop_header
                %s195 = sphi 0, %s199
                %p196 = scmp.ge.s32.totalorder %s195, 1
                %s200 = sphi %s185, %s185
                %s201 = sphi %s180, %s180
              $region35: #{cikgrec_forward.3} parent=31 // loop_header_branch
                %198 = sbr.rel (%p196) target = $region39
              $region36: #{cikgrec_forward.3} parent=31 // loop_body
                %v202 = vld [vmem:[%s200] sm:%s193]
                %203 = vst [vmem:[%s201] sm:%s193] %v202
                %v204 = vld [vmem:[%s200 + $0x8] sm:%s193]
                %205 = vst [vmem:[%s201 + $0x4] sm:%s193] %v204
                %v206 = vld [vmem:[%s200 + $0x10] sm:%s193]
                %207 = vst [vmem:[%s201 + $0x8] sm:%s193] %v206
                %v208 = vld [vmem:[%s200 + $0x18] sm:%s193]
                %209 = vst [vmem:[%s201 + $0xc] sm:%s193] %v208
                %v210 = vld [vmem:[%s200 + $0x20] sm:%s193]
                %211 = vst [vmem:[%s201 + $0x10] sm:%s193] %v210
                %v212 = vld [vmem:[%s200 + $0x28] sm:%s193]
                %213 = vst [vmem:[%s201 + $0x14] sm:%s193] %v212
                %v214 = vld [vmem:[%s200 + $0x30] sm:%s193]
                %215 = vst [vmem:[%s201 + $0x18] sm:%s193] %v214
                %v216 = vld [vmem:[%s200 + $0x38] sm:%s193]
                %217 = vst [vmem:[%s201 + $0x1c] sm:%s193] %v216
                %v218 = vld [vmem:[%s200 + $0x40] sm:%s193]
                %219 = vst [vmem:[%s201 + $0x20] sm:%s193] %v218
                %v220 = vld [vmem:[%s200 + $0x48] sm:%s193]
                %221 = vst [vmem:[%s201 + $0x24] sm:%s193] %v220
                %v222 = vld [vmem:[%s200 + $0x50] sm:%s193]
                %223 = vst [vmem:[%s201 + $0x28] sm:%s193] %v222
                %v224 = vld [vmem:[%s200 + $0x58] sm:%s193]
                %225 = vst [vmem:[%s201 + $0x2c] sm:%s193] %v224
                %v226 = vld [vmem:[%s200 + $0x60] sm:%s193]
                %227 = vst [vmem:[%s201 + $0x30] sm:%s193] %v226
                %v228 = vld [vmem:[%s200 + $0x68] sm:%s193]
                %229 = vst [vmem:[%s201 + $0x34] sm:%s193] %v228
                %v230 = vld [vmem:[%s200 + $0x70] sm:%s193]
                %231 = vst [vmem:[%s201 + $0x38] sm:%s193] %v230
                %v232 = vld [vmem:[%s200 + $0x78] sm:%s193]
                %233 = vst [vmem:[%s201 + $0x3c] sm:%s193] %v232
              $region37: #{cikgrec_forward.3} parent=31 // loop_footer
                %s199 = sadd.s32 1, %s195
              $region38: #{cikgrec_forward.3} parent=31 // loop_footer_branch
                %194 = sbr.rel target = $region34
              $region39: #{cikgrec_forward.3} parent=31 // loop_exit
                _
            $region32: #{cikgrec_forward.3} parent=23 // pred_fallthru
              _
          $region24: #{cikgrec_forward.3} parent=19 // pred_fallthru
            _
          %286 = vnop
        $region20: #{cikgrec_forward.3} parent=15 // pred_fallthru
          _
        // Predicated region
        $region58: #{cikgrec_forward.3} parent=15 // pred_check
          %p287 = pneg %p71
        $region59: #{cikgrec_forward.3} parent=15 // pred_check_branch
          %289 = sbr.rel (%p287) target = $region61
        $region60: #{cikgrec_forward.3} parent=15 // pred_region
          %s290 = smul.u32 16, %s19
          %p291 = scmp.lt.s32.totalorder %s290, 31
          %s292 = scalar_select %p291, %s290, 31
          %s293 = smul.addr %s292, 4
          %s294 = scalar_lea.vmem %s1, %s293
          %s295 = smul.u32 16, %s19
        $region61: #{cikgrec_forward.3} parent=15 // pred_fallthru
          _
        // Predicated region
        $region62: #{cikgrec_forward.3} parent=15 // pred_check
          %p296 = pneg %p97
        $region63: #{cikgrec_forward.3} parent=15 // pred_check_branch
          %298 = sbr.rel (%p296) target = $region65
        $region64: #{cikgrec_forward.3} parent=15 // pred_region
          %s299 = smul.u32 16, %s18
          %p300 = scmp.lt.s32.totalorder %s299, 31
          %s301 = scalar_select %p300, %s299, 31
          %s302 = smul.addr %s301, 8
          %s303 = scalar_lea.vmem %s2, %s302
          %s304 = smul.u32 16, %s18
        $region65: #{cikgrec_forward.3} parent=15 // pred_fallthru
          _
      $region16: #{cikgrec_forward.3} parent=5 // pred_fallthru
        _
      %p305 = scmp.le.s32.totalorder 1, %s11
      %p306 = scmp.lt.s32.totalorder %s11, 5
      %p307 = pnand %p305, %p306
      %p308 = pneg %p307
      // Predicated region
      $region66: #{cikgrec_forward.3} parent=5 // pred_check
        _
      $region67: #{cikgrec_forward.3} parent=5 // pred_check_branch
        %310 = sbr.rel (%p307) target = $region69
      $region68: #{cikgrec_forward.3} parent=5 // pred_region
        %s311 = ssub.s32 %s11, 1
        %s312 = sand.u32 %s38, 1
        %s313 = sand.u32 %s38, 1
        %s314 = smul.addr %s313, 64
        %s315 = scalar_lea.vmem [#allocation3], %s314
        // Predicated region
        $region70: #{cikgrec_forward.3} parent=68 // pred_check
          %p316 = pneg %p51
        $region71: #{cikgrec_forward.3} parent=68 // pred_check_branch
          %318 = sbr.rel (%p316) target = $region73
        $region72: #{cikgrec_forward.3} parent=68 // pred_region
          _
        $region73: #{cikgrec_forward.3} parent=68 // pred_fallthru
          _
        %s319 = sand.u32 %s38, 1
        %s320 = sand.u32 %s38, 1
        %s321 = smul.addr %s320, 64
        %s322 = scalar_lea.vmem [#allocation3], %s321
        %p323 = pneg %p51
        %p324 = pneg %p48
        %s325 = smul.u32 16, %s21
        %p326 = scmp.lt.s32.totalorder %s325, 31
        %s327 = scalar_select %p326, %s325, 31
        %s328 = smul.addr %s327, 4
        %s329 = scalar_lea.vmem %s1, %s328
        %p330 = pneg %p77
        %p331 = pneg %p74
        %s332 = smul.u32 16, %s20
        %p333 = scmp.lt.s32.totalorder %s332, 31
        %s334 = scalar_select %p333, %s332, 31
        %s335 = smul.addr %s334, 8
        %s336 = scalar_lea.vmem %s2, %s335
        %p337 = pneg %p103
        %p338 = pneg %p100
        %p339 = pneg %p129
        %p340 = pneg %p126
        %s341 = smul.u32 16, %s20
        %p342 = scmp.lt.s32.totalorder %s341, 31
        %s343 = scalar_select %p342, %s341, 31
        %s344 = smul.addr %s343, 8
        %s345 = scalar_lea.vmem %s3, %s344
        %p346 = pneg %p155
        %p347 = pneg %p152
        %s348 = smul.u32 16, %s20
        %p349 = scmp.lt.s32.totalorder %s348, 31
        %s350 = scalar_select %p349, %s348, 31
        %s351 = smul.addr %s350, 4
        %s352 = scalar_lea.vmem %s4, %s351
        %s353 = smul.u32 16, %s20
        %s354 = smul.u32 16, %s21
        %p355 = scmp.lt.s32.totalorder %s354, 31
        %s356 = scalar_select %p355, %s354, 31
        %s357 = smul.addr %s356, 4
        %s358 = scalar_lea.vmem %s1, %s357
        %s359 = smul.u32 16, %s21
        %s360 = smul.u32 16, %s20
        %p361 = scmp.lt.s32.totalorder %s360, 31
        %s362 = scalar_select %p361, %s360, 31
        %s363 = smul.addr %s362, 8
        %s364 = scalar_lea.vmem %s2, %s363
        %s365 = smul.u32 16, %s20
        %s366 = smul.u32 16, %s20
        %p367 = scmp.lt.s32.totalorder %s366, 31
        %s368 = scalar_select %p367, %s366, 31
        %s369 = smul.addr %s368, 8
        %s370 = scalar_lea.vmem %s3, %s369
        %s371 = smul.u32 16, %s20
        %s372 = smul.u32 16, %s20
        %p373 = scmp.lt.s32.totalorder %s372, 31
        %s374 = scalar_select %p373, %s372, 31
        %s375 = smul.addr %s374, 4
        %s376 = scalar_lea.vmem %s4, %s375
        %s377 = smul.u32 16, %s20
        %p379 = scmp.eq.s32.totalorder %s21, 0
        // Predicated region
        $region74: #{cikgrec_forward.3} parent=68 // pred_check
          %p380 = pneg %p379
        $region75: #{cikgrec_forward.3} parent=68 // pred_check_branch
          %382 = sbr.rel (%p380) target = $region77
        $region76: #{cikgrec_forward.3} parent=68 // pred_region
          %383 = vst [vmem:[#allocation2] sm:$0xff] 0.0
          %384 = vst [vmem:[#allocation2 + $0x8] sm:$0xff] 0.0
          %385 = vst [vmem:[#allocation2 + $0x10] sm:$0xff] 0.0
          %386 = vst [vmem:[#allocation2 + $0x18] sm:$0xff] 0.0
          %387 = vst [vmem:[#allocation2 + $0x20] sm:$0xff] 0.0
          %388 = vst [vmem:[#allocation2 + $0x28] sm:$0xff] 0.0
          %389 = vst [vmem:[#allocation2 + $0x30] sm:$0xff] 0.0
          %390 = vst [vmem:[#allocation2 + $0x38] sm:$0xff] 0.0
          %391 = vst [vmem:[#allocation2 + $0x40] sm:$0xff] 0.0
          %392 = vst [vmem:[#allocation2 + $0x48] sm:$0xff] 0.0
          %393 = vst [vmem:[#allocation2 + $0x50] sm:$0xff] 0.0
          %394 = vst [vmem:[#allocation2 + $0x58] sm:$0xff] 0.0
          %395 = vst [vmem:[#allocation2 + $0x60] sm:$0xff] 0.0
          %396 = vst [vmem:[#allocation2 + $0x68] sm:$0xff] 0.0
          %397 = vst [vmem:[#allocation2 + $0x70] sm:$0xff] 0.0
          %398 = vst [vmem:[#allocation2 + $0x78] sm:$0xff] 0.0
        $region77: #{cikgrec_forward.3} parent=68 // pred_fallthru
          _
        %v399 = vld [vmem:[#allocation2] sm:$0xff]
        %v400 = vld [vmem:[#allocation2 + $0x8] sm:$0xff]
        %v401 = vld [vmem:[#allocation2 + $0x10] sm:$0xff]
        %v402 = vld [vmem:[#allocation2 + $0x18] sm:$0xff]
        %v403 = vld [vmem:[#allocation2 + $0x20] sm:$0xff]
        %v404 = vld [vmem:[#allocation2 + $0x28] sm:$0xff]
        %v405 = vld [vmem:[#allocation2 + $0x30] sm:$0xff]
        %v406 = vld [vmem:[#allocation2 + $0x38] sm:$0xff]
        %v407 = vld [vmem:[#allocation2 + $0x40] sm:$0xff]
        %v408 = vld [vmem:[#allocation2 + $0x48] sm:$0xff]
        %v409 = vld [vmem:[#allocation2 + $0x50] sm:$0xff]
        %v410 = vld [vmem:[#allocation2 + $0x58] sm:$0xff]
        %v411 = vld [vmem:[#allocation2 + $0x60] sm:$0xff]
        %v412 = vld [vmem:[#allocation2 + $0x68] sm:$0xff]
        %v413 = vld [vmem:[#allocation2 + $0x70] sm:$0xff]
        %v414 = vld [vmem:[#allocation2 + $0x78] sm:$0xff]
        %v415 = vld [vmem:[%s315] sm:$0xf]
        %v416 = vld [vmem:[%s315 + $0x4] sm:$0xf]
        %v417 = vld [vmem:[%s315 + $0x8] sm:$0xf]
        %v418 = vld [vmem:[%s315 + $0xc] sm:$0xf]
        %v419 = vld [vmem:[%s315 + $0x10] sm:$0xf]
        %v420 = vld [vmem:[%s315 + $0x14] sm:$0xf]
        %v421 = vld [vmem:[%s315 + $0x18] sm:$0xf]
        %v422 = vld [vmem:[%s315 + $0x1c] sm:$0xf]
        %v423 = vld [vmem:[%s315 + $0x20] sm:$0xf]
        %v424 = vld [vmem:[%s315 + $0x24] sm:$0xf]
        %v425 = vld [vmem:[%s315 + $0x28] sm:$0xf]
        %v426 = vld [vmem:[%s315 + $0x2c] sm:$0xf]
        %v427 = vld [vmem:[%s315 + $0x30] sm:$0xf]
        %v428 = vld [vmem:[%s315 + $0x34] sm:$0xf]
        %v429 = vld [vmem:[%s315 + $0x38] sm:$0xf]
        %v430 = vld [vmem:[%s315 + $0x3c] sm:$0xf]
        %v431 = vld [vmem:[%s358] sm:$0xf]
        %v432 = vld [vmem:[%s358 + $0x4] sm:$0xf]
        %v433 = vld [vmem:[%s358 + $0x8] sm:$0xf]
        %v434 = vld [vmem:[%s358 + $0xc] sm:$0xf]
        %v435 = vld [vmem:[%s358 + $0x10] sm:$0xf]
        %v436 = vld [vmem:[%s358 + $0x14] sm:$0xf]
        %v437 = vld [vmem:[%s358 + $0x18] sm:$0xf]
        %v438 = vld [vmem:[%s358 + $0x1c] sm:$0xf]
        %v439 = vld [vmem:[%s358 + $0x20] sm:$0xf]
        %v440 = vld [vmem:[%s358 + $0x24] sm:$0xf]
        %v441 = vld [vmem:[%s358 + $0x28] sm:$0xf]
        %v442 = vld [vmem:[%s358 + $0x2c] sm:$0xf]
        %v443 = vld [vmem:[%s358 + $0x30] sm:$0xf]
        %v444 = vld [vmem:[%s358 + $0x34] sm:$0xf]
        %v445 = vld [vmem:[%s358 + $0x38] sm:$0xf]
        %v446 = vld [vmem:[%s358 + $0x3c] sm:$0xf]
        %v463 = vunpack.c.l.b16 %v415
        %v464 = vunpack.c.l.b16 %v416
        %v465 = vunpack.c.l.b16 %v417
        %v466 = vunpack.c.l.b16 %v418
        %v467 = vunpack.c.l.b16 %v419
        %v468 = vunpack.c.l.b16 %v420
        %v469 = vunpack.c.l.b16 %v421
        %v470 = vunpack.c.l.b16 %v422
        %v471 = vunpack.c.l.b16 %v423
        %v472 = vunpack.c.l.b16 %v424
        %v473 = vunpack.c.l.b16 %v425
        %v474 = vunpack.c.l.b16 %v426
        %v475 = vunpack.c.l.b16 %v427
        %v476 = vunpack.c.l.b16 %v428
        %v477 = vunpack.c.l.b16 %v429
        %v478 = vunpack.c.l.b16 %v430
        %v479 = vpack.c.b16 %v464, %v463
        %v480 = vpack.c.b16 %v466, %v465
        %v481 = vpack.c.b16 %v468, %v467
        %v482 = vpack.c.b16 %v470, %v469
        %v483 = vpack.c.b16 %v472, %v471
        %v484 = vpack.c.b16 %v474, %v473
        %v485 = vpack.c.b16 %v476, %v475
        %v486 = vpack.c.b16 %v478, %v477
        %v511 = vunpack.c.l.b16 %v431
        %v512 = vunpack.c.l.b16 %v432
        %v513 = vunpack.c.l.b16 %v433
        %v514 = vunpack.c.l.b16 %v434
        %v515 = vunpack.c.l.b16 %v435
        %v516 = vunpack.c.l.b16 %v436
        %v517 = vunpack.c.l.b16 %v437
        %v518 = vunpack.c.l.b16 %v438
        %v519 = vunpack.c.l.b16 %v439
        %v520 = vunpack.c.l.b16 %v440
        %v521 = vunpack.c.l.b16 %v441
        %v522 = vunpack.c.l.b16 %v442
        %v523 = vunpack.c.l.b16 %v443
        %v524 = vunpack.c.l.b16 %v444
        %v525 = vunpack.c.l.b16 %v445
        %v526 = vunpack.c.l.b16 %v446
        %v527 = vpack.c.b16 %v512, %v511
        %v528 = vpack.c.b16 %v514, %v513
        %v529 = vpack.c.b16 %v516, %v515
        %v530 = vpack.c.b16 %v518, %v517
        %v531 = vpack.c.b16 %v520, %v519
        %v532 = vpack.c.b16 %v522, %v521
        %v533 = vpack.c.b16 %v524, %v523
        %v534 = vpack.c.b16 %v526, %v525
        %543 = vmatprep.subr.bf16.mxu0 0
        %544 = vmatpush1.bf16.msra.mxu0 %v534
        %545 = vmatprep.subr.bf16.mxu0 0
        %546 = vmatpush1.bf16.msra.mxu0 %v533
        %547 = vmatprep.subr.bf16.mxu0 0
        %548 = vmatpush1.bf16.msra.mxu0 %v532
        %549 = vmatprep.subr.bf16.mxu0 0
        %550 = vmatpush1.bf16.msra.mxu0 %v531
        %551 = vmatprep.subr.bf16.mxu0 0
        %552 = vmatpush1.bf16.msra.mxu0 %v530
        %553 = vmatprep.subr.bf16.mxu0 0
        %554 = vmatpush1.bf16.msra.mxu0 %v529
        %555 = vmatprep.subr.bf16.mxu0 0
        %556 = vmatpush1.bf16.msra.mxu0 %v528
        %557 = vmatprep.subr.bf16.mxu0 0
        %558 = vmatpush1.bf16.msra.mxu0 %v527
        %559 = vmatprep.subr.bf16.mxu0 0
        %560 = vmatpush2.bf16.msra.mxu0 0
        %561 = vmatprep.subr.bf16.mxu0 0
        %562 = vmatpush2.bf16.msra.mxu0 0
        %563 = vmatprep.subr.bf16.mxu0 0
        %564 = vmatpush2.bf16.msra.mxu0 0
        %565 = vmatprep.subr.bf16.mxu0 0
        %566 = vmatpush2.bf16.msra.mxu0 0
        %567 = vmatprep.subr.bf16.mxu0 0
        %568 = vmatpush2.bf16.msra.mxu0 0
        %569 = vmatprep.subr.bf16.mxu0 0
        %570 = vmatpush2.bf16.msra.mxu0 0
        %571 = vmatprep.subr.bf16.mxu0 0
        %572 = vmatpush2.bf16.msra.mxu0 0
        %573 = vmatprep.subr.bf16.mxu0 0
        %574 = vmatpush2.bf16.msra.mxu0 0
        %575 = vmatprep.mubr.bf16.mxu0 0
        %576 = vmatmul.mubr.bf16.gmra.mxu0 %v479
        %v577 = vpop.f32.mrf.mxu0
        %v578 = vadd.f32 0.0, %v577
        %v579 = vpop.f32.mrf.mxu0
        %v580 = vpop.f32.mrf.mxu0
        %v581 = vadd.f32 0.0, %v580
        %v582 = vpop.f32.mrf.mxu0
        %583 = vmatprep.mubr.bf16.mxu0 0
        %584 = vmatmul.mubr.bf16.gmra.mxu0 %v480
        %v585 = vpop.f32.mrf.mxu0
        %v586 = vadd.f32 0.0, %v585
        %v587 = vpop.f32.mrf.mxu0
        %v588 = vpop.f32.mrf.mxu0
        %v589 = vadd.f32 0.0, %v588
        %v590 = vpop.f32.mrf.mxu0
        %591 = vmatprep.mubr.bf16.mxu0 0
        %592 = vmatmul.mubr.bf16.gmra.mxu0 %v481
        %v593 = vpop.f32.mrf.mxu0
        %v594 = vadd.f32 0.0, %v593
        %v595 = vpop.f32.mrf.mxu0
        %v596 = vpop.f32.mrf.mxu0
        %v597 = vadd.f32 0.0, %v596
        %v598 = vpop.f32.mrf.mxu0
        %599 = vmatprep.mubr.bf16.mxu0 0
        %600 = vmatmul.mubr.bf16.gmra.mxu0 %v482
        %v601 = vpop.f32.mrf.mxu0
        %v602 = vadd.f32 0.0, %v601
        %v603 = vpop.f32.mrf.mxu0
        %v604 = vpop.f32.mrf.mxu0
        %v605 = vadd.f32 0.0, %v604
        %v606 = vpop.f32.mrf.mxu0
        %607 = vmatprep.mubr.bf16.mxu0 0
        %608 = vmatmul.mubr.bf16.gmra.mxu0 %v483
        %v609 = vpop.f32.mrf.mxu0
        %v610 = vadd.f32 0.0, %v609
        %v611 = vpop.f32.mrf.mxu0
        %v612 = vpop.f32.mrf.mxu0
        %v613 = vadd.f32 0.0, %v612
        %v614 = vpop.f32.mrf.mxu0
        %615 = vmatprep.mubr.bf16.mxu0 0
        %616 = vmatmul.mubr.bf16.gmra.mxu0 %v484
        %v617 = vpop.f32.mrf.mxu0
        %v618 = vadd.f32 0.0, %v617
        %v619 = vpop.f32.mrf.mxu0
        %v620 = vpop.f32.mrf.mxu0
        %v621 = vadd.f32 0.0, %v620
        %v622 = vpop.f32.mrf.mxu0
        %623 = vmatprep.mubr.bf16.mxu0 0
        %624 = vmatmul.mubr.bf16.gmra.mxu0 %v485
        %v625 = vpop.f32.mrf.mxu0
        %v626 = vadd.f32 0.0, %v625
        %v627 = vpop.f32.mrf.mxu0
        %v628 = vpop.f32.mrf.mxu0
        %v629 = vadd.f32 0.0, %v628
        %v630 = vpop.f32.mrf.mxu0
        %631 = vmatprep.mubr.bf16.mxu0 0
        %632 = vmatmul.mubr.bf16.gmra.mxu0 %v486
        %v633 = vpop.f32.mrf.mxu0
        %v634 = vadd.f32 0.0, %v633
        %v635 = vpop.f32.mrf.mxu0
        %v636 = vpop.f32.mrf.mxu0
        %v637 = vadd.f32 0.0, %v636
        %v638 = vpop.f32.mrf.mxu0
        %639 = vdwg.mxu0
        %v640 = vadd.f32 %v399, %v578
        %v641 = vadd.f32 %v400, %v581
        %v642 = vadd.f32 %v401, %v586
        %v643 = vadd.f32 %v402, %v589
        %v644 = vadd.f32 %v403, %v594
        %v645 = vadd.f32 %v404, %v597
        %v646 = vadd.f32 %v405, %v602
        %v647 = vadd.f32 %v406, %v605
        %v648 = vadd.f32 %v407, %v610
        %v649 = vadd.f32 %v408, %v613
        %v650 = vadd.f32 %v409, %v618
        %v651 = vadd.f32 %v410, %v621
        %v652 = vadd.f32 %v411, %v626
        %v653 = vadd.f32 %v412, %v629
        %v654 = vadd.f32 %v413, %v634
        %v655 = vadd.f32 %v414, %v637
        %656 = vst [vmem:[#allocation2] sm:$0xff] %v640
        %657 = vst [vmem:[#allocation2 + $0x8] sm:$0xff] %v641
        %658 = vst [vmem:[#allocation2 + $0x10] sm:$0xff] %v642
        %659 = vst [vmem:[#allocation2 + $0x18] sm:$0xff] %v643
        %660 = vst [vmem:[#allocation2 + $0x20] sm:$0xff] %v644
        %661 = vst [vmem:[#allocation2 + $0x28] sm:$0xff] %v645
        %662 = vst [vmem:[#allocation2 + $0x30] sm:$0xff] %v646
        %663 = vst [vmem:[#allocation2 + $0x38] sm:$0xff] %v647
        %664 = vst [vmem:[#allocation2 + $0x40] sm:$0xff] %v648
        %665 = vst [vmem:[#allocation2 + $0x48] sm:$0xff] %v649
        %666 = vst [vmem:[#allocation2 + $0x50] sm:$0xff] %v650
        %667 = vst [vmem:[#allocation2 + $0x58] sm:$0xff] %v651
        %668 = vst [vmem:[#allocation2 + $0x60] sm:$0xff] %v652
        %669 = vst [vmem:[#allocation2 + $0x68] sm:$0xff] %v653
        %670 = vst [vmem:[#allocation2 + $0x70] sm:$0xff] %v654
        %671 = vst [vmem:[#allocation2 + $0x78] sm:$0xff] %v655
        %p672 = scmp.eq.s32.totalorder %s21, 1
        // Predicated region
        $region78: #{cikgrec_forward.3} parent=68 // pred_check
          %p673 = pneg %p672
        $region79: #{cikgrec_forward.3} parent=68 // pred_check_branch
          %675 = sbr.rel (%p673) target = $region81
        $region80: #{cikgrec_forward.3} parent=68 // pred_region
          %v676 = vld [vmem:[#allocation2] sm:$0xff]
          %v677 = vld [vmem:[#allocation2 + $0x8] sm:$0xff]
          %v678 = vld [vmem:[#allocation2 + $0x10] sm:$0xff]
          %v679 = vld [vmem:[#allocation2 + $0x18] sm:$0xff]
          %v680 = vld [vmem:[#allocation2 + $0x20] sm:$0xff]
          %v681 = vld [vmem:[#allocation2 + $0x28] sm:$0xff]
          %v682 = vld [vmem:[#allocation2 + $0x30] sm:$0xff]
          %v683 = vld [vmem:[#allocation2 + $0x38] sm:$0xff]
          %v684 = vld [vmem:[#allocation2 + $0x40] sm:$0xff]
          %v685 = vld [vmem:[#allocation2 + $0x48] sm:$0xff]
          %v686 = vld [vmem:[#allocation2 + $0x50] sm:$0xff]
          %v687 = vld [vmem:[#allocation2 + $0x58] sm:$0xff]
          %v688 = vld [vmem:[#allocation2 + $0x60] sm:$0xff]
          %v689 = vld [vmem:[#allocation2 + $0x68] sm:$0xff]
          %v690 = vld [vmem:[#allocation2 + $0x70] sm:$0xff]
          %v691 = vld [vmem:[#allocation2 + $0x78] sm:$0xff]
          %v692 = vld [vmem:[%s364] sm:$0xff]
          %v693 = vld [vmem:[%s364 + $0x8] sm:$0xff]
          %v694 = vld [vmem:[%s364 + $0x10] sm:$0xff]
          %v695 = vld [vmem:[%s364 + $0x18] sm:$0xff]
          %v696 = vld [vmem:[%s364 + $0x20] sm:$0xff]
          %v697 = vld [vmem:[%s364 + $0x28] sm:$0xff]
          %v698 = vld [vmem:[%s364 + $0x30] sm:$0xff]
          %v699 = vld [vmem:[%s364 + $0x38] sm:$0xff]
          %v700 = vld [vmem:[%s364 + $0x40] sm:$0xff]
          %v701 = vld [vmem:[%s364 + $0x48] sm:$0xff]
          %v702 = vld [vmem:[%s364 + $0x50] sm:$0xff]
          %v703 = vld [vmem:[%s364 + $0x58] sm:$0xff]
          %v704 = vld [vmem:[%s364 + $0x60] sm:$0xff]
          %v705 = vld [vmem:[%s364 + $0x68] sm:$0xff]
          %v706 = vld [vmem:[%s364 + $0x70] sm:$0xff]
          %v707 = vld [vmem:[%s364 + $0x78] sm:$0xff]
          %v708 = vadd.f32 %v692, %v676
          %v709 = vadd.f32 %v693, %v677
          %v710 = vadd.f32 %v694, %v678
          %v711 = vadd.f32 %v695, %v679
          %v712 = vadd.f32 %v696, %v680
          %v713 = vadd.f32 %v697, %v681
          %v714 = vadd.f32 %v698, %v682
          %v715 = vadd.f32 %v699, %v683
          %v716 = vadd.f32 %v700, %v684
          %v717 = vadd.f32 %v701, %v685
          %v718 = vadd.f32 %v702, %v686
          %v719 = vadd.f32 %v703, %v687
          %v720 = vadd.f32 %v704, %v688
          %v721 = vadd.f32 %v705, %v689
          %v722 = vadd.f32 %v706, %v690
          %v723 = vadd.f32 %v707, %v691
          %724 = vst [vmem:[%s370] sm:$0xff] %v708
          %725 = vst [vmem:[%s370 + $0x8] sm:$0xff] %v709
          %726 = vst [vmem:[%s370 + $0x10] sm:$0xff] %v710
          %727 = vst [vmem:[%s370 + $0x18] sm:$0xff] %v711
          %728 = vst [vmem:[%s370 + $0x20] sm:$0xff] %v712
          %729 = vst [vmem:[%s370 + $0x28] sm:$0xff] %v713
          %730 = vst [vmem:[%s370 + $0x30] sm:$0xff] %v714
          %731 = vst [vmem:[%s370 + $0x38] sm:$0xff] %v715
          %732 = vst [vmem:[%s370 + $0x40] sm:$0xff] %v716
          %733 = vst [vmem:[%s370 + $0x48] sm:$0xff] %v717
          %734 = vst [vmem:[%s370 + $0x50] sm:$0xff] %v718
          %735 = vst [vmem:[%s370 + $0x58] sm:$0xff] %v719
          %736 = vst [vmem:[%s370 + $0x60] sm:$0xff] %v720
          %737 = vst [vmem:[%s370 + $0x68] sm:$0xff] %v721
          %738 = vst [vmem:[%s370 + $0x70] sm:$0xff] %v722
          %739 = vst [vmem:[%s370 + $0x78] sm:$0xff] %v723
          %v740 = vpack.c.bf16 %v677, %v676
          %v741 = vpack.c.bf16 %v679, %v678
          %v742 = vpack.c.bf16 %v681, %v680
          %v743 = vpack.c.bf16 %v683, %v682
          %v744 = vpack.c.bf16 %v685, %v684
          %v745 = vpack.c.bf16 %v687, %v686
          %v746 = vpack.c.bf16 %v689, %v688
          %v747 = vpack.c.bf16 %v691, %v690
          %v756 = vunpack.c.l.b16 %v740
          %v757 = vunpack.c.h.b16 %v740
          %v758 = vunpack.c.l.b16 %v741
          %v759 = vunpack.c.h.b16 %v741
          %v760 = vunpack.c.l.b16 %v742
          %v761 = vunpack.c.h.b16 %v742
          %v762 = vunpack.c.l.b16 %v743
          %v763 = vunpack.c.h.b16 %v743
          %v764 = vunpack.c.l.b16 %v744
          %v765 = vunpack.c.h.b16 %v744
          %v766 = vunpack.c.l.b16 %v745
          %v767 = vunpack.c.h.b16 %v745
          %v768 = vunpack.c.l.b16 %v746
          %v769 = vunpack.c.h.b16 %v746
          %v770 = vunpack.c.l.b16 %v747
          %v771 = vunpack.c.h.b16 %v747
          %v772 = vpack.c.b16 %v756, %v756
          %v773 = vpack.c.b16 %v757, %v757
          %v774 = vpack.c.b16 %v758, %v758
          %v775 = vpack.c.b16 %v759, %v759
          %v776 = vpack.c.b16 %v760, %v760
          %v777 = vpack.c.b16 %v761, %v761
          %v778 = vpack.c.b16 %v762, %v762
          %v779 = vpack.c.b16 %v763, %v763
          %v780 = vpack.c.b16 %v764, %v764
          %v781 = vpack.c.b16 %v765, %v765
          %v782 = vpack.c.b16 %v766, %v766
          %v783 = vpack.c.b16 %v767, %v767
          %v784 = vpack.c.b16 %v768, %v768
          %v785 = vpack.c.b16 %v769, %v769
          %v786 = vpack.c.b16 %v770, %v770
          %v787 = vpack.c.b16 %v771, %v771
          %804 = vst [vmem:[%s376] sm:$0xf] %v772
          %805 = vst [vmem:[%s376 + $0x4] sm:$0xf] %v773
          %806 = vst [vmem:[%s376 + $0x8] sm:$0xf] %v774
          %807 = vst [vmem:[%s376 + $0xc] sm:$0xf] %v775
          %808 = vst [vmem:[%s376 + $0x10] sm:$0xf] %v776
          %809 = vst [vmem:[%s376 + $0x14] sm:$0xf] %v777
          %810 = vst [vmem:[%s376 + $0x18] sm:$0xf] %v778
          %811 = vst [vmem:[%s376 + $0x1c] sm:$0xf] %v779
          %812 = vst [vmem:[%s376 + $0x20] sm:$0xf] %v780
          %813 = vst [vmem:[%s376 + $0x24] sm:$0xf] %v781
          %814 = vst [vmem:[%s376 + $0x28] sm:$0xf] %v782
          %815 = vst [vmem:[%s376 + $0x2c] sm:$0xf] %v783
          %816 = vst [vmem:[%s376 + $0x30] sm:$0xf] %v784
          %817 = vst [vmem:[%s376 + $0x34] sm:$0xf] %v785
          %818 = vst [vmem:[%s376 + $0x38] sm:$0xf] %v786
          %819 = vst [vmem:[%s376 + $0x3c] sm:$0xf] %v787
        $region81: #{cikgrec_forward.3} parent=68 // pred_fallthru
          _
        %s820 = smul.u32 16, %s20
        %p821 = scmp.lt.s32.totalorder %s820, 31
        %s822 = scalar_select %p821, %s820, 31
        %s823 = smul.addr %s822, 8
        %s824 = scalar_lea.vmem %s3, %s823
        %s825 = smul.u32 16, %s20
        %p826 = scmp.lt.s32.totalorder %s825, 31
        %s827 = scalar_select %p826, %s825, 31
        %s828 = smul.addr %s827, 4
        %s829 = scalar_lea.vmem %s4, %s828
        // Predicated region
        $region82: #{cikgrec_forward.3} parent=68 // pred_check
          %p830 = pneg %p126
        $region83: #{cikgrec_forward.3} parent=68 // pred_check_branch
          %832 = sbr.rel (%p830) target = $region85
        $region84: #{cikgrec_forward.3} parent=68 // pred_region
          %s833 = smul.u32 16, %s20
        $region85: #{cikgrec_forward.3} parent=68 // pred_fallthru
          _
        // Predicated region
        $region86: #{cikgrec_forward.3} parent=68 // pred_check
          %p834 = pneg %p152
        $region87: #{cikgrec_forward.3} parent=68 // pred_check_branch
          %836 = sbr.rel (%p834) target = $region89
        $region88: #{cikgrec_forward.3} parent=68 // pred_region
          %s837 = smul.u32 16, %s20
        $region89: #{cikgrec_forward.3} parent=68 // pred_fallthru
          _
      $region69: #{cikgrec_forward.3} parent=5 // pred_fallthru
        _
      %p838 = scmp.le.s32.totalorder 2, %s11
      // Predicated region
      $region90: #{cikgrec_forward.3} parent=5 // pred_check
        %p839 = pneg %p838
      $region91: #{cikgrec_forward.3} parent=5 // pred_check_branch
        %841 = sbr.rel (%p839) target = $region93
      $region92: #{cikgrec_forward.3} parent=5 // pred_region
        %s842 = ssub.s32 %s11, 2
        // Predicated region
        $region94: #{cikgrec_forward.3} parent=92 // pred_check
          %p843 = pneg %p132
        $region95: #{cikgrec_forward.3} parent=92 // pred_check_branch
          %845 = sbr.rel (%p843) target = $region97
        $region96: #{cikgrec_forward.3} parent=92 // pred_region
          %s846 = smul.u32 16, %s22
          %p847 = scmp.lt.s32.totalorder %s846, 31
          %s848 = scalar_select %p847, %s846, 31
          %s849 = smul.addr %s848, 8
          %s850 = scalar_lea.vmem %s3, %s849
        $region97: #{cikgrec_forward.3} parent=92 // pred_fallthru
          _
        // Predicated region
        $region98: #{cikgrec_forward.3} parent=92 // pred_check
          %p851 = pneg %p158
        $region99: #{cikgrec_forward.3} parent=92 // pred_check_branch
          %853 = sbr.rel (%p851) target = $region101
        $region100: #{cikgrec_forward.3} parent=92 // pred_region
          %s854 = smul.u32 16, %s22
          %p855 = scmp.lt.s32.totalorder %s854, 31
          %s856 = scalar_select %p855, %s854, 31
          %s857 = smul.addr %s856, 4
          %s858 = scalar_lea.vmem %s4, %s857
        $region101: #{cikgrec_forward.3} parent=92 // pred_fallthru
          _
      $region93: #{cikgrec_forward.3} parent=5 // pred_fallthru
        _
    $region6: #{cikgrec_forward.3} parent=1 // loop_footer
      %s15 = sadd.s32 1, %s11
    $region7: #{cikgrec_forward.3} parent=1 // loop_footer_branch
      %10 = sbr.rel target = $region3
    $region8: #{cikgrec_forward.3} parent=1 // loop_exit
      _

// kernel: cikgrec_forward.4
$region0: #{cikgrec_forward.4}
  #allocation0 [shape = 'u32[]', space=smem, size = 0x4, offset = 0x4, fixed_abs, tag = 'smem constant byte address 0x4 - core index']
  #allocation1 [shape = 'u32[144,128]{1,0:T(1,128)}', space=vmem, size = 0x12000, scoped, tag = 'internal scratch']
  #allocation2 [shape = 'f32[128,128]{1,0:T(8,128)}', space=vmem, size = 0x10000, scoped, tag = 'scratch operand']
  %s0 = inlined_call_operand.vmem [shape: bf16[256,256], index: 0, kind: input, shape index: {}]
  %s1 = inlined_call_operand.vmem [shape: bf16[256,128], index: 1, kind: input, shape index: {}]
  %s2 = inlined_call_operand.vmem [shape: f32[256,128], index: 2, kind: input, shape index: {}, may-alias: {2,3}]
  %s3 = inlined_call_operand.vmem [shape: f32[256,128], index: 3, kind: output, shape index: {0}, may-alias: {2,3}]
  %s4 = inlined_call_operand.hbm [shape: bf16[256,128], index: 4, kind: output, shape index: {1}]
  %5 = xla_tuple %s3, %s4
  %s6 = sld [smem:[#allocation0]]
  $region102: #{cikgrec_forward.4} parent=0
    _
  %s8 = ssub.s32 1, %s6
  %s9 = scalar_select 0, %s8, %s6
  $region1: #{cikgrec_forward.4} parent=0
    #allocation3 [shape = 'u8[65536]{0}', space=vmem, size = 0x10000, scoped, tag = 'input window, operand 0']
    #allocation4 [shape = 'u8[65536]{0}', space=vmem, size = 0x10000, scoped, tag = 'output window, operand 1']
    #allocation5 [shape = 's32[2]{0}', space=sflag, size = 0x8, scoped, tag = 'scoped memory for cikgrec_forward.4']
    %10 = vsyncpa [#allocation5], 0
    %s11 = scalar_lea.sflag [#allocation5], 1
    %12 = vsyncpa %s11, 0
    loop: start=0, step=1, limit=6
    $region2: #{cikgrec_forward.4} parent=1 // loop_pre_header
      _
    $region3: #{cikgrec_forward.4} parent=1 // loop_header
      %s14 = sphi 0, %s18
      %p15 = scmp.ge.s32.totalorder %s14, 6
      %s21 = sphi 0, %s33
      %s22 = sphi 0, %s29
      %s23 = sphi 0, %s21
      %s24 = sphi 0, %s22
      %s25 = sphi 0, %s23
      %s26 = sphi 0, %s24
      %s38 = sphi 0, %s40
      %s41 = sphi 0, %s38
      %s42 = sphi 0, %s41
      %s58 = sphi 0, %s42
      %s64 = sphi 0, %s66
      %s67 = sphi 0, %s64
      %s68 = sphi 0, %s67
      %s84 = sphi 0, %s68
      %s90 = sphi 0, %s92
      %s93 = sphi 0, %s90
      %s94 = sphi 0, %s93
      %s110 = sphi 0, %s94
      %s116 = sphi 0, %s118
      %s119 = sphi 0, %s116
      %s120 = sphi 0, %s119
      %s136 = sphi 0, %s120
      %s142 = sphi 0, %s144
      %s145 = sphi 0, %s142
      %s146 = sphi 0, %s145
      %s162 = sphi 0, %s146
    $region4: #{cikgrec_forward.4} parent=1 // loop_header_branch
      %17 = sbr.rel (%p15) target = $region8
    $region5: #{cikgrec_forward.4} parent=1 // loop_body
      %s19 = ssub.s32 %s14, 1
      %s20 = ssub.s32 %s14, 2
      %s27 = sadd.s32 1, %s22
      %p28 = scmp.ge.s32.totalorder %s27, 2
      %s29 = scalar_select %p28, 0, %s27
      %s30 = sadd.s32 1, %s21
      %s31 = scalar_select %p28, %s30, %s21
      %p32 = scmp.ge.s32.totalorder %s31, 2
      %s33 = scalar_select %p32, 0, %s31
      %s34 = ssub.s32 %s21, %s33
      %s35 = ssub.s32 %s22, %s29
      %s36 = sor.u32 %s34, %s35
      %p37 = scmp.eq.s32.totalorder %s36, 0
      %s39 = sadd.s32 %s38, 1
      %s40 = scalar_select %p37, %s38, %s39
      %p43 = pneg %p37
      %p44 = scmp.eq.s32.totalorder %s14, 3
      %p45 = por %p43, %p44
      %p46 = scmp.ne.s32.totalorder %s38, %s41
      %p47 = scmp.eq.s32.totalorder %s14, 0
      %p48 = por %p46, %p47
      %p49 = scmp.ne.s32.totalorder %s38, %s41
      %p50 = scmp.eq.s32.totalorder %s19, 3
      %p51 = por %p49, %p50
      %p52 = scmp.ne.s32.totalorder %s41, %s42
      %p53 = scmp.eq.s32.totalorder %s19, 0
      %p54 = por %p52, %p53
      %p55 = scmp.ne.s32.totalorder %s41, %s42
      %p56 = scmp.eq.s32.totalorder %s20, 3
      %p57 = por %p55, %p56
      %p59 = scmp.ne.s32.totalorder %s42, %s58
      %p60 = scmp.eq.s32.totalorder %s20, 0
      %p61 = por %p59, %p60
      %s62 = ssub.s32 %s22, %s29
      %p63 = scmp.eq.s32.totalorder %s62, 0
      %s65 = sadd.s32 %s64, 1
      %s66 = scalar_select %p63, %s64, %s65
      %p69 = pneg %p63
      %p70 = scmp.eq.s32.totalorder %s14, 3
      %p71 = por %p69, %p70
      %p72 = scmp.ne.s32.totalorder %s64, %s67
      %p73 = scmp.eq.s32.totalorder %s14, 0
      %p74 = por %p72, %p73
      %p75 = scmp.ne.s32.totalorder %s64, %s67
      %p76 = scmp.eq.s32.totalorder %s19, 3
      %p77 = por %p75, %p76
      %p78 = scmp.ne.s32.totalorder %s67, %s68
      %p79 = scmp.eq.s32.totalorder %s19, 0
      %p80 = por %p78, %p79
      %p81 = scmp.ne.s32.totalorder %s67, %s68
      %p82 = scmp.eq.s32.totalorder %s20, 3
      %p83 = por %p81, %p82
      %p85 = scmp.ne.s32.totalorder %s68, %s84
      %p86 = scmp.eq.s32.totalorder %s20, 0
      %p87 = por %p85, %p86
      %s88 = ssub.s32 %s21, %s33
      %p89 = scmp.eq.s32.totalorder %s88, 0
      %s91 = sadd.s32 %s90, 1
      %s92 = scalar_select %p89, %s90, %s91
      %p95 = pneg %p89
      %p96 = scmp.eq.s32.totalorder %s14, 3
      %p97 = por %p95, %p96
      %p98 = scmp.ne.s32.totalorder %s90, %s93
      %p99 = scmp.eq.s32.totalorder %s14, 0
      %p100 = por %p98, %p99
      %p101 = scmp.ne.s32.totalorder %s90, %s93
      %p102 = scmp.eq.s32.totalorder %s19, 3
      %p103 = por %p101, %p102
      %p104 = scmp.ne.s32.totalorder %s93, %s94
      %p105 = scmp.eq.s32.totalorder %s19, 0
      %p106 = por %p104, %p105
      %p107 = scmp.ne.s32.totalorder %s93, %s94
      %p108 = scmp.eq.s32.totalorder %s20, 3
      %p109 = por %p107, %p108
      %p111 = scmp.ne.s32.totalorder %s94, %s110
      %p112 = scmp.eq.s32.totalorder %s20, 0
      %p113 = por %p111, %p112
      %s114 = ssub.s32 %s21, %s33
      %p115 = scmp.eq.s32.totalorder %s114, 0
      %s117 = sadd.s32 %s116, 1
      %s118 = scalar_select %p115, %s116, %s117
      %p121 = pneg %p115
      %p122 = scmp.eq.s32.totalorder %s14, 3
      %p123 = por %p121, %p122
      %p124 = scmp.ne.s32.totalorder %s116, %s119
      %p125 = scmp.eq.s32.totalorder %s14, 0
      %p126 = por %p124, %p125
      %p127 = scmp.ne.s32.totalorder %s116, %s119
      %p128 = scmp.eq.s32.totalorder %s19, 3
      %p129 = por %p127, %p128
      %p130 = scmp.ne.s32.totalorder %s119, %s120
      %p131 = scmp.eq.s32.totalorder %s19, 0
      %p132 = por %p130, %p131
      %p133 = scmp.ne.s32.totalorder %s119, %s120
      %p134 = scmp.eq.s32.totalorder %s20, 3
      %p135 = por %p133, %p134
      %p137 = scmp.ne.s32.totalorder %s120, %s136
      %p138 = scmp.eq.s32.totalorder %s20, 0
      %p139 = por %p137, %p138
      %s140 = ssub.s32 %s21, %s33
      %p141 = scmp.eq.s32.totalorder %s140, 0
      %s143 = sadd.s32 %s142, 1
      %s144 = scalar_select %p141, %s142, %s143
      %p147 = pneg %p141
      %p148 = scmp.eq.s32.totalorder %s14, 3
      %p149 = por %p147, %p148
      %p150 = scmp.ne.s32.totalorder %s142, %s145
      %p151 = scmp.eq.s32.totalorder %s14, 0
      %p152 = por %p150, %p151
      %p153 = scmp.ne.s32.totalorder %s142, %s145
      %p154 = scmp.eq.s32.totalorder %s19, 3
      %p155 = por %p153, %p154
      %p156 = scmp.ne.s32.totalorder %s145, %s146
      %p157 = scmp.eq.s32.totalorder %s19, 0
      %p158 = por %p156, %p157
      %p159 = scmp.ne.s32.totalorder %s145, %s146
      %p160 = scmp.eq.s32.totalorder %s20, 3
      %p161 = por %p159, %p160
      %p163 = scmp.ne.s32.totalorder %s146, %s162
      %p164 = scmp.eq.s32.totalorder %s20, 0
      %p165 = por %p163, %p164
      %p166 = scmp.le.s32.totalorder 1, %s14
      %p167 = scmp.lt.s32.totalorder %s14, 5
      %p168 = pnand %p166, %p167
      %p169 = pneg %p168
      // Predicated region
      $region9: #{cikgrec_forward.4} parent=5 // pred_check
        _
      $region10: #{cikgrec_forward.4} parent=5 // pred_check_branch
        %171 = sbr.rel (%p168) target = $region12
      $region11: #{cikgrec_forward.4} parent=5 // pred_region
        %s172 = ssub.s32 %s14, 1
      $region12: #{cikgrec_forward.4} parent=5 // pred_fallthru
        _
      %p173 = scmp.lt.s32.totalorder %s14, 4
      // Predicated region
      $region13: #{cikgrec_forward.4} parent=5 // pred_check
        %p174 = pneg %p173
      $region14: #{cikgrec_forward.4} parent=5 // pred_check_branch
        %176 = sbr.rel (%p174) target = $region16
      $region15: #{cikgrec_forward.4} parent=5 // pred_region
        // Predicated region
        $region17: #{cikgrec_forward.4} parent=15 // pred_check
          %p177 = pneg %p48
        $region18: #{cikgrec_forward.4} parent=15 // pred_check_branch
          %179 = sbr.rel (%p177) target = $region20
        $region19: #{cikgrec_forward.4} parent=15 // pred_region
          %s180 = sand.u32 %s38, 1
          %s181 = sand.u32 %s38, 1
          %s182 = smul.addr %s181, 64
          %s183 = scalar_lea.vmem [#allocation3], %s182
          %s184 = smul.u32 16, %s21
          %s185 = smul.addr %s184, 2
          %s186 = sadd.s32 %s22, %s185
          %s187 = smul.addr %s186, 4
          %s188 = scalar_lea.vmem %s0, %s187
          // Predicated region
          $region21: #{cikgrec_forward.4} parent=19 // pred_check
            _
          $region22: #{cikgrec_forward.4} parent=19 // pred_check_branch
            %190 = sbr.rel (0) target = $region24
          $region23: #{cikgrec_forward.4} parent=19 // pred_region
            // Predicated region
            $region25: #{cikgrec_forward.4} parent=23 // pred_check
              _
            $region26: #{cikgrec_forward.4} parent=23 // pred_check_branch
              %192 = sbr.rel target = $region28
            $region27: #{cikgrec_forward.4} parent=23 // pred_region
              // Predicated region
              $region40: #{cikgrec_forward.4} parent=27 // pred_check
                _
              $region41: #{cikgrec_forward.4} parent=27 // pred_check_branch
                %238 = sbr.rel (0) target = $region43
              $region42: #{cikgrec_forward.4} parent=27 // pred_region
                loop: start=0, step=1, limit=1
                $region44: #{cikgrec_forward.4} parent=42 // loop_pre_header
                  _
                $region45: #{cikgrec_forward.4} parent=42 // loop_header
                  %s240 = sphi 0, %s244
                  %p241 = scmp.ge.s32.totalorder %s240, 1
                  %s245 = sphi %s188, %s188
                  %s246 = sphi %s183, %s183
                $region46: #{cikgrec_forward.4} parent=42 // loop_header_branch
                  %243 = sbr.rel (%p241) target = $region50
                $region47: #{cikgrec_forward.4} parent=42 // loop_body
                  _
                $region48: #{cikgrec_forward.4} parent=42 // loop_footer
                  %s244 = sadd.s32 1, %s240
                $region49: #{cikgrec_forward.4} parent=42 // loop_footer_branch
                  %239 = sbr.rel target = $region45
                $region50: #{cikgrec_forward.4} parent=42 // loop_exit
                  _
                %s248 = ssub.s32 16, 1
                loop: start=0, step=1, limit=1
                $region51: #{cikgrec_forward.4} parent=42 // loop_pre_header
                  _
                $region52: #{cikgrec_forward.4} parent=42 // loop_header
                  %s250 = sphi 0, %s254
                  %p251 = scmp.ge.s32.totalorder %s250, 1
                  %s255 = sphi %s188, %s188
                  %s256 = sphi %s183, %s183
                $region53: #{cikgrec_forward.4} parent=42 // loop_header_branch
                  %253 = sbr.rel (%p251) target = $region57
                $region54: #{cikgrec_forward.4} parent=42 // loop_body
                  %v257 = vld [vmem:[%s255] sm:%s248]
                  %258 = vst [vmem:[%s256] sm:%s248] %v257
                  %v259 = vld [vmem:[%s255 + $0x8] sm:%s248]
                  %260 = vst [vmem:[%s256 + $0x4] sm:%s248] %v259
                  %v261 = vld [vmem:[%s255 + $0x10] sm:%s248]
                  %262 = vst [vmem:[%s256 + $0x8] sm:%s248] %v261
                  %v263 = vld [vmem:[%s255 + $0x18] sm:%s248]
                  %264 = vst [vmem:[%s256 + $0xc] sm:%s248] %v263
                  %v265 = vld [vmem:[%s255 + $0x20] sm:%s248]
                  %266 = vst [vmem:[%s256 + $0x10] sm:%s248] %v265
                  %v267 = vld [vmem:[%s255 + $0x28] sm:%s248]
                  %268 = vst [vmem:[%s256 + $0x14] sm:%s248] %v267
                  %v269 = vld [vmem:[%s255 + $0x30] sm:%s248]
                  %270 = vst [vmem:[%s256 + $0x18] sm:%s248] %v269
                  %v271 = vld [vmem:[%s255 + $0x38] sm:%s248]
                  %272 = vst [vmem:[%s256 + $0x1c] sm:%s248] %v271
                  %v273 = vld [vmem:[%s255 + $0x40] sm:%s248]
                  %274 = vst [vmem:[%s256 + $0x20] sm:%s248] %v273
                  %v275 = vld [vmem:[%s255 + $0x48] sm:%s248]
                  %276 = vst [vmem:[%s256 + $0x24] sm:%s248] %v275
                  %v277 = vld [vmem:[%s255 + $0x50] sm:%s248]
                  %278 = vst [vmem:[%s256 + $0x28] sm:%s248] %v277
                  %v279 = vld [vmem:[%s255 + $0x58] sm:%s248]
                  %280 = vst [vmem:[%s256 + $0x2c] sm:%s248] %v279
                  %v281 = vld [vmem:[%s255 + $0x60] sm:%s248]
                  %282 = vst [vmem:[%s256 + $0x30] sm:%s248] %v281
                  %v283 = vld [vmem:[%s255 + $0x68] sm:%s248]
                  %284 = vst [vmem:[%s256 + $0x34] sm:%s248] %v283
                  %v285 = vld [vmem:[%s255 + $0x70] sm:%s248]
                  %286 = vst [vmem:[%s256 + $0x38] sm:%s248] %v285
                  %v287 = vld [vmem:[%s255 + $0x78] sm:%s248]
                  %288 = vst [vmem:[%s256 + $0x3c] sm:%s248] %v287
                $region55: #{cikgrec_forward.4} parent=42 // loop_footer
                  %s254 = sadd.s32 1, %s250
                $region56: #{cikgrec_forward.4} parent=42 // loop_footer_branch
                  %249 = sbr.rel target = $region52
                $region57: #{cikgrec_forward.4} parent=42 // loop_exit
                  _
              $region43: #{cikgrec_forward.4} parent=27 // pred_fallthru
                _
            $region28: #{cikgrec_forward.4} parent=23 // pred_fallthru
              _
            // Predicated region
            $region29: #{cikgrec_forward.4} parent=23 // pred_check
              _
            $region30: #{cikgrec_forward.4} parent=23 // pred_check_branch
              %194 = sbr.rel (0) target = $region32
            $region31: #{cikgrec_forward.4} parent=23 // pred_region
              %s196 = ssub.s32 16, 1
              loop: start=0, step=1, limit=1
              $region33: #{cikgrec_forward.4} parent=31 // loop_pre_header
                _
              $region34: #{cikgrec_forward.4} parent=31 // loop_header
                %s198 = sphi 0, %s202
                %p199 = scmp.ge.s32.totalorder %s198, 1
                %s203 = sphi %s188, %s188
                %s204 = sphi %s183, %s183
              $region35: #{cikgrec_forward.4} parent=31 // loop_header_branch
                %201 = sbr.rel (%p199) target = $region39
              $region36: #{cikgrec_forward.4} parent=31 // loop_body
                %v205 = vld [vmem:[%s203] sm:%s196]
                %206 = vst [vmem:[%s204] sm:%s196] %v205
                %v207 = vld [vmem:[%s203 + $0x8] sm:%s196]
                %208 = vst [vmem:[%s204 + $0x4] sm:%s196] %v207
                %v209 = vld [vmem:[%s203 + $0x10] sm:%s196]
                %210 = vst [vmem:[%s204 + $0x8] sm:%s196] %v209
                %v211 = vld [vmem:[%s203 + $0x18] sm:%s196]
                %212 = vst [vmem:[%s204 + $0xc] sm:%s196] %v211
                %v213 = vld [vmem:[%s203 + $0x20] sm:%s196]
                %214 = vst [vmem:[%s204 + $0x10] sm:%s196] %v213
                %v215 = vld [vmem:[%s203 + $0x28] sm:%s196]
                %216 = vst [vmem:[%s204 + $0x14] sm:%s196] %v215
                %v217 = vld [vmem:[%s203 + $0x30] sm:%s196]
                %218 = vst [vmem:[%s204 + $0x18] sm:%s196] %v217
                %v219 = vld [vmem:[%s203 + $0x38] sm:%s196]
                %220 = vst [vmem:[%s204 + $0x1c] sm:%s196] %v219
                %v221 = vld [vmem:[%s203 + $0x40] sm:%s196]
                %222 = vst [vmem:[%s204 + $0x20] sm:%s196] %v221
                %v223 = vld [vmem:[%s203 + $0x48] sm:%s196]
                %224 = vst [vmem:[%s204 + $0x24] sm:%s196] %v223
                %v225 = vld [vmem:[%s203 + $0x50] sm:%s196]
                %226 = vst [vmem:[%s204 + $0x28] sm:%s196] %v225
                %v227 = vld [vmem:[%s203 + $0x58] sm:%s196]
                %228 = vst [vmem:[%s204 + $0x2c] sm:%s196] %v227
                %v229 = vld [vmem:[%s203 + $0x60] sm:%s196]
                %230 = vst [vmem:[%s204 + $0x30] sm:%s196] %v229
                %v231 = vld [vmem:[%s203 + $0x68] sm:%s196]
                %232 = vst [vmem:[%s204 + $0x34] sm:%s196] %v231
                %v233 = vld [vmem:[%s203 + $0x70] sm:%s196]
                %234 = vst [vmem:[%s204 + $0x38] sm:%s196] %v233
                %v235 = vld [vmem:[%s203 + $0x78] sm:%s196]
                %236 = vst [vmem:[%s204 + $0x3c] sm:%s196] %v235
              $region37: #{cikgrec_forward.4} parent=31 // loop_footer
                %s202 = sadd.s32 1, %s198
              $region38: #{cikgrec_forward.4} parent=31 // loop_footer_branch
                %197 = sbr.rel target = $region34
              $region39: #{cikgrec_forward.4} parent=31 // loop_exit
                _
            $region32: #{cikgrec_forward.4} parent=23 // pred_fallthru
              _
          $region24: #{cikgrec_forward.4} parent=19 // pred_fallthru
            _
          %289 = vnop
        $region20: #{cikgrec_forward.4} parent=15 // pred_fallthru
          _
        // Predicated region
        $region58: #{cikgrec_forward.4} parent=15 // pred_check
          %p290 = pneg %p74
        $region59: #{cikgrec_forward.4} parent=15 // pred_check_branch
          %292 = sbr.rel (%p290) target = $region61
        $region60: #{cikgrec_forward.4} parent=15 // pred_region
          %s293 = smul.u32 16, %s22
          %p294 = scmp.lt.s32.totalorder %s293, 31
          %s295 = scalar_select %p294, %s293, 31
          %s296 = smul.addr %s295, 4
          %s297 = scalar_lea.vmem %s1, %s296
          %s298 = smul.u32 16, %s22
        $region61: #{cikgrec_forward.4} parent=15 // pred_fallthru
          _
        // Predicated region
        $region62: #{cikgrec_forward.4} parent=15 // pred_check
          %p299 = pneg %p100
        $region63: #{cikgrec_forward.4} parent=15 // pred_check_branch
          %301 = sbr.rel (%p299) target = $region65
        $region64: #{cikgrec_forward.4} parent=15 // pred_region
          %s302 = smul.u32 16, %s21
          %p303 = scmp.lt.s32.totalorder %s302, 31
          %s304 = scalar_select %p303, %s302, 31
          %s305 = smul.addr %s304, 8
          %s306 = scalar_lea.vmem %s2, %s305
          %s307 = smul.u32 16, %s21
        $region65: #{cikgrec_forward.4} parent=15 // pred_fallthru
          _
      $region16: #{cikgrec_forward.4} parent=5 // pred_fallthru
        _
      %p308 = scmp.le.s32.totalorder 1, %s14
      %p309 = scmp.lt.s32.totalorder %s14, 5
      %p310 = pnand %p308, %p309
      %p311 = pneg %p310
      // Predicated region
      $region66: #{cikgrec_forward.4} parent=5 // pred_check
        _
      $region67: #{cikgrec_forward.4} parent=5 // pred_check_branch
        %313 = sbr.rel (%p310) target = $region69
      $region68: #{cikgrec_forward.4} parent=5 // pred_region
        %s314 = ssub.s32 %s14, 1
        %s315 = sand.u32 %s41, 1
        %s316 = sand.u32 %s41, 1
        %s317 = smul.addr %s316, 64
        %s318 = scalar_lea.vmem [#allocation3], %s317
        // Predicated region
        $region70: #{cikgrec_forward.4} parent=68 // pred_check
          %p319 = pneg %p54
        $region71: #{cikgrec_forward.4} parent=68 // pred_check_branch
          %321 = sbr.rel (%p319) target = $region73
        $region72: #{cikgrec_forward.4} parent=68 // pred_region
          _
        $region73: #{cikgrec_forward.4} parent=68 // pred_fallthru
          _
        %s322 = sand.u32 %s41, 1
        %s323 = sand.u32 %s41, 1
        %s324 = smul.addr %s323, 64
        %s325 = scalar_lea.vmem [#allocation3], %s324
        %p326 = pneg %p54
        %p327 = pneg %p51
        %s328 = smul.u32 16, %s24
        %p329 = scmp.lt.s32.totalorder %s328, 31
        %s330 = scalar_select %p329, %s328, 31
        %s331 = smul.addr %s330, 4
        %s332 = scalar_lea.vmem %s1, %s331
        %p333 = pneg %p80
        %p334 = pneg %p77
        %s335 = smul.u32 16, %s23
        %p336 = scmp.lt.s32.totalorder %s335, 31
        %s337 = scalar_select %p336, %s335, 31
        %s338 = smul.addr %s337, 8
        %s339 = scalar_lea.vmem %s2, %s338
        %p340 = pneg %p106
        %p341 = pneg %p103
        %p342 = pneg %p132
        %p343 = pneg %p129
        %s344 = smul.u32 16, %s23
        %p345 = scmp.lt.s32.totalorder %s344, 31
        %s346 = scalar_select %p345, %s344, 31
        %s347 = smul.addr %s346, 8
        %s348 = scalar_lea.vmem %s3, %s347
        %p349 = pneg %p158
        %p350 = pneg %p155
        %s351 = sand.u32 %s145, 1
        %s352 = scalar_lea.sflag [#allocation5], %s351
        %s353 = sand.u32 %s145, 1
        %s354 = smul.addr %s353, 64
        %s355 = scalar_lea.vmem [#allocation4], %s354
        %s356 = smul.u32 16, %s23
        %s357 = smul.u32 16, %s24
        %p358 = scmp.lt.s32.totalorder %s357, 31
        %s359 = scalar_select %p358, %s357, 31
        %s360 = smul.addr %s359, 4
        %s361 = scalar_lea.vmem %s1, %s360
        %s362 = smul.u32 16, %s24
        %s363 = smul.u32 16, %s23
        %p364 = scmp.lt.s32.totalorder %s363, 31
        %s365 = scalar_select %p364, %s363, 31
        %s366 = smul.addr %s365, 8
        %s367 = scalar_lea.vmem %s2, %s366
        %s368 = smul.u32 16, %s23
        %s369 = smul.u32 16, %s23
        %p370 = scmp.lt.s32.totalorder %s369, 31
        %s371 = scalar_select %p370, %s369, 31
        %s372 = smul.addr %s371, 8
        %s373 = scalar_lea.vmem %s3, %s372
        %s374 = smul.u32 16, %s23
        %s375 = smul.u32 16, %s23
        %p377 = scmp.eq.s32.totalorder %s24, 0
        // Predicated region
        $region74: #{cikgrec_forward.4} parent=68 // pred_check
          %p378 = pneg %p377
        $region75: #{cikgrec_forward.4} parent=68 // pred_check_branch
          %380 = sbr.rel (%p378) target = $region77
        $region76: #{cikgrec_forward.4} parent=68 // pred_region
          %381 = vst [vmem:[#allocation2] sm:$0xff] 0.0
          %382 = vst [vmem:[#allocation2 + $0x8] sm:$0xff] 0.0
          %383 = vst [vmem:[#allocation2 + $0x10] sm:$0xff] 0.0
          %384 = vst [vmem:[#allocation2 + $0x18] sm:$0xff] 0.0
          %385 = vst [vmem:[#allocation2 + $0x20] sm:$0xff] 0.0
          %386 = vst [vmem:[#allocation2 + $0x28] sm:$0xff] 0.0
          %387 = vst [vmem:[#allocation2 + $0x30] sm:$0xff] 0.0
          %388 = vst [vmem:[#allocation2 + $0x38] sm:$0xff] 0.0
          %389 = vst [vmem:[#allocation2 + $0x40] sm:$0xff] 0.0
          %390 = vst [vmem:[#allocation2 + $0x48] sm:$0xff] 0.0
          %391 = vst [vmem:[#allocation2 + $0x50] sm:$0xff] 0.0
          %392 = vst [vmem:[#allocation2 + $0x58] sm:$0xff] 0.0
          %393 = vst [vmem:[#allocation2 + $0x60] sm:$0xff] 0.0
          %394 = vst [vmem:[#allocation2 + $0x68] sm:$0xff] 0.0
          %395 = vst [vmem:[#allocation2 + $0x70] sm:$0xff] 0.0
          %396 = vst [vmem:[#allocation2 + $0x78] sm:$0xff] 0.0
        $region77: #{cikgrec_forward.4} parent=68 // pred_fallthru
          _
        %v397 = vld [vmem:[#allocation2] sm:$0xff]
        %v398 = vld [vmem:[#allocation2 + $0x8] sm:$0xff]
        %v399 = vld [vmem:[#allocation2 + $0x10] sm:$0xff]
        %v400 = vld [vmem:[#allocation2 + $0x18] sm:$0xff]
        %v401 = vld [vmem:[#allocation2 + $0x20] sm:$0xff]
        %v402 = vld [vmem:[#allocation2 + $0x28] sm:$0xff]
        %v403 = vld [vmem:[#allocation2 + $0x30] sm:$0xff]
        %v404 = vld [vmem:[#allocation2 + $0x38] sm:$0xff]
        %v405 = vld [vmem:[#allocation2 + $0x40] sm:$0xff]
        %v406 = vld [vmem:[#allocation2 + $0x48] sm:$0xff]
        %v407 = vld [vmem:[#allocation2 + $0x50] sm:$0xff]
        %v408 = vld [vmem:[#allocation2 + $0x58] sm:$0xff]
        %v409 = vld [vmem:[#allocation2 + $0x60] sm:$0xff]
        %v410 = vld [vmem:[#allocation2 + $0x68] sm:$0xff]
        %v411 = vld [vmem:[#allocation2 + $0x70] sm:$0xff]
        %v412 = vld [vmem:[#allocation2 + $0x78] sm:$0xff]
        %v413 = vld [vmem:[%s318] sm:$0xf]
        %v414 = vld [vmem:[%s318 + $0x4] sm:$0xf]
        %v415 = vld [vmem:[%s318 + $0x8] sm:$0xf]
        %v416 = vld [vmem:[%s318 + $0xc] sm:$0xf]
        %v417 = vld [vmem:[%s318 + $0x10] sm:$0xf]
        %v418 = vld [vmem:[%s318 + $0x14] sm:$0xf]
        %v419 = vld [vmem:[%s318 + $0x18] sm:$0xf]
        %v420 = vld [vmem:[%s318 + $0x1c] sm:$0xf]
        %v421 = vld [vmem:[%s318 + $0x20] sm:$0xf]
        %v422 = vld [vmem:[%s318 + $0x24] sm:$0xf]
        %v423 = vld [vmem:[%s318 + $0x28] sm:$0xf]
        %v424 = vld [vmem:[%s318 + $0x2c] sm:$0xf]
        %v425 = vld [vmem:[%s318 + $0x30] sm:$0xf]
        %v426 = vld [vmem:[%s318 + $0x34] sm:$0xf]
        %v427 = vld [vmem:[%s318 + $0x38] sm:$0xf]
        %v428 = vld [vmem:[%s318 + $0x3c] sm:$0xf]
        %v429 = vld [vmem:[%s361] sm:$0xf]
        %v430 = vld [vmem:[%s361 + $0x4] sm:$0xf]
        %v431 = vld [vmem:[%s361 + $0x8] sm:$0xf]
        %v432 = vld [vmem:[%s361 + $0xc] sm:$0xf]
        %v433 = vld [vmem:[%s361 + $0x10] sm:$0xf]
        %v434 = vld [vmem:[%s361 + $0x14] sm:$0xf]
        %v435 = vld [vmem:[%s361 + $0x18] sm:$0xf]
        %v436 = vld [vmem:[%s361 + $0x1c] sm:$0xf]
        %v437 = vld [vmem:[%s361 + $0x20] sm:$0xf]
        %v438 = vld [vmem:[%s361 + $0x24] sm:$0xf]
        %v439 = vld [vmem:[%s361 + $0x28] sm:$0xf]
        %v440 = vld [vmem:[%s361 + $0x2c] sm:$0xf]
        %v441 = vld [vmem:[%s361 + $0x30] sm:$0xf]
        %v442 = vld [vmem:[%s361 + $0x34] sm:$0xf]
        %v443 = vld [vmem:[%s361 + $0x38] sm:$0xf]
        %v444 = vld [vmem:[%s361 + $0x3c] sm:$0xf]
        %v461 = vunpack.c.l.b16 %v413
        %v462 = vunpack.c.l.b16 %v414
        %v463 = vunpack.c.l.b16 %v415
        %v464 = vunpack.c.l.b16 %v416
        %v465 = vunpack.c.l.b16 %v417
        %v466 = vunpack.c.l.b16 %v418
        %v467 = vunpack.c.l.b16 %v419
        %v468 = vunpack.c.l.b16 %v420
        %v469 = vunpack.c.l.b16 %v421
        %v470 = vunpack.c.l.b16 %v422
        %v471 = vunpack.c.l.b16 %v423
        %v472 = vunpack.c.l.b16 %v424
        %v473 = vunpack.c.l.b16 %v425
        %v474 = vunpack.c.l.b16 %v426
        %v475 = vunpack.c.l.b16 %v427
        %v476 = vunpack.c.l.b16 %v428
        %v477 = vpack.c.b16 %v462, %v461
        %v478 = vpack.c.b16 %v464, %v463
        %v479 = vpack.c.b16 %v466, %v465
        %v480 = vpack.c.b16 %v468, %v467
        %v481 = vpack.c.b16 %v470, %v469
        %v482 = vpack.c.b16 %v472, %v471
        %v483 = vpack.c.b16 %v474, %v473
        %v484 = vpack.c.b16 %v476, %v475
        %v509 = vunpack.c.l.b16 %v429
        %v510 = vunpack.c.l.b16 %v430
        %v511 = vunpack.c.l.b16 %v431
        %v512 = vunpack.c.l.b16 %v432
        %v513 = vunpack.c.l.b16 %v433
        %v514 = vunpack.c.l.b16 %v434
        %v515 = vunpack.c.l.b16 %v435
        %v516 = vunpack.c.l.b16 %v436
        %v517 = vunpack.c.l.b16 %v437
        %v518 = vunpack.c.l.b16 %v438
        %v519 = vunpack.c.l.b16 %v439
        %v520 = vunpack.c.l.b16 %v440
        %v521 = vunpack.c.l.b16 %v441
        %v522 = vunpack.c.l.b16 %v442
        %v523 = vunpack.c.l.b16 %v443
        %v524 = vunpack.c.l.b16 %v444
        %v525 = vpack.c.b16 %v510, %v509
        %v526 = vpack.c.b16 %v512, %v511
        %v527 = vpack.c.b16 %v514, %v513
        %v528 = vpack.c.b16 %v516, %v515
        %v529 = vpack.c.b16 %v518, %v517
        %v530 = vpack.c.b16 %v520, %v519
        %v531 = vpack.c.b16 %v522, %v521
        %v532 = vpack.c.b16 %v524, %v523
        %541 = vmatprep.subr.bf16.mxu0 0
        %542 = vmatpush1.bf16.msra.mxu0 %v532
        %543 = vmatprep.subr.bf16.mxu0 0
        %544 = vmatpush1.bf16.msra.mxu0 %v531
        %545 = vmatprep.subr.bf16.mxu0 0
        %546 = vmatpush1.bf16.msra.mxu0 %v530
        %547 = vmatprep.subr.bf16.mxu0 0
        %548 = vmatpush1.bf16.msra.mxu0 %v529
        %549 = vmatprep.subr.bf16.mxu0 0
        %550 = vmatpush1.bf16.msra.mxu0 %v528
        %551 = vmatprep.subr.bf16.mxu0 0
        %552 = vmatpush1.bf16.msra.mxu0 %v527
        %553 = vmatprep.subr.bf16.mxu0 0
        %554 = vmatpush1.bf16.msra.mxu0 %v526
        %555 = vmatprep.subr.bf16.mxu0 0
        %556 = vmatpush1.bf16.msra.mxu0 %v525
        %557 = vmatprep.subr.bf16.mxu0 0
        %558 = vmatpush2.bf16.msra.mxu0 0
        %559 = vmatprep.subr.bf16.mxu0 0
        %560 = vmatpush2.bf16.msra.mxu0 0
        %561 = vmatprep.subr.bf16.mxu0 0
        %562 = vmatpush2.bf16.msra.mxu0 0
        %563 = vmatprep.subr.bf16.mxu0 0
        %564 = vmatpush2.bf16.msra.mxu0 0
        %565 = vmatprep.subr.bf16.mxu0 0
        %566 = vmatpush2.bf16.msra.mxu0 0
        %567 = vmatprep.subr.bf16.mxu0 0
        %568 = vmatpush2.bf16.msra.mxu0 0
        %569 = vmatprep.subr.bf16.mxu0 0
        %570 = vmatpush2.bf16.msra.mxu0 0
        %571 = vmatprep.subr.bf16.mxu0 0
        %572 = vmatpush2.bf16.msra.mxu0 0
        %573 = vmatprep.mubr.bf16.mxu0 0
        %574 = vmatmul.mubr.bf16.gmra.mxu0 %v477
        %v575 = vpop.f32.mrf.mxu0
        %v576 = vadd.f32 0.0, %v575
        %v577 = vpop.f32.mrf.mxu0
        %v578 = vpop.f32.mrf.mxu0
        %v579 = vadd.f32 0.0, %v578
        %v580 = vpop.f32.mrf.mxu0
        %581 = vmatprep.mubr.bf16.mxu0 0
        %582 = vmatmul.mubr.bf16.gmra.mxu0 %v478
        %v583 = vpop.f32.mrf.mxu0
        %v584 = vadd.f32 0.0, %v583
        %v585 = vpop.f32.mrf.mxu0
        %v586 = vpop.f32.mrf.mxu0
        %v587 = vadd.f32 0.0, %v586
        %v588 = vpop.f32.mrf.mxu0
        %589 = vmatprep.mubr.bf16.mxu0 0
        %590 = vmatmul.mubr.bf16.gmra.mxu0 %v479
        %v591 = vpop.f32.mrf.mxu0
        %v592 = vadd.f32 0.0, %v591
        %v593 = vpop.f32.mrf.mxu0
        %v594 = vpop.f32.mrf.mxu0
        %v595 = vadd.f32 0.0, %v594
        %v596 = vpop.f32.mrf.mxu0
        %597 = vmatprep.mubr.bf16.mxu0 0
        %598 = vmatmul.mubr.bf16.gmra.mxu0 %v480
        %v599 = vpop.f32.mrf.mxu0
        %v600 = vadd.f32 0.0, %v599
        %v601 = vpop.f32.mrf.mxu0
        %v602 = vpop.f32.mrf.mxu0
        %v603 = vadd.f32 0.0, %v602
        %v604 = vpop.f32.mrf.mxu0
        %605 = vmatprep.mubr.bf16.mxu0 0
        %606 = vmatmul.mubr.bf16.gmra.mxu0 %v481
        %v607 = vpop.f32.mrf.mxu0
        %v608 = vadd.f32 0.0, %v607
        %v609 = vpop.f32.mrf.mxu0
        %v610 = vpop.f32.mrf.mxu0
        %v611 = vadd.f32 0.0, %v610
        %v612 = vpop.f32.mrf.mxu0
        %613 = vmatprep.mubr.bf16.mxu0 0
        %614 = vmatmul.mubr.bf16.gmra.mxu0 %v482
        %v615 = vpop.f32.mrf.mxu0
        %v616 = vadd.f32 0.0, %v615
        %v617 = vpop.f32.mrf.mxu0
        %v618 = vpop.f32.mrf.mxu0
        %v619 = vadd.f32 0.0, %v618
        %v620 = vpop.f32.mrf.mxu0
        %621 = vmatprep.mubr.bf16.mxu0 0
        %622 = vmatmul.mubr.bf16.gmra.mxu0 %v483
        %v623 = vpop.f32.mrf.mxu0
        %v624 = vadd.f32 0.0, %v623
        %v625 = vpop.f32.mrf.mxu0
        %v626 = vpop.f32.mrf.mxu0
        %v627 = vadd.f32 0.0, %v626
        %v628 = vpop.f32.mrf.mxu0
        %629 = vmatprep.mubr.bf16.mxu0 0
        %630 = vmatmul.mubr.bf16.gmra.mxu0 %v484
        %v631 = vpop.f32.mrf.mxu0
        %v632 = vadd.f32 0.0, %v631
        %v633 = vpop.f32.mrf.mxu0
        %v634 = vpop.f32.mrf.mxu0
        %v635 = vadd.f32 0.0, %v634
        %v636 = vpop.f32.mrf.mxu0
        %637 = vdwg.mxu0
        %v638 = vadd.f32 %v397, %v576
        %v639 = vadd.f32 %v398, %v579
        %v640 = vadd.f32 %v399, %v584
        %v641 = vadd.f32 %v400, %v587
        %v642 = vadd.f32 %v401, %v592
        %v643 = vadd.f32 %v402, %v595
        %v644 = vadd.f32 %v403, %v600
        %v645 = vadd.f32 %v404, %v603
        %v646 = vadd.f32 %v405, %v608
        %v647 = vadd.f32 %v406, %v611
        %v648 = vadd.f32 %v407, %v616
        %v649 = vadd.f32 %v408, %v619
        %v650 = vadd.f32 %v409, %v624
        %v651 = vadd.f32 %v410, %v627
        %v652 = vadd.f32 %v411, %v632
        %v653 = vadd.f32 %v412, %v635
        %654 = vst [vmem:[#allocation2] sm:$0xff] %v638
        %655 = vst [vmem:[#allocation2 + $0x8] sm:$0xff] %v639
        %656 = vst [vmem:[#allocation2 + $0x10] sm:$0xff] %v640
        %657 = vst [vmem:[#allocation2 + $0x18] sm:$0xff] %v641
        %658 = vst [vmem:[#allocation2 + $0x20] sm:$0xff] %v642
        %659 = vst [vmem:[#allocation2 + $0x28] sm:$0xff] %v643
        %660 = vst [vmem:[#allocation2 + $0x30] sm:$0xff] %v644
        %661 = vst [vmem:[#allocation2 + $0x38] sm:$0xff] %v645
        %662 = vst [vmem:[#allocation2 + $0x40] sm:$0xff] %v646
        %663 = vst [vmem:[#allocation2 + $0x48] sm:$0xff] %v647
        %664 = vst [vmem:[#allocation2 + $0x50] sm:$0xff] %v648
        %665 = vst [vmem:[#allocation2 + $0x58] sm:$0xff] %v649
        %666 = vst [vmem:[#allocation2 + $0x60] sm:$0xff] %v650
        %667 = vst [vmem:[#allocation2 + $0x68] sm:$0xff] %v651
        %668 = vst [vmem:[#allocation2 + $0x70] sm:$0xff] %v652
        %669 = vst [vmem:[#allocation2 + $0x78] sm:$0xff] %v653
        %p670 = scmp.eq.s32.totalorder %s24, 1
        // Predicated region
        $region78: #{cikgrec_forward.4} parent=68 // pred_check
          %p671 = pneg %p670
        $region79: #{cikgrec_forward.4} parent=68 // pred_check_branch
          %673 = sbr.rel (%p671) target = $region81
        $region80: #{cikgrec_forward.4} parent=68 // pred_region
          %v674 = vld [vmem:[#allocation2] sm:$0xff]
          %v675 = vld [vmem:[#allocation2 + $0x8] sm:$0xff]
          %v676 = vld [vmem:[#allocation2 + $0x10] sm:$0xff]
          %v677 = vld [vmem:[#allocation2 + $0x18] sm:$0xff]
          %v678 = vld [vmem:[#allocation2 + $0x20] sm:$0xff]
          %v679 = vld [vmem:[#allocation2 + $0x28] sm:$0xff]
          %v680 = vld [vmem:[#allocation2 + $0x30] sm:$0xff]
          %v681 = vld [vmem:[#allocation2 + $0x38] sm:$0xff]
          %v682 = vld [vmem:[#allocation2 + $0x40] sm:$0xff]
          %v683 = vld [vmem:[#allocation2 + $0x48] sm:$0xff]
          %v684 = vld [vmem:[#allocation2 + $0x50] sm:$0xff]
          %v685 = vld [vmem:[#allocation2 + $0x58] sm:$0xff]
          %v686 = vld [vmem:[#allocation2 + $0x60] sm:$0xff]
          %v687 = vld [vmem:[#allocation2 + $0x68] sm:$0xff]
          %v688 = vld [vmem:[#allocation2 + $0x70] sm:$0xff]
          %v689 = vld [vmem:[#allocation2 + $0x78] sm:$0xff]
          %v690 = vld [vmem:[%s367] sm:$0xff]
          %v691 = vld [vmem:[%s367 + $0x8] sm:$0xff]
          %v692 = vld [vmem:[%s367 + $0x10] sm:$0xff]
          %v693 = vld [vmem:[%s367 + $0x18] sm:$0xff]
          %v694 = vld [vmem:[%s367 + $0x20] sm:$0xff]
          %v695 = vld [vmem:[%s367 + $0x28] sm:$0xff]
          %v696 = vld [vmem:[%s367 + $0x30] sm:$0xff]
          %v697 = vld [vmem:[%s367 + $0x38] sm:$0xff]
          %v698 = vld [vmem:[%s367 + $0x40] sm:$0xff]
          %v699 = vld [vmem:[%s367 + $0x48] sm:$0xff]
          %v700 = vld [vmem:[%s367 + $0x50] sm:$0xff]
          %v701 = vld [vmem:[%s367 + $0x58] sm:$0xff]
          %v702 = vld [vmem:[%s367 + $0x60] sm:$0xff]
          %v703 = vld [vmem:[%s367 + $0x68] sm:$0xff]
          %v704 = vld [vmem:[%s367 + $0x70] sm:$0xff]
          %v705 = vld [vmem:[%s367 + $0x78] sm:$0xff]
          %v706 = vadd.f32 %v690, %v674
          %v707 = vadd.f32 %v691, %v675
          %v708 = vadd.f32 %v692, %v676
          %v709 = vadd.f32 %v693, %v677
          %v710 = vadd.f32 %v694, %v678
          %v711 = vadd.f32 %v695, %v679
          %v712 = vadd.f32 %v696, %v680
          %v713 = vadd.f32 %v697, %v681
          %v714 = vadd.f32 %v698, %v682
          %v715 = vadd.f32 %v699, %v683
          %v716 = vadd.f32 %v700, %v684
          %v717 = vadd.f32 %v701, %v685
          %v718 = vadd.f32 %v702, %v686
          %v719 = vadd.f32 %v703, %v687
          %v720 = vadd.f32 %v704, %v688
          %v721 = vadd.f32 %v705, %v689
          %722 = vst [vmem:[%s373] sm:$0xff] %v706
          %723 = vst [vmem:[%s373 + $0x8] sm:$0xff] %v707
          %724 = vst [vmem:[%s373 + $0x10] sm:$0xff] %v708
          %725 = vst [vmem:[%s373 + $0x18] sm:$0xff] %v709
          %726 = vst [vmem:[%s373 + $0x20] sm:$0xff] %v710
          %727 = vst [vmem:[%s373 + $0x28] sm:$0xff] %v711
          %728 = vst [vmem:[%s373 + $0x30] sm:$0xff] %v712
          %729 = vst [vmem:[%s373 + $0x38] sm:$0xff] %v713
          %730 = vst [vmem:[%s373 + $0x40] sm:$0xff] %v714
          %731 = vst [vmem:[%s373 + $0x48] sm:$0xff] %v715
          %732 = vst [vmem:[%s373 + $0x50] sm:$0xff] %v716
          %733 = vst [vmem:[%s373 + $0x58] sm:$0xff] %v717
          %734 = vst [vmem:[%s373 + $0x60] sm:$0xff] %v718
          %735 = vst [vmem:[%s373 + $0x68] sm:$0xff] %v719
          %736 = vst [vmem:[%s373 + $0x70] sm:$0xff] %v720
          %737 = vst [vmem:[%s373 + $0x78] sm:$0xff] %v721
          %v738 = vpack.c.bf16 %v675, %v674
          %v739 = vpack.c.bf16 %v677, %v676
          %v740 = vpack.c.bf16 %v679, %v678
          %v741 = vpack.c.bf16 %v681, %v680
          %v742 = vpack.c.bf16 %v683, %v682
          %v743 = vpack.c.bf16 %v685, %v684
          %v744 = vpack.c.bf16 %v687, %v686
          %v745 = vpack.c.bf16 %v689, %v688
          %v754 = vunpack.c.l.b16 %v738
          %v755 = vunpack.c.h.b16 %v738
          %v756 = vunpack.c.l.b16 %v739
          %v757 = vunpack.c.h.b16 %v739
          %v758 = vunpack.c.l.b16 %v740
          %v759 = vunpack.c.h.b16 %v740
          %v760 = vunpack.c.l.b16 %v741
          %v761 = vunpack.c.h.b16 %v741
          %v762 = vunpack.c.l.b16 %v742
          %v763 = vunpack.c.h.b16 %v742
          %v764 = vunpack.c.l.b16 %v743
          %v765 = vunpack.c.h.b16 %v743
          %v766 = vunpack.c.l.b16 %v744
          %v767 = vunpack.c.h.b16 %v744
          %v768 = vunpack.c.l.b16 %v745
          %v769 = vunpack.c.h.b16 %v745
          %v770 = vpack.c.b16 %v754, %v754
          %v771 = vpack.c.b16 %v755, %v755
          %v772 = vpack.c.b16 %v756, %v756
          %v773 = vpack.c.b16 %v757, %v757
          %v774 = vpack.c.b16 %v758, %v758
          %v775 = vpack.c.b16 %v759, %v759
          %v776 = vpack.c.b16 %v760, %v760
          %v777 = vpack.c.b16 %v761, %v761
          %v778 = vpack.c.b16 %v762, %v762
          %v779 = vpack.c.b16 %v763, %v763
          %v780 = vpack.c.b16 %v764, %v764
          %v781 = vpack.c.b16 %v765, %v765
          %v782 = vpack.c.b16 %v766, %v766
          %v783 = vpack.c.b16 %v767, %v767
          %v784 = vpack.c.b16 %v768, %v768
          %v785 = vpack.c.b16 %v769, %v769
          %802 = vst [vmem:[%s355] sm:$0xf] %v770
          %803 = vst [vmem:[%s355 + $0x4] sm:$0xf] %v771
          %804 = vst [vmem:[%s355 + $0x8] sm:$0xf] %v772
          %805 = vst [vmem:[%s355 + $0xc] sm:$0xf] %v773
          %806 = vst [vmem:[%s355 + $0x10] sm:$0xf] %v774
          %807 = vst [vmem:[%s355 + $0x14] sm:$0xf] %v775
          %808 = vst [vmem:[%s355 + $0x18] sm:$0xf] %v776
          %809 = vst [vmem:[%s355 + $0x1c] sm:$0xf] %v777
          %810 = vst [vmem:[%s355 + $0x20] sm:$0xf] %v778
          %811 = vst [vmem:[%s355 + $0x24] sm:$0xf] %v779
          %812 = vst [vmem:[%s355 + $0x28] sm:$0xf] %v780
          %813 = vst [vmem:[%s355 + $0x2c] sm:$0xf] %v781
          %814 = vst [vmem:[%s355 + $0x30] sm:$0xf] %v782
          %815 = vst [vmem:[%s355 + $0x34] sm:$0xf] %v783
          %816 = vst [vmem:[%s355 + $0x38] sm:$0xf] %v784
          %817 = vst [vmem:[%s355 + $0x3c] sm:$0xf] %v785
        $region81: #{cikgrec_forward.4} parent=68 // pred_fallthru
          _
        %s818 = smul.u32 16, %s23
        %p819 = scmp.lt.s32.totalorder %s818, 31
        %s820 = scalar_select %p819, %s818, 31
        %s821 = smul.addr %s820, 8
        %s822 = scalar_lea.vmem %s3, %s821
        %s823 = sand.u32 %s145, 1
        %s824 = scalar_lea.sflag [#allocation5], %s823
        %s825 = sand.u32 %s145, 1
        %s826 = smul.addr %s825, 64
        %s827 = scalar_lea.vmem [#allocation4], %s826
        // Predicated region
        $region82: #{cikgrec_forward.4} parent=68 // pred_check
          %p828 = pneg %p129
        $region83: #{cikgrec_forward.4} parent=68 // pred_check_branch
          %830 = sbr.rel (%p828) target = $region85
        $region84: #{cikgrec_forward.4} parent=68 // pred_region
          %s831 = smul.u32 16, %s23
        $region85: #{cikgrec_forward.4} parent=68 // pred_fallthru
          _
        // Predicated region
        $region86: #{cikgrec_forward.4} parent=68 // pred_check
          %p832 = pneg %p155
        $region87: #{cikgrec_forward.4} parent=68 // pred_check_branch
          %834 = sbr.rel (%p832) target = $region89
        $region88: #{cikgrec_forward.4} parent=68 // pred_region
          %s835 = smul.u32 16, %s23
          %s837 = ssub.s32 1024, 1024
          %838 = vsyncadd %s824, %s837
          %s839 = smul.addr %s835, 64
          %s840 = scalar_lea.hbm %s4, %s839
          %s841 = sshll.u32 %s827, 4
          %s842 = int_to_ptr.vmem [resolvable:$true] %s841
          %847 = dma.vmem_to_hbm [thread:$0]  %s842, 1024, %s840, %s824, 64, 64, 4
        $region89: #{cikgrec_forward.4} parent=68 // pred_fallthru
          _
      $region69: #{cikgrec_forward.4} parent=5 // pred_fallthru
        _
      %p848 = scmp.le.s32.totalorder 2, %s14
      // Predicated region
      $region90: #{cikgrec_forward.4} parent=5 // pred_check
        %p849 = pneg %p848
      $region91: #{cikgrec_forward.4} parent=5 // pred_check_branch
        %851 = sbr.rel (%p849) target = $region93
      $region92: #{cikgrec_forward.4} parent=5 // pred_region
        %s852 = ssub.s32 %s14, 2
        // Predicated region
        $region94: #{cikgrec_forward.4} parent=92 // pred_check
          %p853 = pneg %p135
        $region95: #{cikgrec_forward.4} parent=92 // pred_check_branch
          %855 = sbr.rel (%p853) target = $region97
        $region96: #{cikgrec_forward.4} parent=92 // pred_region
          %s856 = smul.u32 16, %s25
          %p857 = scmp.lt.s32.totalorder %s856, 31
          %s858 = scalar_select %p857, %s856, 31
          %s859 = smul.addr %s858, 8
          %s860 = scalar_lea.vmem %s3, %s859
        $region97: #{cikgrec_forward.4} parent=92 // pred_fallthru
          _
        // Predicated region
        $region98: #{cikgrec_forward.4} parent=92 // pred_check
          %p861 = pneg %p161
        $region99: #{cikgrec_forward.4} parent=92 // pred_check_branch
          %863 = sbr.rel (%p861) target = $region101
        $region100: #{cikgrec_forward.4} parent=92 // pred_region
          %s864 = sand.u32 %s146, 1
          %s865 = scalar_lea.sflag [#allocation5], %s864
          %s866 = sand.u32 %s146, 1
          %s867 = smul.addr %s866, 64
          %s868 = scalar_lea.vmem [#allocation4], %s867
          %869 = dma.done %s865, 1024
        $region101: #{cikgrec_forward.4} parent=92 // pred_fallthru
          _
      $region93: #{cikgrec_forward.4} parent=5 // pred_fallthru
        _
    $region6: #{cikgrec_forward.4} parent=1 // loop_footer
      %s18 = sadd.s32 1, %s14
    $region7: #{cikgrec_forward.4} parent=1 // loop_footer_branch
      %13 = sbr.rel target = $region3
    $region8: #{cikgrec_forward.4} parent=1 // loop_exit
      _
    %870 = vsyncpa [#allocation5], 1
    %s871 = scalar_lea.sflag [#allocation5], 1
    %872 = vsyncpa %s871, 1

// kernel: cikgrec_forward.5
$region0: #{cikgrec_forward.5}
  #allocation0 [shape = 'u32[]', space=smem, size = 0x4, offset = 0x4, fixed_abs, tag = 'smem constant byte address 0x4 - core index']
  #allocation1 [shape = 'u32[144,128]{1,0:T(1,128)}', space=vmem, size = 0x12000, scoped, tag = 'internal scratch']
  #allocation2 [shape = 'f32[3,8,128]{2,1,0:T(8,128)}', space=vmem, size = 0x3000, scoped, tag = 'scratch operand']
  #allocation3 [shape = 'f32[3,8,128]{2,1,0:T(8,128)}', space=vmem, size = 0x3000, scoped, tag = 'scratch operand']
  #allocation4 [shape = 's32[48]{0}', space=sflag, size = 0xc0, scoped, tag = 'scratch operand']
  #allocation12 [shape = 's32[]', space=sflag, size = 0x4, offset = 0, fixed_abs, tag = 'sflag constant byte address 0x0 - dummy sync flag']
  #allocation13 [shape = 's32[]', space=sflag, size = 0x4, offset = 0, fixed_abs, tag = 'sflag constant byte address 0x0 - dummy sync flag']
  #allocation14 [shape = 's32[]', space=sflag, size = 0x4, offset = 0, fixed_abs, tag = 'sflag constant byte address 0x0 - dummy sync flag']
  #allocation15 [shape = 's32[]', space=sflag, size = 0x4, offset = 0, fixed_abs, tag = 'sflag constant byte address 0x0 - dummy sync flag']
  #allocation16 [shape = 's32[]', space=sflag, size = 0x4, offset = 0, fixed_abs, tag = 'sflag constant byte address 0x0 - dummy sync flag']
  #allocation17 [shape = 's32[]', space=sflag, size = 0x4, offset = 0, fixed_abs, tag = 'sflag constant byte address 0x0 - dummy sync flag']
  #allocation18 [shape = 's32[]', space=sflag, size = 0x4, offset = 0, fixed_abs, tag = 'sflag constant byte address 0x0 - dummy sync flag']
  #allocation19 [shape = 's32[]', space=sflag, size = 0x4, offset = 0, fixed_abs, tag = 'sflag constant byte address 0x0 - dummy sync flag']
  #allocation20 [shape = 's32[]', space=sflag, size = 0x4, offset = 0, fixed_abs, tag = 'sflag constant byte address 0x0 - dummy sync flag']
  #allocation21 [shape = 's32[]', space=sflag, size = 0x4, offset = 0, fixed_abs, tag = 'sflag constant byte address 0x0 - dummy sync flag']
  #allocation22 [shape = 's32[]', space=sflag, size = 0x4, offset = 0, fixed_abs, tag = 'sflag constant byte address 0x0 - dummy sync flag']
  #allocation23 [shape = 's32[]', space=sflag, size = 0x4, offset = 0, fixed_abs, tag = 'sflag constant byte address 0x0 - dummy sync flag']
  #allocation24 [shape = 's32[]', space=sflag, size = 0x4, offset = 0, fixed_abs, tag = 'sflag constant byte address 0x0 - dummy sync flag']
  #allocation25 [shape = 's32[]', space=sflag, size = 0x4, offset = 0, fixed_abs, tag = 'sflag constant byte address 0x0 - dummy sync flag']
  #allocation26 [shape = 's32[]', space=sflag, size = 0x4, offset = 0, fixed_abs, tag = 'sflag constant byte address 0x0 - dummy sync flag']
  #allocation27 [shape = 's32[]', space=sflag, size = 0x4, offset = 0, fixed_abs, tag = 'sflag constant byte address 0x0 - dummy sync flag']
  #allocation28 [shape = 's32[]', space=sflag, size = 0x4, offset = 0, fixed_abs, tag = 'sflag constant byte address 0x0 - dummy sync flag']
  #allocation29 [shape = 's32[]', space=sflag, size = 0x4, offset = 0, fixed_abs, tag = 'sflag constant byte address 0x0 - dummy sync flag']
  #allocation30 [shape = 's32[]', space=sflag, size = 0x4, offset = 0, fixed_abs, tag = 'sflag constant byte address 0x0 - dummy sync flag']
  #allocation31 [shape = 's32[]', space=sflag, size = 0x4, offset = 0, fixed_abs, tag = 'sflag constant byte address 0x0 - dummy sync flag']
  #allocation32 [shape = 's32[]', space=sflag, size = 0x4, offset = 0, fixed_abs, tag = 'sflag constant byte address 0x0 - dummy sync flag']
  #allocation33 [shape = 's32[]', space=sflag, size = 0x4, offset = 0, fixed_abs, tag = 'sflag constant byte address 0x0 - dummy sync flag']
  #allocation34 [shape = 's32[]', space=sflag, size = 0x4, offset = 0, fixed_abs, tag = 'sflag constant byte address 0x0 - dummy sync flag']
  #allocation35 [shape = 's32[]', space=sflag, size = 0x4, offset = 0, fixed_abs, tag = 'sflag constant byte address 0x0 - dummy sync flag']
  #allocation36 [shape = 's32[]', space=sflag, size = 0x4, offset = 0, fixed_abs, tag = 'sflag constant byte address 0x0 - dummy sync flag']
  #allocation37 [shape = 's32[]', space=sflag, size = 0x4, offset = 0, fixed_abs, tag = 'sflag constant byte address 0x0 - dummy sync flag']
  #allocation38 [shape = 's32[]', space=sflag, size = 0x4, offset = 0, fixed_abs, tag = 'sflag constant byte address 0x0 - dummy sync flag']
  #allocation39 [shape = 's32[]', space=sflag, size = 0x4, offset = 0, fixed_abs, tag = 'sflag constant byte address 0x0 - dummy sync flag']
  #allocation40 [shape = 's32[]', space=sflag, size = 0x4, offset = 0, fixed_abs, tag = 'sflag constant byte address 0x0 - dummy sync flag']
  #allocation41 [shape = 's32[]', space=sflag, size = 0x4, offset = 0, fixed_abs, tag = 'sflag constant byte address 0x0 - dummy sync flag']
  #allocation42 [shape = 's32[]', space=sflag, size = 0x4, offset = 0, fixed_abs, tag = 'sflag constant byte address 0x0 - dummy sync flag']
  #allocation43 [shape = 's32[]', space=sflag, size = 0x4, offset = 0, fixed_abs, tag = 'sflag constant byte address 0x0 - dummy sync flag']
  #allocation44 [shape = 's32[]', space=sflag, size = 0x4, offset = 0, fixed_abs, tag = 'sflag constant byte address 0x0 - dummy sync flag']
  #allocation45 [shape = 's32[]', space=sflag, size = 0x4, offset = 0, fixed_abs, tag = 'sflag constant byte address 0x0 - dummy sync flag']
  #allocation46 [shape = 's32[]', space=sflag, size = 0x4, offset = 0, fixed_abs, tag = 'sflag constant byte address 0x0 - dummy sync flag']
  #allocation47 [shape = 's32[]', space=sflag, size = 0x4, offset = 0, fixed_abs, tag = 'sflag constant byte address 0x0 - dummy sync flag']
  #allocation48 [shape = 's32[]', space=sflag, size = 0x4, offset = 0, fixed_abs, tag = 'sflag constant byte address 0x0 - dummy sync flag']
  #allocation49 [shape = 's32[]', space=sflag, size = 0x4, offset = 0, fixed_abs, tag = 'sflag constant byte address 0x0 - dummy sync flag']
  #allocation50 [shape = 's32[]', space=sflag, size = 0x4, offset = 0, fixed_abs, tag = 'sflag constant byte address 0x0 - dummy sync flag']
  #allocation51 [shape = 's32[]', space=sflag, size = 0x4, offset = 0, fixed_abs, tag = 'sflag constant byte address 0x0 - dummy sync flag']
  #allocation52 [shape = 's32[]', space=sflag, size = 0x4, offset = 0, fixed_abs, tag = 'sflag constant byte address 0x0 - dummy sync flag']
  #allocation53 [shape = 's32[]', space=sflag, size = 0x4, offset = 0, fixed_abs, tag = 'sflag constant byte address 0x0 - dummy sync flag']
  #allocation54 [shape = 's32[]', space=sflag, size = 0x4, offset = 0, fixed_abs, tag = 'sflag constant byte address 0x0 - dummy sync flag']
  #allocation55 [shape = 's32[]', space=sflag, size = 0x4, offset = 0, fixed_abs, tag = 'sflag constant byte address 0x0 - dummy sync flag']
  #allocation56 [shape = 's32[]', space=sflag, size = 0x4, offset = 0, fixed_abs, tag = 'sflag constant byte address 0x0 - dummy sync flag']
  #allocation57 [shape = 's32[]', space=sflag, size = 0x4, offset = 0, fixed_abs, tag = 'sflag constant byte address 0x0 - dummy sync flag']
  #allocation58 [shape = 's32[]', space=sflag, size = 0x4, offset = 0, fixed_abs, tag = 'sflag constant byte address 0x0 - dummy sync flag']
  #allocation59 [shape = 's32[]', space=sflag, size = 0x4, offset = 0, fixed_abs, tag = 'sflag constant byte address 0x0 - dummy sync flag']
  %s0 = inlined_call_operand.vmem [shape: s32[8], index: 0, kind: input, shape index: {}]
  %s1 = inlined_call_operand.vmem [shape: s32[8], index: 1, kind: input, shape index: {}]
  %s2 = inlined_call_operand.vmem [shape: s32[8], index: 2, kind: input, shape index: {}]
  %s3 = inlined_call_operand.vmem [shape: f32[256,128], index: 3, kind: input, shape index: {}]
  %s4 = inlined_call_operand.vmem [shape: f32[256,128], index: 4, kind: input, shape index: {}]
  %s5 = inlined_call_operand.hbm [shape: f32[1,1], index: 5, kind: output, shape index: {}]
  %s6 = sld [smem:[#allocation0]]
  $region1474: #{cikgrec_forward.5} parent=0
    _
  %s8 = ssub.s32 1, %s6
  %s9 = scalar_select 0, %s8, %s6
  $region1: #{cikgrec_forward.5} parent=0
    #allocation5 [shape = 'u8[512]{0}', space=smem, size = 0x200, scoped, tag = 'input window, operand 0, single buffered']
    #allocation6 [shape = 's32[1]{0}', space=sflag, size = 0x4, scoped, tag = 'scoped memory for cikgrec_forward.5']
    #allocation7 [shape = 's32[1]{0}', space=sflag, size = 0x4, scoped, tag = 'scoped memory for cikgrec_forward.5']
    #allocation8 [shape = 'u8[512]{0}', space=smem, size = 0x200, scoped, tag = 'input window, operand 1, single buffered']
    #allocation9 [shape = 's32[1]{0}', space=sflag, size = 0x4, scoped, tag = 'scoped memory for cikgrec_forward.5']
    #allocation10 [shape = 'u8[512]{0}', space=smem, size = 0x200, scoped, tag = 'input window, operand 2, single buffered']
    #allocation11 [shape = 'u8[512]{0}', space=vmem, size = 0x400, scoped, tag = 'output window, operand 0, single buffered']
    %10 = vsyncpa [#allocation7], 0
    %11 = vsyncpa [#allocation9], 0
    %12 = vsyncpa [#allocation6], 0
    // Predicated region
    $region2: #{cikgrec_forward.5} parent=1 // pred_check
      _
    $region3: #{cikgrec_forward.5} parent=1 // pred_check_branch
      %14 = sbr.rel (0) target = $region5
    $region4: #{cikgrec_forward.5} parent=1 // pred_region
      %s16 = ssub.s32 16, 16
      %17 = vsyncadd [#allocation7], %s16
      %s19 = sshll.u32 %s0, 4
      %s20 = int_to_ptr.vmem [resolvable:$true] %s19
      %22 = dma.vmem_to_smem %s20, 16, [#allocation5], [#allocation7]
    $region5: #{cikgrec_forward.5} parent=1 // pred_fallthru
      _
    // Predicated region
    $region6: #{cikgrec_forward.5} parent=1 // pred_check
      _
    $region7: #{cikgrec_forward.5} parent=1 // pred_check_branch
      %24 = sbr.rel (0) target = $region9
    $region8: #{cikgrec_forward.5} parent=1 // pred_region
      %s26 = ssub.s32 16, 16
      %27 = vsyncadd [#allocation9], %s26
      %s29 = sshll.u32 %s1, 4
      %s30 = int_to_ptr.vmem [resolvable:$true] %s29
      %32 = dma.vmem_to_smem %s30, 16, [#allocation8], [#allocation9]
    $region9: #{cikgrec_forward.5} parent=1 // pred_fallthru
      _
    // Predicated region
    $region10: #{cikgrec_forward.5} parent=1 // pred_check
      _
    $region11: #{cikgrec_forward.5} parent=1 // pred_check_branch
      %34 = sbr.rel (0) target = $region13
    $region12: #{cikgrec_forward.5} parent=1 // pred_region
      %s36 = ssub.s32 16, 16
      %37 = vsyncadd [#allocation9], %s36
      %s39 = sshll.u32 %s2, 4
      %s40 = int_to_ptr.vmem [resolvable:$true] %s39
      %42 = dma.vmem_to_smem %s40, 16, [#allocation10], [#allocation9]
    $region13: #{cikgrec_forward.5} parent=1 // pred_fallthru
      _
    // Predicated region
    $region14: #{cikgrec_forward.5} parent=1 // pred_check
      _
    $region15: #{cikgrec_forward.5} parent=1 // pred_check_branch
      %44 = sbr.rel (0) target = $region17
    $region16: #{cikgrec_forward.5} parent=1 // pred_region
      %45 = dma.done [#allocation7], 16
    $region17: #{cikgrec_forward.5} parent=1 // pred_fallthru
      _
    // Predicated region
    $region18: #{cikgrec_forward.5} parent=1 // pred_check
      _
    $region19: #{cikgrec_forward.5} parent=1 // pred_check_branch
      %47 = sbr.rel (0) target = $region21
    $region20: #{cikgrec_forward.5} parent=1 // pred_region
      %48 = dma.done [#allocation9], 16
    $region21: #{cikgrec_forward.5} parent=1 // pred_fallthru
      _
    // Predicated region
    $region22: #{cikgrec_forward.5} parent=1 // pred_check
      _
    $region23: #{cikgrec_forward.5} parent=1 // pred_check_branch
      %50 = sbr.rel (0) target = $region25
    $region24: #{cikgrec_forward.5} parent=1 // pred_region
      %51 = dma.done [#allocation9], 16
    $region25: #{cikgrec_forward.5} parent=1 // pred_fallthru
      _
    %52 = sfence
    %s53 = sld [smem:[#allocation5]]
    %s54 = scalar_lea.vmem %s3, %s53
    %p56 = scmp.lt.u32.totalorder 1, 8
    %p57 = pneg %p56
    // Predicated region
    $region26: #{cikgrec_forward.5} parent=1 // pred_check
      _
    $region27: #{cikgrec_forward.5} parent=1 // pred_check_branch
      %59 = sbr.rel (%p56) target = $region29
    $region28: #{cikgrec_forward.5} parent=1 // pred_region
      %s75 = sand.u32 1, 7
      %p76 = scmp.eq.s32.totalorder %s75, 0
      %p77 = pneg %p76
      // Predicated region
      $region41: #{cikgrec_forward.5} parent=28 // pred_check
        _
      $region42: #{cikgrec_forward.5} parent=28 // pred_check_branch
        %79 = sbr.rel (%p76) target = $region44
      $region43: #{cikgrec_forward.5} parent=28 // pred_region
        %s80 = sand.u32 1, 7
        %s81 = ssub.s32 1, %s80
        %s82 = scalar_lea.vmem %s54, %s81
        %s83 = ssub.s32 1, %s80
        %s84 = scalar_lea.vmem [#allocation2], %s83
        %s85 = sshll.u32 1, %s80
        %s86 = ssub.s32 %s85, 1
        loop: start=0, step=1, limit=1
        $region45: #{cikgrec_forward.5} parent=43 // loop_pre_header
          _
        $region46: #{cikgrec_forward.5} parent=43 // loop_header
          %s88 = sphi 0, %s92
          %p89 = scmp.ge.s32.totalorder %s88, 1
          %s93 = sphi %s82, %s82
          %s94 = sphi %s84, %s84
        $region47: #{cikgrec_forward.5} parent=43 // loop_header_branch
          %91 = sbr.rel (%p89) target = $region51
        $region48: #{cikgrec_forward.5} parent=43 // loop_body
          %v95 = vld [vmem:[%s93] sm:%s86]
          %96 = vst [vmem:[%s94] sm:%s86] %v95
        $region49: #{cikgrec_forward.5} parent=43 // loop_footer
          %s92 = sadd.s32 1, %s88
        $region50: #{cikgrec_forward.5} parent=43 // loop_footer_branch
          %87 = sbr.rel target = $region46
        $region51: #{cikgrec_forward.5} parent=43 // loop_exit
          _
      $region44: #{cikgrec_forward.5} parent=28 // pred_fallthru
        _
    $region29: #{cikgrec_forward.5} parent=1 // pred_fallthru
      _
    // Predicated region
    $region30: #{cikgrec_forward.5} parent=1 // pred_check
      %p60 = pneg %p56
    $region31: #{cikgrec_forward.5} parent=1 // pred_check_branch
      %62 = sbr.rel (%p60) target = $region33
    $region32: #{cikgrec_forward.5} parent=1 // pred_region
      %s63 = sshll.u32 1, 1
      %s64 = ssub.s32 %s63, 1
      loop: start=0, step=1, limit=1
      $region34: #{cikgrec_forward.5} parent=32 // loop_pre_header
        _
      $region35: #{cikgrec_forward.5} parent=32 // loop_header
        %s66 = sphi 0, %s70
        %p67 = scmp.ge.s32.totalorder %s66, 1
        %s71 = sphi %s54, %s54
        %s72 = sphi [#allocation2], [#allocation2]
      $region36: #{cikgrec_forward.5} parent=32 // loop_header_branch
        %69 = sbr.rel (%p67) target = $region40
      $region37: #{cikgrec_forward.5} parent=32 // loop_body
        %v73 = vld [vmem:[%s71] sm:%s64]
        %74 = vst [vmem:[%s72] sm:%s64] %v73
      $region38: #{cikgrec_forward.5} parent=32 // loop_footer
        %s70 = sadd.s32 1, %s66
      $region39: #{cikgrec_forward.5} parent=32 // loop_footer_branch
        %65 = sbr.rel target = $region35
      $region40: #{cikgrec_forward.5} parent=32 // loop_exit
        _
    $region33: #{cikgrec_forward.5} parent=1 // pred_fallthru
      _
    // Predicated region
    $region52: #{cikgrec_forward.5} parent=1 // pred_check
      _
    $region53: #{cikgrec_forward.5} parent=1 // pred_check_branch
      %99 = sbr.rel (0) target = $region55
    $region54: #{cikgrec_forward.5} parent=1 // pred_region
      %100 = vsyncadd [#allocation4], 16
    $region55: #{cikgrec_forward.5} parent=1 // pred_fallthru
      _
    %s101 = scalar_lea.vmem %s4, %s53
    %s102 = scalar_lea.sflag [#allocation4], 24
    %p104 = scmp.lt.u32.totalorder 1, 8
    %p105 = pneg %p104
    // Predicated region
    $region56: #{cikgrec_forward.5} parent=1 // pred_check
      _
    $region57: #{cikgrec_forward.5} parent=1 // pred_check_branch
      %107 = sbr.rel (%p104) target = $region59
    $region58: #{cikgrec_forward.5} parent=1 // pred_region
      %s123 = sand.u32 1, 7
      %p124 = scmp.eq.s32.totalorder %s123, 0
      %p125 = pneg %p124
      // Predicated region
      $region71: #{cikgrec_forward.5} parent=58 // pred_check
        _
      $region72: #{cikgrec_forward.5} parent=58 // pred_check_branch
        %127 = sbr.rel (%p124) target = $region74
      $region73: #{cikgrec_forward.5} parent=58 // pred_region
        %s128 = sand.u32 1, 7
        %s129 = ssub.s32 1, %s128
        %s130 = scalar_lea.vmem %s101, %s129
        %s131 = ssub.s32 1, %s128
        %s132 = scalar_lea.vmem [#allocation3], %s131
        %s133 = sshll.u32 1, %s128
        %s134 = ssub.s32 %s133, 1
        loop: start=0, step=1, limit=1
        $region75: #{cikgrec_forward.5} parent=73 // loop_pre_header
          _
        $region76: #{cikgrec_forward.5} parent=73 // loop_header
          %s136 = sphi 0, %s140
          %p137 = scmp.ge.s32.totalorder %s136, 1
          %s141 = sphi %s130, %s130
          %s142 = sphi %s132, %s132
        $region77: #{cikgrec_forward.5} parent=73 // loop_header_branch
          %139 = sbr.rel (%p137) target = $region81
        $region78: #{cikgrec_forward.5} parent=73 // loop_body
          %v143 = vld [vmem:[%s141] sm:%s134]
          %144 = vst [vmem:[%s142] sm:%s134] %v143
        $region79: #{cikgrec_forward.5} parent=73 // loop_footer
          %s140 = sadd.s32 1, %s136
        $region80: #{cikgrec_forward.5} parent=73 // loop_footer_branch
          %135 = sbr.rel target = $region76
        $region81: #{cikgrec_forward.5} parent=73 // loop_exit
          _
      $region74: #{cikgrec_forward.5} parent=58 // pred_fallthru
        _
    $region59: #{cikgrec_forward.5} parent=1 // pred_fallthru
      _
    // Predicated region
    $region60: #{cikgrec_forward.5} parent=1 // pred_check
      %p108 = pneg %p104
    $region61: #{cikgrec_forward.5} parent=1 // pred_check_branch
      %110 = sbr.rel (%p108) target = $region63
    $region62: #{cikgrec_forward.5} parent=1 // pred_region
      %s111 = sshll.u32 1, 1
      %s112 = ssub.s32 %s111, 1
      loop: start=0, step=1, limit=1
      $region64: #{cikgrec_forward.5} parent=62 // loop_pre_header
        _
      $region65: #{cikgrec_forward.5} parent=62 // loop_header
        %s114 = sphi 0, %s118
        %p115 = scmp.ge.s32.totalorder %s114, 1
        %s119 = sphi %s101, %s101
        %s120 = sphi [#allocation3], [#allocation3]
      $region66: #{cikgrec_forward.5} parent=62 // loop_header_branch
        %117 = sbr.rel (%p115) target = $region70
      $region67: #{cikgrec_forward.5} parent=62 // loop_body
        %v121 = vld [vmem:[%s119] sm:%s112]
        %122 = vst [vmem:[%s120] sm:%s112] %v121
      $region68: #{cikgrec_forward.5} parent=62 // loop_footer
        %s118 = sadd.s32 1, %s114
      $region69: #{cikgrec_forward.5} parent=62 // loop_footer_branch
        %113 = sbr.rel target = $region65
      $region70: #{cikgrec_forward.5} parent=62 // loop_exit
        _
    $region63: #{cikgrec_forward.5} parent=1 // pred_fallthru
      _
    // Predicated region
    $region82: #{cikgrec_forward.5} parent=1 // pred_check
      _
    $region83: #{cikgrec_forward.5} parent=1 // pred_check_branch
      %147 = sbr.rel (0) target = $region85
    $region84: #{cikgrec_forward.5} parent=1 // pred_region
      %148 = vsyncadd %s102, 16
    $region85: #{cikgrec_forward.5} parent=1 // pred_fallthru
      _
    %s149 = sld [smem:[#allocation5 + $0x1]]
    %s150 = scalar_lea.vmem %s3, %s149
    %s151 = scalar_lea.vmem [#allocation2], 1
    %s152 = scalar_lea.sflag [#allocation4], 1
    %p154 = scmp.lt.u32.totalorder 1, 8
    %p155 = pneg %p154
    // Predicated region
    $region86: #{cikgrec_forward.5} parent=1 // pred_check
      _
    $region87: #{cikgrec_forward.5} parent=1 // pred_check_branch
      %157 = sbr.rel (%p154) target = $region89
    $region88: #{cikgrec_forward.5} parent=1 // pred_region
      %s173 = sand.u32 1, 7
      %p174 = scmp.eq.s32.totalorder %s173, 0
      %p175 = pneg %p174
      // Predicated region
      $region101: #{cikgrec_forward.5} parent=88 // pred_check
        _
      $region102: #{cikgrec_forward.5} parent=88 // pred_check_branch
        %177 = sbr.rel (%p174) target = $region104
      $region103: #{cikgrec_forward.5} parent=88 // pred_region
        %s178 = sand.u32 1, 7
        %s179 = ssub.s32 1, %s178
        %s180 = scalar_lea.vmem %s150, %s179
        %s181 = ssub.s32 1, %s178
        %s182 = scalar_lea.vmem %s151, %s181 [#allocation2]
        %s183 = sshll.u32 1, %s178
        %s184 = ssub.s32 %s183, 1
        loop: start=0, step=1, limit=1
        $region105: #{cikgrec_forward.5} parent=103 // loop_pre_header
          _
        $region106: #{cikgrec_forward.5} parent=103 // loop_header
          %s186 = sphi 0, %s190
          %p187 = scmp.ge.s32.totalorder %s186, 1
          %s191 = sphi %s180, %s180
          %s192 = sphi %s182, %s182
        $region107: #{cikgrec_forward.5} parent=103 // loop_header_branch
          %189 = sbr.rel (%p187) target = $region111
        $region108: #{cikgrec_forward.5} parent=103 // loop_body
          %v193 = vld [vmem:[%s191] sm:%s184]
          %194 = vst [vmem:[%s192] sm:%s184] %v193
        $region109: #{cikgrec_forward.5} parent=103 // loop_footer
          %s190 = sadd.s32 1, %s186
        $region110: #{cikgrec_forward.5} parent=103 // loop_footer_branch
          %185 = sbr.rel target = $region106
        $region111: #{cikgrec_forward.5} parent=103 // loop_exit
          _
      $region104: #{cikgrec_forward.5} parent=88 // pred_fallthru
        _
    $region89: #{cikgrec_forward.5} parent=1 // pred_fallthru
      _
    // Predicated region
    $region90: #{cikgrec_forward.5} parent=1 // pred_check
      %p158 = pneg %p154
    $region91: #{cikgrec_forward.5} parent=1 // pred_check_branch
      %160 = sbr.rel (%p158) target = $region93
    $region92: #{cikgrec_forward.5} parent=1 // pred_region
      %s161 = sshll.u32 1, 1
      %s162 = ssub.s32 %s161, 1
      loop: start=0, step=1, limit=1
      $region94: #{cikgrec_forward.5} parent=92 // loop_pre_header
        _
      $region95: #{cikgrec_forward.5} parent=92 // loop_header
        %s164 = sphi 0, %s168
        %p165 = scmp.ge.s32.totalorder %s164, 1
        %s169 = sphi %s150, %s150
        %s170 = sphi %s151, %s151
      $region96: #{cikgrec_forward.5} parent=92 // loop_header_branch
        %167 = sbr.rel (%p165) target = $region100
      $region97: #{cikgrec_forward.5} parent=92 // loop_body
        %v171 = vld [vmem:[%s169] sm:%s162]
        %172 = vst [vmem:[%s170] sm:%s162] %v171
      $region98: #{cikgrec_forward.5} parent=92 // loop_footer
        %s168 = sadd.s32 1, %s164
      $region99: #{cikgrec_forward.5} parent=92 // loop_footer_branch
        %163 = sbr.rel target = $region95
      $region100: #{cikgrec_forward.5} parent=92 // loop_exit
        _
    $region93: #{cikgrec_forward.5} parent=1 // pred_fallthru
      _
    // Predicated region
    $region112: #{cikgrec_forward.5} parent=1 // pred_check
      _
    $region113: #{cikgrec_forward.5} parent=1 // pred_check_branch
      %197 = sbr.rel (0) target = $region115
    $region114: #{cikgrec_forward.5} parent=1 // pred_region
      %198 = vsyncadd %s152, 16
    $region115: #{cikgrec_forward.5} parent=1 // pred_fallthru
      _
    %s199 = scalar_lea.vmem %s4, %s149
    %s200 = scalar_lea.vmem [#allocation3], 1
    %s201 = scalar_lea.sflag [#allocation4], 25
    %p203 = scmp.lt.u32.totalorder 1, 8
    %p204 = pneg %p203
    // Predicated region
    $region116: #{cikgrec_forward.5} parent=1 // pred_check
      _
    $region117: #{cikgrec_forward.5} parent=1 // pred_check_branch
      %206 = sbr.rel (%p203) target = $region119
    $region118: #{cikgrec_forward.5} parent=1 // pred_region
      %s222 = sand.u32 1, 7
      %p223 = scmp.eq.s32.totalorder %s222, 0
      %p224 = pneg %p223
      // Predicated region
      $region131: #{cikgrec_forward.5} parent=118 // pred_check
        _
      $region132: #{cikgrec_forward.5} parent=118 // pred_check_branch
        %226 = sbr.rel (%p223) target = $region134
      $region133: #{cikgrec_forward.5} parent=118 // pred_region
        %s227 = sand.u32 1, 7
        %s228 = ssub.s32 1, %s227
        %s229 = scalar_lea.vmem %s199, %s228
        %s230 = ssub.s32 1, %s227
        %s231 = scalar_lea.vmem %s200, %s230 [#allocation3]
        %s232 = sshll.u32 1, %s227
        %s233 = ssub.s32 %s232, 1
        loop: start=0, step=1, limit=1
        $region135: #{cikgrec_forward.5} parent=133 // loop_pre_header
          _
        $region136: #{cikgrec_forward.5} parent=133 // loop_header
          %s235 = sphi 0, %s239
          %p236 = scmp.ge.s32.totalorder %s235, 1
          %s240 = sphi %s229, %s229
          %s241 = sphi %s231, %s231
        $region137: #{cikgrec_forward.5} parent=133 // loop_header_branch
          %238 = sbr.rel (%p236) target = $region141
        $region138: #{cikgrec_forward.5} parent=133 // loop_body
          %v242 = vld [vmem:[%s240] sm:%s233]
          %243 = vst [vmem:[%s241] sm:%s233] %v242
        $region139: #{cikgrec_forward.5} parent=133 // loop_footer
          %s239 = sadd.s32 1, %s235
        $region140: #{cikgrec_forward.5} parent=133 // loop_footer_branch
          %234 = sbr.rel target = $region136
        $region141: #{cikgrec_forward.5} parent=133 // loop_exit
          _
      $region134: #{cikgrec_forward.5} parent=118 // pred_fallthru
        _
    $region119: #{cikgrec_forward.5} parent=1 // pred_fallthru
      _
    // Predicated region
    $region120: #{cikgrec_forward.5} parent=1 // pred_check
      %p207 = pneg %p203
    $region121: #{cikgrec_forward.5} parent=1 // pred_check_branch
      %209 = sbr.rel (%p207) target = $region123
    $region122: #{cikgrec_forward.5} parent=1 // pred_region
      %s210 = sshll.u32 1, 1
      %s211 = ssub.s32 %s210, 1
      loop: start=0, step=1, limit=1
      $region124: #{cikgrec_forward.5} parent=122 // loop_pre_header
        _
      $region125: #{cikgrec_forward.5} parent=122 // loop_header
        %s213 = sphi 0, %s217
        %p214 = scmp.ge.s32.totalorder %s213, 1
        %s218 = sphi %s199, %s199
        %s219 = sphi %s200, %s200
      $region126: #{cikgrec_forward.5} parent=122 // loop_header_branch
        %216 = sbr.rel (%p214) target = $region130
      $region127: #{cikgrec_forward.5} parent=122 // loop_body
        %v220 = vld [vmem:[%s218] sm:%s211]
        %221 = vst [vmem:[%s219] sm:%s211] %v220
      $region128: #{cikgrec_forward.5} parent=122 // loop_footer
        %s217 = sadd.s32 1, %s213
      $region129: #{cikgrec_forward.5} parent=122 // loop_footer_branch
        %212 = sbr.rel target = $region125
      $region130: #{cikgrec_forward.5} parent=122 // loop_exit
        _
    $region123: #{cikgrec_forward.5} parent=1 // pred_fallthru
      _
    // Predicated region
    $region142: #{cikgrec_forward.5} parent=1 // pred_check
      _
    $region143: #{cikgrec_forward.5} parent=1 // pred_check_branch
      %246 = sbr.rel (0) target = $region145
    $region144: #{cikgrec_forward.5} parent=1 // pred_region
      %247 = vsyncadd %s201, 16
    $region145: #{cikgrec_forward.5} parent=1 // pred_fallthru
      _
    %s248 = sld [smem:[#allocation5 + $0x2]]
    %s249 = scalar_lea.vmem %s3, %s248
    %s250 = scalar_lea.vmem [#allocation2], 2
    %s251 = scalar_lea.sflag [#allocation4], 2
    %p253 = scmp.lt.u32.totalorder 1, 8
    %p254 = pneg %p253
    // Predicated region
    $region146: #{cikgrec_forward.5} parent=1 // pred_check
      _
    $region147: #{cikgrec_forward.5} parent=1 // pred_check_branch
      %256 = sbr.rel (%p253) target = $region149
    $region148: #{cikgrec_forward.5} parent=1 // pred_region
      %s272 = sand.u32 1, 7
      %p273 = scmp.eq.s32.totalorder %s272, 0
      %p274 = pneg %p273
      // Predicated region
      $region161: #{cikgrec_forward.5} parent=148 // pred_check
        _
      $region162: #{cikgrec_forward.5} parent=148 // pred_check_branch
        %276 = sbr.rel (%p273) target = $region164
      $region163: #{cikgrec_forward.5} parent=148 // pred_region
        %s277 = sand.u32 1, 7
        %s278 = ssub.s32 1, %s277
        %s279 = scalar_lea.vmem %s249, %s278
        %s280 = ssub.s32 1, %s277
        %s281 = scalar_lea.vmem %s250, %s280 [#allocation2]
        %s282 = sshll.u32 1, %s277
        %s283 = ssub.s32 %s282, 1
        loop: start=0, step=1, limit=1
        $region165: #{cikgrec_forward.5} parent=163 // loop_pre_header
          _
        $region166: #{cikgrec_forward.5} parent=163 // loop_header
          %s285 = sphi 0, %s289
          %p286 = scmp.ge.s32.totalorder %s285, 1
          %s290 = sphi %s279, %s279
          %s291 = sphi %s281, %s281
        $region167: #{cikgrec_forward.5} parent=163 // loop_header_branch
          %288 = sbr.rel (%p286) target = $region171
        $region168: #{cikgrec_forward.5} parent=163 // loop_body
          %v292 = vld [vmem:[%s290] sm:%s283]
          %293 = vst [vmem:[%s291] sm:%s283] %v292
        $region169: #{cikgrec_forward.5} parent=163 // loop_footer
          %s289 = sadd.s32 1, %s285
        $region170: #{cikgrec_forward.5} parent=163 // loop_footer_branch
          %284 = sbr.rel target = $region166
        $region171: #{cikgrec_forward.5} parent=163 // loop_exit
          _
      $region164: #{cikgrec_forward.5} parent=148 // pred_fallthru
        _
    $region149: #{cikgrec_forward.5} parent=1 // pred_fallthru
      _
    // Predicated region
    $region150: #{cikgrec_forward.5} parent=1 // pred_check
      %p257 = pneg %p253
    $region151: #{cikgrec_forward.5} parent=1 // pred_check_branch
      %259 = sbr.rel (%p257) target = $region153
    $region152: #{cikgrec_forward.5} parent=1 // pred_region
      %s260 = sshll.u32 1, 1
      %s261 = ssub.s32 %s260, 1
      loop: start=0, step=1, limit=1
      $region154: #{cikgrec_forward.5} parent=152 // loop_pre_header
        _
      $region155: #{cikgrec_forward.5} parent=152 // loop_header
        %s263 = sphi 0, %s267
        %p264 = scmp.ge.s32.totalorder %s263, 1
        %s268 = sphi %s249, %s249
        %s269 = sphi %s250, %s250
      $region156: #{cikgrec_forward.5} parent=152 // loop_header_branch
        %266 = sbr.rel (%p264) target = $region160
      $region157: #{cikgrec_forward.5} parent=152 // loop_body
        %v270 = vld [vmem:[%s268] sm:%s261]
        %271 = vst [vmem:[%s269] sm:%s261] %v270
      $region158: #{cikgrec_forward.5} parent=152 // loop_footer
        %s267 = sadd.s32 1, %s263
      $region159: #{cikgrec_forward.5} parent=152 // loop_footer_branch
        %262 = sbr.rel target = $region155
      $region160: #{cikgrec_forward.5} parent=152 // loop_exit
        _
    $region153: #{cikgrec_forward.5} parent=1 // pred_fallthru
      _
    // Predicated region
    $region172: #{cikgrec_forward.5} parent=1 // pred_check
      _
    $region173: #{cikgrec_forward.5} parent=1 // pred_check_branch
      %296 = sbr.rel (0) target = $region175
    $region174: #{cikgrec_forward.5} parent=1 // pred_region
      %297 = vsyncadd %s251, 16
    $region175: #{cikgrec_forward.5} parent=1 // pred_fallthru
      _
    %s298 = scalar_lea.vmem %s4, %s248
    %s299 = scalar_lea.vmem [#allocation3], 2
    %s300 = scalar_lea.sflag [#allocation4], 26
    %p302 = scmp.lt.u32.totalorder 1, 8
    %p303 = pneg %p302
    // Predicated region
    $region176: #{cikgrec_forward.5} parent=1 // pred_check
      _
    $region177: #{cikgrec_forward.5} parent=1 // pred_check_branch
      %305 = sbr.rel (%p302) target = $region179
    $region178: #{cikgrec_forward.5} parent=1 // pred_region
      %s321 = sand.u32 1, 7
      %p322 = scmp.eq.s32.totalorder %s321, 0
      %p323 = pneg %p322
      // Predicated region
      $region191: #{cikgrec_forward.5} parent=178 // pred_check
        _
      $region192: #{cikgrec_forward.5} parent=178 // pred_check_branch
        %325 = sbr.rel (%p322) target = $region194
      $region193: #{cikgrec_forward.5} parent=178 // pred_region
        %s326 = sand.u32 1, 7
        %s327 = ssub.s32 1, %s326
        %s328 = scalar_lea.vmem %s298, %s327
        %s329 = ssub.s32 1, %s326
        %s330 = scalar_lea.vmem %s299, %s329 [#allocation3]
        %s331 = sshll.u32 1, %s326
        %s332 = ssub.s32 %s331, 1
        loop: start=0, step=1, limit=1
        $region195: #{cikgrec_forward.5} parent=193 // loop_pre_header
          _
        $region196: #{cikgrec_forward.5} parent=193 // loop_header
          %s334 = sphi 0, %s338
          %p335 = scmp.ge.s32.totalorder %s334, 1
          %s339 = sphi %s328, %s328
          %s340 = sphi %s330, %s330
        $region197: #{cikgrec_forward.5} parent=193 // loop_header_branch
          %337 = sbr.rel (%p335) target = $region201
        $region198: #{cikgrec_forward.5} parent=193 // loop_body
          %v341 = vld [vmem:[%s339] sm:%s332]
          %342 = vst [vmem:[%s340] sm:%s332] %v341
        $region199: #{cikgrec_forward.5} parent=193 // loop_footer
          %s338 = sadd.s32 1, %s334
        $region200: #{cikgrec_forward.5} parent=193 // loop_footer_branch
          %333 = sbr.rel target = $region196
        $region201: #{cikgrec_forward.5} parent=193 // loop_exit
          _
      $region194: #{cikgrec_forward.5} parent=178 // pred_fallthru
        _
    $region179: #{cikgrec_forward.5} parent=1 // pred_fallthru
      _
    // Predicated region
    $region180: #{cikgrec_forward.5} parent=1 // pred_check
      %p306 = pneg %p302
    $region181: #{cikgrec_forward.5} parent=1 // pred_check_branch
      %308 = sbr.rel (%p306) target = $region183
    $region182: #{cikgrec_forward.5} parent=1 // pred_region
      %s309 = sshll.u32 1, 1
      %s310 = ssub.s32 %s309, 1
      loop: start=0, step=1, limit=1
      $region184: #{cikgrec_forward.5} parent=182 // loop_pre_header
        _
      $region185: #{cikgrec_forward.5} parent=182 // loop_header
        %s312 = sphi 0, %s316
        %p313 = scmp.ge.s32.totalorder %s312, 1
        %s317 = sphi %s298, %s298
        %s318 = sphi %s299, %s299
      $region186: #{cikgrec_forward.5} parent=182 // loop_header_branch
        %315 = sbr.rel (%p313) target = $region190
      $region187: #{cikgrec_forward.5} parent=182 // loop_body
        %v319 = vld [vmem:[%s317] sm:%s310]
        %320 = vst [vmem:[%s318] sm:%s310] %v319
      $region188: #{cikgrec_forward.5} parent=182 // loop_footer
        %s316 = sadd.s32 1, %s312
      $region189: #{cikgrec_forward.5} parent=182 // loop_footer_branch
        %311 = sbr.rel target = $region185
      $region190: #{cikgrec_forward.5} parent=182 // loop_exit
        _
    $region183: #{cikgrec_forward.5} parent=1 // pred_fallthru
      _
    // Predicated region
    $region202: #{cikgrec_forward.5} parent=1 // pred_check
      _
    $region203: #{cikgrec_forward.5} parent=1 // pred_check_branch
      %345 = sbr.rel (0) target = $region205
    $region204: #{cikgrec_forward.5} parent=1 // pred_region
      %346 = vsyncadd %s300, 16
    $region205: #{cikgrec_forward.5} parent=1 // pred_fallthru
      _
    %s347 = sld [smem:[#allocation5 + $0x3]]
    %s348 = scalar_lea.vmem %s3, %s347
    %s349 = scalar_lea.vmem [#allocation2], 3
    %s350 = scalar_lea.sflag [#allocation4], 3
    %p352 = scmp.lt.u32.totalorder 1, 8
    %p353 = pneg %p352
    // Predicated region
    $region206: #{cikgrec_forward.5} parent=1 // pred_check
      _
    $region207: #{cikgrec_forward.5} parent=1 // pred_check_branch
      %355 = sbr.rel (%p352) target = $region209
    $region208: #{cikgrec_forward.5} parent=1 // pred_region
      %s371 = sand.u32 1, 7
      %p372 = scmp.eq.s32.totalorder %s371, 0
      %p373 = pneg %p372
      // Predicated region
      $region221: #{cikgrec_forward.5} parent=208 // pred_check
        _
      $region222: #{cikgrec_forward.5} parent=208 // pred_check_branch
        %375 = sbr.rel (%p372) target = $region224
      $region223: #{cikgrec_forward.5} parent=208 // pred_region
        %s376 = sand.u32 1, 7
        %s377 = ssub.s32 1, %s376
        %s378 = scalar_lea.vmem %s348, %s377
        %s379 = ssub.s32 1, %s376
        %s380 = scalar_lea.vmem %s349, %s379 [#allocation2]
        %s381 = sshll.u32 1, %s376
        %s382 = ssub.s32 %s381, 1
        loop: start=0, step=1, limit=1
        $region225: #{cikgrec_forward.5} parent=223 // loop_pre_header
          _
        $region226: #{cikgrec_forward.5} parent=223 // loop_header
          %s384 = sphi 0, %s388
          %p385 = scmp.ge.s32.totalorder %s384, 1
          %s389 = sphi %s378, %s378
          %s390 = sphi %s380, %s380
        $region227: #{cikgrec_forward.5} parent=223 // loop_header_branch
          %387 = sbr.rel (%p385) target = $region231
        $region228: #{cikgrec_forward.5} parent=223 // loop_body
          %v391 = vld [vmem:[%s389] sm:%s382]
          %392 = vst [vmem:[%s390] sm:%s382] %v391
        $region229: #{cikgrec_forward.5} parent=223 // loop_footer
          %s388 = sadd.s32 1, %s384
        $region230: #{cikgrec_forward.5} parent=223 // loop_footer_branch
          %383 = sbr.rel target = $region226
        $region231: #{cikgrec_forward.5} parent=223 // loop_exit
          _
      $region224: #{cikgrec_forward.5} parent=208 // pred_fallthru
        _
    $region209: #{cikgrec_forward.5} parent=1 // pred_fallthru
      _
    // Predicated region
    $region210: #{cikgrec_forward.5} parent=1 // pred_check
      %p356 = pneg %p352
    $region211: #{cikgrec_forward.5} parent=1 // pred_check_branch
      %358 = sbr.rel (%p356) target = $region213
    $region212: #{cikgrec_forward.5} parent=1 // pred_region
      %s359 = sshll.u32 1, 1
      %s360 = ssub.s32 %s359, 1
      loop: start=0, step=1, limit=1
      $region214: #{cikgrec_forward.5} parent=212 // loop_pre_header
        _
      $region215: #{cikgrec_forward.5} parent=212 // loop_header
        %s362 = sphi 0, %s366
        %p363 = scmp.ge.s32.totalorder %s362, 1
        %s367 = sphi %s348, %s348
        %s368 = sphi %s349, %s349
      $region216: #{cikgrec_forward.5} parent=212 // loop_header_branch
        %365 = sbr.rel (%p363) target = $region220
      $region217: #{cikgrec_forward.5} parent=212 // loop_body
        %v369 = vld [vmem:[%s367] sm:%s360]
        %370 = vst [vmem:[%s368] sm:%s360] %v369
      $region218: #{cikgrec_forward.5} parent=212 // loop_footer
        %s366 = sadd.s32 1, %s362
      $region219: #{cikgrec_forward.5} parent=212 // loop_footer_branch
        %361 = sbr.rel target = $region215
      $region220: #{cikgrec_forward.5} parent=212 // loop_exit
        _
    $region213: #{cikgrec_forward.5} parent=1 // pred_fallthru
      _
    // Predicated region
    $region232: #{cikgrec_forward.5} parent=1 // pred_check
      _
    $region233: #{cikgrec_forward.5} parent=1 // pred_check_branch
      %395 = sbr.rel (0) target = $region235
    $region234: #{cikgrec_forward.5} parent=1 // pred_region
      %396 = vsyncadd %s350, 16
    $region235: #{cikgrec_forward.5} parent=1 // pred_fallthru
      _
    %s397 = scalar_lea.vmem %s4, %s347
    %s398 = scalar_lea.vmem [#allocation3], 3
    %s399 = scalar_lea.sflag [#allocation4], 27
    %p401 = scmp.lt.u32.totalorder 1, 8
    %p402 = pneg %p401
    // Predicated region
    $region236: #{cikgrec_forward.5} parent=1 // pred_check
      _
    $region237: #{cikgrec_forward.5} parent=1 // pred_check_branch
      %404 = sbr.rel (%p401) target = $region239
    $region238: #{cikgrec_forward.5} parent=1 // pred_region
      %s420 = sand.u32 1, 7
      %p421 = scmp.eq.s32.totalorder %s420, 0
      %p422 = pneg %p421
      // Predicated region
      $region251: #{cikgrec_forward.5} parent=238 // pred_check
        _
      $region252: #{cikgrec_forward.5} parent=238 // pred_check_branch
        %424 = sbr.rel (%p421) target = $region254
      $region253: #{cikgrec_forward.5} parent=238 // pred_region
        %s425 = sand.u32 1, 7
        %s426 = ssub.s32 1, %s425
        %s427 = scalar_lea.vmem %s397, %s426
        %s428 = ssub.s32 1, %s425
        %s429 = scalar_lea.vmem %s398, %s428 [#allocation3]
        %s430 = sshll.u32 1, %s425
        %s431 = ssub.s32 %s430, 1
        loop: start=0, step=1, limit=1
        $region255: #{cikgrec_forward.5} parent=253 // loop_pre_header
          _
        $region256: #{cikgrec_forward.5} parent=253 // loop_header
          %s433 = sphi 0, %s437
          %p434 = scmp.ge.s32.totalorder %s433, 1
          %s438 = sphi %s427, %s427
          %s439 = sphi %s429, %s429
        $region257: #{cikgrec_forward.5} parent=253 // loop_header_branch
          %436 = sbr.rel (%p434) target = $region261
        $region258: #{cikgrec_forward.5} parent=253 // loop_body
          %v440 = vld [vmem:[%s438] sm:%s431]
          %441 = vst [vmem:[%s439] sm:%s431] %v440
        $region259: #{cikgrec_forward.5} parent=253 // loop_footer
          %s437 = sadd.s32 1, %s433
        $region260: #{cikgrec_forward.5} parent=253 // loop_footer_branch
          %432 = sbr.rel target = $region256
        $region261: #{cikgrec_forward.5} parent=253 // loop_exit
          _
      $region254: #{cikgrec_forward.5} parent=238 // pred_fallthru
        _
    $region239: #{cikgrec_forward.5} parent=1 // pred_fallthru
      _
    // Predicated region
    $region240: #{cikgrec_forward.5} parent=1 // pred_check
      %p405 = pneg %p401
    $region241: #{cikgrec_forward.5} parent=1 // pred_check_branch
      %407 = sbr.rel (%p405) target = $region243
    $region242: #{cikgrec_forward.5} parent=1 // pred_region
      %s408 = sshll.u32 1, 1
      %s409 = ssub.s32 %s408, 1
      loop: start=0, step=1, limit=1
      $region244: #{cikgrec_forward.5} parent=242 // loop_pre_header
        _
      $region245: #{cikgrec_forward.5} parent=242 // loop_header
        %s411 = sphi 0, %s415
        %p412 = scmp.ge.s32.totalorder %s411, 1
        %s416 = sphi %s397, %s397
        %s417 = sphi %s398, %s398
      $region246: #{cikgrec_forward.5} parent=242 // loop_header_branch
        %414 = sbr.rel (%p412) target = $region250
      $region247: #{cikgrec_forward.5} parent=242 // loop_body
        %v418 = vld [vmem:[%s416] sm:%s409]
        %419 = vst [vmem:[%s417] sm:%s409] %v418
      $region248: #{cikgrec_forward.5} parent=242 // loop_footer
        %s415 = sadd.s32 1, %s411
      $region249: #{cikgrec_forward.5} parent=242 // loop_footer_branch
        %410 = sbr.rel target = $region245
      $region250: #{cikgrec_forward.5} parent=242 // loop_exit
        _
    $region243: #{cikgrec_forward.5} parent=1 // pred_fallthru
      _
    // Predicated region
    $region262: #{cikgrec_forward.5} parent=1 // pred_check
      _
    $region263: #{cikgrec_forward.5} parent=1 // pred_check_branch
      %444 = sbr.rel (0) target = $region265
    $region264: #{cikgrec_forward.5} parent=1 // pred_region
      %445 = vsyncadd %s399, 16
    $region265: #{cikgrec_forward.5} parent=1 // pred_fallthru
      _
    %s446 = sld [smem:[#allocation5 + $0x4]]
    %s447 = scalar_lea.vmem %s3, %s446
    %s448 = scalar_lea.vmem [#allocation2], 4
    %s449 = scalar_lea.sflag [#allocation4], 4
    %p451 = scmp.lt.u32.totalorder 1, 8
    %p452 = pneg %p451
    // Predicated region
    $region266: #{cikgrec_forward.5} parent=1 // pred_check
      _
    $region267: #{cikgrec_forward.5} parent=1 // pred_check_branch
      %454 = sbr.rel (%p451) target = $region269
    $region268: #{cikgrec_forward.5} parent=1 // pred_region
      %s470 = sand.u32 1, 7
      %p471 = scmp.eq.s32.totalorder %s470, 0
      %p472 = pneg %p471
      // Predicated region
      $region281: #{cikgrec_forward.5} parent=268 // pred_check
        _
      $region282: #{cikgrec_forward.5} parent=268 // pred_check_branch
        %474 = sbr.rel (%p471) target = $region284
      $region283: #{cikgrec_forward.5} parent=268 // pred_region
        %s475 = sand.u32 1, 7
        %s476 = ssub.s32 1, %s475
        %s477 = scalar_lea.vmem %s447, %s476
        %s478 = ssub.s32 1, %s475
        %s479 = scalar_lea.vmem %s448, %s478 [#allocation2]
        %s480 = sshll.u32 1, %s475
        %s481 = ssub.s32 %s480, 1
        loop: start=0, step=1, limit=1
        $region285: #{cikgrec_forward.5} parent=283 // loop_pre_header
          _
        $region286: #{cikgrec_forward.5} parent=283 // loop_header
          %s483 = sphi 0, %s487
          %p484 = scmp.ge.s32.totalorder %s483, 1
          %s488 = sphi %s477, %s477
          %s489 = sphi %s479, %s479
        $region287: #{cikgrec_forward.5} parent=283 // loop_header_branch
          %486 = sbr.rel (%p484) target = $region291
        $region288: #{cikgrec_forward.5} parent=283 // loop_body
          %v490 = vld [vmem:[%s488] sm:%s481]
          %491 = vst [vmem:[%s489] sm:%s481] %v490
        $region289: #{cikgrec_forward.5} parent=283 // loop_footer
          %s487 = sadd.s32 1, %s483
        $region290: #{cikgrec_forward.5} parent=283 // loop_footer_branch
          %482 = sbr.rel target = $region286
        $region291: #{cikgrec_forward.5} parent=283 // loop_exit
          _
      $region284: #{cikgrec_forward.5} parent=268 // pred_fallthru
        _
    $region269: #{cikgrec_forward.5} parent=1 // pred_fallthru
      _
    // Predicated region
    $region270: #{cikgrec_forward.5} parent=1 // pred_check
      %p455 = pneg %p451
    $region271: #{cikgrec_forward.5} parent=1 // pred_check_branch
      %457 = sbr.rel (%p455) target = $region273
    $region272: #{cikgrec_forward.5} parent=1 // pred_region
      %s458 = sshll.u32 1, 1
      %s459 = ssub.s32 %s458, 1
      loop: start=0, step=1, limit=1
      $region274: #{cikgrec_forward.5} parent=272 // loop_pre_header
        _
      $region275: #{cikgrec_forward.5} parent=272 // loop_header
        %s461 = sphi 0, %s465
        %p462 = scmp.ge.s32.totalorder %s461, 1
        %s466 = sphi %s447, %s447
        %s467 = sphi %s448, %s448
      $region276: #{cikgrec_forward.5} parent=272 // loop_header_branch
        %464 = sbr.rel (%p462) target = $region280
      $region277: #{cikgrec_forward.5} parent=272 // loop_body
        %v468 = vld [vmem:[%s466] sm:%s459]
        %469 = vst [vmem:[%s467] sm:%s459] %v468
      $region278: #{cikgrec_forward.5} parent=272 // loop_footer
        %s465 = sadd.s32 1, %s461
      $region279: #{cikgrec_forward.5} parent=272 // loop_footer_branch
        %460 = sbr.rel target = $region275
      $region280: #{cikgrec_forward.5} parent=272 // loop_exit
        _
    $region273: #{cikgrec_forward.5} parent=1 // pred_fallthru
      _
    // Predicated region
    $region292: #{cikgrec_forward.5} parent=1 // pred_check
      _
    $region293: #{cikgrec_forward.5} parent=1 // pred_check_branch
      %494 = sbr.rel (0) target = $region295
    $region294: #{cikgrec_forward.5} parent=1 // pred_region
      %495 = vsyncadd %s449, 16
    $region295: #{cikgrec_forward.5} parent=1 // pred_fallthru
      _
    %s496 = scalar_lea.vmem %s4, %s446
    %s497 = scalar_lea.vmem [#allocation3], 4
    %s498 = scalar_lea.sflag [#allocation4], 28
    %p500 = scmp.lt.u32.totalorder 1, 8
    %p501 = pneg %p500
    // Predicated region
    $region296: #{cikgrec_forward.5} parent=1 // pred_check
      _
    $region297: #{cikgrec_forward.5} parent=1 // pred_check_branch
      %503 = sbr.rel (%p500) target = $region299
    $region298: #{cikgrec_forward.5} parent=1 // pred_region
      %s519 = sand.u32 1, 7
      %p520 = scmp.eq.s32.totalorder %s519, 0
      %p521 = pneg %p520
      // Predicated region
      $region311: #{cikgrec_forward.5} parent=298 // pred_check
        _
      $region312: #{cikgrec_forward.5} parent=298 // pred_check_branch
        %523 = sbr.rel (%p520) target = $region314
      $region313: #{cikgrec_forward.5} parent=298 // pred_region
        %s524 = sand.u32 1, 7
        %s525 = ssub.s32 1, %s524
        %s526 = scalar_lea.vmem %s496, %s525
        %s527 = ssub.s32 1, %s524
        %s528 = scalar_lea.vmem %s497, %s527 [#allocation3]
        %s529 = sshll.u32 1, %s524
        %s530 = ssub.s32 %s529, 1
        loop: start=0, step=1, limit=1
        $region315: #{cikgrec_forward.5} parent=313 // loop_pre_header
          _
        $region316: #{cikgrec_forward.5} parent=313 // loop_header
          %s532 = sphi 0, %s536
          %p533 = scmp.ge.s32.totalorder %s532, 1
          %s537 = sphi %s526, %s526
          %s538 = sphi %s528, %s528
        $region317: #{cikgrec_forward.5} parent=313 // loop_header_branch
          %535 = sbr.rel (%p533) target = $region321
        $region318: #{cikgrec_forward.5} parent=313 // loop_body
          %v539 = vld [vmem:[%s537] sm:%s530]
          %540 = vst [vmem:[%s538] sm:%s530] %v539
        $region319: #{cikgrec_forward.5} parent=313 // loop_footer
          %s536 = sadd.s32 1, %s532
        $region320: #{cikgrec_forward.5} parent=313 // loop_footer_branch
          %531 = sbr.rel target = $region316
        $region321: #{cikgrec_forward.5} parent=313 // loop_exit
          _
      $region314: #{cikgrec_forward.5} parent=298 // pred_fallthru
        _
    $region299: #{cikgrec_forward.5} parent=1 // pred_fallthru
      _
    // Predicated region
    $region300: #{cikgrec_forward.5} parent=1 // pred_check
      %p504 = pneg %p500
    $region301: #{cikgrec_forward.5} parent=1 // pred_check_branch
      %506 = sbr.rel (%p504) target = $region303
    $region302: #{cikgrec_forward.5} parent=1 // pred_region
      %s507 = sshll.u32 1, 1
      %s508 = ssub.s32 %s507, 1
      loop: start=0, step=1, limit=1
      $region304: #{cikgrec_forward.5} parent=302 // loop_pre_header
        _
      $region305: #{cikgrec_forward.5} parent=302 // loop_header
        %s510 = sphi 0, %s514
        %p511 = scmp.ge.s32.totalorder %s510, 1
        %s515 = sphi %s496, %s496
        %s516 = sphi %s497, %s497
      $region306: #{cikgrec_forward.5} parent=302 // loop_header_branch
        %513 = sbr.rel (%p511) target = $region310
      $region307: #{cikgrec_forward.5} parent=302 // loop_body
        %v517 = vld [vmem:[%s515] sm:%s508]
        %518 = vst [vmem:[%s516] sm:%s508] %v517
      $region308: #{cikgrec_forward.5} parent=302 // loop_footer
        %s514 = sadd.s32 1, %s510
      $region309: #{cikgrec_forward.5} parent=302 // loop_footer_branch
        %509 = sbr.rel target = $region305
      $region310: #{cikgrec_forward.5} parent=302 // loop_exit
        _
    $region303: #{cikgrec_forward.5} parent=1 // pred_fallthru
      _
    // Predicated region
    $region322: #{cikgrec_forward.5} parent=1 // pred_check
      _
    $region323: #{cikgrec_forward.5} parent=1 // pred_check_branch
      %543 = sbr.rel (0) target = $region325
    $region324: #{cikgrec_forward.5} parent=1 // pred_region
      %544 = vsyncadd %s498, 16
    $region325: #{cikgrec_forward.5} parent=1 // pred_fallthru
      _
    %s545 = sld [smem:[#allocation5 + $0x5]]
    %s546 = scalar_lea.vmem %s3, %s545
    %s547 = scalar_lea.vmem [#allocation2], 5
    %s548 = scalar_lea.sflag [#allocation4], 5
    %p550 = scmp.lt.u32.totalorder 1, 8
    %p551 = pneg %p550
    // Predicated region
    $region326: #{cikgrec_forward.5} parent=1 // pred_check
      _
    $region327: #{cikgrec_forward.5} parent=1 // pred_check_branch
      %553 = sbr.rel (%p550) target = $region329
    $region328: #{cikgrec_forward.5} parent=1 // pred_region
      %s569 = sand.u32 1, 7
      %p570 = scmp.eq.s32.totalorder %s569, 0
      %p571 = pneg %p570
      // Predicated region
      $region341: #{cikgrec_forward.5} parent=328 // pred_check
        _
      $region342: #{cikgrec_forward.5} parent=328 // pred_check_branch
        %573 = sbr.rel (%p570) target = $region344
      $region343: #{cikgrec_forward.5} parent=328 // pred_region
        %s574 = sand.u32 1, 7
        %s575 = ssub.s32 1, %s574
        %s576 = scalar_lea.vmem %s546, %s575
        %s577 = ssub.s32 1, %s574
        %s578 = scalar_lea.vmem %s547, %s577 [#allocation2]
        %s579 = sshll.u32 1, %s574
        %s580 = ssub.s32 %s579, 1
        loop: start=0, step=1, limit=1
        $region345: #{cikgrec_forward.5} parent=343 // loop_pre_header
          _
        $region346: #{cikgrec_forward.5} parent=343 // loop_header
          %s582 = sphi 0, %s586
          %p583 = scmp.ge.s32.totalorder %s582, 1
          %s587 = sphi %s576, %s576
          %s588 = sphi %s578, %s578
        $region347: #{cikgrec_forward.5} parent=343 // loop_header_branch
          %585 = sbr.rel (%p583) target = $region351
        $region348: #{cikgrec_forward.5} parent=343 // loop_body
          %v589 = vld [vmem:[%s587] sm:%s580]
          %590 = vst [vmem:[%s588] sm:%s580] %v589
        $region349: #{cikgrec_forward.5} parent=343 // loop_footer
          %s586 = sadd.s32 1, %s582
        $region350: #{cikgrec_forward.5} parent=343 // loop_footer_branch
          %581 = sbr.rel target = $region346
        $region351: #{cikgrec_forward.5} parent=343 // loop_exit
          _
      $region344: #{cikgrec_forward.5} parent=328 // pred_fallthru
        _
    $region329: #{cikgrec_forward.5} parent=1 // pred_fallthru
      _
    // Predicated region
    $region330: #{cikgrec_forward.5} parent=1 // pred_check
      %p554 = pneg %p550
    $region331: #{cikgrec_forward.5} parent=1 // pred_check_branch
      %556 = sbr.rel (%p554) target = $region333
    $region332: #{cikgrec_forward.5} parent=1 // pred_region
      %s557 = sshll.u32 1, 1
      %s558 = ssub.s32 %s557, 1
      loop: start=0, step=1, limit=1
      $region334: #{cikgrec_forward.5} parent=332 // loop_pre_header
        _
      $region335: #{cikgrec_forward.5} parent=332 // loop_header
        %s560 = sphi 0, %s564
        %p561 = scmp.ge.s32.totalorder %s560, 1
        %s565 = sphi %s546, %s546
        %s566 = sphi %s547, %s547
      $region336: #{cikgrec_forward.5} parent=332 // loop_header_branch
        %563 = sbr.rel (%p561) target = $region340
      $region337: #{cikgrec_forward.5} parent=332 // loop_body
        %v567 = vld [vmem:[%s565] sm:%s558]
        %568 = vst [vmem:[%s566] sm:%s558] %v567
      $region338: #{cikgrec_forward.5} parent=332 // loop_footer
        %s564 = sadd.s32 1, %s560
      $region339: #{cikgrec_forward.5} parent=332 // loop_footer_branch
        %559 = sbr.rel target = $region335
      $region340: #{cikgrec_forward.5} parent=332 // loop_exit
        _
    $region333: #{cikgrec_forward.5} parent=1 // pred_fallthru
      _
    // Predicated region
    $region352: #{cikgrec_forward.5} parent=1 // pred_check
      _
    $region353: #{cikgrec_forward.5} parent=1 // pred_check_branch
      %593 = sbr.rel (0) target = $region355
    $region354: #{cikgrec_forward.5} parent=1 // pred_region
      %594 = vsyncadd %s548, 16
    $region355: #{cikgrec_forward.5} parent=1 // pred_fallthru
      _
    %s595 = scalar_lea.vmem %s4, %s545
    %s596 = scalar_lea.vmem [#allocation3], 5
    %s597 = scalar_lea.sflag [#allocation4], 29
    %p599 = scmp.lt.u32.totalorder 1, 8
    %p600 = pneg %p599
    // Predicated region
    $region356: #{cikgrec_forward.5} parent=1 // pred_check
      _
    $region357: #{cikgrec_forward.5} parent=1 // pred_check_branch
      %602 = sbr.rel (%p599) target = $region359
    $region358: #{cikgrec_forward.5} parent=1 // pred_region
      %s618 = sand.u32 1, 7
      %p619 = scmp.eq.s32.totalorder %s618, 0
      %p620 = pneg %p619
      // Predicated region
      $region371: #{cikgrec_forward.5} parent=358 // pred_check
        _
      $region372: #{cikgrec_forward.5} parent=358 // pred_check_branch
        %622 = sbr.rel (%p619) target = $region374
      $region373: #{cikgrec_forward.5} parent=358 // pred_region
        %s623 = sand.u32 1, 7
        %s624 = ssub.s32 1, %s623
        %s625 = scalar_lea.vmem %s595, %s624
        %s626 = ssub.s32 1, %s623
        %s627 = scalar_lea.vmem %s596, %s626 [#allocation3]
        %s628 = sshll.u32 1, %s623
        %s629 = ssub.s32 %s628, 1
        loop: start=0, step=1, limit=1
        $region375: #{cikgrec_forward.5} parent=373 // loop_pre_header
          _
        $region376: #{cikgrec_forward.5} parent=373 // loop_header
          %s631 = sphi 0, %s635
          %p632 = scmp.ge.s32.totalorder %s631, 1
          %s636 = sphi %s625, %s625
          %s637 = sphi %s627, %s627
        $region377: #{cikgrec_forward.5} parent=373 // loop_header_branch
          %634 = sbr.rel (%p632) target = $region381
        $region378: #{cikgrec_forward.5} parent=373 // loop_body
          %v638 = vld [vmem:[%s636] sm:%s629]
          %639 = vst [vmem:[%s637] sm:%s629] %v638
        $region379: #{cikgrec_forward.5} parent=373 // loop_footer
          %s635 = sadd.s32 1, %s631
        $region380: #{cikgrec_forward.5} parent=373 // loop_footer_branch
          %630 = sbr.rel target = $region376
        $region381: #{cikgrec_forward.5} parent=373 // loop_exit
          _
      $region374: #{cikgrec_forward.5} parent=358 // pred_fallthru
        _
    $region359: #{cikgrec_forward.5} parent=1 // pred_fallthru
      _
    // Predicated region
    $region360: #{cikgrec_forward.5} parent=1 // pred_check
      %p603 = pneg %p599
    $region361: #{cikgrec_forward.5} parent=1 // pred_check_branch
      %605 = sbr.rel (%p603) target = $region363
    $region362: #{cikgrec_forward.5} parent=1 // pred_region
      %s606 = sshll.u32 1, 1
      %s607 = ssub.s32 %s606, 1
      loop: start=0, step=1, limit=1
      $region364: #{cikgrec_forward.5} parent=362 // loop_pre_header
        _
      $region365: #{cikgrec_forward.5} parent=362 // loop_header
        %s609 = sphi 0, %s613
        %p610 = scmp.ge.s32.totalorder %s609, 1
        %s614 = sphi %s595, %s595
        %s615 = sphi %s596, %s596
      $region366: #{cikgrec_forward.5} parent=362 // loop_header_branch
        %612 = sbr.rel (%p610) target = $region370
      $region367: #{cikgrec_forward.5} parent=362 // loop_body
        %v616 = vld [vmem:[%s614] sm:%s607]
        %617 = vst [vmem:[%s615] sm:%s607] %v616
      $region368: #{cikgrec_forward.5} parent=362 // loop_footer
        %s613 = sadd.s32 1, %s609
      $region369: #{cikgrec_forward.5} parent=362 // loop_footer_branch
        %608 = sbr.rel target = $region365
      $region370: #{cikgrec_forward.5} parent=362 // loop_exit
        _
    $region363: #{cikgrec_forward.5} parent=1 // pred_fallthru
      _
    // Predicated region
    $region382: #{cikgrec_forward.5} parent=1 // pred_check
      _
    $region383: #{cikgrec_forward.5} parent=1 // pred_check_branch
      %642 = sbr.rel (0) target = $region385
    $region384: #{cikgrec_forward.5} parent=1 // pred_region
      %643 = vsyncadd %s597, 16
    $region385: #{cikgrec_forward.5} parent=1 // pred_fallthru
      _
    %s644 = sld [smem:[#allocation5 + $0x6]]
    %s645 = scalar_lea.vmem %s3, %s644
    %s646 = scalar_lea.vmem [#allocation2], 6
    %s647 = scalar_lea.sflag [#allocation4], 6
    %p649 = scmp.lt.u32.totalorder 1, 8
    %p650 = pneg %p649
    // Predicated region
    $region386: #{cikgrec_forward.5} parent=1 // pred_check
      _
    $region387: #{cikgrec_forward.5} parent=1 // pred_check_branch
      %652 = sbr.rel (%p649) target = $region389
    $region388: #{cikgrec_forward.5} parent=1 // pred_region
      %s668 = sand.u32 1, 7
      %p669 = scmp.eq.s32.totalorder %s668, 0
      %p670 = pneg %p669
      // Predicated region
      $region401: #{cikgrec_forward.5} parent=388 // pred_check
        _
      $region402: #{cikgrec_forward.5} parent=388 // pred_check_branch
        %672 = sbr.rel (%p669) target = $region404
      $region403: #{cikgrec_forward.5} parent=388 // pred_region
        %s673 = sand.u32 1, 7
        %s674 = ssub.s32 1, %s673
        %s675 = scalar_lea.vmem %s645, %s674
        %s676 = ssub.s32 1, %s673
        %s677 = scalar_lea.vmem %s646, %s676 [#allocation2]
        %s678 = sshll.u32 1, %s673
        %s679 = ssub.s32 %s678, 1
        loop: start=0, step=1, limit=1
        $region405: #{cikgrec_forward.5} parent=403 // loop_pre_header
          _
        $region406: #{cikgrec_forward.5} parent=403 // loop_header
          %s681 = sphi 0, %s685
          %p682 = scmp.ge.s32.totalorder %s681, 1
          %s686 = sphi %s675, %s675
          %s687 = sphi %s677, %s677
        $region407: #{cikgrec_forward.5} parent=403 // loop_header_branch
          %684 = sbr.rel (%p682) target = $region411
        $region408: #{cikgrec_forward.5} parent=403 // loop_body
          %v688 = vld [vmem:[%s686] sm:%s679]
          %689 = vst [vmem:[%s687] sm:%s679] %v688
        $region409: #{cikgrec_forward.5} parent=403 // loop_footer
          %s685 = sadd.s32 1, %s681
        $region410: #{cikgrec_forward.5} parent=403 // loop_footer_branch
          %680 = sbr.rel target = $region406
        $region411: #{cikgrec_forward.5} parent=403 // loop_exit
          _
      $region404: #{cikgrec_forward.5} parent=388 // pred_fallthru
        _
    $region389: #{cikgrec_forward.5} parent=1 // pred_fallthru
      _
    // Predicated region
    $region390: #{cikgrec_forward.5} parent=1 // pred_check
      %p653 = pneg %p649
    $region391: #{cikgrec_forward.5} parent=1 // pred_check_branch
      %655 = sbr.rel (%p653) target = $region393
    $region392: #{cikgrec_forward.5} parent=1 // pred_region
      %s656 = sshll.u32 1, 1
      %s657 = ssub.s32 %s656, 1
      loop: start=0, step=1, limit=1
      $region394: #{cikgrec_forward.5} parent=392 // loop_pre_header
        _
      $region395: #{cikgrec_forward.5} parent=392 // loop_header
        %s659 = sphi 0, %s663
        %p660 = scmp.ge.s32.totalorder %s659, 1
        %s664 = sphi %s645, %s645
        %s665 = sphi %s646, %s646
      $region396: #{cikgrec_forward.5} parent=392 // loop_header_branch
        %662 = sbr.rel (%p660) target = $region400
      $region397: #{cikgrec_forward.5} parent=392 // loop_body
        %v666 = vld [vmem:[%s664] sm:%s657]
        %667 = vst [vmem:[%s665] sm:%s657] %v666
      $region398: #{cikgrec_forward.5} parent=392 // loop_footer
        %s663 = sadd.s32 1, %s659
      $region399: #{cikgrec_forward.5} parent=392 // loop_footer_branch
        %658 = sbr.rel target = $region395
      $region400: #{cikgrec_forward.5} parent=392 // loop_exit
        _
    $region393: #{cikgrec_forward.5} parent=1 // pred_fallthru
      _
    // Predicated region
    $region412: #{cikgrec_forward.5} parent=1 // pred_check
      _
    $region413: #{cikgrec_forward.5} parent=1 // pred_check_branch
      %692 = sbr.rel (0) target = $region415
    $region414: #{cikgrec_forward.5} parent=1 // pred_region
      %693 = vsyncadd %s647, 16
    $region415: #{cikgrec_forward.5} parent=1 // pred_fallthru
      _
    %s694 = scalar_lea.vmem %s4, %s644
    %s695 = scalar_lea.vmem [#allocation3], 6
    %s696 = scalar_lea.sflag [#allocation4], 30
    %p698 = scmp.lt.u32.totalorder 1, 8
    %p699 = pneg %p698
    // Predicated region
    $region416: #{cikgrec_forward.5} parent=1 // pred_check
      _
    $region417: #{cikgrec_forward.5} parent=1 // pred_check_branch
      %701 = sbr.rel (%p698) target = $region419
    $region418: #{cikgrec_forward.5} parent=1 // pred_region
      %s717 = sand.u32 1, 7
      %p718 = scmp.eq.s32.totalorder %s717, 0
      %p719 = pneg %p718
      // Predicated region
      $region431: #{cikgrec_forward.5} parent=418 // pred_check
        _
      $region432: #{cikgrec_forward.5} parent=418 // pred_check_branch
        %721 = sbr.rel (%p718) target = $region434
      $region433: #{cikgrec_forward.5} parent=418 // pred_region
        %s722 = sand.u32 1, 7
        %s723 = ssub.s32 1, %s722
        %s724 = scalar_lea.vmem %s694, %s723
        %s725 = ssub.s32 1, %s722
        %s726 = scalar_lea.vmem %s695, %s725 [#allocation3]
        %s727 = sshll.u32 1, %s722
        %s728 = ssub.s32 %s727, 1
        loop: start=0, step=1, limit=1
        $region435: #{cikgrec_forward.5} parent=433 // loop_pre_header
          _
        $region436: #{cikgrec_forward.5} parent=433 // loop_header
          %s730 = sphi 0, %s734
          %p731 = scmp.ge.s32.totalorder %s730, 1
          %s735 = sphi %s724, %s724
          %s736 = sphi %s726, %s726
        $region437: #{cikgrec_forward.5} parent=433 // loop_header_branch
          %733 = sbr.rel (%p731) target = $region441
        $region438: #{cikgrec_forward.5} parent=433 // loop_body
          %v737 = vld [vmem:[%s735] sm:%s728]
          %738 = vst [vmem:[%s736] sm:%s728] %v737
        $region439: #{cikgrec_forward.5} parent=433 // loop_footer
          %s734 = sadd.s32 1, %s730
        $region440: #{cikgrec_forward.5} parent=433 // loop_footer_branch
          %729 = sbr.rel target = $region436
        $region441: #{cikgrec_forward.5} parent=433 // loop_exit
          _
      $region434: #{cikgrec_forward.5} parent=418 // pred_fallthru
        _
    $region419: #{cikgrec_forward.5} parent=1 // pred_fallthru
      _
    // Predicated region
    $region420: #{cikgrec_forward.5} parent=1 // pred_check
      %p702 = pneg %p698
    $region421: #{cikgrec_forward.5} parent=1 // pred_check_branch
      %704 = sbr.rel (%p702) target = $region423
    $region422: #{cikgrec_forward.5} parent=1 // pred_region
      %s705 = sshll.u32 1, 1
      %s706 = ssub.s32 %s705, 1
      loop: start=0, step=1, limit=1
      $region424: #{cikgrec_forward.5} parent=422 // loop_pre_header
        _
      $region425: #{cikgrec_forward.5} parent=422 // loop_header
        %s708 = sphi 0, %s712
        %p709 = scmp.ge.s32.totalorder %s708, 1
        %s713 = sphi %s694, %s694
        %s714 = sphi %s695, %s695
      $region426: #{cikgrec_forward.5} parent=422 // loop_header_branch
        %711 = sbr.rel (%p709) target = $region430
      $region427: #{cikgrec_forward.5} parent=422 // loop_body
        %v715 = vld [vmem:[%s713] sm:%s706]
        %716 = vst [vmem:[%s714] sm:%s706] %v715
      $region428: #{cikgrec_forward.5} parent=422 // loop_footer
        %s712 = sadd.s32 1, %s708
      $region429: #{cikgrec_forward.5} parent=422 // loop_footer_branch
        %707 = sbr.rel target = $region425
      $region430: #{cikgrec_forward.5} parent=422 // loop_exit
        _
    $region423: #{cikgrec_forward.5} parent=1 // pred_fallthru
      _
    // Predicated region
    $region442: #{cikgrec_forward.5} parent=1 // pred_check
      _
    $region443: #{cikgrec_forward.5} parent=1 // pred_check_branch
      %741 = sbr.rel (0) target = $region445
    $region444: #{cikgrec_forward.5} parent=1 // pred_region
      %742 = vsyncadd %s696, 16
    $region445: #{cikgrec_forward.5} parent=1 // pred_fallthru
      _
    %s743 = sld [smem:[#allocation5 + $0x7]]
    %s744 = scalar_lea.vmem %s3, %s743
    %s745 = scalar_lea.vmem [#allocation2], 7
    %s746 = scalar_lea.sflag [#allocation4], 7
    %p748 = scmp.lt.u32.totalorder 1, 8
    %p749 = pneg %p748
    // Predicated region
    $region446: #{cikgrec_forward.5} parent=1 // pred_check
      _
    $region447: #{cikgrec_forward.5} parent=1 // pred_check_branch
      %751 = sbr.rel (%p748) target = $region449
    $region448: #{cikgrec_forward.5} parent=1 // pred_region
      %s767 = sand.u32 1, 7
      %p768 = scmp.eq.s32.totalorder %s767, 0
      %p769 = pneg %p768
      // Predicated region
      $region461: #{cikgrec_forward.5} parent=448 // pred_check
        _
      $region462: #{cikgrec_forward.5} parent=448 // pred_check_branch
        %771 = sbr.rel (%p768) target = $region464
      $region463: #{cikgrec_forward.5} parent=448 // pred_region
        %s772 = sand.u32 1, 7
        %s773 = ssub.s32 1, %s772
        %s774 = scalar_lea.vmem %s744, %s773
        %s775 = ssub.s32 1, %s772
        %s776 = scalar_lea.vmem %s745, %s775 [#allocation2]
        %s777 = sshll.u32 1, %s772
        %s778 = ssub.s32 %s777, 1
        loop: start=0, step=1, limit=1
        $region465: #{cikgrec_forward.5} parent=463 // loop_pre_header
          _
        $region466: #{cikgrec_forward.5} parent=463 // loop_header
          %s780 = sphi 0, %s784
          %p781 = scmp.ge.s32.totalorder %s780, 1
          %s785 = sphi %s774, %s774
          %s786 = sphi %s776, %s776
        $region467: #{cikgrec_forward.5} parent=463 // loop_header_branch
          %783 = sbr.rel (%p781) target = $region471
        $region468: #{cikgrec_forward.5} parent=463 // loop_body
          %v787 = vld [vmem:[%s785] sm:%s778]
          %788 = vst [vmem:[%s786] sm:%s778] %v787
        $region469: #{cikgrec_forward.5} parent=463 // loop_footer
          %s784 = sadd.s32 1, %s780
        $region470: #{cikgrec_forward.5} parent=463 // loop_footer_branch
          %779 = sbr.rel target = $region466
        $region471: #{cikgrec_forward.5} parent=463 // loop_exit
          _
      $region464: #{cikgrec_forward.5} parent=448 // pred_fallthru
        _
    $region449: #{cikgrec_forward.5} parent=1 // pred_fallthru
      _
    // Predicated region
    $region450: #{cikgrec_forward.5} parent=1 // pred_check
      %p752 = pneg %p748
    $region451: #{cikgrec_forward.5} parent=1 // pred_check_branch
      %754 = sbr.rel (%p752) target = $region453
    $region452: #{cikgrec_forward.5} parent=1 // pred_region
      %s755 = sshll.u32 1, 1
      %s756 = ssub.s32 %s755, 1
      loop: start=0, step=1, limit=1
      $region454: #{cikgrec_forward.5} parent=452 // loop_pre_header
        _
      $region455: #{cikgrec_forward.5} parent=452 // loop_header
        %s758 = sphi 0, %s762
        %p759 = scmp.ge.s32.totalorder %s758, 1
        %s763 = sphi %s744, %s744
        %s764 = sphi %s745, %s745
      $region456: #{cikgrec_forward.5} parent=452 // loop_header_branch
        %761 = sbr.rel (%p759) target = $region460
      $region457: #{cikgrec_forward.5} parent=452 // loop_body
        %v765 = vld [vmem:[%s763] sm:%s756]
        %766 = vst [vmem:[%s764] sm:%s756] %v765
      $region458: #{cikgrec_forward.5} parent=452 // loop_footer
        %s762 = sadd.s32 1, %s758
      $region459: #{cikgrec_forward.5} parent=452 // loop_footer_branch
        %757 = sbr.rel target = $region455
      $region460: #{cikgrec_forward.5} parent=452 // loop_exit
        _
    $region453: #{cikgrec_forward.5} parent=1 // pred_fallthru
      _
    // Predicated region
    $region472: #{cikgrec_forward.5} parent=1 // pred_check
      _
    $region473: #{cikgrec_forward.5} parent=1 // pred_check_branch
      %791 = sbr.rel (0) target = $region475
    $region474: #{cikgrec_forward.5} parent=1 // pred_region
      %792 = vsyncadd %s746, 16
    $region475: #{cikgrec_forward.5} parent=1 // pred_fallthru
      _
    %s793 = scalar_lea.vmem %s4, %s743
    %s794 = scalar_lea.vmem [#allocation3], 7
    %s795 = scalar_lea.sflag [#allocation4], 31
    %p797 = scmp.lt.u32.totalorder 1, 8
    %p798 = pneg %p797
    // Predicated region
    $region476: #{cikgrec_forward.5} parent=1 // pred_check
      _
    $region477: #{cikgrec_forward.5} parent=1 // pred_check_branch
      %800 = sbr.rel (%p797) target = $region479
    $region478: #{cikgrec_forward.5} parent=1 // pred_region
      %s816 = sand.u32 1, 7
      %p817 = scmp.eq.s32.totalorder %s816, 0
      %p818 = pneg %p817
      // Predicated region
      $region491: #{cikgrec_forward.5} parent=478 // pred_check
        _
      $region492: #{cikgrec_forward.5} parent=478 // pred_check_branch
        %820 = sbr.rel (%p817) target = $region494
      $region493: #{cikgrec_forward.5} parent=478 // pred_region
        %s821 = sand.u32 1, 7
        %s822 = ssub.s32 1, %s821
        %s823 = scalar_lea.vmem %s793, %s822
        %s824 = ssub.s32 1, %s821
        %s825 = scalar_lea.vmem %s794, %s824 [#allocation3]
        %s826 = sshll.u32 1, %s821
        %s827 = ssub.s32 %s826, 1
        loop: start=0, step=1, limit=1
        $region495: #{cikgrec_forward.5} parent=493 // loop_pre_header
          _
        $region496: #{cikgrec_forward.5} parent=493 // loop_header
          %s829 = sphi 0, %s833
          %p830 = scmp.ge.s32.totalorder %s829, 1
          %s834 = sphi %s823, %s823
          %s835 = sphi %s825, %s825
        $region497: #{cikgrec_forward.5} parent=493 // loop_header_branch
          %832 = sbr.rel (%p830) target = $region501
        $region498: #{cikgrec_forward.5} parent=493 // loop_body
          %v836 = vld [vmem:[%s834] sm:%s827]
          %837 = vst [vmem:[%s835] sm:%s827] %v836
        $region499: #{cikgrec_forward.5} parent=493 // loop_footer
          %s833 = sadd.s32 1, %s829
        $region500: #{cikgrec_forward.5} parent=493 // loop_footer_branch
          %828 = sbr.rel target = $region496
        $region501: #{cikgrec_forward.5} parent=493 // loop_exit
          _
      $region494: #{cikgrec_forward.5} parent=478 // pred_fallthru
        _
    $region479: #{cikgrec_forward.5} parent=1 // pred_fallthru
      _
    // Predicated region
    $region480: #{cikgrec_forward.5} parent=1 // pred_check
      %p801 = pneg %p797
    $region481: #{cikgrec_forward.5} parent=1 // pred_check_branch
      %803 = sbr.rel (%p801) target = $region483
    $region482: #{cikgrec_forward.5} parent=1 // pred_region
      %s804 = sshll.u32 1, 1
      %s805 = ssub.s32 %s804, 1
      loop: start=0, step=1, limit=1
      $region484: #{cikgrec_forward.5} parent=482 // loop_pre_header
        _
      $region485: #{cikgrec_forward.5} parent=482 // loop_header
        %s807 = sphi 0, %s811
        %p808 = scmp.ge.s32.totalorder %s807, 1
        %s812 = sphi %s793, %s793
        %s813 = sphi %s794, %s794
      $region486: #{cikgrec_forward.5} parent=482 // loop_header_branch
        %810 = sbr.rel (%p808) target = $region490
      $region487: #{cikgrec_forward.5} parent=482 // loop_body
        %v814 = vld [vmem:[%s812] sm:%s805]
        %815 = vst [vmem:[%s813] sm:%s805] %v814
      $region488: #{cikgrec_forward.5} parent=482 // loop_footer
        %s811 = sadd.s32 1, %s807
      $region489: #{cikgrec_forward.5} parent=482 // loop_footer_branch
        %806 = sbr.rel target = $region485
      $region490: #{cikgrec_forward.5} parent=482 // loop_exit
        _
    $region483: #{cikgrec_forward.5} parent=1 // pred_fallthru
      _
    // Predicated region
    $region502: #{cikgrec_forward.5} parent=1 // pred_check
      _
    $region503: #{cikgrec_forward.5} parent=1 // pred_check_branch
      %840 = sbr.rel (0) target = $region505
    $region504: #{cikgrec_forward.5} parent=1 // pred_region
      %841 = vsyncadd %s795, 16
    $region505: #{cikgrec_forward.5} parent=1 // pred_fallthru
      _
    %s842 = sld [smem:[#allocation8]]
    %s843 = scalar_lea.vmem %s3, %s842
    %s844 = scalar_lea.vmem [#allocation2], 8
    %s845 = scalar_lea.sflag [#allocation4], 8
    %p847 = scmp.lt.u32.totalorder 1, 8
    %p848 = pneg %p847
    // Predicated region
    $region506: #{cikgrec_forward.5} parent=1 // pred_check
      _
    $region507: #{cikgrec_forward.5} parent=1 // pred_check_branch
      %850 = sbr.rel (%p847) target = $region509
    $region508: #{cikgrec_forward.5} parent=1 // pred_region
      %s866 = sand.u32 1, 7
      %p867 = scmp.eq.s32.totalorder %s866, 0
      %p868 = pneg %p867
      // Predicated region
      $region521: #{cikgrec_forward.5} parent=508 // pred_check
        _
      $region522: #{cikgrec_forward.5} parent=508 // pred_check_branch
        %870 = sbr.rel (%p867) target = $region524
      $region523: #{cikgrec_forward.5} parent=508 // pred_region
        %s871 = sand.u32 1, 7
        %s872 = ssub.s32 1, %s871
        %s873 = scalar_lea.vmem %s843, %s872
        %s874 = ssub.s32 1, %s871
        %s875 = scalar_lea.vmem %s844, %s874 [#allocation2]
        %s876 = sshll.u32 1, %s871
        %s877 = ssub.s32 %s876, 1
        loop: start=0, step=1, limit=1
        $region525: #{cikgrec_forward.5} parent=523 // loop_pre_header
          _
        $region526: #{cikgrec_forward.5} parent=523 // loop_header
          %s879 = sphi 0, %s883
          %p880 = scmp.ge.s32.totalorder %s879, 1
          %s884 = sphi %s873, %s873
          %s885 = sphi %s875, %s875
        $region527: #{cikgrec_forward.5} parent=523 // loop_header_branch
          %882 = sbr.rel (%p880) target = $region531
        $region528: #{cikgrec_forward.5} parent=523 // loop_body
          %v886 = vld [vmem:[%s884] sm:%s877]
          %887 = vst [vmem:[%s885] sm:%s877] %v886
        $region529: #{cikgrec_forward.5} parent=523 // loop_footer
          %s883 = sadd.s32 1, %s879
        $region530: #{cikgrec_forward.5} parent=523 // loop_footer_branch
          %878 = sbr.rel target = $region526
        $region531: #{cikgrec_forward.5} parent=523 // loop_exit
          _
      $region524: #{cikgrec_forward.5} parent=508 // pred_fallthru
        _
    $region509: #{cikgrec_forward.5} parent=1 // pred_fallthru
      _
    // Predicated region
    $region510: #{cikgrec_forward.5} parent=1 // pred_check
      %p851 = pneg %p847
    $region511: #{cikgrec_forward.5} parent=1 // pred_check_branch
      %853 = sbr.rel (%p851) target = $region513
    $region512: #{cikgrec_forward.5} parent=1 // pred_region
      %s854 = sshll.u32 1, 1
      %s855 = ssub.s32 %s854, 1
      loop: start=0, step=1, limit=1
      $region514: #{cikgrec_forward.5} parent=512 // loop_pre_header
        _
      $region515: #{cikgrec_forward.5} parent=512 // loop_header
        %s857 = sphi 0, %s861
        %p858 = scmp.ge.s32.totalorder %s857, 1
        %s862 = sphi %s843, %s843
        %s863 = sphi %s844, %s844
      $region516: #{cikgrec_forward.5} parent=512 // loop_header_branch
        %860 = sbr.rel (%p858) target = $region520
      $region517: #{cikgrec_forward.5} parent=512 // loop_body
        %v864 = vld [vmem:[%s862] sm:%s855]
        %865 = vst [vmem:[%s863] sm:%s855] %v864
      $region518: #{cikgrec_forward.5} parent=512 // loop_footer
        %s861 = sadd.s32 1, %s857
      $region519: #{cikgrec_forward.5} parent=512 // loop_footer_branch
        %856 = sbr.rel target = $region515
      $region520: #{cikgrec_forward.5} parent=512 // loop_exit
        _
    $region513: #{cikgrec_forward.5} parent=1 // pred_fallthru
      _
    // Predicated region
    $region532: #{cikgrec_forward.5} parent=1 // pred_check
      _
    $region533: #{cikgrec_forward.5} parent=1 // pred_check_branch
      %890 = sbr.rel (0) target = $region535
    $region534: #{cikgrec_forward.5} parent=1 // pred_region
      %891 = vsyncadd %s845, 16
    $region535: #{cikgrec_forward.5} parent=1 // pred_fallthru
      _
    %s892 = scalar_lea.vmem %s4, %s842
    %s893 = scalar_lea.vmem [#allocation3], 8
    %s894 = scalar_lea.sflag [#allocation4], 32
    %p896 = scmp.lt.u32.totalorder 1, 8
    %p897 = pneg %p896
    // Predicated region
    $region536: #{cikgrec_forward.5} parent=1 // pred_check
      _
    $region537: #{cikgrec_forward.5} parent=1 // pred_check_branch
      %899 = sbr.rel (%p896) target = $region539
    $region538: #{cikgrec_forward.5} parent=1 // pred_region
      %s915 = sand.u32 1, 7
      %p916 = scmp.eq.s32.totalorder %s915, 0
      %p917 = pneg %p916
      // Predicated region
      $region551: #{cikgrec_forward.5} parent=538 // pred_check
        _
      $region552: #{cikgrec_forward.5} parent=538 // pred_check_branch
        %919 = sbr.rel (%p916) target = $region554
      $region553: #{cikgrec_forward.5} parent=538 // pred_region
        %s920 = sand.u32 1, 7
        %s921 = ssub.s32 1, %s920
        %s922 = scalar_lea.vmem %s892, %s921
        %s923 = ssub.s32 1, %s920
        %s924 = scalar_lea.vmem %s893, %s923 [#allocation3]
        %s925 = sshll.u32 1, %s920
        %s926 = ssub.s32 %s925, 1
        loop: start=0, step=1, limit=1
        $region555: #{cikgrec_forward.5} parent=553 // loop_pre_header
          _
        $region556: #{cikgrec_forward.5} parent=553 // loop_header
          %s928 = sphi 0, %s932
          %p929 = scmp.ge.s32.totalorder %s928, 1
          %s933 = sphi %s922, %s922
          %s934 = sphi %s924, %s924
        $region557: #{cikgrec_forward.5} parent=553 // loop_header_branch
          %931 = sbr.rel (%p929) target = $region561
        $region558: #{cikgrec_forward.5} parent=553 // loop_body
          %v935 = vld [vmem:[%s933] sm:%s926]
          %936 = vst [vmem:[%s934] sm:%s926] %v935
        $region559: #{cikgrec_forward.5} parent=553 // loop_footer
          %s932 = sadd.s32 1, %s928
        $region560: #{cikgrec_forward.5} parent=553 // loop_footer_branch
          %927 = sbr.rel target = $region556
        $region561: #{cikgrec_forward.5} parent=553 // loop_exit
          _
      $region554: #{cikgrec_forward.5} parent=538 // pred_fallthru
        _
    $region539: #{cikgrec_forward.5} parent=1 // pred_fallthru
      _
    // Predicated region
    $region540: #{cikgrec_forward.5} parent=1 // pred_check
      %p900 = pneg %p896
    $region541: #{cikgrec_forward.5} parent=1 // pred_check_branch
      %902 = sbr.rel (%p900) target = $region543
    $region542: #{cikgrec_forward.5} parent=1 // pred_region
      %s903 = sshll.u32 1, 1
      %s904 = ssub.s32 %s903, 1
      loop: start=0, step=1, limit=1
      $region544: #{cikgrec_forward.5} parent=542 // loop_pre_header
        _
      $region545: #{cikgrec_forward.5} parent=542 // loop_header
        %s906 = sphi 0, %s910
        %p907 = scmp.ge.s32.totalorder %s906, 1
        %s911 = sphi %s892, %s892
        %s912 = sphi %s893, %s893
      $region546: #{cikgrec_forward.5} parent=542 // loop_header_branch
        %909 = sbr.rel (%p907) target = $region550
      $region547: #{cikgrec_forward.5} parent=542 // loop_body
        %v913 = vld [vmem:[%s911] sm:%s904]
        %914 = vst [vmem:[%s912] sm:%s904] %v913
      $region548: #{cikgrec_forward.5} parent=542 // loop_footer
        %s910 = sadd.s32 1, %s906
      $region549: #{cikgrec_forward.5} parent=542 // loop_footer_branch
        %905 = sbr.rel target = $region545
      $region550: #{cikgrec_forward.5} parent=542 // loop_exit
        _
    $region543: #{cikgrec_forward.5} parent=1 // pred_fallthru
      _
    // Predicated region
    $region562: #{cikgrec_forward.5} parent=1 // pred_check
      _
    $region563: #{cikgrec_forward.5} parent=1 // pred_check_branch
      %939 = sbr.rel (0) target = $region565
    $region564: #{cikgrec_forward.5} parent=1 // pred_region
      %940 = vsyncadd %s894, 16
    $region565: #{cikgrec_forward.5} parent=1 // pred_fallthru
      _
    %s941 = sld [smem:[#allocation8 + $0x1]]
    %s942 = scalar_lea.vmem %s3, %s941
    %s943 = scalar_lea.vmem [#allocation2], 9
    %s944 = scalar_lea.sflag [#allocation4], 9
    %p946 = scmp.lt.u32.totalorder 1, 8
    %p947 = pneg %p946
    // Predicated region
    $region566: #{cikgrec_forward.5} parent=1 // pred_check
      _
    $region567: #{cikgrec_forward.5} parent=1 // pred_check_branch
      %949 = sbr.rel (%p946) target = $region569
    $region568: #{cikgrec_forward.5} parent=1 // pred_region
      %s965 = sand.u32 1, 7
      %p966 = scmp.eq.s32.totalorder %s965, 0
      %p967 = pneg %p966
      // Predicated region
      $region581: #{cikgrec_forward.5} parent=568 // pred_check
        _
      $region582: #{cikgrec_forward.5} parent=568 // pred_check_branch
        %969 = sbr.rel (%p966) target = $region584
      $region583: #{cikgrec_forward.5} parent=568 // pred_region
        %s970 = sand.u32 1, 7
        %s971 = ssub.s32 1, %s970
        %s972 = scalar_lea.vmem %s942, %s971
        %s973 = ssub.s32 1, %s970
        %s974 = scalar_lea.vmem %s943, %s973 [#allocation2]
        %s975 = sshll.u32 1, %s970
        %s976 = ssub.s32 %s975, 1
        loop: start=0, step=1, limit=1
        $region585: #{cikgrec_forward.5} parent=583 // loop_pre_header
          _
        $region586: #{cikgrec_forward.5} parent=583 // loop_header
          %s978 = sphi 0, %s982
          %p979 = scmp.ge.s32.totalorder %s978, 1
          %s983 = sphi %s972, %s972
          %s984 = sphi %s974, %s974
        $region587: #{cikgrec_forward.5} parent=583 // loop_header_branch
          %981 = sbr.rel (%p979) target = $region591
        $region588: #{cikgrec_forward.5} parent=583 // loop_body
          %v985 = vld [vmem:[%s983] sm:%s976]
          %986 = vst [vmem:[%s984] sm:%s976] %v985
        $region589: #{cikgrec_forward.5} parent=583 // loop_footer
          %s982 = sadd.s32 1, %s978
        $region590: #{cikgrec_forward.5} parent=583 // loop_footer_branch
          %977 = sbr.rel target = $region586
        $region591: #{cikgrec_forward.5} parent=583 // loop_exit
          _
      $region584: #{cikgrec_forward.5} parent=568 // pred_fallthru
        _
    $region569: #{cikgrec_forward.5} parent=1 // pred_fallthru
      _
    // Predicated region
    $region570: #{cikgrec_forward.5} parent=1 // pred_check
      %p950 = pneg %p946
    $region571: #{cikgrec_forward.5} parent=1 // pred_check_branch
      %952 = sbr.rel (%p950) target = $region573
    $region572: #{cikgrec_forward.5} parent=1 // pred_region
      %s953 = sshll.u32 1, 1
      %s954 = ssub.s32 %s953, 1
      loop: start=0, step=1, limit=1
      $region574: #{cikgrec_forward.5} parent=572 // loop_pre_header
        _
      $region575: #{cikgrec_forward.5} parent=572 // loop_header
        %s956 = sphi 0, %s960
        %p957 = scmp.ge.s32.totalorder %s956, 1
        %s961 = sphi %s942, %s942
        %s962 = sphi %s943, %s943
      $region576: #{cikgrec_forward.5} parent=572 // loop_header_branch
        %959 = sbr.rel (%p957) target = $region580
      $region577: #{cikgrec_forward.5} parent=572 // loop_body
        %v963 = vld [vmem:[%s961] sm:%s954]
        %964 = vst [vmem:[%s962] sm:%s954] %v963
      $region578: #{cikgrec_forward.5} parent=572 // loop_footer
        %s960 = sadd.s32 1, %s956
      $region579: #{cikgrec_forward.5} parent=572 // loop_footer_branch
        %955 = sbr.rel target = $region575
      $region580: #{cikgrec_forward.5} parent=572 // loop_exit
        _
    $region573: #{cikgrec_forward.5} parent=1 // pred_fallthru
      _
    // Predicated region
    $region592: #{cikgrec_forward.5} parent=1 // pred_check
      _
    $region593: #{cikgrec_forward.5} parent=1 // pred_check_branch
      %989 = sbr.rel (0) target = $region595
    $region594: #{cikgrec_forward.5} parent=1 // pred_region
      %990 = vsyncadd %s944, 16
    $region595: #{cikgrec_forward.5} parent=1 // pred_fallthru
      _
    %s991 = scalar_lea.vmem %s4, %s941
    %s992 = scalar_lea.vmem [#allocation3], 9
    %s993 = scalar_lea.sflag [#allocation4], 33
    %p995 = scmp.lt.u32.totalorder 1, 8
    %p996 = pneg %p995
    // Predicated region
    $region596: #{cikgrec_forward.5} parent=1 // pred_check
      _
    $region597: #{cikgrec_forward.5} parent=1 // pred_check_branch
      %998 = sbr.rel (%p995) target = $region599
    $region598: #{cikgrec_forward.5} parent=1 // pred_region
      %s1014 = sand.u32 1, 7
      %p1015 = scmp.eq.s32.totalorder %s1014, 0
      %p1016 = pneg %p1015
      // Predicated region
      $region611: #{cikgrec_forward.5} parent=598 // pred_check
        _
      $region612: #{cikgrec_forward.5} parent=598 // pred_check_branch
        %1018 = sbr.rel (%p1015) target = $region614
      $region613: #{cikgrec_forward.5} parent=598 // pred_region
        %s1019 = sand.u32 1, 7
        %s1020 = ssub.s32 1, %s1019
        %s1021 = scalar_lea.vmem %s991, %s1020
        %s1022 = ssub.s32 1, %s1019
        %s1023 = scalar_lea.vmem %s992, %s1022 [#allocation3]
        %s1024 = sshll.u32 1, %s1019
        %s1025 = ssub.s32 %s1024, 1
        loop: start=0, step=1, limit=1
        $region615: #{cikgrec_forward.5} parent=613 // loop_pre_header
          _
        $region616: #{cikgrec_forward.5} parent=613 // loop_header
          %s1027 = sphi 0, %s1031
          %p1028 = scmp.ge.s32.totalorder %s1027, 1
          %s1032 = sphi %s1021, %s1021
          %s1033 = sphi %s1023, %s1023
        $region617: #{cikgrec_forward.5} parent=613 // loop_header_branch
          %1030 = sbr.rel (%p1028) target = $region621
        $region618: #{cikgrec_forward.5} parent=613 // loop_body
          %v1034 = vld [vmem:[%s1032] sm:%s1025]
          %1035 = vst [vmem:[%s1033] sm:%s1025] %v1034
        $region619: #{cikgrec_forward.5} parent=613 // loop_footer
          %s1031 = sadd.s32 1, %s1027
        $region620: #{cikgrec_forward.5} parent=613 // loop_footer_branch
          %1026 = sbr.rel target = $region616
        $region621: #{cikgrec_forward.5} parent=613 // loop_exit
          _
      $region614: #{cikgrec_forward.5} parent=598 // pred_fallthru
        _
    $region599: #{cikgrec_forward.5} parent=1 // pred_fallthru
      _
    // Predicated region
    $region600: #{cikgrec_forward.5} parent=1 // pred_check
      %p999 = pneg %p995
    $region601: #{cikgrec_forward.5} parent=1 // pred_check_branch
      %1001 = sbr.rel (%p999) target = $region603
    $region602: #{cikgrec_forward.5} parent=1 // pred_region
      %s1002 = sshll.u32 1, 1
      %s1003 = ssub.s32 %s1002, 1
      loop: start=0, step=1, limit=1
      $region604: #{cikgrec_forward.5} parent=602 // loop_pre_header
        _
      $region605: #{cikgrec_forward.5} parent=602 // loop_header
        %s1005 = sphi 0, %s1009
        %p1006 = scmp.ge.s32.totalorder %s1005, 1
        %s1010 = sphi %s991, %s991
        %s1011 = sphi %s992, %s992
      $region606: #{cikgrec_forward.5} parent=602 // loop_header_branch
        %1008 = sbr.rel (%p1006) target = $region610
      $region607: #{cikgrec_forward.5} parent=602 // loop_body
        %v1012 = vld [vmem:[%s1010] sm:%s1003]
        %1013 = vst [vmem:[%s1011] sm:%s1003] %v1012
      $region608: #{cikgrec_forward.5} parent=602 // loop_footer
        %s1009 = sadd.s32 1, %s1005
      $region609: #{cikgrec_forward.5} parent=602 // loop_footer_branch
        %1004 = sbr.rel target = $region605
      $region610: #{cikgrec_forward.5} parent=602 // loop_exit
        _
    $region603: #{cikgrec_forward.5} parent=1 // pred_fallthru
      _
    // Predicated region
    $region622: #{cikgrec_forward.5} parent=1 // pred_check
      _
    $region623: #{cikgrec_forward.5} parent=1 // pred_check_branch
      %1038 = sbr.rel (0) target = $region625
    $region624: #{cikgrec_forward.5} parent=1 // pred_region
      %1039 = vsyncadd %s993, 16
    $region625: #{cikgrec_forward.5} parent=1 // pred_fallthru
      _
    %s1040 = sld [smem:[#allocation8 + $0x2]]
    %s1041 = scalar_lea.vmem %s3, %s1040
    %s1042 = scalar_lea.vmem [#allocation2], 10
    %s1043 = scalar_lea.sflag [#allocation4], 10
    %p1045 = scmp.lt.u32.totalorder 1, 8
    %p1046 = pneg %p1045
    // Predicated region
    $region626: #{cikgrec_forward.5} parent=1 // pred_check
      _
    $region627: #{cikgrec_forward.5} parent=1 // pred_check_branch
      %1048 = sbr.rel (%p1045) target = $region629
    $region628: #{cikgrec_forward.5} parent=1 // pred_region
      %s1064 = sand.u32 1, 7
      %p1065 = scmp.eq.s32.totalorder %s1064, 0
      %p1066 = pneg %p1065
      // Predicated region
      $region641: #{cikgrec_forward.5} parent=628 // pred_check
        _
      $region642: #{cikgrec_forward.5} parent=628 // pred_check_branch
        %1068 = sbr.rel (%p1065) target = $region644
      $region643: #{cikgrec_forward.5} parent=628 // pred_region
        %s1069 = sand.u32 1, 7
        %s1070 = ssub.s32 1, %s1069
        %s1071 = scalar_lea.vmem %s1041, %s1070
        %s1072 = ssub.s32 1, %s1069
        %s1073 = scalar_lea.vmem %s1042, %s1072 [#allocation2]
        %s1074 = sshll.u32 1, %s1069
        %s1075 = ssub.s32 %s1074, 1
        loop: start=0, step=1, limit=1
        $region645: #{cikgrec_forward.5} parent=643 // loop_pre_header
          _
        $region646: #{cikgrec_forward.5} parent=643 // loop_header
          %s1077 = sphi 0, %s1081
          %p1078 = scmp.ge.s32.totalorder %s1077, 1
          %s1082 = sphi %s1071, %s1071
          %s1083 = sphi %s1073, %s1073
        $region647: #{cikgrec_forward.5} parent=643 // loop_header_branch
          %1080 = sbr.rel (%p1078) target = $region651
        $region648: #{cikgrec_forward.5} parent=643 // loop_body
          %v1084 = vld [vmem:[%s1082] sm:%s1075]
          %1085 = vst [vmem:[%s1083] sm:%s1075] %v1084
        $region649: #{cikgrec_forward.5} parent=643 // loop_footer
          %s1081 = sadd.s32 1, %s1077
        $region650: #{cikgrec_forward.5} parent=643 // loop_footer_branch
          %1076 = sbr.rel target = $region646
        $region651: #{cikgrec_forward.5} parent=643 // loop_exit
          _
      $region644: #{cikgrec_forward.5} parent=628 // pred_fallthru
        _
    $region629: #{cikgrec_forward.5} parent=1 // pred_fallthru
      _
    // Predicated region
    $region630: #{cikgrec_forward.5} parent=1 // pred_check
      %p1049 = pneg %p1045
    $region631: #{cikgrec_forward.5} parent=1 // pred_check_branch
      %1051 = sbr.rel (%p1049) target = $region633
    $region632: #{cikgrec_forward.5} parent=1 // pred_region
      %s1052 = sshll.u32 1, 1
      %s1053 = ssub.s32 %s1052, 1
      loop: start=0, step=1, limit=1
      $region634: #{cikgrec_forward.5} parent=632 // loop_pre_header
        _
      $region635: #{cikgrec_forward.5} parent=632 // loop_header
        %s1055 = sphi 0, %s1059
        %p1056 = scmp.ge.s32.totalorder %s1055, 1
        %s1060 = sphi %s1041, %s1041
        %s1061 = sphi %s1042, %s1042
      $region636: #{cikgrec_forward.5} parent=632 // loop_header_branch
        %1058 = sbr.rel (%p1056) target = $region640
      $region637: #{cikgrec_forward.5} parent=632 // loop_body
        %v1062 = vld [vmem:[%s1060] sm:%s1053]
        %1063 = vst [vmem:[%s1061] sm:%s1053] %v1062
      $region638: #{cikgrec_forward.5} parent=632 // loop_footer
        %s1059 = sadd.s32 1, %s1055
      $region639: #{cikgrec_forward.5} parent=632 // loop_footer_branch
        %1054 = sbr.rel target = $region635
      $region640: #{cikgrec_forward.5} parent=632 // loop_exit
        _
    $region633: #{cikgrec_forward.5} parent=1 // pred_fallthru
      _
    // Predicated region
    $region652: #{cikgrec_forward.5} parent=1 // pred_check
      _
    $region653: #{cikgrec_forward.5} parent=1 // pred_check_branch
      %1088 = sbr.rel (0) target = $region655
    $region654: #{cikgrec_forward.5} parent=1 // pred_region
      %1089 = vsyncadd %s1043, 16
    $region655: #{cikgrec_forward.5} parent=1 // pred_fallthru
      _
    %s1090 = scalar_lea.vmem %s4, %s1040
    %s1091 = scalar_lea.vmem [#allocation3], 10
    %s1092 = scalar_lea.sflag [#allocation4], 34
    %p1094 = scmp.lt.u32.totalorder 1, 8
    %p1095 = pneg %p1094
    // Predicated region
    $region656: #{cikgrec_forward.5} parent=1 // pred_check
      _
    $region657: #{cikgrec_forward.5} parent=1 // pred_check_branch
      %1097 = sbr.rel (%p1094) target = $region659
    $region658: #{cikgrec_forward.5} parent=1 // pred_region
      %s1113 = sand.u32 1, 7
      %p1114 = scmp.eq.s32.totalorder %s1113, 0
      %p1115 = pneg %p1114
      // Predicated region
      $region671: #{cikgrec_forward.5} parent=658 // pred_check
        _
      $region672: #{cikgrec_forward.5} parent=658 // pred_check_branch
        %1117 = sbr.rel (%p1114) target = $region674
      $region673: #{cikgrec_forward.5} parent=658 // pred_region
        %s1118 = sand.u32 1, 7
        %s1119 = ssub.s32 1, %s1118
        %s1120 = scalar_lea.vmem %s1090, %s1119
        %s1121 = ssub.s32 1, %s1118
        %s1122 = scalar_lea.vmem %s1091, %s1121 [#allocation3]
        %s1123 = sshll.u32 1, %s1118
        %s1124 = ssub.s32 %s1123, 1
        loop: start=0, step=1, limit=1
        $region675: #{cikgrec_forward.5} parent=673 // loop_pre_header
          _
        $region676: #{cikgrec_forward.5} parent=673 // loop_header
          %s1126 = sphi 0, %s1130
          %p1127 = scmp.ge.s32.totalorder %s1126, 1
          %s1131 = sphi %s1120, %s1120
          %s1132 = sphi %s1122, %s1122
        $region677: #{cikgrec_forward.5} parent=673 // loop_header_branch
          %1129 = sbr.rel (%p1127) target = $region681
        $region678: #{cikgrec_forward.5} parent=673 // loop_body
          %v1133 = vld [vmem:[%s1131] sm:%s1124]
          %1134 = vst [vmem:[%s1132] sm:%s1124] %v1133
        $region679: #{cikgrec_forward.5} parent=673 // loop_footer
          %s1130 = sadd.s32 1, %s1126
        $region680: #{cikgrec_forward.5} parent=673 // loop_footer_branch
          %1125 = sbr.rel target = $region676
        $region681: #{cikgrec_forward.5} parent=673 // loop_exit
          _
      $region674: #{cikgrec_forward.5} parent=658 // pred_fallthru
        _
    $region659: #{cikgrec_forward.5} parent=1 // pred_fallthru
      _
    // Predicated region
    $region660: #{cikgrec_forward.5} parent=1 // pred_check
      %p1098 = pneg %p1094
    $region661: #{cikgrec_forward.5} parent=1 // pred_check_branch
      %1100 = sbr.rel (%p1098) target = $region663
    $region662: #{cikgrec_forward.5} parent=1 // pred_region
      %s1101 = sshll.u32 1, 1
      %s1102 = ssub.s32 %s1101, 1
      loop: start=0, step=1, limit=1
      $region664: #{cikgrec_forward.5} parent=662 // loop_pre_header
        _
      $region665: #{cikgrec_forward.5} parent=662 // loop_header
        %s1104 = sphi 0, %s1108
        %p1105 = scmp.ge.s32.totalorder %s1104, 1
        %s1109 = sphi %s1090, %s1090
        %s1110 = sphi %s1091, %s1091
      $region666: #{cikgrec_forward.5} parent=662 // loop_header_branch
        %1107 = sbr.rel (%p1105) target = $region670
      $region667: #{cikgrec_forward.5} parent=662 // loop_body
        %v1111 = vld [vmem:[%s1109] sm:%s1102]
        %1112 = vst [vmem:[%s1110] sm:%s1102] %v1111
      $region668: #{cikgrec_forward.5} parent=662 // loop_footer
        %s1108 = sadd.s32 1, %s1104
      $region669: #{cikgrec_forward.5} parent=662 // loop_footer_branch
        %1103 = sbr.rel target = $region665
      $region670: #{cikgrec_forward.5} parent=662 // loop_exit
        _
    $region663: #{cikgrec_forward.5} parent=1 // pred_fallthru
      _
    // Predicated region
    $region682: #{cikgrec_forward.5} parent=1 // pred_check
      _
    $region683: #{cikgrec_forward.5} parent=1 // pred_check_branch
      %1137 = sbr.rel (0) target = $region685
    $region684: #{cikgrec_forward.5} parent=1 // pred_region
      %1138 = vsyncadd %s1092, 16
    $region685: #{cikgrec_forward.5} parent=1 // pred_fallthru
      _
    %s1139 = sld [smem:[#allocation8 + $0x3]]
    %s1140 = scalar_lea.vmem %s3, %s1139
    %s1141 = scalar_lea.vmem [#allocation2], 11
    %s1142 = scalar_lea.sflag [#allocation4], 11
    %p1144 = scmp.lt.u32.totalorder 1, 8
    %p1145 = pneg %p1144
    // Predicated region
    $region686: #{cikgrec_forward.5} parent=1 // pred_check
      _
    $region687: #{cikgrec_forward.5} parent=1 // pred_check_branch
      %1147 = sbr.rel (%p1144) target = $region689
    $region688: #{cikgrec_forward.5} parent=1 // pred_region
      %s1163 = sand.u32 1, 7
      %p1164 = scmp.eq.s32.totalorder %s1163, 0
      %p1165 = pneg %p1164
      // Predicated region
      $region701: #{cikgrec_forward.5} parent=688 // pred_check
        _
      $region702: #{cikgrec_forward.5} parent=688 // pred_check_branch
        %1167 = sbr.rel (%p1164) target = $region704
      $region703: #{cikgrec_forward.5} parent=688 // pred_region
        %s1168 = sand.u32 1, 7
        %s1169 = ssub.s32 1, %s1168
        %s1170 = scalar_lea.vmem %s1140, %s1169
        %s1171 = ssub.s32 1, %s1168
        %s1172 = scalar_lea.vmem %s1141, %s1171 [#allocation2]
        %s1173 = sshll.u32 1, %s1168
        %s1174 = ssub.s32 %s1173, 1
        loop: start=0, step=1, limit=1
        $region705: #{cikgrec_forward.5} parent=703 // loop_pre_header
          _
        $region706: #{cikgrec_forward.5} parent=703 // loop_header
          %s1176 = sphi 0, %s1180
          %p1177 = scmp.ge.s32.totalorder %s1176, 1
          %s1181 = sphi %s1170, %s1170
          %s1182 = sphi %s1172, %s1172
        $region707: #{cikgrec_forward.5} parent=703 // loop_header_branch
          %1179 = sbr.rel (%p1177) target = $region711
        $region708: #{cikgrec_forward.5} parent=703 // loop_body
          %v1183 = vld [vmem:[%s1181] sm:%s1174]
          %1184 = vst [vmem:[%s1182] sm:%s1174] %v1183
        $region709: #{cikgrec_forward.5} parent=703 // loop_footer
          %s1180 = sadd.s32 1, %s1176
        $region710: #{cikgrec_forward.5} parent=703 // loop_footer_branch
          %1175 = sbr.rel target = $region706
        $region711: #{cikgrec_forward.5} parent=703 // loop_exit
          _
      $region704: #{cikgrec_forward.5} parent=688 // pred_fallthru
        _
    $region689: #{cikgrec_forward.5} parent=1 // pred_fallthru
      _
    // Predicated region
    $region690: #{cikgrec_forward.5} parent=1 // pred_check
      %p1148 = pneg %p1144
    $region691: #{cikgrec_forward.5} parent=1 // pred_check_branch
      %1150 = sbr.rel (%p1148) target = $region693
    $region692: #{cikgrec_forward.5} parent=1 // pred_region
      %s1151 = sshll.u32 1, 1
      %s1152 = ssub.s32 %s1151, 1
      loop: start=0, step=1, limit=1
      $region694: #{cikgrec_forward.5} parent=692 // loop_pre_header
        _
      $region695: #{cikgrec_forward.5} parent=692 // loop_header
        %s1154 = sphi 0, %s1158
        %p1155 = scmp.ge.s32.totalorder %s1154, 1
        %s1159 = sphi %s1140, %s1140
        %s1160 = sphi %s1141, %s1141
      $region696: #{cikgrec_forward.5} parent=692 // loop_header_branch
        %1157 = sbr.rel (%p1155) target = $region700
      $region697: #{cikgrec_forward.5} parent=692 // loop_body
        %v1161 = vld [vmem:[%s1159] sm:%s1152]
        %1162 = vst [vmem:[%s1160] sm:%s1152] %v1161
      $region698: #{cikgrec_forward.5} parent=692 // loop_footer
        %s1158 = sadd.s32 1, %s1154
      $region699: #{cikgrec_forward.5} parent=692 // loop_footer_branch
        %1153 = sbr.rel target = $region695
      $region700: #{cikgrec_forward.5} parent=692 // loop_exit
        _
    $region693: #{cikgrec_forward.5} parent=1 // pred_fallthru
      _
    // Predicated region
    $region712: #{cikgrec_forward.5} parent=1 // pred_check
      _
    $region713: #{cikgrec_forward.5} parent=1 // pred_check_branch
      %1187 = sbr.rel (0) target = $region715
    $region714: #{cikgrec_forward.5} parent=1 // pred_region
      %1188 = vsyncadd %s1142, 16
    $region715: #{cikgrec_forward.5} parent=1 // pred_fallthru
      _
    %s1189 = scalar_lea.vmem %s4, %s1139
    %s1190 = scalar_lea.vmem [#allocation3], 11
    %s1191 = scalar_lea.sflag [#allocation4], 35
    %p1193 = scmp.lt.u32.totalorder 1, 8
    %p1194 = pneg %p1193
    // Predicated region
    $region716: #{cikgrec_forward.5} parent=1 // pred_check
      _
    $region717: #{cikgrec_forward.5} parent=1 // pred_check_branch
      %1196 = sbr.rel (%p1193) target = $region719
    $region718: #{cikgrec_forward.5} parent=1 // pred_region
      %s1212 = sand.u32 1, 7
      %p1213 = scmp.eq.s32.totalorder %s1212, 0
      %p1214 = pneg %p1213
      // Predicated region
      $region731: #{cikgrec_forward.5} parent=718 // pred_check
        _
      $region732: #{cikgrec_forward.5} parent=718 // pred_check_branch
        %1216 = sbr.rel (%p1213) target = $region734
      $region733: #{cikgrec_forward.5} parent=718 // pred_region
        %s1217 = sand.u32 1, 7
        %s1218 = ssub.s32 1, %s1217
        %s1219 = scalar_lea.vmem %s1189, %s1218
        %s1220 = ssub.s32 1, %s1217
        %s1221 = scalar_lea.vmem %s1190, %s1220 [#allocation3]
        %s1222 = sshll.u32 1, %s1217
        %s1223 = ssub.s32 %s1222, 1
        loop: start=0, step=1, limit=1
        $region735: #{cikgrec_forward.5} parent=733 // loop_pre_header
          _
        $region736: #{cikgrec_forward.5} parent=733 // loop_header
          %s1225 = sphi 0, %s1229
          %p1226 = scmp.ge.s32.totalorder %s1225, 1
          %s1230 = sphi %s1219, %s1219
          %s1231 = sphi %s1221, %s1221
        $region737: #{cikgrec_forward.5} parent=733 // loop_header_branch
          %1228 = sbr.rel (%p1226) target = $region741
        $region738: #{cikgrec_forward.5} parent=733 // loop_body
          %v1232 = vld [vmem:[%s1230] sm:%s1223]
          %1233 = vst [vmem:[%s1231] sm:%s1223] %v1232
        $region739: #{cikgrec_forward.5} parent=733 // loop_footer
          %s1229 = sadd.s32 1, %s1225
        $region740: #{cikgrec_forward.5} parent=733 // loop_footer_branch
          %1224 = sbr.rel target = $region736
        $region741: #{cikgrec_forward.5} parent=733 // loop_exit
          _
      $region734: #{cikgrec_forward.5} parent=718 // pred_fallthru
        _
    $region719: #{cikgrec_forward.5} parent=1 // pred_fallthru
      _
    // Predicated region
    $region720: #{cikgrec_forward.5} parent=1 // pred_check
      %p1197 = pneg %p1193
    $region721: #{cikgrec_forward.5} parent=1 // pred_check_branch
      %1199 = sbr.rel (%p1197) target = $region723
    $region722: #{cikgrec_forward.5} parent=1 // pred_region
      %s1200 = sshll.u32 1, 1
      %s1201 = ssub.s32 %s1200, 1
      loop: start=0, step=1, limit=1
      $region724: #{cikgrec_forward.5} parent=722 // loop_pre_header
        _
      $region725: #{cikgrec_forward.5} parent=722 // loop_header
        %s1203 = sphi 0, %s1207
        %p1204 = scmp.ge.s32.totalorder %s1203, 1
        %s1208 = sphi %s1189, %s1189
        %s1209 = sphi %s1190, %s1190
      $region726: #{cikgrec_forward.5} parent=722 // loop_header_branch
        %1206 = sbr.rel (%p1204) target = $region730
      $region727: #{cikgrec_forward.5} parent=722 // loop_body
        %v1210 = vld [vmem:[%s1208] sm:%s1201]
        %1211 = vst [vmem:[%s1209] sm:%s1201] %v1210
      $region728: #{cikgrec_forward.5} parent=722 // loop_footer
        %s1207 = sadd.s32 1, %s1203
      $region729: #{cikgrec_forward.5} parent=722 // loop_footer_branch
        %1202 = sbr.rel target = $region725
      $region730: #{cikgrec_forward.5} parent=722 // loop_exit
        _
    $region723: #{cikgrec_forward.5} parent=1 // pred_fallthru
      _
    // Predicated region
    $region742: #{cikgrec_forward.5} parent=1 // pred_check
      _
    $region743: #{cikgrec_forward.5} parent=1 // pred_check_branch
      %1236 = sbr.rel (0) target = $region745
    $region744: #{cikgrec_forward.5} parent=1 // pred_region
      %1237 = vsyncadd %s1191, 16
    $region745: #{cikgrec_forward.5} parent=1 // pred_fallthru
      _
    %s1238 = sld [smem:[#allocation8 + $0x4]]
    %s1239 = scalar_lea.vmem %s3, %s1238
    %s1240 = scalar_lea.vmem [#allocation2], 12
    %s1241 = scalar_lea.sflag [#allocation4], 12
    %p1243 = scmp.lt.u32.totalorder 1, 8
    %p1244 = pneg %p1243
    // Predicated region
    $region746: #{cikgrec_forward.5} parent=1 // pred_check
      _
    $region747: #{cikgrec_forward.5} parent=1 // pred_check_branch
      %1246 = sbr.rel (%p1243) target = $region749
    $region748: #{cikgrec_forward.5} parent=1 // pred_region
      %s1262 = sand.u32 1, 7
      %p1263 = scmp.eq.s32.totalorder %s1262, 0
      %p1264 = pneg %p1263
      // Predicated region
      $region761: #{cikgrec_forward.5} parent=748 // pred_check
        _
      $region762: #{cikgrec_forward.5} parent=748 // pred_check_branch
        %1266 = sbr.rel (%p1263) target = $region764
      $region763: #{cikgrec_forward.5} parent=748 // pred_region
        %s1267 = sand.u32 1, 7
        %s1268 = ssub.s32 1, %s1267
        %s1269 = scalar_lea.vmem %s1239, %s1268
        %s1270 = ssub.s32 1, %s1267
        %s1271 = scalar_lea.vmem %s1240, %s1270 [#allocation2]
        %s1272 = sshll.u32 1, %s1267
        %s1273 = ssub.s32 %s1272, 1
        loop: start=0, step=1, limit=1
        $region765: #{cikgrec_forward.5} parent=763 // loop_pre_header
          _
        $region766: #{cikgrec_forward.5} parent=763 // loop_header
          %s1275 = sphi 0, %s1279
          %p1276 = scmp.ge.s32.totalorder %s1275, 1
          %s1280 = sphi %s1269, %s1269
          %s1281 = sphi %s1271, %s1271
        $region767: #{cikgrec_forward.5} parent=763 // loop_header_branch
          %1278 = sbr.rel (%p1276) target = $region771
        $region768: #{cikgrec_forward.5} parent=763 // loop_body
          %v1282 = vld [vmem:[%s1280] sm:%s1273]
          %1283 = vst [vmem:[%s1281] sm:%s1273] %v1282
        $region769: #{cikgrec_forward.5} parent=763 // loop_footer
          %s1279 = sadd.s32 1, %s1275
        $region770: #{cikgrec_forward.5} parent=763 // loop_footer_branch
          %1274 = sbr.rel target = $region766
        $region771: #{cikgrec_forward.5} parent=763 // loop_exit
          _
      $region764: #{cikgrec_forward.5} parent=748 // pred_fallthru
        _
    $region749: #{cikgrec_forward.5} parent=1 // pred_fallthru
      _
    // Predicated region
    $region750: #{cikgrec_forward.5} parent=1 // pred_check
      %p1247 = pneg %p1243
    $region751: #{cikgrec_forward.5} parent=1 // pred_check_branch
      %1249 = sbr.rel (%p1247) target = $region753
    $region752: #{cikgrec_forward.5} parent=1 // pred_region
      %s1250 = sshll.u32 1, 1
      %s1251 = ssub.s32 %s1250, 1
      loop: start=0, step=1, limit=1
      $region754: #{cikgrec_forward.5} parent=752 // loop_pre_header
        _
      $region755: #{cikgrec_forward.5} parent=752 // loop_header
        %s1253 = sphi 0, %s1257
        %p1254 = scmp.ge.s32.totalorder %s1253, 1
        %s1258 = sphi %s1239, %s1239
        %s1259 = sphi %s1240, %s1240
      $region756: #{cikgrec_forward.5} parent=752 // loop_header_branch
        %1256 = sbr.rel (%p1254) target = $region760
      $region757: #{cikgrec_forward.5} parent=752 // loop_body
        %v1260 = vld [vmem:[%s1258] sm:%s1251]
        %1261 = vst [vmem:[%s1259] sm:%s1251] %v1260
      $region758: #{cikgrec_forward.5} parent=752 // loop_footer
        %s1257 = sadd.s32 1, %s1253
      $region759: #{cikgrec_forward.5} parent=752 // loop_footer_branch
        %1252 = sbr.rel target = $region755
      $region760: #{cikgrec_forward.5} parent=752 // loop_exit
        _
    $region753: #{cikgrec_forward.5} parent=1 // pred_fallthru
      _
    // Predicated region
    $region772: #{cikgrec_forward.5} parent=1 // pred_check
      _
    $region773: #{cikgrec_forward.5} parent=1 // pred_check_branch
      %1286 = sbr.rel (0) target = $region775
    $region774: #{cikgrec_forward.5} parent=1 // pred_region
      %1287 = vsyncadd %s1241, 16
    $region775: #{cikgrec_forward.5} parent=1 // pred_fallthru
      _
    %s1288 = scalar_lea.vmem %s4, %s1238
    %s1289 = scalar_lea.vmem [#allocation3], 12
    %s1290 = scalar_lea.sflag [#allocation4], 36
    %p1292 = scmp.lt.u32.totalorder 1, 8
    %p1293 = pneg %p1292
    // Predicated region
    $region776: #{cikgrec_forward.5} parent=1 // pred_check
      _
    $region777: #{cikgrec_forward.5} parent=1 // pred_check_branch
      %1295 = sbr.rel (%p1292) target = $region779
    $region778: #{cikgrec_forward.5} parent=1 // pred_region
      %s1311 = sand.u32 1, 7
      %p1312 = scmp.eq.s32.totalorder %s1311, 0
      %p1313 = pneg %p1312
      // Predicated region
      $region791: #{cikgrec_forward.5} parent=778 // pred_check
        _
      $region792: #{cikgrec_forward.5} parent=778 // pred_check_branch
        %1315 = sbr.rel (%p1312) target = $region794
      $region793: #{cikgrec_forward.5} parent=778 // pred_region
        %s1316 = sand.u32 1, 7
        %s1317 = ssub.s32 1, %s1316
        %s1318 = scalar_lea.vmem %s1288, %s1317
        %s1319 = ssub.s32 1, %s1316
        %s1320 = scalar_lea.vmem %s1289, %s1319 [#allocation3]
        %s1321 = sshll.u32 1, %s1316
        %s1322 = ssub.s32 %s1321, 1
        loop: start=0, step=1, limit=1
        $region795: #{cikgrec_forward.5} parent=793 // loop_pre_header
          _
        $region796: #{cikgrec_forward.5} parent=793 // loop_header
          %s1324 = sphi 0, %s1328
          %p1325 = scmp.ge.s32.totalorder %s1324, 1
          %s1329 = sphi %s1318, %s1318
          %s1330 = sphi %s1320, %s1320
        $region797: #{cikgrec_forward.5} parent=793 // loop_header_branch
          %1327 = sbr.rel (%p1325) target = $region801
        $region798: #{cikgrec_forward.5} parent=793 // loop_body
          %v1331 = vld [vmem:[%s1329] sm:%s1322]
          %1332 = vst [vmem:[%s1330] sm:%s1322] %v1331
        $region799: #{cikgrec_forward.5} parent=793 // loop_footer
          %s1328 = sadd.s32 1, %s1324
        $region800: #{cikgrec_forward.5} parent=793 // loop_footer_branch
          %1323 = sbr.rel target = $region796
        $region801: #{cikgrec_forward.5} parent=793 // loop_exit
          _
      $region794: #{cikgrec_forward.5} parent=778 // pred_fallthru
        _
    $region779: #{cikgrec_forward.5} parent=1 // pred_fallthru
      _
    // Predicated region
    $region780: #{cikgrec_forward.5} parent=1 // pred_check
      %p1296 = pneg %p1292
    $region781: #{cikgrec_forward.5} parent=1 // pred_check_branch
      %1298 = sbr.rel (%p1296) target = $region783
    $region782: #{cikgrec_forward.5} parent=1 // pred_region
      %s1299 = sshll.u32 1, 1
      %s1300 = ssub.s32 %s1299, 1
      loop: start=0, step=1, limit=1
      $region784: #{cikgrec_forward.5} parent=782 // loop_pre_header
        _
      $region785: #{cikgrec_forward.5} parent=782 // loop_header
        %s1302 = sphi 0, %s1306
        %p1303 = scmp.ge.s32.totalorder %s1302, 1
        %s1307 = sphi %s1288, %s1288
        %s1308 = sphi %s1289, %s1289
      $region786: #{cikgrec_forward.5} parent=782 // loop_header_branch
        %1305 = sbr.rel (%p1303) target = $region790
      $region787: #{cikgrec_forward.5} parent=782 // loop_body
        %v1309 = vld [vmem:[%s1307] sm:%s1300]
        %1310 = vst [vmem:[%s1308] sm:%s1300] %v1309
      $region788: #{cikgrec_forward.5} parent=782 // loop_footer
        %s1306 = sadd.s32 1, %s1302
      $region789: #{cikgrec_forward.5} parent=782 // loop_footer_branch
        %1301 = sbr.rel target = $region785
      $region790: #{cikgrec_forward.5} parent=782 // loop_exit
        _
    $region783: #{cikgrec_forward.5} parent=1 // pred_fallthru
      _
    // Predicated region
    $region802: #{cikgrec_forward.5} parent=1 // pred_check
      _
    $region803: #{cikgrec_forward.5} parent=1 // pred_check_branch
      %1335 = sbr.rel (0) target = $region805
    $region804: #{cikgrec_forward.5} parent=1 // pred_region
      %1336 = vsyncadd %s1290, 16
    $region805: #{cikgrec_forward.5} parent=1 // pred_fallthru
      _
    %s1337 = sld [smem:[#allocation8 + $0x5]]
    %s1338 = scalar_lea.vmem %s3, %s1337
    %s1339 = scalar_lea.vmem [#allocation2], 13
    %s1340 = scalar_lea.sflag [#allocation4], 13
    %p1342 = scmp.lt.u32.totalorder 1, 8
    %p1343 = pneg %p1342
    // Predicated region
    $region806: #{cikgrec_forward.5} parent=1 // pred_check
      _
    $region807: #{cikgrec_forward.5} parent=1 // pred_check_branch
      %1345 = sbr.rel (%p1342) target = $region809
    $region808: #{cikgrec_forward.5} parent=1 // pred_region
      %s1361 = sand.u32 1, 7
      %p1362 = scmp.eq.s32.totalorder %s1361, 0
      %p1363 = pneg %p1362
      // Predicated region
      $region821: #{cikgrec_forward.5} parent=808 // pred_check
        _
      $region822: #{cikgrec_forward.5} parent=808 // pred_check_branch
        %1365 = sbr.rel (%p1362) target = $region824
      $region823: #{cikgrec_forward.5} parent=808 // pred_region
        %s1366 = sand.u32 1, 7
        %s1367 = ssub.s32 1, %s1366
        %s1368 = scalar_lea.vmem %s1338, %s1367
        %s1369 = ssub.s32 1, %s1366
        %s1370 = scalar_lea.vmem %s1339, %s1369 [#allocation2]
        %s1371 = sshll.u32 1, %s1366
        %s1372 = ssub.s32 %s1371, 1
        loop: start=0, step=1, limit=1
        $region825: #{cikgrec_forward.5} parent=823 // loop_pre_header
          _
        $region826: #{cikgrec_forward.5} parent=823 // loop_header
          %s1374 = sphi 0, %s1378
          %p1375 = scmp.ge.s32.totalorder %s1374, 1
          %s1379 = sphi %s1368, %s1368
          %s1380 = sphi %s1370, %s1370
        $region827: #{cikgrec_forward.5} parent=823 // loop_header_branch
          %1377 = sbr.rel (%p1375) target = $region831
        $region828: #{cikgrec_forward.5} parent=823 // loop_body
          %v1381 = vld [vmem:[%s1379] sm:%s1372]
          %1382 = vst [vmem:[%s1380] sm:%s1372] %v1381
        $region829: #{cikgrec_forward.5} parent=823 // loop_footer
          %s1378 = sadd.s32 1, %s1374
        $region830: #{cikgrec_forward.5} parent=823 // loop_footer_branch
          %1373 = sbr.rel target = $region826
        $region831: #{cikgrec_forward.5} parent=823 // loop_exit
          _
      $region824: #{cikgrec_forward.5} parent=808 // pred_fallthru
        _
    $region809: #{cikgrec_forward.5} parent=1 // pred_fallthru
      _
    // Predicated region
    $region810: #{cikgrec_forward.5} parent=1 // pred_check
      %p1346 = pneg %p1342
    $region811: #{cikgrec_forward.5} parent=1 // pred_check_branch
      %1348 = sbr.rel (%p1346) target = $region813
    $region812: #{cikgrec_forward.5} parent=1 // pred_region
      %s1349 = sshll.u32 1, 1
      %s1350 = ssub.s32 %s1349, 1
      loop: start=0, step=1, limit=1
      $region814: #{cikgrec_forward.5} parent=812 // loop_pre_header
        _
      $region815: #{cikgrec_forward.5} parent=812 // loop_header
        %s1352 = sphi 0, %s1356
        %p1353 = scmp.ge.s32.totalorder %s1352, 1
        %s1357 = sphi %s1338, %s1338
        %s1358 = sphi %s1339, %s1339
      $region816: #{cikgrec_forward.5} parent=812 // loop_header_branch
        %1355 = sbr.rel (%p1353) target = $region820
      $region817: #{cikgrec_forward.5} parent=812 // loop_body
        %v1359 = vld [vmem:[%s1357] sm:%s1350]
        %1360 = vst [vmem:[%s1358] sm:%s1350] %v1359
      $region818: #{cikgrec_forward.5} parent=812 // loop_footer
        %s1356 = sadd.s32 1, %s1352
      $region819: #{cikgrec_forward.5} parent=812 // loop_footer_branch
        %1351 = sbr.rel target = $region815
      $region820: #{cikgrec_forward.5} parent=812 // loop_exit
        _
    $region813: #{cikgrec_forward.5} parent=1 // pred_fallthru
      _
    // Predicated region
    $region832: #{cikgrec_forward.5} parent=1 // pred_check
      _
    $region833: #{cikgrec_forward.5} parent=1 // pred_check_branch
      %1385 = sbr.rel (0) target = $region835
    $region834: #{cikgrec_forward.5} parent=1 // pred_region
      %1386 = vsyncadd %s1340, 16
    $region835: #{cikgrec_forward.5} parent=1 // pred_fallthru
      _
    %s1387 = scalar_lea.vmem %s4, %s1337
    %s1388 = scalar_lea.vmem [#allocation3], 13
    %s1389 = scalar_lea.sflag [#allocation4], 37
    %p1391 = scmp.lt.u32.totalorder 1, 8
    %p1392 = pneg %p1391
    // Predicated region
    $region836: #{cikgrec_forward.5} parent=1 // pred_check
      _
    $region837: #{cikgrec_forward.5} parent=1 // pred_check_branch
      %1394 = sbr.rel (%p1391) target = $region839
    $region838: #{cikgrec_forward.5} parent=1 // pred_region
      %s1410 = sand.u32 1, 7
      %p1411 = scmp.eq.s32.totalorder %s1410, 0
      %p1412 = pneg %p1411
      // Predicated region
      $region851: #{cikgrec_forward.5} parent=838 // pred_check
        _
      $region852: #{cikgrec_forward.5} parent=838 // pred_check_branch
        %1414 = sbr.rel (%p1411) target = $region854
      $region853: #{cikgrec_forward.5} parent=838 // pred_region
        %s1415 = sand.u32 1, 7
        %s1416 = ssub.s32 1, %s1415
        %s1417 = scalar_lea.vmem %s1387, %s1416
        %s1418 = ssub.s32 1, %s1415
        %s1419 = scalar_lea.vmem %s1388, %s1418 [#allocation3]
        %s1420 = sshll.u32 1, %s1415
        %s1421 = ssub.s32 %s1420, 1
        loop: start=0, step=1, limit=1
        $region855: #{cikgrec_forward.5} parent=853 // loop_pre_header
          _
        $region856: #{cikgrec_forward.5} parent=853 // loop_header
          %s1423 = sphi 0, %s1427
          %p1424 = scmp.ge.s32.totalorder %s1423, 1
          %s1428 = sphi %s1417, %s1417
          %s1429 = sphi %s1419, %s1419
        $region857: #{cikgrec_forward.5} parent=853 // loop_header_branch
          %1426 = sbr.rel (%p1424) target = $region861
        $region858: #{cikgrec_forward.5} parent=853 // loop_body
          %v1430 = vld [vmem:[%s1428] sm:%s1421]
          %1431 = vst [vmem:[%s1429] sm:%s1421] %v1430
        $region859: #{cikgrec_forward.5} parent=853 // loop_footer
          %s1427 = sadd.s32 1, %s1423
        $region860: #{cikgrec_forward.5} parent=853 // loop_footer_branch
          %1422 = sbr.rel target = $region856
        $region861: #{cikgrec_forward.5} parent=853 // loop_exit
          _
      $region854: #{cikgrec_forward.5} parent=838 // pred_fallthru
        _
    $region839: #{cikgrec_forward.5} parent=1 // pred_fallthru
      _
    // Predicated region
    $region840: #{cikgrec_forward.5} parent=1 // pred_check
      %p1395 = pneg %p1391
    $region841: #{cikgrec_forward.5} parent=1 // pred_check_branch
      %1397 = sbr.rel (%p1395) target = $region843
    $region842: #{cikgrec_forward.5} parent=1 // pred_region
      %s1398 = sshll.u32 1, 1
      %s1399 = ssub.s32 %s1398, 1
      loop: start=0, step=1, limit=1
      $region844: #{cikgrec_forward.5} parent=842 // loop_pre_header
        _
      $region845: #{cikgrec_forward.5} parent=842 // loop_header
        %s1401 = sphi 0, %s1405
        %p1402 = scmp.ge.s32.totalorder %s1401, 1
        %s1406 = sphi %s1387, %s1387
        %s1407 = sphi %s1388, %s1388
      $region846: #{cikgrec_forward.5} parent=842 // loop_header_branch
        %1404 = sbr.rel (%p1402) target = $region850
      $region847: #{cikgrec_forward.5} parent=842 // loop_body
        %v1408 = vld [vmem:[%s1406] sm:%s1399]
        %1409 = vst [vmem:[%s1407] sm:%s1399] %v1408
      $region848: #{cikgrec_forward.5} parent=842 // loop_footer
        %s1405 = sadd.s32 1, %s1401
      $region849: #{cikgrec_forward.5} parent=842 // loop_footer_branch
        %1400 = sbr.rel target = $region845
      $region850: #{cikgrec_forward.5} parent=842 // loop_exit
        _
    $region843: #{cikgrec_forward.5} parent=1 // pred_fallthru
      _
    // Predicated region
    $region862: #{cikgrec_forward.5} parent=1 // pred_check
      _
    $region863: #{cikgrec_forward.5} parent=1 // pred_check_branch
      %1434 = sbr.rel (0) target = $region865
    $region864: #{cikgrec_forward.5} parent=1 // pred_region
      %1435 = vsyncadd %s1389, 16
    $region865: #{cikgrec_forward.5} parent=1 // pred_fallthru
      _
    %s1436 = sld [smem:[#allocation8 + $0x6]]
    %s1437 = scalar_lea.vmem %s3, %s1436
    %s1438 = scalar_lea.vmem [#allocation2], 14
    %s1439 = scalar_lea.sflag [#allocation4], 14
    %p1441 = scmp.lt.u32.totalorder 1, 8
    %p1442 = pneg %p1441
    // Predicated region
    $region866: #{cikgrec_forward.5} parent=1 // pred_check
      _
    $region867: #{cikgrec_forward.5} parent=1 // pred_check_branch
      %1444 = sbr.rel (%p1441) target = $region869
    $region868: #{cikgrec_forward.5} parent=1 // pred_region
      %s1460 = sand.u32 1, 7
      %p1461 = scmp.eq.s32.totalorder %s1460, 0
      %p1462 = pneg %p1461
      // Predicated region
      $region881: #{cikgrec_forward.5} parent=868 // pred_check
        _
      $region882: #{cikgrec_forward.5} parent=868 // pred_check_branch
        %1464 = sbr.rel (%p1461) target = $region884
      $region883: #{cikgrec_forward.5} parent=868 // pred_region
        %s1465 = sand.u32 1, 7
        %s1466 = ssub.s32 1, %s1465
        %s1467 = scalar_lea.vmem %s1437, %s1466
        %s1468 = ssub.s32 1, %s1465
        %s1469 = scalar_lea.vmem %s1438, %s1468 [#allocation2]
        %s1470 = sshll.u32 1, %s1465
        %s1471 = ssub.s32 %s1470, 1
        loop: start=0, step=1, limit=1
        $region885: #{cikgrec_forward.5} parent=883 // loop_pre_header
          _
        $region886: #{cikgrec_forward.5} parent=883 // loop_header
          %s1473 = sphi 0, %s1477
          %p1474 = scmp.ge.s32.totalorder %s1473, 1
          %s1478 = sphi %s1467, %s1467
          %s1479 = sphi %s1469, %s1469
        $region887: #{cikgrec_forward.5} parent=883 // loop_header_branch
          %1476 = sbr.rel (%p1474) target = $region891
        $region888: #{cikgrec_forward.5} parent=883 // loop_body
          %v1480 = vld [vmem:[%s1478] sm:%s1471]
          %1481 = vst [vmem:[%s1479] sm:%s1471] %v1480
        $region889: #{cikgrec_forward.5} parent=883 // loop_footer
          %s1477 = sadd.s32 1, %s1473
        $region890: #{cikgrec_forward.5} parent=883 // loop_footer_branch
          %1472 = sbr.rel target = $region886
        $region891: #{cikgrec_forward.5} parent=883 // loop_exit
          _
      $region884: #{cikgrec_forward.5} parent=868 // pred_fallthru
        _
    $region869: #{cikgrec_forward.5} parent=1 // pred_fallthru
      _
    // Predicated region
    $region870: #{cikgrec_forward.5} parent=1 // pred_check
      %p1445 = pneg %p1441
    $region871: #{cikgrec_forward.5} parent=1 // pred_check_branch
      %1447 = sbr.rel (%p1445) target = $region873
    $region872: #{cikgrec_forward.5} parent=1 // pred_region
      %s1448 = sshll.u32 1, 1
      %s1449 = ssub.s32 %s1448, 1
      loop: start=0, step=1, limit=1
      $region874: #{cikgrec_forward.5} parent=872 // loop_pre_header
        _
      $region875: #{cikgrec_forward.5} parent=872 // loop_header
        %s1451 = sphi 0, %s1455
        %p1452 = scmp.ge.s32.totalorder %s1451, 1
        %s1456 = sphi %s1437, %s1437
        %s1457 = sphi %s1438, %s1438
      $region876: #{cikgrec_forward.5} parent=872 // loop_header_branch
        %1454 = sbr.rel (%p1452) target = $region880
      $region877: #{cikgrec_forward.5} parent=872 // loop_body
        %v1458 = vld [vmem:[%s1456] sm:%s1449]
        %1459 = vst [vmem:[%s1457] sm:%s1449] %v1458
      $region878: #{cikgrec_forward.5} parent=872 // loop_footer
        %s1455 = sadd.s32 1, %s1451
      $region879: #{cikgrec_forward.5} parent=872 // loop_footer_branch
        %1450 = sbr.rel target = $region875
      $region880: #{cikgrec_forward.5} parent=872 // loop_exit
        _
    $region873: #{cikgrec_forward.5} parent=1 // pred_fallthru
      _
    // Predicated region
    $region892: #{cikgrec_forward.5} parent=1 // pred_check
      _
    $region893: #{cikgrec_forward.5} parent=1 // pred_check_branch
      %1484 = sbr.rel (0) target = $region895
    $region894: #{cikgrec_forward.5} parent=1 // pred_region
      %1485 = vsyncadd %s1439, 16
    $region895: #{cikgrec_forward.5} parent=1 // pred_fallthru
      _
    %s1486 = scalar_lea.vmem %s4, %s1436
    %s1487 = scalar_lea.vmem [#allocation3], 14
    %s1488 = scalar_lea.sflag [#allocation4], 38
    %p1490 = scmp.lt.u32.totalorder 1, 8
    %p1491 = pneg %p1490
    // Predicated region
    $region896: #{cikgrec_forward.5} parent=1 // pred_check
      _
    $region897: #{cikgrec_forward.5} parent=1 // pred_check_branch
      %1493 = sbr.rel (%p1490) target = $region899
    $region898: #{cikgrec_forward.5} parent=1 // pred_region
      %s1509 = sand.u32 1, 7
      %p1510 = scmp.eq.s32.totalorder %s1509, 0
      %p1511 = pneg %p1510
      // Predicated region
      $region911: #{cikgrec_forward.5} parent=898 // pred_check
        _
      $region912: #{cikgrec_forward.5} parent=898 // pred_check_branch
        %1513 = sbr.rel (%p1510) target = $region914
      $region913: #{cikgrec_forward.5} parent=898 // pred_region
        %s1514 = sand.u32 1, 7
        %s1515 = ssub.s32 1, %s1514
        %s1516 = scalar_lea.vmem %s1486, %s1515
        %s1517 = ssub.s32 1, %s1514
        %s1518 = scalar_lea.vmem %s1487, %s1517 [#allocation3]
        %s1519 = sshll.u32 1, %s1514
        %s1520 = ssub.s32 %s1519, 1
        loop: start=0, step=1, limit=1
        $region915: #{cikgrec_forward.5} parent=913 // loop_pre_header
          _
        $region916: #{cikgrec_forward.5} parent=913 // loop_header
          %s1522 = sphi 0, %s1526
          %p1523 = scmp.ge.s32.totalorder %s1522, 1
          %s1527 = sphi %s1516, %s1516
          %s1528 = sphi %s1518, %s1518
        $region917: #{cikgrec_forward.5} parent=913 // loop_header_branch
          %1525 = sbr.rel (%p1523) target = $region921
        $region918: #{cikgrec_forward.5} parent=913 // loop_body
          %v1529 = vld [vmem:[%s1527] sm:%s1520]
          %1530 = vst [vmem:[%s1528] sm:%s1520] %v1529
        $region919: #{cikgrec_forward.5} parent=913 // loop_footer
          %s1526 = sadd.s32 1, %s1522
        $region920: #{cikgrec_forward.5} parent=913 // loop_footer_branch
          %1521 = sbr.rel target = $region916
        $region921: #{cikgrec_forward.5} parent=913 // loop_exit
          _
      $region914: #{cikgrec_forward.5} parent=898 // pred_fallthru
        _
    $region899: #{cikgrec_forward.5} parent=1 // pred_fallthru
      _
    // Predicated region
    $region900: #{cikgrec_forward.5} parent=1 // pred_check
      %p1494 = pneg %p1490
    $region901: #{cikgrec_forward.5} parent=1 // pred_check_branch
      %1496 = sbr.rel (%p1494) target = $region903
    $region902: #{cikgrec_forward.5} parent=1 // pred_region
      %s1497 = sshll.u32 1, 1
      %s1498 = ssub.s32 %s1497, 1
      loop: start=0, step=1, limit=1
      $region904: #{cikgrec_forward.5} parent=902 // loop_pre_header
        _
      $region905: #{cikgrec_forward.5} parent=902 // loop_header
        %s1500 = sphi 0, %s1504
        %p1501 = scmp.ge.s32.totalorder %s1500, 1
        %s1505 = sphi %s1486, %s1486
        %s1506 = sphi %s1487, %s1487
      $region906: #{cikgrec_forward.5} parent=902 // loop_header_branch
        %1503 = sbr.rel (%p1501) target = $region910
      $region907: #{cikgrec_forward.5} parent=902 // loop_body
        %v1507 = vld [vmem:[%s1505] sm:%s1498]
        %1508 = vst [vmem:[%s1506] sm:%s1498] %v1507
      $region908: #{cikgrec_forward.5} parent=902 // loop_footer
        %s1504 = sadd.s32 1, %s1500
      $region909: #{cikgrec_forward.5} parent=902 // loop_footer_branch
        %1499 = sbr.rel target = $region905
      $region910: #{cikgrec_forward.5} parent=902 // loop_exit
        _
    $region903: #{cikgrec_forward.5} parent=1 // pred_fallthru
      _
    // Predicated region
    $region922: #{cikgrec_forward.5} parent=1 // pred_check
      _
    $region923: #{cikgrec_forward.5} parent=1 // pred_check_branch
      %1533 = sbr.rel (0) target = $region925
    $region924: #{cikgrec_forward.5} parent=1 // pred_region
      %1534 = vsyncadd %s1488, 16
    $region925: #{cikgrec_forward.5} parent=1 // pred_fallthru
      _
    %s1535 = sld [smem:[#allocation8 + $0x7]]
    %s1536 = scalar_lea.vmem %s3, %s1535
    %s1537 = scalar_lea.vmem [#allocation2], 15
    %s1538 = scalar_lea.sflag [#allocation4], 15
    %p1540 = scmp.lt.u32.totalorder 1, 8
    %p1541 = pneg %p1540
    // Predicated region
    $region926: #{cikgrec_forward.5} parent=1 // pred_check
      _
    $region927: #{cikgrec_forward.5} parent=1 // pred_check_branch
      %1543 = sbr.rel (%p1540) target = $region929
    $region928: #{cikgrec_forward.5} parent=1 // pred_region
      %s1559 = sand.u32 1, 7
      %p1560 = scmp.eq.s32.totalorder %s1559, 0
      %p1561 = pneg %p1560
      // Predicated region
      $region941: #{cikgrec_forward.5} parent=928 // pred_check
        _
      $region942: #{cikgrec_forward.5} parent=928 // pred_check_branch
        %1563 = sbr.rel (%p1560) target = $region944
      $region943: #{cikgrec_forward.5} parent=928 // pred_region
        %s1564 = sand.u32 1, 7
        %s1565 = ssub.s32 1, %s1564
        %s1566 = scalar_lea.vmem %s1536, %s1565
        %s1567 = ssub.s32 1, %s1564
        %s1568 = scalar_lea.vmem %s1537, %s1567 [#allocation2]
        %s1569 = sshll.u32 1, %s1564
        %s1570 = ssub.s32 %s1569, 1
        loop: start=0, step=1, limit=1
        $region945: #{cikgrec_forward.5} parent=943 // loop_pre_header
          _
        $region946: #{cikgrec_forward.5} parent=943 // loop_header
          %s1572 = sphi 0, %s1576
          %p1573 = scmp.ge.s32.totalorder %s1572, 1
          %s1577 = sphi %s1566, %s1566
          %s1578 = sphi %s1568, %s1568
        $region947: #{cikgrec_forward.5} parent=943 // loop_header_branch
          %1575 = sbr.rel (%p1573) target = $region951
        $region948: #{cikgrec_forward.5} parent=943 // loop_body
          %v1579 = vld [vmem:[%s1577] sm:%s1570]
          %1580 = vst [vmem:[%s1578] sm:%s1570] %v1579
        $region949: #{cikgrec_forward.5} parent=943 // loop_footer
          %s1576 = sadd.s32 1, %s1572
        $region950: #{cikgrec_forward.5} parent=943 // loop_footer_branch
          %1571 = sbr.rel target = $region946
        $region951: #{cikgrec_forward.5} parent=943 // loop_exit
          _
      $region944: #{cikgrec_forward.5} parent=928 // pred_fallthru
        _
    $region929: #{cikgrec_forward.5} parent=1 // pred_fallthru
      _
    // Predicated region
    $region930: #{cikgrec_forward.5} parent=1 // pred_check
      %p1544 = pneg %p1540
    $region931: #{cikgrec_forward.5} parent=1 // pred_check_branch
      %1546 = sbr.rel (%p1544) target = $region933
    $region932: #{cikgrec_forward.5} parent=1 // pred_region
      %s1547 = sshll.u32 1, 1
      %s1548 = ssub.s32 %s1547, 1
      loop: start=0, step=1, limit=1
      $region934: #{cikgrec_forward.5} parent=932 // loop_pre_header
        _
      $region935: #{cikgrec_forward.5} parent=932 // loop_header
        %s1550 = sphi 0, %s1554
        %p1551 = scmp.ge.s32.totalorder %s1550, 1
        %s1555 = sphi %s1536, %s1536
        %s1556 = sphi %s1537, %s1537
      $region936: #{cikgrec_forward.5} parent=932 // loop_header_branch
        %1553 = sbr.rel (%p1551) target = $region940
      $region937: #{cikgrec_forward.5} parent=932 // loop_body
        %v1557 = vld [vmem:[%s1555] sm:%s1548]
        %1558 = vst [vmem:[%s1556] sm:%s1548] %v1557
      $region938: #{cikgrec_forward.5} parent=932 // loop_footer
        %s1554 = sadd.s32 1, %s1550
      $region939: #{cikgrec_forward.5} parent=932 // loop_footer_branch
        %1549 = sbr.rel target = $region935
      $region940: #{cikgrec_forward.5} parent=932 // loop_exit
        _
    $region933: #{cikgrec_forward.5} parent=1 // pred_fallthru
      _
    // Predicated region
    $region952: #{cikgrec_forward.5} parent=1 // pred_check
      _
    $region953: #{cikgrec_forward.5} parent=1 // pred_check_branch
      %1583 = sbr.rel (0) target = $region955
    $region954: #{cikgrec_forward.5} parent=1 // pred_region
      %1584 = vsyncadd %s1538, 16
    $region955: #{cikgrec_forward.5} parent=1 // pred_fallthru
      _
    %s1585 = scalar_lea.vmem %s4, %s1535
    %s1586 = scalar_lea.vmem [#allocation3], 15
    %s1587 = scalar_lea.sflag [#allocation4], 39
    %p1589 = scmp.lt.u32.totalorder 1, 8
    %p1590 = pneg %p1589
    // Predicated region
    $region956: #{cikgrec_forward.5} parent=1 // pred_check
      _
    $region957: #{cikgrec_forward.5} parent=1 // pred_check_branch
      %1592 = sbr.rel (%p1589) target = $region959
    $region958: #{cikgrec_forward.5} parent=1 // pred_region
      %s1608 = sand.u32 1, 7
      %p1609 = scmp.eq.s32.totalorder %s1608, 0
      %p1610 = pneg %p1609
      // Predicated region
      $region971: #{cikgrec_forward.5} parent=958 // pred_check
        _
      $region972: #{cikgrec_forward.5} parent=958 // pred_check_branch
        %1612 = sbr.rel (%p1609) target = $region974
      $region973: #{cikgrec_forward.5} parent=958 // pred_region
        %s1613 = sand.u32 1, 7
        %s1614 = ssub.s32 1, %s1613
        %s1615 = scalar_lea.vmem %s1585, %s1614
        %s1616 = ssub.s32 1, %s1613
        %s1617 = scalar_lea.vmem %s1586, %s1616 [#allocation3]
        %s1618 = sshll.u32 1, %s1613
        %s1619 = ssub.s32 %s1618, 1
        loop: start=0, step=1, limit=1
        $region975: #{cikgrec_forward.5} parent=973 // loop_pre_header
          _
        $region976: #{cikgrec_forward.5} parent=973 // loop_header
          %s1621 = sphi 0, %s1625
          %p1622 = scmp.ge.s32.totalorder %s1621, 1
          %s1626 = sphi %s1615, %s1615
          %s1627 = sphi %s1617, %s1617
        $region977: #{cikgrec_forward.5} parent=973 // loop_header_branch
          %1624 = sbr.rel (%p1622) target = $region981
        $region978: #{cikgrec_forward.5} parent=973 // loop_body
          %v1628 = vld [vmem:[%s1626] sm:%s1619]
          %1629 = vst [vmem:[%s1627] sm:%s1619] %v1628
        $region979: #{cikgrec_forward.5} parent=973 // loop_footer
          %s1625 = sadd.s32 1, %s1621
        $region980: #{cikgrec_forward.5} parent=973 // loop_footer_branch
          %1620 = sbr.rel target = $region976
        $region981: #{cikgrec_forward.5} parent=973 // loop_exit
          _
      $region974: #{cikgrec_forward.5} parent=958 // pred_fallthru
        _
    $region959: #{cikgrec_forward.5} parent=1 // pred_fallthru
      _
    // Predicated region
    $region960: #{cikgrec_forward.5} parent=1 // pred_check
      %p1593 = pneg %p1589
    $region961: #{cikgrec_forward.5} parent=1 // pred_check_branch
      %1595 = sbr.rel (%p1593) target = $region963
    $region962: #{cikgrec_forward.5} parent=1 // pred_region
      %s1596 = sshll.u32 1, 1
      %s1597 = ssub.s32 %s1596, 1
      loop: start=0, step=1, limit=1
      $region964: #{cikgrec_forward.5} parent=962 // loop_pre_header
        _
      $region965: #{cikgrec_forward.5} parent=962 // loop_header
        %s1599 = sphi 0, %s1603
        %p1600 = scmp.ge.s32.totalorder %s1599, 1
        %s1604 = sphi %s1585, %s1585
        %s1605 = sphi %s1586, %s1586
      $region966: #{cikgrec_forward.5} parent=962 // loop_header_branch
        %1602 = sbr.rel (%p1600) target = $region970
      $region967: #{cikgrec_forward.5} parent=962 // loop_body
        %v1606 = vld [vmem:[%s1604] sm:%s1597]
        %1607 = vst [vmem:[%s1605] sm:%s1597] %v1606
      $region968: #{cikgrec_forward.5} parent=962 // loop_footer
        %s1603 = sadd.s32 1, %s1599
      $region969: #{cikgrec_forward.5} parent=962 // loop_footer_branch
        %1598 = sbr.rel target = $region965
      $region970: #{cikgrec_forward.5} parent=962 // loop_exit
        _
    $region963: #{cikgrec_forward.5} parent=1 // pred_fallthru
      _
    // Predicated region
    $region982: #{cikgrec_forward.5} parent=1 // pred_check
      _
    $region983: #{cikgrec_forward.5} parent=1 // pred_check_branch
      %1632 = sbr.rel (0) target = $region985
    $region984: #{cikgrec_forward.5} parent=1 // pred_region
      %1633 = vsyncadd %s1587, 16
    $region985: #{cikgrec_forward.5} parent=1 // pred_fallthru
      _
    %s1634 = sld [smem:[#allocation10]]
    %s1635 = scalar_lea.vmem %s3, %s1634
    %s1636 = scalar_lea.vmem [#allocation2], 16
    %s1637 = scalar_lea.sflag [#allocation4], 16
    %p1639 = scmp.lt.u32.totalorder 1, 8
    %p1640 = pneg %p1639
    // Predicated region
    $region986: #{cikgrec_forward.5} parent=1 // pred_check
      _
    $region987: #{cikgrec_forward.5} parent=1 // pred_check_branch
      %1642 = sbr.rel (%p1639) target = $region989
    $region988: #{cikgrec_forward.5} parent=1 // pred_region
      %s1658 = sand.u32 1, 7
      %p1659 = scmp.eq.s32.totalorder %s1658, 0
      %p1660 = pneg %p1659
      // Predicated region
      $region1001: #{cikgrec_forward.5} parent=988 // pred_check
        _
      $region1002: #{cikgrec_forward.5} parent=988 // pred_check_branch
        %1662 = sbr.rel (%p1659) target = $region1004
      $region1003: #{cikgrec_forward.5} parent=988 // pred_region
        %s1663 = sand.u32 1, 7
        %s1664 = ssub.s32 1, %s1663
        %s1665 = scalar_lea.vmem %s1635, %s1664
        %s1666 = ssub.s32 1, %s1663
        %s1667 = scalar_lea.vmem %s1636, %s1666 [#allocation2]
        %s1668 = sshll.u32 1, %s1663
        %s1669 = ssub.s32 %s1668, 1
        loop: start=0, step=1, limit=1
        $region1005: #{cikgrec_forward.5} parent=1003 // loop_pre_header
          _
        $region1006: #{cikgrec_forward.5} parent=1003 // loop_header
          %s1671 = sphi 0, %s1675
          %p1672 = scmp.ge.s32.totalorder %s1671, 1
          %s1676 = sphi %s1665, %s1665
          %s1677 = sphi %s1667, %s1667
        $region1007: #{cikgrec_forward.5} parent=1003 // loop_header_branch
          %1674 = sbr.rel (%p1672) target = $region1011
        $region1008: #{cikgrec_forward.5} parent=1003 // loop_body
          %v1678 = vld [vmem:[%s1676] sm:%s1669]
          %1679 = vst [vmem:[%s1677] sm:%s1669] %v1678
        $region1009: #{cikgrec_forward.5} parent=1003 // loop_footer
          %s1675 = sadd.s32 1, %s1671
        $region1010: #{cikgrec_forward.5} parent=1003 // loop_footer_branch
          %1670 = sbr.rel target = $region1006
        $region1011: #{cikgrec_forward.5} parent=1003 // loop_exit
          _
      $region1004: #{cikgrec_forward.5} parent=988 // pred_fallthru
        _
    $region989: #{cikgrec_forward.5} parent=1 // pred_fallthru
      _
    // Predicated region
    $region990: #{cikgrec_forward.5} parent=1 // pred_check
      %p1643 = pneg %p1639
    $region991: #{cikgrec_forward.5} parent=1 // pred_check_branch
      %1645 = sbr.rel (%p1643) target = $region993
    $region992: #{cikgrec_forward.5} parent=1 // pred_region
      %s1646 = sshll.u32 1, 1
      %s1647 = ssub.s32 %s1646, 1
      loop: start=0, step=1, limit=1
      $region994: #{cikgrec_forward.5} parent=992 // loop_pre_header
        _
      $region995: #{cikgrec_forward.5} parent=992 // loop_header
        %s1649 = sphi 0, %s1653
        %p1650 = scmp.ge.s32.totalorder %s1649, 1
        %s1654 = sphi %s1635, %s1635
        %s1655 = sphi %s1636, %s1636
      $region996: #{cikgrec_forward.5} parent=992 // loop_header_branch
        %1652 = sbr.rel (%p1650) target = $region1000
      $region997: #{cikgrec_forward.5} parent=992 // loop_body
        %v1656 = vld [vmem:[%s1654] sm:%s1647]
        %1657 = vst [vmem:[%s1655] sm:%s1647] %v1656
      $region998: #{cikgrec_forward.5} parent=992 // loop_footer
        %s1653 = sadd.s32 1, %s1649
      $region999: #{cikgrec_forward.5} parent=992 // loop_footer_branch
        %1648 = sbr.rel target = $region995
      $region1000: #{cikgrec_forward.5} parent=992 // loop_exit
        _
    $region993: #{cikgrec_forward.5} parent=1 // pred_fallthru
      _
    // Predicated region
    $region1012: #{cikgrec_forward.5} parent=1 // pred_check
      _
    $region1013: #{cikgrec_forward.5} parent=1 // pred_check_branch
      %1682 = sbr.rel (0) target = $region1015
    $region1014: #{cikgrec_forward.5} parent=1 // pred_region
      %1683 = vsyncadd %s1637, 16
    $region1015: #{cikgrec_forward.5} parent=1 // pred_fallthru
      _
    %s1684 = scalar_lea.vmem %s4, %s1634
    %s1685 = scalar_lea.vmem [#allocation3], 16
    %s1686 = scalar_lea.sflag [#allocation4], 40
    %p1688 = scmp.lt.u32.totalorder 1, 8
    %p1689 = pneg %p1688
    // Predicated region
    $region1016: #{cikgrec_forward.5} parent=1 // pred_check
      _
    $region1017: #{cikgrec_forward.5} parent=1 // pred_check_branch
      %1691 = sbr.rel (%p1688) target = $region1019
    $region1018: #{cikgrec_forward.5} parent=1 // pred_region
      %s1707 = sand.u32 1, 7
      %p1708 = scmp.eq.s32.totalorder %s1707, 0
      %p1709 = pneg %p1708
      // Predicated region
      $region1031: #{cikgrec_forward.5} parent=1018 // pred_check
        _
      $region1032: #{cikgrec_forward.5} parent=1018 // pred_check_branch
        %1711 = sbr.rel (%p1708) target = $region1034
      $region1033: #{cikgrec_forward.5} parent=1018 // pred_region
        %s1712 = sand.u32 1, 7
        %s1713 = ssub.s32 1, %s1712
        %s1714 = scalar_lea.vmem %s1684, %s1713
        %s1715 = ssub.s32 1, %s1712
        %s1716 = scalar_lea.vmem %s1685, %s1715 [#allocation3]
        %s1717 = sshll.u32 1, %s1712
        %s1718 = ssub.s32 %s1717, 1
        loop: start=0, step=1, limit=1
        $region1035: #{cikgrec_forward.5} parent=1033 // loop_pre_header
          _
        $region1036: #{cikgrec_forward.5} parent=1033 // loop_header
          %s1720 = sphi 0, %s1724
          %p1721 = scmp.ge.s32.totalorder %s1720, 1
          %s1725 = sphi %s1714, %s1714
          %s1726 = sphi %s1716, %s1716
        $region1037: #{cikgrec_forward.5} parent=1033 // loop_header_branch
          %1723 = sbr.rel (%p1721) target = $region1041
        $region1038: #{cikgrec_forward.5} parent=1033 // loop_body
          %v1727 = vld [vmem:[%s1725] sm:%s1718]
          %1728 = vst [vmem:[%s1726] sm:%s1718] %v1727
        $region1039: #{cikgrec_forward.5} parent=1033 // loop_footer
          %s1724 = sadd.s32 1, %s1720
        $region1040: #{cikgrec_forward.5} parent=1033 // loop_footer_branch
          %1719 = sbr.rel target = $region1036
        $region1041: #{cikgrec_forward.5} parent=1033 // loop_exit
          _
      $region1034: #{cikgrec_forward.5} parent=1018 // pred_fallthru
        _
    $region1019: #{cikgrec_forward.5} parent=1 // pred_fallthru
      _
    // Predicated region
    $region1020: #{cikgrec_forward.5} parent=1 // pred_check
      %p1692 = pneg %p1688
    $region1021: #{cikgrec_forward.5} parent=1 // pred_check_branch
      %1694 = sbr.rel (%p1692) target = $region1023
    $region1022: #{cikgrec_forward.5} parent=1 // pred_region
      %s1695 = sshll.u32 1, 1
      %s1696 = ssub.s32 %s1695, 1
      loop: start=0, step=1, limit=1
      $region1024: #{cikgrec_forward.5} parent=1022 // loop_pre_header
        _
      $region1025: #{cikgrec_forward.5} parent=1022 // loop_header
        %s1698 = sphi 0, %s1702
        %p1699 = scmp.ge.s32.totalorder %s1698, 1
        %s1703 = sphi %s1684, %s1684
        %s1704 = sphi %s1685, %s1685
      $region1026: #{cikgrec_forward.5} parent=1022 // loop_header_branch
        %1701 = sbr.rel (%p1699) target = $region1030
      $region1027: #{cikgrec_forward.5} parent=1022 // loop_body
        %v1705 = vld [vmem:[%s1703] sm:%s1696]
        %1706 = vst [vmem:[%s1704] sm:%s1696] %v1705
      $region1028: #{cikgrec_forward.5} parent=1022 // loop_footer
        %s1702 = sadd.s32 1, %s1698
      $region1029: #{cikgrec_forward.5} parent=1022 // loop_footer_branch
        %1697 = sbr.rel target = $region1025
      $region1030: #{cikgrec_forward.5} parent=1022 // loop_exit
        _
    $region1023: #{cikgrec_forward.5} parent=1 // pred_fallthru
      _
    // Predicated region
    $region1042: #{cikgrec_forward.5} parent=1 // pred_check
      _
    $region1043: #{cikgrec_forward.5} parent=1 // pred_check_branch
      %1731 = sbr.rel (0) target = $region1045
    $region1044: #{cikgrec_forward.5} parent=1 // pred_region
      %1732 = vsyncadd %s1686, 16
    $region1045: #{cikgrec_forward.5} parent=1 // pred_fallthru
      _
    %s1733 = sld [smem:[#allocation10 + $0x1]]
    %s1734 = scalar_lea.vmem %s3, %s1733
    %s1735 = scalar_lea.vmem [#allocation2], 17
    %s1736 = scalar_lea.sflag [#allocation4], 17
    %p1738 = scmp.lt.u32.totalorder 1, 8
    %p1739 = pneg %p1738
    // Predicated region
    $region1046: #{cikgrec_forward.5} parent=1 // pred_check
      _
    $region1047: #{cikgrec_forward.5} parent=1 // pred_check_branch
      %1741 = sbr.rel (%p1738) target = $region1049
    $region1048: #{cikgrec_forward.5} parent=1 // pred_region
      %s1757 = sand.u32 1, 7
      %p1758 = scmp.eq.s32.totalorder %s1757, 0
      %p1759 = pneg %p1758
      // Predicated region
      $region1061: #{cikgrec_forward.5} parent=1048 // pred_check
        _
      $region1062: #{cikgrec_forward.5} parent=1048 // pred_check_branch
        %1761 = sbr.rel (%p1758) target = $region1064
      $region1063: #{cikgrec_forward.5} parent=1048 // pred_region
        %s1762 = sand.u32 1, 7
        %s1763 = ssub.s32 1, %s1762
        %s1764 = scalar_lea.vmem %s1734, %s1763
        %s1765 = ssub.s32 1, %s1762
        %s1766 = scalar_lea.vmem %s1735, %s1765 [#allocation2]
        %s1767 = sshll.u32 1, %s1762
        %s1768 = ssub.s32 %s1767, 1
        loop: start=0, step=1, limit=1
        $region1065: #{cikgrec_forward.5} parent=1063 // loop_pre_header
          _
        $region1066: #{cikgrec_forward.5} parent=1063 // loop_header
          %s1770 = sphi 0, %s1774
          %p1771 = scmp.ge.s32.totalorder %s1770, 1
          %s1775 = sphi %s1764, %s1764
          %s1776 = sphi %s1766, %s1766
        $region1067: #{cikgrec_forward.5} parent=1063 // loop_header_branch
          %1773 = sbr.rel (%p1771) target = $region1071
        $region1068: #{cikgrec_forward.5} parent=1063 // loop_body
          %v1777 = vld [vmem:[%s1775] sm:%s1768]
          %1778 = vst [vmem:[%s1776] sm:%s1768] %v1777
        $region1069: #{cikgrec_forward.5} parent=1063 // loop_footer
          %s1774 = sadd.s32 1, %s1770
        $region1070: #{cikgrec_forward.5} parent=1063 // loop_footer_branch
          %1769 = sbr.rel target = $region1066
        $region1071: #{cikgrec_forward.5} parent=1063 // loop_exit
          _
      $region1064: #{cikgrec_forward.5} parent=1048 // pred_fallthru
        _
    $region1049: #{cikgrec_forward.5} parent=1 // pred_fallthru
      _
    // Predicated region
    $region1050: #{cikgrec_forward.5} parent=1 // pred_check
      %p1742 = pneg %p1738
    $region1051: #{cikgrec_forward.5} parent=1 // pred_check_branch
      %1744 = sbr.rel (%p1742) target = $region1053
    $region1052: #{cikgrec_forward.5} parent=1 // pred_region
      %s1745 = sshll.u32 1, 1
      %s1746 = ssub.s32 %s1745, 1
      loop: start=0, step=1, limit=1
      $region1054: #{cikgrec_forward.5} parent=1052 // loop_pre_header
        _
      $region1055: #{cikgrec_forward.5} parent=1052 // loop_header
        %s1748 = sphi 0, %s1752
        %p1749 = scmp.ge.s32.totalorder %s1748, 1
        %s1753 = sphi %s1734, %s1734
        %s1754 = sphi %s1735, %s1735
      $region1056: #{cikgrec_forward.5} parent=1052 // loop_header_branch
        %1751 = sbr.rel (%p1749) target = $region1060
      $region1057: #{cikgrec_forward.5} parent=1052 // loop_body
        %v1755 = vld [vmem:[%s1753] sm:%s1746]
        %1756 = vst [vmem:[%s1754] sm:%s1746] %v1755
      $region1058: #{cikgrec_forward.5} parent=1052 // loop_footer
        %s1752 = sadd.s32 1, %s1748
      $region1059: #{cikgrec_forward.5} parent=1052 // loop_footer_branch
        %1747 = sbr.rel target = $region1055
      $region1060: #{cikgrec_forward.5} parent=1052 // loop_exit
        _
    $region1053: #{cikgrec_forward.5} parent=1 // pred_fallthru
      _
    // Predicated region
    $region1072: #{cikgrec_forward.5} parent=1 // pred_check
      _
    $region1073: #{cikgrec_forward.5} parent=1 // pred_check_branch
      %1781 = sbr.rel (0) target = $region1075
    $region1074: #{cikgrec_forward.5} parent=1 // pred_region
      %1782 = vsyncadd %s1736, 16
    $region1075: #{cikgrec_forward.5} parent=1 // pred_fallthru
      _
    %s1783 = scalar_lea.vmem %s4, %s1733
    %s1784 = scalar_lea.vmem [#allocation3], 17
    %s1785 = scalar_lea.sflag [#allocation4], 41
    %p1787 = scmp.lt.u32.totalorder 1, 8
    %p1788 = pneg %p1787
    // Predicated region
    $region1076: #{cikgrec_forward.5} parent=1 // pred_check
      _
    $region1077: #{cikgrec_forward.5} parent=1 // pred_check_branch
      %1790 = sbr.rel (%p1787) target = $region1079
    $region1078: #{cikgrec_forward.5} parent=1 // pred_region
      %s1806 = sand.u32 1, 7
      %p1807 = scmp.eq.s32.totalorder %s1806, 0
      %p1808 = pneg %p1807
      // Predicated region
      $region1091: #{cikgrec_forward.5} parent=1078 // pred_check
        _
      $region1092: #{cikgrec_forward.5} parent=1078 // pred_check_branch
        %1810 = sbr.rel (%p1807) target = $region1094
      $region1093: #{cikgrec_forward.5} parent=1078 // pred_region
        %s1811 = sand.u32 1, 7
        %s1812 = ssub.s32 1, %s1811
        %s1813 = scalar_lea.vmem %s1783, %s1812
        %s1814 = ssub.s32 1, %s1811
        %s1815 = scalar_lea.vmem %s1784, %s1814 [#allocation3]
        %s1816 = sshll.u32 1, %s1811
        %s1817 = ssub.s32 %s1816, 1
        loop: start=0, step=1, limit=1
        $region1095: #{cikgrec_forward.5} parent=1093 // loop_pre_header
          _
        $region1096: #{cikgrec_forward.5} parent=1093 // loop_header
          %s1819 = sphi 0, %s1823
          %p1820 = scmp.ge.s32.totalorder %s1819, 1
          %s1824 = sphi %s1813, %s1813
          %s1825 = sphi %s1815, %s1815
        $region1097: #{cikgrec_forward.5} parent=1093 // loop_header_branch
          %1822 = sbr.rel (%p1820) target = $region1101
        $region1098: #{cikgrec_forward.5} parent=1093 // loop_body
          %v1826 = vld [vmem:[%s1824] sm:%s1817]
          %1827 = vst [vmem:[%s1825] sm:%s1817] %v1826
        $region1099: #{cikgrec_forward.5} parent=1093 // loop_footer
          %s1823 = sadd.s32 1, %s1819
        $region1100: #{cikgrec_forward.5} parent=1093 // loop_footer_branch
          %1818 = sbr.rel target = $region1096
        $region1101: #{cikgrec_forward.5} parent=1093 // loop_exit
          _
      $region1094: #{cikgrec_forward.5} parent=1078 // pred_fallthru
        _
    $region1079: #{cikgrec_forward.5} parent=1 // pred_fallthru
      _
    // Predicated region
    $region1080: #{cikgrec_forward.5} parent=1 // pred_check
      %p1791 = pneg %p1787
    $region1081: #{cikgrec_forward.5} parent=1 // pred_check_branch
      %1793 = sbr.rel (%p1791) target = $region1083
    $region1082: #{cikgrec_forward.5} parent=1 // pred_region
      %s1794 = sshll.u32 1, 1
      %s1795 = ssub.s32 %s1794, 1
      loop: start=0, step=1, limit=1
      $region1084: #{cikgrec_forward.5} parent=1082 // loop_pre_header
        _
      $region1085: #{cikgrec_forward.5} parent=1082 // loop_header
        %s1797 = sphi 0, %s1801
        %p1798 = scmp.ge.s32.totalorder %s1797, 1
        %s1802 = sphi %s1783, %s1783
        %s1803 = sphi %s1784, %s1784
      $region1086: #{cikgrec_forward.5} parent=1082 // loop_header_branch
        %1800 = sbr.rel (%p1798) target = $region1090
      $region1087: #{cikgrec_forward.5} parent=1082 // loop_body
        %v1804 = vld [vmem:[%s1802] sm:%s1795]
        %1805 = vst [vmem:[%s1803] sm:%s1795] %v1804
      $region1088: #{cikgrec_forward.5} parent=1082 // loop_footer
        %s1801 = sadd.s32 1, %s1797
      $region1089: #{cikgrec_forward.5} parent=1082 // loop_footer_branch
        %1796 = sbr.rel target = $region1085
      $region1090: #{cikgrec_forward.5} parent=1082 // loop_exit
        _
    $region1083: #{cikgrec_forward.5} parent=1 // pred_fallthru
      _
    // Predicated region
    $region1102: #{cikgrec_forward.5} parent=1 // pred_check
      _
    $region1103: #{cikgrec_forward.5} parent=1 // pred_check_branch
      %1830 = sbr.rel (0) target = $region1105
    $region1104: #{cikgrec_forward.5} parent=1 // pred_region
      %1831 = vsyncadd %s1785, 16
    $region1105: #{cikgrec_forward.5} parent=1 // pred_fallthru
      _
    %s1832 = sld [smem:[#allocation10 + $0x2]]
    %s1833 = scalar_lea.vmem %s3, %s1832
    %s1834 = scalar_lea.vmem [#allocation2], 18
    %s1835 = scalar_lea.sflag [#allocation4], 18
    %p1837 = scmp.lt.u32.totalorder 1, 8
    %p1838 = pneg %p1837
    // Predicated region
    $region1106: #{cikgrec_forward.5} parent=1 // pred_check
      _
    $region1107: #{cikgrec_forward.5} parent=1 // pred_check_branch
      %1840 = sbr.rel (%p1837) target = $region1109
    $region1108: #{cikgrec_forward.5} parent=1 // pred_region
      %s1856 = sand.u32 1, 7
      %p1857 = scmp.eq.s32.totalorder %s1856, 0
      %p1858 = pneg %p1857
      // Predicated region
      $region1121: #{cikgrec_forward.5} parent=1108 // pred_check
        _
      $region1122: #{cikgrec_forward.5} parent=1108 // pred_check_branch
        %1860 = sbr.rel (%p1857) target = $region1124
      $region1123: #{cikgrec_forward.5} parent=1108 // pred_region
        %s1861 = sand.u32 1, 7
        %s1862 = ssub.s32 1, %s1861
        %s1863 = scalar_lea.vmem %s1833, %s1862
        %s1864 = ssub.s32 1, %s1861
        %s1865 = scalar_lea.vmem %s1834, %s1864 [#allocation2]
        %s1866 = sshll.u32 1, %s1861
        %s1867 = ssub.s32 %s1866, 1
        loop: start=0, step=1, limit=1
        $region1125: #{cikgrec_forward.5} parent=1123 // loop_pre_header
          _
        $region1126: #{cikgrec_forward.5} parent=1123 // loop_header
          %s1869 = sphi 0, %s1873
          %p1870 = scmp.ge.s32.totalorder %s1869, 1
          %s1874 = sphi %s1863, %s1863
          %s1875 = sphi %s1865, %s1865
        $region1127: #{cikgrec_forward.5} parent=1123 // loop_header_branch
          %1872 = sbr.rel (%p1870) target = $region1131
        $region1128: #{cikgrec_forward.5} parent=1123 // loop_body
          %v1876 = vld [vmem:[%s1874] sm:%s1867]
          %1877 = vst [vmem:[%s1875] sm:%s1867] %v1876
        $region1129: #{cikgrec_forward.5} parent=1123 // loop_footer
          %s1873 = sadd.s32 1, %s1869
        $region1130: #{cikgrec_forward.5} parent=1123 // loop_footer_branch
          %1868 = sbr.rel target = $region1126
        $region1131: #{cikgrec_forward.5} parent=1123 // loop_exit
          _
      $region1124: #{cikgrec_forward.5} parent=1108 // pred_fallthru
        _
    $region1109: #{cikgrec_forward.5} parent=1 // pred_fallthru
      _
    // Predicated region
    $region1110: #{cikgrec_forward.5} parent=1 // pred_check
      %p1841 = pneg %p1837
    $region1111: #{cikgrec_forward.5} parent=1 // pred_check_branch
      %1843 = sbr.rel (%p1841) target = $region1113
    $region1112: #{cikgrec_forward.5} parent=1 // pred_region
      %s1844 = sshll.u32 1, 1
      %s1845 = ssub.s32 %s1844, 1
      loop: start=0, step=1, limit=1
      $region1114: #{cikgrec_forward.5} parent=1112 // loop_pre_header
        _
      $region1115: #{cikgrec_forward.5} parent=1112 // loop_header
        %s1847 = sphi 0, %s1851
        %p1848 = scmp.ge.s32.totalorder %s1847, 1
        %s1852 = sphi %s1833, %s1833
        %s1853 = sphi %s1834, %s1834
      $region1116: #{cikgrec_forward.5} parent=1112 // loop_header_branch
        %1850 = sbr.rel (%p1848) target = $region1120
      $region1117: #{cikgrec_forward.5} parent=1112 // loop_body
        %v1854 = vld [vmem:[%s1852] sm:%s1845]
        %1855 = vst [vmem:[%s1853] sm:%s1845] %v1854
      $region1118: #{cikgrec_forward.5} parent=1112 // loop_footer
        %s1851 = sadd.s32 1, %s1847
      $region1119: #{cikgrec_forward.5} parent=1112 // loop_footer_branch
        %1846 = sbr.rel target = $region1115
      $region1120: #{cikgrec_forward.5} parent=1112 // loop_exit
        _
    $region1113: #{cikgrec_forward.5} parent=1 // pred_fallthru
      _
    // Predicated region
    $region1132: #{cikgrec_forward.5} parent=1 // pred_check
      _
    $region1133: #{cikgrec_forward.5} parent=1 // pred_check_branch
      %1880 = sbr.rel (0) target = $region1135
    $region1134: #{cikgrec_forward.5} parent=1 // pred_region
      %1881 = vsyncadd %s1835, 16
    $region1135: #{cikgrec_forward.5} parent=1 // pred_fallthru
      _
    %s1882 = scalar_lea.vmem %s4, %s1832
    %s1883 = scalar_lea.vmem [#allocation3], 18
    %s1884 = scalar_lea.sflag [#allocation4], 42
    %p1886 = scmp.lt.u32.totalorder 1, 8
    %p1887 = pneg %p1886
    // Predicated region
    $region1136: #{cikgrec_forward.5} parent=1 // pred_check
      _
    $region1137: #{cikgrec_forward.5} parent=1 // pred_check_branch
      %1889 = sbr.rel (%p1886) target = $region1139
    $region1138: #{cikgrec_forward.5} parent=1 // pred_region
      %s1905 = sand.u32 1, 7
      %p1906 = scmp.eq.s32.totalorder %s1905, 0
      %p1907 = pneg %p1906
      // Predicated region
      $region1151: #{cikgrec_forward.5} parent=1138 // pred_check
        _
      $region1152: #{cikgrec_forward.5} parent=1138 // pred_check_branch
        %1909 = sbr.rel (%p1906) target = $region1154
      $region1153: #{cikgrec_forward.5} parent=1138 // pred_region
        %s1910 = sand.u32 1, 7
        %s1911 = ssub.s32 1, %s1910
        %s1912 = scalar_lea.vmem %s1882, %s1911
        %s1913 = ssub.s32 1, %s1910
        %s1914 = scalar_lea.vmem %s1883, %s1913 [#allocation3]
        %s1915 = sshll.u32 1, %s1910
        %s1916 = ssub.s32 %s1915, 1
        loop: start=0, step=1, limit=1
        $region1155: #{cikgrec_forward.5} parent=1153 // loop_pre_header
          _
        $region1156: #{cikgrec_forward.5} parent=1153 // loop_header
          %s1918 = sphi 0, %s1922
          %p1919 = scmp.ge.s32.totalorder %s1918, 1
          %s1923 = sphi %s1912, %s1912
          %s1924 = sphi %s1914, %s1914
        $region1157: #{cikgrec_forward.5} parent=1153 // loop_header_branch
          %1921 = sbr.rel (%p1919) target = $region1161
        $region1158: #{cikgrec_forward.5} parent=1153 // loop_body
          %v1925 = vld [vmem:[%s1923] sm:%s1916]
          %1926 = vst [vmem:[%s1924] sm:%s1916] %v1925
        $region1159: #{cikgrec_forward.5} parent=1153 // loop_footer
          %s1922 = sadd.s32 1, %s1918
        $region1160: #{cikgrec_forward.5} parent=1153 // loop_footer_branch
          %1917 = sbr.rel target = $region1156
        $region1161: #{cikgrec_forward.5} parent=1153 // loop_exit
          _
      $region1154: #{cikgrec_forward.5} parent=1138 // pred_fallthru
        _
    $region1139: #{cikgrec_forward.5} parent=1 // pred_fallthru
      _
    // Predicated region
    $region1140: #{cikgrec_forward.5} parent=1 // pred_check
      %p1890 = pneg %p1886
    $region1141: #{cikgrec_forward.5} parent=1 // pred_check_branch
      %1892 = sbr.rel (%p1890) target = $region1143
    $region1142: #{cikgrec_forward.5} parent=1 // pred_region
      %s1893 = sshll.u32 1, 1
      %s1894 = ssub.s32 %s1893, 1
      loop: start=0, step=1, limit=1
      $region1144: #{cikgrec_forward.5} parent=1142 // loop_pre_header
        _
      $region1145: #{cikgrec_forward.5} parent=1142 // loop_header
        %s1896 = sphi 0, %s1900
        %p1897 = scmp.ge.s32.totalorder %s1896, 1
        %s1901 = sphi %s1882, %s1882
        %s1902 = sphi %s1883, %s1883
      $region1146: #{cikgrec_forward.5} parent=1142 // loop_header_branch
        %1899 = sbr.rel (%p1897) target = $region1150
      $region1147: #{cikgrec_forward.5} parent=1142 // loop_body
        %v1903 = vld [vmem:[%s1901] sm:%s1894]
        %1904 = vst [vmem:[%s1902] sm:%s1894] %v1903
      $region1148: #{cikgrec_forward.5} parent=1142 // loop_footer
        %s1900 = sadd.s32 1, %s1896
      $region1149: #{cikgrec_forward.5} parent=1142 // loop_footer_branch
        %1895 = sbr.rel target = $region1145
      $region1150: #{cikgrec_forward.5} parent=1142 // loop_exit
        _
    $region1143: #{cikgrec_forward.5} parent=1 // pred_fallthru
      _
    // Predicated region
    $region1162: #{cikgrec_forward.5} parent=1 // pred_check
      _
    $region1163: #{cikgrec_forward.5} parent=1 // pred_check_branch
      %1929 = sbr.rel (0) target = $region1165
    $region1164: #{cikgrec_forward.5} parent=1 // pred_region
      %1930 = vsyncadd %s1884, 16
    $region1165: #{cikgrec_forward.5} parent=1 // pred_fallthru
      _
    %s1931 = sld [smem:[#allocation10 + $0x3]]
    %s1932 = scalar_lea.vmem %s3, %s1931
    %s1933 = scalar_lea.vmem [#allocation2], 19
    %s1934 = scalar_lea.sflag [#allocation4], 19
    %p1936 = scmp.lt.u32.totalorder 1, 8
    %p1937 = pneg %p1936
    // Predicated region
    $region1166: #{cikgrec_forward.5} parent=1 // pred_check
      _
    $region1167: #{cikgrec_forward.5} parent=1 // pred_check_branch
      %1939 = sbr.rel (%p1936) target = $region1169
    $region1168: #{cikgrec_forward.5} parent=1 // pred_region
      %s1955 = sand.u32 1, 7
      %p1956 = scmp.eq.s32.totalorder %s1955, 0
      %p1957 = pneg %p1956
      // Predicated region
      $region1181: #{cikgrec_forward.5} parent=1168 // pred_check
        _
      $region1182: #{cikgrec_forward.5} parent=1168 // pred_check_branch
        %1959 = sbr.rel (%p1956) target = $region1184
      $region1183: #{cikgrec_forward.5} parent=1168 // pred_region
        %s1960 = sand.u32 1, 7
        %s1961 = ssub.s32 1, %s1960
        %s1962 = scalar_lea.vmem %s1932, %s1961
        %s1963 = ssub.s32 1, %s1960
        %s1964 = scalar_lea.vmem %s1933, %s1963 [#allocation2]
        %s1965 = sshll.u32 1, %s1960
        %s1966 = ssub.s32 %s1965, 1
        loop: start=0, step=1, limit=1
        $region1185: #{cikgrec_forward.5} parent=1183 // loop_pre_header
          _
        $region1186: #{cikgrec_forward.5} parent=1183 // loop_header
          %s1968 = sphi 0, %s1972
          %p1969 = scmp.ge.s32.totalorder %s1968, 1
          %s1973 = sphi %s1962, %s1962
          %s1974 = sphi %s1964, %s1964
        $region1187: #{cikgrec_forward.5} parent=1183 // loop_header_branch
          %1971 = sbr.rel (%p1969) target = $region1191
        $region1188: #{cikgrec_forward.5} parent=1183 // loop_body
          %v1975 = vld [vmem:[%s1973] sm:%s1966]
          %1976 = vst [vmem:[%s1974] sm:%s1966] %v1975
        $region1189: #{cikgrec_forward.5} parent=1183 // loop_footer
          %s1972 = sadd.s32 1, %s1968
        $region1190: #{cikgrec_forward.5} parent=1183 // loop_footer_branch
          %1967 = sbr.rel target = $region1186
        $region1191: #{cikgrec_forward.5} parent=1183 // loop_exit
          _
      $region1184: #{cikgrec_forward.5} parent=1168 // pred_fallthru
        _
    $region1169: #{cikgrec_forward.5} parent=1 // pred_fallthru
      _
    // Predicated region
    $region1170: #{cikgrec_forward.5} parent=1 // pred_check
      %p1940 = pneg %p1936
    $region1171: #{cikgrec_forward.5} parent=1 // pred_check_branch
      %1942 = sbr.rel (%p1940) target = $region1173
    $region1172: #{cikgrec_forward.5} parent=1 // pred_region
      %s1943 = sshll.u32 1, 1
      %s1944 = ssub.s32 %s1943, 1
      loop: start=0, step=1, limit=1
      $region1174: #{cikgrec_forward.5} parent=1172 // loop_pre_header
        _
      $region1175: #{cikgrec_forward.5} parent=1172 // loop_header
        %s1946 = sphi 0, %s1950
        %p1947 = scmp.ge.s32.totalorder %s1946, 1
        %s1951 = sphi %s1932, %s1932
        %s1952 = sphi %s1933, %s1933
      $region1176: #{cikgrec_forward.5} parent=1172 // loop_header_branch
        %1949 = sbr.rel (%p1947) target = $region1180
      $region1177: #{cikgrec_forward.5} parent=1172 // loop_body
        %v1953 = vld [vmem:[%s1951] sm:%s1944]
        %1954 = vst [vmem:[%s1952] sm:%s1944] %v1953
      $region1178: #{cikgrec_forward.5} parent=1172 // loop_footer
        %s1950 = sadd.s32 1, %s1946
      $region1179: #{cikgrec_forward.5} parent=1172 // loop_footer_branch
        %1945 = sbr.rel target = $region1175
      $region1180: #{cikgrec_forward.5} parent=1172 // loop_exit
        _
    $region1173: #{cikgrec_forward.5} parent=1 // pred_fallthru
      _
    // Predicated region
    $region1192: #{cikgrec_forward.5} parent=1 // pred_check
      _
    $region1193: #{cikgrec_forward.5} parent=1 // pred_check_branch
      %1979 = sbr.rel (0) target = $region1195
    $region1194: #{cikgrec_forward.5} parent=1 // pred_region
      %1980 = vsyncadd %s1934, 16
    $region1195: #{cikgrec_forward.5} parent=1 // pred_fallthru
      _
    %s1981 = scalar_lea.vmem %s4, %s1931
    %s1982 = scalar_lea.vmem [#allocation3], 19
    %s1983 = scalar_lea.sflag [#allocation4], 43
    %p1985 = scmp.lt.u32.totalorder 1, 8
    %p1986 = pneg %p1985
    // Predicated region
    $region1196: #{cikgrec_forward.5} parent=1 // pred_check
      _
    $region1197: #{cikgrec_forward.5} parent=1 // pred_check_branch
      %1988 = sbr.rel (%p1985) target = $region1199
    $region1198: #{cikgrec_forward.5} parent=1 // pred_region
      %s2004 = sand.u32 1, 7
      %p2005 = scmp.eq.s32.totalorder %s2004, 0
      %p2006 = pneg %p2005
      // Predicated region
      $region1211: #{cikgrec_forward.5} parent=1198 // pred_check
        _
      $region1212: #{cikgrec_forward.5} parent=1198 // pred_check_branch
        %2008 = sbr.rel (%p2005) target = $region1214
      $region1213: #{cikgrec_forward.5} parent=1198 // pred_region
        %s2009 = sand.u32 1, 7
        %s2010 = ssub.s32 1, %s2009
        %s2011 = scalar_lea.vmem %s1981, %s2010
        %s2012 = ssub.s32 1, %s2009
        %s2013 = scalar_lea.vmem %s1982, %s2012 [#allocation3]
        %s2014 = sshll.u32 1, %s2009
        %s2015 = ssub.s32 %s2014, 1
        loop: start=0, step=1, limit=1
        $region1215: #{cikgrec_forward.5} parent=1213 // loop_pre_header
          _
        $region1216: #{cikgrec_forward.5} parent=1213 // loop_header
          %s2017 = sphi 0, %s2021
          %p2018 = scmp.ge.s32.totalorder %s2017, 1
          %s2022 = sphi %s2011, %s2011
          %s2023 = sphi %s2013, %s2013
        $region1217: #{cikgrec_forward.5} parent=1213 // loop_header_branch
          %2020 = sbr.rel (%p2018) target = $region1221
        $region1218: #{cikgrec_forward.5} parent=1213 // loop_body
          %v2024 = vld [vmem:[%s2022] sm:%s2015]
          %2025 = vst [vmem:[%s2023] sm:%s2015] %v2024
        $region1219: #{cikgrec_forward.5} parent=1213 // loop_footer
          %s2021 = sadd.s32 1, %s2017
        $region1220: #{cikgrec_forward.5} parent=1213 // loop_footer_branch
          %2016 = sbr.rel target = $region1216
        $region1221: #{cikgrec_forward.5} parent=1213 // loop_exit
          _
      $region1214: #{cikgrec_forward.5} parent=1198 // pred_fallthru
        _
    $region1199: #{cikgrec_forward.5} parent=1 // pred_fallthru
      _
    // Predicated region
    $region1200: #{cikgrec_forward.5} parent=1 // pred_check
      %p1989 = pneg %p1985
    $region1201: #{cikgrec_forward.5} parent=1 // pred_check_branch
      %1991 = sbr.rel (%p1989) target = $region1203
    $region1202: #{cikgrec_forward.5} parent=1 // pred_region
      %s1992 = sshll.u32 1, 1
      %s1993 = ssub.s32 %s1992, 1
      loop: start=0, step=1, limit=1
      $region1204: #{cikgrec_forward.5} parent=1202 // loop_pre_header
        _
      $region1205: #{cikgrec_forward.5} parent=1202 // loop_header
        %s1995 = sphi 0, %s1999
        %p1996 = scmp.ge.s32.totalorder %s1995, 1
        %s2000 = sphi %s1981, %s1981
        %s2001 = sphi %s1982, %s1982
      $region1206: #{cikgrec_forward.5} parent=1202 // loop_header_branch
        %1998 = sbr.rel (%p1996) target = $region1210
      $region1207: #{cikgrec_forward.5} parent=1202 // loop_body
        %v2002 = vld [vmem:[%s2000] sm:%s1993]
        %2003 = vst [vmem:[%s2001] sm:%s1993] %v2002
      $region1208: #{cikgrec_forward.5} parent=1202 // loop_footer
        %s1999 = sadd.s32 1, %s1995
      $region1209: #{cikgrec_forward.5} parent=1202 // loop_footer_branch
        %1994 = sbr.rel target = $region1205
      $region1210: #{cikgrec_forward.5} parent=1202 // loop_exit
        _
    $region1203: #{cikgrec_forward.5} parent=1 // pred_fallthru
      _
    // Predicated region
    $region1222: #{cikgrec_forward.5} parent=1 // pred_check
      _
    $region1223: #{cikgrec_forward.5} parent=1 // pred_check_branch
      %2028 = sbr.rel (0) target = $region1225
    $region1224: #{cikgrec_forward.5} parent=1 // pred_region
      %2029 = vsyncadd %s1983, 16
    $region1225: #{cikgrec_forward.5} parent=1 // pred_fallthru
      _
    %s2030 = sld [smem:[#allocation10 + $0x4]]
    %s2031 = scalar_lea.vmem %s3, %s2030
    %s2032 = scalar_lea.vmem [#allocation2], 20
    %s2033 = scalar_lea.sflag [#allocation4], 20
    %p2035 = scmp.lt.u32.totalorder 1, 8
    %p2036 = pneg %p2035
    // Predicated region
    $region1226: #{cikgrec_forward.5} parent=1 // pred_check
      _
    $region1227: #{cikgrec_forward.5} parent=1 // pred_check_branch
      %2038 = sbr.rel (%p2035) target = $region1229
    $region1228: #{cikgrec_forward.5} parent=1 // pred_region
      %s2054 = sand.u32 1, 7
      %p2055 = scmp.eq.s32.totalorder %s2054, 0
      %p2056 = pneg %p2055
      // Predicated region
      $region1241: #{cikgrec_forward.5} parent=1228 // pred_check
        _
      $region1242: #{cikgrec_forward.5} parent=1228 // pred_check_branch
        %2058 = sbr.rel (%p2055) target = $region1244
      $region1243: #{cikgrec_forward.5} parent=1228 // pred_region
        %s2059 = sand.u32 1, 7
        %s2060 = ssub.s32 1, %s2059
        %s2061 = scalar_lea.vmem %s2031, %s2060
        %s2062 = ssub.s32 1, %s2059
        %s2063 = scalar_lea.vmem %s2032, %s2062 [#allocation2]
        %s2064 = sshll.u32 1, %s2059
        %s2065 = ssub.s32 %s2064, 1
        loop: start=0, step=1, limit=1
        $region1245: #{cikgrec_forward.5} parent=1243 // loop_pre_header
          _
        $region1246: #{cikgrec_forward.5} parent=1243 // loop_header
          %s2067 = sphi 0, %s2071
          %p2068 = scmp.ge.s32.totalorder %s2067, 1
          %s2072 = sphi %s2061, %s2061
          %s2073 = sphi %s2063, %s2063
        $region1247: #{cikgrec_forward.5} parent=1243 // loop_header_branch
          %2070 = sbr.rel (%p2068) target = $region1251
        $region1248: #{cikgrec_forward.5} parent=1243 // loop_body
          %v2074 = vld [vmem:[%s2072] sm:%s2065]
          %2075 = vst [vmem:[%s2073] sm:%s2065] %v2074
        $region1249: #{cikgrec_forward.5} parent=1243 // loop_footer
          %s2071 = sadd.s32 1, %s2067
        $region1250: #{cikgrec_forward.5} parent=1243 // loop_footer_branch
          %2066 = sbr.rel target = $region1246
        $region1251: #{cikgrec_forward.5} parent=1243 // loop_exit
          _
      $region1244: #{cikgrec_forward.5} parent=1228 // pred_fallthru
        _
    $region1229: #{cikgrec_forward.5} parent=1 // pred_fallthru
      _
    // Predicated region
    $region1230: #{cikgrec_forward.5} parent=1 // pred_check
      %p2039 = pneg %p2035
    $region1231: #{cikgrec_forward.5} parent=1 // pred_check_branch
      %2041 = sbr.rel (%p2039) target = $region1233
    $region1232: #{cikgrec_forward.5} parent=1 // pred_region
      %s2042 = sshll.u32 1, 1
      %s2043 = ssub.s32 %s2042, 1
      loop: start=0, step=1, limit=1
      $region1234: #{cikgrec_forward.5} parent=1232 // loop_pre_header
        _
      $region1235: #{cikgrec_forward.5} parent=1232 // loop_header
        %s2045 = sphi 0, %s2049
        %p2046 = scmp.ge.s32.totalorder %s2045, 1
        %s2050 = sphi %s2031, %s2031
        %s2051 = sphi %s2032, %s2032
      $region1236: #{cikgrec_forward.5} parent=1232 // loop_header_branch
        %2048 = sbr.rel (%p2046) target = $region1240
      $region1237: #{cikgrec_forward.5} parent=1232 // loop_body
        %v2052 = vld [vmem:[%s2050] sm:%s2043]
        %2053 = vst [vmem:[%s2051] sm:%s2043] %v2052
      $region1238: #{cikgrec_forward.5} parent=1232 // loop_footer
        %s2049 = sadd.s32 1, %s2045
      $region1239: #{cikgrec_forward.5} parent=1232 // loop_footer_branch
        %2044 = sbr.rel target = $region1235
      $region1240: #{cikgrec_forward.5} parent=1232 // loop_exit
        _
    $region1233: #{cikgrec_forward.5} parent=1 // pred_fallthru
      _
    // Predicated region
    $region1252: #{cikgrec_forward.5} parent=1 // pred_check
      _
    $region1253: #{cikgrec_forward.5} parent=1 // pred_check_branch
      %2078 = sbr.rel (0) target = $region1255
    $region1254: #{cikgrec_forward.5} parent=1 // pred_region
      %2079 = vsyncadd %s2033, 16
    $region1255: #{cikgrec_forward.5} parent=1 // pred_fallthru
      _
    %s2080 = scalar_lea.vmem %s4, %s2030
    %s2081 = scalar_lea.vmem [#allocation3], 20
    %s2082 = scalar_lea.sflag [#allocation4], 44
    %p2084 = scmp.lt.u32.totalorder 1, 8
    %p2085 = pneg %p2084
    // Predicated region
    $region1256: #{cikgrec_forward.5} parent=1 // pred_check
      _
    $region1257: #{cikgrec_forward.5} parent=1 // pred_check_branch
      %2087 = sbr.rel (%p2084) target = $region1259
    $region1258: #{cikgrec_forward.5} parent=1 // pred_region
      %s2103 = sand.u32 1, 7
      %p2104 = scmp.eq.s32.totalorder %s2103, 0
      %p2105 = pneg %p2104
      // Predicated region
      $region1271: #{cikgrec_forward.5} parent=1258 // pred_check
        _
      $region1272: #{cikgrec_forward.5} parent=1258 // pred_check_branch
        %2107 = sbr.rel (%p2104) target = $region1274
      $region1273: #{cikgrec_forward.5} parent=1258 // pred_region
        %s2108 = sand.u32 1, 7
        %s2109 = ssub.s32 1, %s2108
        %s2110 = scalar_lea.vmem %s2080, %s2109
        %s2111 = ssub.s32 1, %s2108
        %s2112 = scalar_lea.vmem %s2081, %s2111 [#allocation3]
        %s2113 = sshll.u32 1, %s2108
        %s2114 = ssub.s32 %s2113, 1
        loop: start=0, step=1, limit=1
        $region1275: #{cikgrec_forward.5} parent=1273 // loop_pre_header
          _
        $region1276: #{cikgrec_forward.5} parent=1273 // loop_header
          %s2116 = sphi 0, %s2120
          %p2117 = scmp.ge.s32.totalorder %s2116, 1
          %s2121 = sphi %s2110, %s2110
          %s2122 = sphi %s2112, %s2112
        $region1277: #{cikgrec_forward.5} parent=1273 // loop_header_branch
          %2119 = sbr.rel (%p2117) target = $region1281
        $region1278: #{cikgrec_forward.5} parent=1273 // loop_body
          %v2123 = vld [vmem:[%s2121] sm:%s2114]
          %2124 = vst [vmem:[%s2122] sm:%s2114] %v2123
        $region1279: #{cikgrec_forward.5} parent=1273 // loop_footer
          %s2120 = sadd.s32 1, %s2116
        $region1280: #{cikgrec_forward.5} parent=1273 // loop_footer_branch
          %2115 = sbr.rel target = $region1276
        $region1281: #{cikgrec_forward.5} parent=1273 // loop_exit
          _
      $region1274: #{cikgrec_forward.5} parent=1258 // pred_fallthru
        _
    $region1259: #{cikgrec_forward.5} parent=1 // pred_fallthru
      _
    // Predicated region
    $region1260: #{cikgrec_forward.5} parent=1 // pred_check
      %p2088 = pneg %p2084
    $region1261: #{cikgrec_forward.5} parent=1 // pred_check_branch
      %2090 = sbr.rel (%p2088) target = $region1263
    $region1262: #{cikgrec_forward.5} parent=1 // pred_region
      %s2091 = sshll.u32 1, 1
      %s2092 = ssub.s32 %s2091, 1
      loop: start=0, step=1, limit=1
      $region1264: #{cikgrec_forward.5} parent=1262 // loop_pre_header
        _
      $region1265: #{cikgrec_forward.5} parent=1262 // loop_header
        %s2094 = sphi 0, %s2098
        %p2095 = scmp.ge.s32.totalorder %s2094, 1
        %s2099 = sphi %s2080, %s2080
        %s2100 = sphi %s2081, %s2081
      $region1266: #{cikgrec_forward.5} parent=1262 // loop_header_branch
        %2097 = sbr.rel (%p2095) target = $region1270
      $region1267: #{cikgrec_forward.5} parent=1262 // loop_body
        %v2101 = vld [vmem:[%s2099] sm:%s2092]
        %2102 = vst [vmem:[%s2100] sm:%s2092] %v2101
      $region1268: #{cikgrec_forward.5} parent=1262 // loop_footer
        %s2098 = sadd.s32 1, %s2094
      $region1269: #{cikgrec_forward.5} parent=1262 // loop_footer_branch
        %2093 = sbr.rel target = $region1265
      $region1270: #{cikgrec_forward.5} parent=1262 // loop_exit
        _
    $region1263: #{cikgrec_forward.5} parent=1 // pred_fallthru
      _
    // Predicated region
    $region1282: #{cikgrec_forward.5} parent=1 // pred_check
      _
    $region1283: #{cikgrec_forward.5} parent=1 // pred_check_branch
      %2127 = sbr.rel (0) target = $region1285
    $region1284: #{cikgrec_forward.5} parent=1 // pred_region
      %2128 = vsyncadd %s2082, 16
    $region1285: #{cikgrec_forward.5} parent=1 // pred_fallthru
      _
    %s2129 = sld [smem:[#allocation10 + $0x5]]
    %s2130 = scalar_lea.vmem %s3, %s2129
    %s2131 = scalar_lea.vmem [#allocation2], 21
    %s2132 = scalar_lea.sflag [#allocation4], 21
    %p2134 = scmp.lt.u32.totalorder 1, 8
    %p2135 = pneg %p2134
    // Predicated region
    $region1286: #{cikgrec_forward.5} parent=1 // pred_check
      _
    $region1287: #{cikgrec_forward.5} parent=1 // pred_check_branch
      %2137 = sbr.rel (%p2134) target = $region1289
    $region1288: #{cikgrec_forward.5} parent=1 // pred_region
      %s2153 = sand.u32 1, 7
      %p2154 = scmp.eq.s32.totalorder %s2153, 0
      %p2155 = pneg %p2154
      // Predicated region
      $region1301: #{cikgrec_forward.5} parent=1288 // pred_check
        _
      $region1302: #{cikgrec_forward.5} parent=1288 // pred_check_branch
        %2157 = sbr.rel (%p2154) target = $region1304
      $region1303: #{cikgrec_forward.5} parent=1288 // pred_region
        %s2158 = sand.u32 1, 7
        %s2159 = ssub.s32 1, %s2158
        %s2160 = scalar_lea.vmem %s2130, %s2159
        %s2161 = ssub.s32 1, %s2158
        %s2162 = scalar_lea.vmem %s2131, %s2161 [#allocation2]
        %s2163 = sshll.u32 1, %s2158
        %s2164 = ssub.s32 %s2163, 1
        loop: start=0, step=1, limit=1
        $region1305: #{cikgrec_forward.5} parent=1303 // loop_pre_header
          _
        $region1306: #{cikgrec_forward.5} parent=1303 // loop_header
          %s2166 = sphi 0, %s2170
          %p2167 = scmp.ge.s32.totalorder %s2166, 1
          %s2171 = sphi %s2160, %s2160
          %s2172 = sphi %s2162, %s2162
        $region1307: #{cikgrec_forward.5} parent=1303 // loop_header_branch
          %2169 = sbr.rel (%p2167) target = $region1311
        $region1308: #{cikgrec_forward.5} parent=1303 // loop_body
          %v2173 = vld [vmem:[%s2171] sm:%s2164]
          %2174 = vst [vmem:[%s2172] sm:%s2164] %v2173
        $region1309: #{cikgrec_forward.5} parent=1303 // loop_footer
          %s2170 = sadd.s32 1, %s2166
        $region1310: #{cikgrec_forward.5} parent=1303 // loop_footer_branch
          %2165 = sbr.rel target = $region1306
        $region1311: #{cikgrec_forward.5} parent=1303 // loop_exit
          _
      $region1304: #{cikgrec_forward.5} parent=1288 // pred_fallthru
        _
    $region1289: #{cikgrec_forward.5} parent=1 // pred_fallthru
      _
    // Predicated region
    $region1290: #{cikgrec_forward.5} parent=1 // pred_check
      %p2138 = pneg %p2134
    $region1291: #{cikgrec_forward.5} parent=1 // pred_check_branch
      %2140 = sbr.rel (%p2138) target = $region1293
    $region1292: #{cikgrec_forward.5} parent=1 // pred_region
      %s2141 = sshll.u32 1, 1
      %s2142 = ssub.s32 %s2141, 1
      loop: start=0, step=1, limit=1
      $region1294: #{cikgrec_forward.5} parent=1292 // loop_pre_header
        _
      $region1295: #{cikgrec_forward.5} parent=1292 // loop_header
        %s2144 = sphi 0, %s2148
        %p2145 = scmp.ge.s32.totalorder %s2144, 1
        %s2149 = sphi %s2130, %s2130
        %s2150 = sphi %s2131, %s2131
      $region1296: #{cikgrec_forward.5} parent=1292 // loop_header_branch
        %2147 = sbr.rel (%p2145) target = $region1300
      $region1297: #{cikgrec_forward.5} parent=1292 // loop_body
        %v2151 = vld [vmem:[%s2149] sm:%s2142]
        %2152 = vst [vmem:[%s2150] sm:%s2142] %v2151
      $region1298: #{cikgrec_forward.5} parent=1292 // loop_footer
        %s2148 = sadd.s32 1, %s2144
      $region1299: #{cikgrec_forward.5} parent=1292 // loop_footer_branch
        %2143 = sbr.rel target = $region1295
      $region1300: #{cikgrec_forward.5} parent=1292 // loop_exit
        _
    $region1293: #{cikgrec_forward.5} parent=1 // pred_fallthru
      _
    // Predicated region
    $region1312: #{cikgrec_forward.5} parent=1 // pred_check
      _
    $region1313: #{cikgrec_forward.5} parent=1 // pred_check_branch
      %2177 = sbr.rel (0) target = $region1315
    $region1314: #{cikgrec_forward.5} parent=1 // pred_region
      %2178 = vsyncadd %s2132, 16
    $region1315: #{cikgrec_forward.5} parent=1 // pred_fallthru
      _
    %s2179 = scalar_lea.vmem %s4, %s2129
    %s2180 = scalar_lea.vmem [#allocation3], 21
    %s2181 = scalar_lea.sflag [#allocation4], 45
    %p2183 = scmp.lt.u32.totalorder 1, 8
    %p2184 = pneg %p2183
    // Predicated region
    $region1316: #{cikgrec_forward.5} parent=1 // pred_check
      _
    $region1317: #{cikgrec_forward.5} parent=1 // pred_check_branch
      %2186 = sbr.rel (%p2183) target = $region1319
    $region1318: #{cikgrec_forward.5} parent=1 // pred_region
      %s2202 = sand.u32 1, 7
      %p2203 = scmp.eq.s32.totalorder %s2202, 0
      %p2204 = pneg %p2203
      // Predicated region
      $region1331: #{cikgrec_forward.5} parent=1318 // pred_check
        _
      $region1332: #{cikgrec_forward.5} parent=1318 // pred_check_branch
        %2206 = sbr.rel (%p2203) target = $region1334
      $region1333: #{cikgrec_forward.5} parent=1318 // pred_region
        %s2207 = sand.u32 1, 7
        %s2208 = ssub.s32 1, %s2207
        %s2209 = scalar_lea.vmem %s2179, %s2208
        %s2210 = ssub.s32 1, %s2207
        %s2211 = scalar_lea.vmem %s2180, %s2210 [#allocation3]
        %s2212 = sshll.u32 1, %s2207
        %s2213 = ssub.s32 %s2212, 1
        loop: start=0, step=1, limit=1
        $region1335: #{cikgrec_forward.5} parent=1333 // loop_pre_header
          _
        $region1336: #{cikgrec_forward.5} parent=1333 // loop_header
          %s2215 = sphi 0, %s2219
          %p2216 = scmp.ge.s32.totalorder %s2215, 1
          %s2220 = sphi %s2209, %s2209
          %s2221 = sphi %s2211, %s2211
        $region1337: #{cikgrec_forward.5} parent=1333 // loop_header_branch
          %2218 = sbr.rel (%p2216) target = $region1341
        $region1338: #{cikgrec_forward.5} parent=1333 // loop_body
          %v2222 = vld [vmem:[%s2220] sm:%s2213]
          %2223 = vst [vmem:[%s2221] sm:%s2213] %v2222
        $region1339: #{cikgrec_forward.5} parent=1333 // loop_footer
          %s2219 = sadd.s32 1, %s2215
        $region1340: #{cikgrec_forward.5} parent=1333 // loop_footer_branch
          %2214 = sbr.rel target = $region1336
        $region1341: #{cikgrec_forward.5} parent=1333 // loop_exit
          _
      $region1334: #{cikgrec_forward.5} parent=1318 // pred_fallthru
        _
    $region1319: #{cikgrec_forward.5} parent=1 // pred_fallthru
      _
    // Predicated region
    $region1320: #{cikgrec_forward.5} parent=1 // pred_check
      %p2187 = pneg %p2183
    $region1321: #{cikgrec_forward.5} parent=1 // pred_check_branch
      %2189 = sbr.rel (%p2187) target = $region1323
    $region1322: #{cikgrec_forward.5} parent=1 // pred_region
      %s2190 = sshll.u32 1, 1
      %s2191 = ssub.s32 %s2190, 1
      loop: start=0, step=1, limit=1
      $region1324: #{cikgrec_forward.5} parent=1322 // loop_pre_header
        _
      $region1325: #{cikgrec_forward.5} parent=1322 // loop_header
        %s2193 = sphi 0, %s2197
        %p2194 = scmp.ge.s32.totalorder %s2193, 1
        %s2198 = sphi %s2179, %s2179
        %s2199 = sphi %s2180, %s2180
      $region1326: #{cikgrec_forward.5} parent=1322 // loop_header_branch
        %2196 = sbr.rel (%p2194) target = $region1330
      $region1327: #{cikgrec_forward.5} parent=1322 // loop_body
        %v2200 = vld [vmem:[%s2198] sm:%s2191]
        %2201 = vst [vmem:[%s2199] sm:%s2191] %v2200
      $region1328: #{cikgrec_forward.5} parent=1322 // loop_footer
        %s2197 = sadd.s32 1, %s2193
      $region1329: #{cikgrec_forward.5} parent=1322 // loop_footer_branch
        %2192 = sbr.rel target = $region1325
      $region1330: #{cikgrec_forward.5} parent=1322 // loop_exit
        _
    $region1323: #{cikgrec_forward.5} parent=1 // pred_fallthru
      _
    // Predicated region
    $region1342: #{cikgrec_forward.5} parent=1 // pred_check
      _
    $region1343: #{cikgrec_forward.5} parent=1 // pred_check_branch
      %2226 = sbr.rel (0) target = $region1345
    $region1344: #{cikgrec_forward.5} parent=1 // pred_region
      %2227 = vsyncadd %s2181, 16
    $region1345: #{cikgrec_forward.5} parent=1 // pred_fallthru
      _
    %s2228 = sld [smem:[#allocation10 + $0x6]]
    %s2229 = scalar_lea.vmem %s3, %s2228
    %s2230 = scalar_lea.vmem [#allocation2], 22
    %s2231 = scalar_lea.sflag [#allocation4], 22
    %p2233 = scmp.lt.u32.totalorder 1, 8
    %p2234 = pneg %p2233
    // Predicated region
    $region1346: #{cikgrec_forward.5} parent=1 // pred_check
      _
    $region1347: #{cikgrec_forward.5} parent=1 // pred_check_branch
      %2236 = sbr.rel (%p2233) target = $region1349
    $region1348: #{cikgrec_forward.5} parent=1 // pred_region
      %s2252 = sand.u32 1, 7
      %p2253 = scmp.eq.s32.totalorder %s2252, 0
      %p2254 = pneg %p2253
      // Predicated region
      $region1361: #{cikgrec_forward.5} parent=1348 // pred_check
        _
      $region1362: #{cikgrec_forward.5} parent=1348 // pred_check_branch
        %2256 = sbr.rel (%p2253) target = $region1364
      $region1363: #{cikgrec_forward.5} parent=1348 // pred_region
        %s2257 = sand.u32 1, 7
        %s2258 = ssub.s32 1, %s2257
        %s2259 = scalar_lea.vmem %s2229, %s2258
        %s2260 = ssub.s32 1, %s2257
        %s2261 = scalar_lea.vmem %s2230, %s2260 [#allocation2]
        %s2262 = sshll.u32 1, %s2257
        %s2263 = ssub.s32 %s2262, 1
        loop: start=0, step=1, limit=1
        $region1365: #{cikgrec_forward.5} parent=1363 // loop_pre_header
          _
        $region1366: #{cikgrec_forward.5} parent=1363 // loop_header
          %s2265 = sphi 0, %s2269
          %p2266 = scmp.ge.s32.totalorder %s2265, 1
          %s2270 = sphi %s2259, %s2259
          %s2271 = sphi %s2261, %s2261
        $region1367: #{cikgrec_forward.5} parent=1363 // loop_header_branch
          %2268 = sbr.rel (%p2266) target = $region1371
        $region1368: #{cikgrec_forward.5} parent=1363 // loop_body
          %v2272 = vld [vmem:[%s2270] sm:%s2263]
          %2273 = vst [vmem:[%s2271] sm:%s2263] %v2272
        $region1369: #{cikgrec_forward.5} parent=1363 // loop_footer
          %s2269 = sadd.s32 1, %s2265
        $region1370: #{cikgrec_forward.5} parent=1363 // loop_footer_branch
          %2264 = sbr.rel target = $region1366
        $region1371: #{cikgrec_forward.5} parent=1363 // loop_exit
          _
      $region1364: #{cikgrec_forward.5} parent=1348 // pred_fallthru
        _
    $region1349: #{cikgrec_forward.5} parent=1 // pred_fallthru
      _
    // Predicated region
    $region1350: #{cikgrec_forward.5} parent=1 // pred_check
      %p2237 = pneg %p2233
    $region1351: #{cikgrec_forward.5} parent=1 // pred_check_branch
      %2239 = sbr.rel (%p2237) target = $region1353
    $region1352: #{cikgrec_forward.5} parent=1 // pred_region
      %s2240 = sshll.u32 1, 1
      %s2241 = ssub.s32 %s2240, 1
      loop: start=0, step=1, limit=1
      $region1354: #{cikgrec_forward.5} parent=1352 // loop_pre_header
        _
      $region1355: #{cikgrec_forward.5} parent=1352 // loop_header
        %s2243 = sphi 0, %s2247
        %p2244 = scmp.ge.s32.totalorder %s2243, 1
        %s2248 = sphi %s2229, %s2229
        %s2249 = sphi %s2230, %s2230
      $region1356: #{cikgrec_forward.5} parent=1352 // loop_header_branch
        %2246 = sbr.rel (%p2244) target = $region1360
      $region1357: #{cikgrec_forward.5} parent=1352 // loop_body
        %v2250 = vld [vmem:[%s2248] sm:%s2241]
        %2251 = vst [vmem:[%s2249] sm:%s2241] %v2250
      $region1358: #{cikgrec_forward.5} parent=1352 // loop_footer
        %s2247 = sadd.s32 1, %s2243
      $region1359: #{cikgrec_forward.5} parent=1352 // loop_footer_branch
        %2242 = sbr.rel target = $region1355
      $region1360: #{cikgrec_forward.5} parent=1352 // loop_exit
        _
    $region1353: #{cikgrec_forward.5} parent=1 // pred_fallthru
      _
    // Predicated region
    $region1372: #{cikgrec_forward.5} parent=1 // pred_check
      _
    $region1373: #{cikgrec_forward.5} parent=1 // pred_check_branch
      %2276 = sbr.rel (0) target = $region1375
    $region1374: #{cikgrec_forward.5} parent=1 // pred_region
      %2277 = vsyncadd %s2231, 16
    $region1375: #{cikgrec_forward.5} parent=1 // pred_fallthru
      _
    %s2278 = scalar_lea.vmem %s4, %s2228
    %s2279 = scalar_lea.vmem [#allocation3], 22
    %s2280 = scalar_lea.sflag [#allocation4], 46
    %p2282 = scmp.lt.u32.totalorder 1, 8
    %p2283 = pneg %p2282
    // Predicated region
    $region1376: #{cikgrec_forward.5} parent=1 // pred_check
      _
    $region1377: #{cikgrec_forward.5} parent=1 // pred_check_branch
      %2285 = sbr.rel (%p2282) target = $region1379
    $region1378: #{cikgrec_forward.5} parent=1 // pred_region
      %s2301 = sand.u32 1, 7
      %p2302 = scmp.eq.s32.totalorder %s2301, 0
      %p2303 = pneg %p2302
      // Predicated region
      $region1391: #{cikgrec_forward.5} parent=1378 // pred_check
        _
      $region1392: #{cikgrec_forward.5} parent=1378 // pred_check_branch
        %2305 = sbr.rel (%p2302) target = $region1394
      $region1393: #{cikgrec_forward.5} parent=1378 // pred_region
        %s2306 = sand.u32 1, 7
        %s2307 = ssub.s32 1, %s2306
        %s2308 = scalar_lea.vmem %s2278, %s2307
        %s2309 = ssub.s32 1, %s2306
        %s2310 = scalar_lea.vmem %s2279, %s2309 [#allocation3]
        %s2311 = sshll.u32 1, %s2306
        %s2312 = ssub.s32 %s2311, 1
        loop: start=0, step=1, limit=1
        $region1395: #{cikgrec_forward.5} parent=1393 // loop_pre_header
          _
        $region1396: #{cikgrec_forward.5} parent=1393 // loop_header
          %s2314 = sphi 0, %s2318
          %p2315 = scmp.ge.s32.totalorder %s2314, 1
          %s2319 = sphi %s2308, %s2308
          %s2320 = sphi %s2310, %s2310
        $region1397: #{cikgrec_forward.5} parent=1393 // loop_header_branch
          %2317 = sbr.rel (%p2315) target = $region1401
        $region1398: #{cikgrec_forward.5} parent=1393 // loop_body
          %v2321 = vld [vmem:[%s2319] sm:%s2312]
          %2322 = vst [vmem:[%s2320] sm:%s2312] %v2321
        $region1399: #{cikgrec_forward.5} parent=1393 // loop_footer
          %s2318 = sadd.s32 1, %s2314
        $region1400: #{cikgrec_forward.5} parent=1393 // loop_footer_branch
          %2313 = sbr.rel target = $region1396
        $region1401: #{cikgrec_forward.5} parent=1393 // loop_exit
          _
      $region1394: #{cikgrec_forward.5} parent=1378 // pred_fallthru
        _
    $region1379: #{cikgrec_forward.5} parent=1 // pred_fallthru
      _
    // Predicated region
    $region1380: #{cikgrec_forward.5} parent=1 // pred_check
      %p2286 = pneg %p2282
    $region1381: #{cikgrec_forward.5} parent=1 // pred_check_branch
      %2288 = sbr.rel (%p2286) target = $region1383
    $region1382: #{cikgrec_forward.5} parent=1 // pred_region
      %s2289 = sshll.u32 1, 1
      %s2290 = ssub.s32 %s2289, 1
      loop: start=0, step=1, limit=1
      $region1384: #{cikgrec_forward.5} parent=1382 // loop_pre_header
        _
      $region1385: #{cikgrec_forward.5} parent=1382 // loop_header
        %s2292 = sphi 0, %s2296
        %p2293 = scmp.ge.s32.totalorder %s2292, 1
        %s2297 = sphi %s2278, %s2278
        %s2298 = sphi %s2279, %s2279
      $region1386: #{cikgrec_forward.5} parent=1382 // loop_header_branch
        %2295 = sbr.rel (%p2293) target = $region1390
      $region1387: #{cikgrec_forward.5} parent=1382 // loop_body
        %v2299 = vld [vmem:[%s2297] sm:%s2290]
        %2300 = vst [vmem:[%s2298] sm:%s2290] %v2299
      $region1388: #{cikgrec_forward.5} parent=1382 // loop_footer
        %s2296 = sadd.s32 1, %s2292
      $region1389: #{cikgrec_forward.5} parent=1382 // loop_footer_branch
        %2291 = sbr.rel target = $region1385
      $region1390: #{cikgrec_forward.5} parent=1382 // loop_exit
        _
    $region1383: #{cikgrec_forward.5} parent=1 // pred_fallthru
      _
    // Predicated region
    $region1402: #{cikgrec_forward.5} parent=1 // pred_check
      _
    $region1403: #{cikgrec_forward.5} parent=1 // pred_check_branch
      %2325 = sbr.rel (0) target = $region1405
    $region1404: #{cikgrec_forward.5} parent=1 // pred_region
      %2326 = vsyncadd %s2280, 16
    $region1405: #{cikgrec_forward.5} parent=1 // pred_fallthru
      _
    %s2327 = sld [smem:[#allocation10 + $0x7]]
    %s2328 = scalar_lea.vmem %s3, %s2327
    %s2329 = scalar_lea.vmem [#allocation2], 23
    %s2330 = scalar_lea.sflag [#allocation4], 23
    %p2332 = scmp.lt.u32.totalorder 1, 8
    %p2333 = pneg %p2332
    // Predicated region
    $region1406: #{cikgrec_forward.5} parent=1 // pred_check
      _
    $region1407: #{cikgrec_forward.5} parent=1 // pred_check_branch
      %2335 = sbr.rel (%p2332) target = $region1409
    $region1408: #{cikgrec_forward.5} parent=1 // pred_region
      %s2351 = sand.u32 1, 7
      %p2352 = scmp.eq.s32.totalorder %s2351, 0
      %p2353 = pneg %p2352
      // Predicated region
      $region1421: #{cikgrec_forward.5} parent=1408 // pred_check
        _
      $region1422: #{cikgrec_forward.5} parent=1408 // pred_check_branch
        %2355 = sbr.rel (%p2352) target = $region1424
      $region1423: #{cikgrec_forward.5} parent=1408 // pred_region
        %s2356 = sand.u32 1, 7
        %s2357 = ssub.s32 1, %s2356
        %s2358 = scalar_lea.vmem %s2328, %s2357
        %s2359 = ssub.s32 1, %s2356
        %s2360 = scalar_lea.vmem %s2329, %s2359 [#allocation2]
        %s2361 = sshll.u32 1, %s2356
        %s2362 = ssub.s32 %s2361, 1
        loop: start=0, step=1, limit=1
        $region1425: #{cikgrec_forward.5} parent=1423 // loop_pre_header
          _
        $region1426: #{cikgrec_forward.5} parent=1423 // loop_header
          %s2364 = sphi 0, %s2368
          %p2365 = scmp.ge.s32.totalorder %s2364, 1
          %s2369 = sphi %s2358, %s2358
          %s2370 = sphi %s2360, %s2360
        $region1427: #{cikgrec_forward.5} parent=1423 // loop_header_branch
          %2367 = sbr.rel (%p2365) target = $region1431
        $region1428: #{cikgrec_forward.5} parent=1423 // loop_body
          %v2371 = vld [vmem:[%s2369] sm:%s2362]
          %2372 = vst [vmem:[%s2370] sm:%s2362] %v2371
        $region1429: #{cikgrec_forward.5} parent=1423 // loop_footer
          %s2368 = sadd.s32 1, %s2364
        $region1430: #{cikgrec_forward.5} parent=1423 // loop_footer_branch
          %2363 = sbr.rel target = $region1426
        $region1431: #{cikgrec_forward.5} parent=1423 // loop_exit
          _
      $region1424: #{cikgrec_forward.5} parent=1408 // pred_fallthru
        _
    $region1409: #{cikgrec_forward.5} parent=1 // pred_fallthru
      _
    // Predicated region
    $region1410: #{cikgrec_forward.5} parent=1 // pred_check
      %p2336 = pneg %p2332
    $region1411: #{cikgrec_forward.5} parent=1 // pred_check_branch
      %2338 = sbr.rel (%p2336) target = $region1413
    $region1412: #{cikgrec_forward.5} parent=1 // pred_region
      %s2339 = sshll.u32 1, 1
      %s2340 = ssub.s32 %s2339, 1
      loop: start=0, step=1, limit=1
      $region1414: #{cikgrec_forward.5} parent=1412 // loop_pre_header
        _
      $region1415: #{cikgrec_forward.5} parent=1412 // loop_header
        %s2342 = sphi 0, %s2346
        %p2343 = scmp.ge.s32.totalorder %s2342, 1
        %s2347 = sphi %s2328, %s2328
        %s2348 = sphi %s2329, %s2329
      $region1416: #{cikgrec_forward.5} parent=1412 // loop_header_branch
        %2345 = sbr.rel (%p2343) target = $region1420
      $region1417: #{cikgrec_forward.5} parent=1412 // loop_body
        %v2349 = vld [vmem:[%s2347] sm:%s2340]
        %2350 = vst [vmem:[%s2348] sm:%s2340] %v2349
      $region1418: #{cikgrec_forward.5} parent=1412 // loop_footer
        %s2346 = sadd.s32 1, %s2342
      $region1419: #{cikgrec_forward.5} parent=1412 // loop_footer_branch
        %2341 = sbr.rel target = $region1415
      $region1420: #{cikgrec_forward.5} parent=1412 // loop_exit
        _
    $region1413: #{cikgrec_forward.5} parent=1 // pred_fallthru
      _
    // Predicated region
    $region1432: #{cikgrec_forward.5} parent=1 // pred_check
      _
    $region1433: #{cikgrec_forward.5} parent=1 // pred_check_branch
      %2375 = sbr.rel (0) target = $region1435
    $region1434: #{cikgrec_forward.5} parent=1 // pred_region
      %2376 = vsyncadd %s2330, 16
    $region1435: #{cikgrec_forward.5} parent=1 // pred_fallthru
      _
    %s2377 = scalar_lea.vmem %s4, %s2327
    %s2378 = scalar_lea.vmem [#allocation3], 23
    %s2379 = scalar_lea.sflag [#allocation4], 47
    %p2381 = scmp.lt.u32.totalorder 1, 8
    %p2382 = pneg %p2381
    // Predicated region
    $region1436: #{cikgrec_forward.5} parent=1 // pred_check
      _
    $region1437: #{cikgrec_forward.5} parent=1 // pred_check_branch
      %2384 = sbr.rel (%p2381) target = $region1439
    $region1438: #{cikgrec_forward.5} parent=1 // pred_region
      %s2400 = sand.u32 1, 7
      %p2401 = scmp.eq.s32.totalorder %s2400, 0
      %p2402 = pneg %p2401
      // Predicated region
      $region1451: #{cikgrec_forward.5} parent=1438 // pred_check
        _
      $region1452: #{cikgrec_forward.5} parent=1438 // pred_check_branch
        %2404 = sbr.rel (%p2401) target = $region1454
      $region1453: #{cikgrec_forward.5} parent=1438 // pred_region
        %s2405 = sand.u32 1, 7
        %s2406 = ssub.s32 1, %s2405
        %s2407 = scalar_lea.vmem %s2377, %s2406
        %s2408 = ssub.s32 1, %s2405
        %s2409 = scalar_lea.vmem %s2378, %s2408 [#allocation3]
        %s2410 = sshll.u32 1, %s2405
        %s2411 = ssub.s32 %s2410, 1
        loop: start=0, step=1, limit=1
        $region1455: #{cikgrec_forward.5} parent=1453 // loop_pre_header
          _
        $region1456: #{cikgrec_forward.5} parent=1453 // loop_header
          %s2413 = sphi 0, %s2417
          %p2414 = scmp.ge.s32.totalorder %s2413, 1
          %s2418 = sphi %s2407, %s2407
          %s2419 = sphi %s2409, %s2409
        $region1457: #{cikgrec_forward.5} parent=1453 // loop_header_branch
          %2416 = sbr.rel (%p2414) target = $region1461
        $region1458: #{cikgrec_forward.5} parent=1453 // loop_body
          %v2420 = vld [vmem:[%s2418] sm:%s2411]
          %2421 = vst [vmem:[%s2419] sm:%s2411] %v2420
        $region1459: #{cikgrec_forward.5} parent=1453 // loop_footer
          %s2417 = sadd.s32 1, %s2413
        $region1460: #{cikgrec_forward.5} parent=1453 // loop_footer_branch
          %2412 = sbr.rel target = $region1456
        $region1461: #{cikgrec_forward.5} parent=1453 // loop_exit
          _
      $region1454: #{cikgrec_forward.5} parent=1438 // pred_fallthru
        _
    $region1439: #{cikgrec_forward.5} parent=1 // pred_fallthru
      _
    // Predicated region
    $region1440: #{cikgrec_forward.5} parent=1 // pred_check
      %p2385 = pneg %p2381
    $region1441: #{cikgrec_forward.5} parent=1 // pred_check_branch
      %2387 = sbr.rel (%p2385) target = $region1443
    $region1442: #{cikgrec_forward.5} parent=1 // pred_region
      %s2388 = sshll.u32 1, 1
      %s2389 = ssub.s32 %s2388, 1
      loop: start=0, step=1, limit=1
      $region1444: #{cikgrec_forward.5} parent=1442 // loop_pre_header
        _
      $region1445: #{cikgrec_forward.5} parent=1442 // loop_header
        %s2391 = sphi 0, %s2395
        %p2392 = scmp.ge.s32.totalorder %s2391, 1
        %s2396 = sphi %s2377, %s2377
        %s2397 = sphi %s2378, %s2378
      $region1446: #{cikgrec_forward.5} parent=1442 // loop_header_branch
        %2394 = sbr.rel (%p2392) target = $region1450
      $region1447: #{cikgrec_forward.5} parent=1442 // loop_body
        %v2398 = vld [vmem:[%s2396] sm:%s2389]
        %2399 = vst [vmem:[%s2397] sm:%s2389] %v2398
      $region1448: #{cikgrec_forward.5} parent=1442 // loop_footer
        %s2395 = sadd.s32 1, %s2391
      $region1449: #{cikgrec_forward.5} parent=1442 // loop_footer_branch
        %2390 = sbr.rel target = $region1445
      $region1450: #{cikgrec_forward.5} parent=1442 // loop_exit
        _
    $region1443: #{cikgrec_forward.5} parent=1 // pred_fallthru
      _
    // Predicated region
    $region1462: #{cikgrec_forward.5} parent=1 // pred_check
      _
    $region1463: #{cikgrec_forward.5} parent=1 // pred_check_branch
      %2424 = sbr.rel (0) target = $region1465
    $region1464: #{cikgrec_forward.5} parent=1 // pred_region
      %2425 = vsyncadd %s2379, 16
    $region1465: #{cikgrec_forward.5} parent=1 // pred_fallthru
      _
    %s2426 = smul.u32 1, 1
    %s2427 = sshll.u32 %s2426, 4
    %2428 = dma.done [#allocation4], %s2427
    %s2429 = sshll.u32 %s2426, 4
    %2430 = dma.done %s102, %s2429
    %s2431 = sshll.u32 %s2426, 4
    %2432 = dma.done %s152, %s2431
    %s2433 = sshll.u32 %s2426, 4
    %2434 = dma.done %s201, %s2433
    %s2435 = sshll.u32 %s2426, 4
    %2436 = dma.done %s251, %s2435
    %s2437 = sshll.u32 %s2426, 4
    %2438 = dma.done %s300, %s2437
    %s2439 = sshll.u32 %s2426, 4
    %2440 = dma.done %s350, %s2439
    %s2441 = sshll.u32 %s2426, 4
    %2442 = dma.done %s399, %s2441
    %s2443 = sshll.u32 %s2426, 4
    %2444 = dma.done %s449, %s2443
    %s2445 = sshll.u32 %s2426, 4
    %2446 = dma.done %s498, %s2445
    %s2447 = sshll.u32 %s2426, 4
    %2448 = dma.done %s548, %s2447
    %s2449 = sshll.u32 %s2426, 4
    %2450 = dma.done %s597, %s2449
    %s2451 = sshll.u32 %s2426, 4
    %2452 = dma.done %s647, %s2451
    %s2453 = sshll.u32 %s2426, 4
    %2454 = dma.done %s696, %s2453
    %s2455 = sshll.u32 %s2426, 4
    %2456 = dma.done %s746, %s2455
    %s2457 = sshll.u32 %s2426, 4
    %2458 = dma.done %s795, %s2457
    %s2459 = sshll.u32 %s2426, 4
    %2460 = dma.done %s845, %s2459
    %s2461 = sshll.u32 %s2426, 4
    %2462 = dma.done %s894, %s2461
    %s2463 = sshll.u32 %s2426, 4
    %2464 = dma.done %s944, %s2463
    %s2465 = sshll.u32 %s2426, 4
    %2466 = dma.done %s993, %s2465
    %s2467 = sshll.u32 %s2426, 4
    %2468 = dma.done %s1043, %s2467
    %s2469 = sshll.u32 %s2426, 4
    %2470 = dma.done %s1092, %s2469
    %s2471 = sshll.u32 %s2426, 4
    %2472 = dma.done %s1142, %s2471
    %s2473 = sshll.u32 %s2426, 4
    %2474 = dma.done %s1191, %s2473
    %s2475 = sshll.u32 %s2426, 4
    %2476 = dma.done %s1241, %s2475
    %s2477 = sshll.u32 %s2426, 4
    %2478 = dma.done %s1290, %s2477
    %s2479 = sshll.u32 %s2426, 4
    %2480 = dma.done %s1340, %s2479
    %s2481 = sshll.u32 %s2426, 4
    %2482 = dma.done %s1389, %s2481
    %s2483 = sshll.u32 %s2426, 4
    %2484 = dma.done %s1439, %s2483
    %s2485 = sshll.u32 %s2426, 4
    %2486 = dma.done %s1488, %s2485
    %s2487 = sshll.u32 %s2426, 4
    %2488 = dma.done %s1538, %s2487
    %s2489 = sshll.u32 %s2426, 4
    %2490 = dma.done %s1587, %s2489
    %s2491 = sshll.u32 %s2426, 4
    %2492 = dma.done %s1637, %s2491
    %s2493 = sshll.u32 %s2426, 4
    %2494 = dma.done %s1686, %s2493
    %s2495 = sshll.u32 %s2426, 4
    %2496 = dma.done %s1736, %s2495
    %s2497 = sshll.u32 %s2426, 4
    %2498 = dma.done %s1785, %s2497
    %s2499 = sshll.u32 %s2426, 4
    %2500 = dma.done %s1835, %s2499
    %s2501 = sshll.u32 %s2426, 4
    %2502 = dma.done %s1884, %s2501
    %s2503 = sshll.u32 %s2426, 4
    %2504 = dma.done %s1934, %s2503
    %s2505 = sshll.u32 %s2426, 4
    %2506 = dma.done %s1983, %s2505
    %s2507 = sshll.u32 %s2426, 4
    %2508 = dma.done %s2033, %s2507
    %s2509 = sshll.u32 %s2426, 4
    %2510 = dma.done %s2082, %s2509
    %s2511 = sshll.u32 %s2426, 4
    %2512 = dma.done %s2132, %s2511
    %s2513 = sshll.u32 %s2426, 4
    %2514 = dma.done %s2181, %s2513
    %s2515 = sshll.u32 %s2426, 4
    %2516 = dma.done %s2231, %s2515
    %s2517 = sshll.u32 %s2426, 4
    %2518 = dma.done %s2280, %s2517
    %s2519 = sshll.u32 %s2426, 4
    %2520 = dma.done %s2330, %s2519
    %s2521 = sshll.u32 %s2426, 4
    %2522 = dma.done %s2379, %s2521
    %v2523 = vld [vmem:[#allocation2] sm:$0xff]
    %v2524 = vld [vmem:[%s844] sm:$0xff]
    %v2525 = vld [vmem:[%s1636] sm:$0xff]
    %v2526 = vld [vmem:[#allocation3] sm:$0xff]
    %v2527 = vld [vmem:[%s893] sm:$0xff]
    %v2528 = vld [vmem:[%s1685] sm:$0xff]
    %v2529 = vmul.f32 %v2523, %v2524
    %2530 = vadd.xlane.f32.xlu0 %v2529
    %v2531 = vpop.xlane.xlu0 %2530
    %v2532 = vmul.f32 %v2531, 0.11111111
    %v2533 = vmul.f32 %v2523, %v2525
    %2534 = vadd.xlane.f32.xlu0 %v2533
    %v2535 = vpop.xlane.xlu0 %2534
    %v2536 = vmul.f32 %v2535, 0.11111111
    %v2537 = vsub.f32 %v2536, %v2532
    %v2538 = vmax.f32 %v2537, 0.0
    %vm2539 = vcmp.ne.f32.partialorder %v2537, %v2537
    %v2540 = vadd.f32 %v2537, 0.0
    %v2541 = vand.u32 2147483647, %v2537
    %v2542 = vsub.f32 0.0, %v2541
    %v2543 = vmul.f32 %v2542, 1.442695
    %v2544 = vpow.pop %v2543
    %v2545 = vadd.f32 %v2544, 1.0
    %v2546 = vlog2.pop %v2545
    %v2547 = vmul.f32 %v2546, 0.6931472
    %v2548 = vmul.f32 -0.5, %v2544
    %v2549 = vadd.f32 %v2548, 1.0
    %v2550 = vmul.f32 %v2549, %v2544
    %v2551 = vand.u32 2147483647, %v2544
    %vm2552 = vcmp.lt.f32.partialorder %v2551, 0.0004427343
    %v2553 = vsel %vm2552, %v2550, %v2547
    %v2554 = vadd.f32 %v2538, %v2553
    %v2555 = vsel %vm2539, %v2540, %v2554
    %v2556 = vrot.slane %v2555, 4
    %v2557 = vadd.f32 %v2555, %v2556
    %v2558 = vrot.slane %v2557, 2
    %v2559 = vadd.f32 %v2557, %v2558
    %v2560 = vrot.slane %v2559, 1
    %v2561 = vadd.f32 %v2559, %v2560
    %v2562 = vmul.f32 %v2526, %v2526
    %2563 = vadd.xlane.f32.xlu0 %v2562
    %v2564 = vpop.xlane.xlu0 %2563
    %v2565 = vrot.slane %v2564, 4
    %v2566 = vadd.f32 %v2564, %v2565
    %v2567 = vrot.slane %v2566, 2
    %v2568 = vadd.f32 %v2566, %v2567
    %v2569 = vrot.slane %v2568, 1
    %v2570 = vadd.f32 %v2568, %v2569
    %s2571 = vtos %v2570
    %v2572 = vstv %s2571
    %v2573 = vmul.f32 %v2527, %v2527
    %2574 = vadd.xlane.f32.xlu0 %v2573
    %v2575 = vpop.xlane.xlu0 %2574
    %v2576 = vrot.slane %v2575, 4
    %v2577 = vadd.f32 %v2575, %v2576
    %v2578 = vrot.slane %v2577, 2
    %v2579 = vadd.f32 %v2577, %v2578
    %v2580 = vrot.slane %v2579, 1
    %v2581 = vadd.f32 %v2579, %v2580
    %s2582 = vtos %v2581
    %v2583 = vstv %s2582
    %v2584 = vadd.f32 %v2572, %v2583
    %v2585 = vmul.f32 %v2528, %v2528
    %2586 = vadd.xlane.f32.xlu0 %v2585
    %v2587 = vpop.xlane.xlu0 %2586
    %v2588 = vrot.slane %v2587, 4
    %v2589 = vadd.f32 %v2587, %v2588
    %v2590 = vrot.slane %v2589, 2
    %v2591 = vadd.f32 %v2589, %v2590
    %v2592 = vrot.slane %v2591, 1
    %v2593 = vadd.f32 %v2591, %v2592
    %s2594 = vtos %v2593
    %v2595 = vstv %s2594
    %v2596 = vadd.f32 %v2584, %v2595
    %v2597 = vmul.f32 %v2596, 0.5
    %v2598 = vmul.f32 %v2561, 0.125
    %v2599 = vmul.f32 %v2597, 1.25e-05
    %v2600 = vadd.f32 %v2598, %v2599
    %vm2601 = vcmask 0
    %2602 = vst.msk [vmem:[#allocation11] sm:$0x1] %vm2601, %v2600
    // Predicated region
    $region1466: #{cikgrec_forward.5} parent=1 // pred_check
      _
    $region1467: #{cikgrec_forward.5} parent=1 // pred_check_branch
      %2604 = sbr.rel (0) target = $region1469
    $region1468: #{cikgrec_forward.5} parent=1 // pred_region
      %s2606 = ssub.s32 16, 16
      %2607 = vsyncadd [#allocation6], %s2606
      %s2609 = sshll.u32 [#allocation11], 4
      %s2610 = int_to_ptr.vmem [resolvable:$true] %s2609
      %2612 = dma.vmem_to_hbm [thread:$0]  %s2610, 16, %s5, [#allocation6]
    $region1469: #{cikgrec_forward.5} parent=1 // pred_fallthru
      _
    // Predicated region
    $region1470: #{cikgrec_forward.5} parent=1 // pred_check
      _
    $region1471: #{cikgrec_forward.5} parent=1 // pred_check_branch
      %2614 = sbr.rel (0) target = $region1473
    $region1472: #{cikgrec_forward.5} parent=1 // pred_region
      %2615 = dma.done [#allocation6], 16
    $region1473: #{cikgrec_forward.5} parent=1 // pred_fallthru
      _
    %2616 = vsyncpa [#allocation6], 1
    %2617 = vsyncpa [#allocation7], 1
    %2618 = vsyncpa [#allocation9], 1
  %2619 = vsyncmov [#allocation4]
  %s2620 = vpop.sfrf %2619
  %p2621 = scmp.eq.s32.totalorder %s2620, 0
  %p2622 = pneg %p2621
  %2624 = shalt.err (%p2622)
  %s2625 = scalar_lea.sflag [#allocation4], 1
  %2626 = vsyncmov %s2625
  %s2627 = vpop.sfrf %2626
  %p2628 = scmp.eq.s32.totalorder %s2627, 0
  %p2629 = pneg %p2628
  %2631 = shalt.err (%p2629)
  %s2632 = scalar_lea.sflag [#allocation4], 2
  %2633 = vsyncmov %s2632
  %s2634 = vpop.sfrf %2633
  %p2635 = scmp.eq.s32.totalorder %s2634, 0
  %p2636 = pneg %p2635
  %2638 = shalt.err (%p2636)
  %s2639 = scalar_lea.sflag [#allocation4], 3
  %2640 = vsyncmov %s2639
  %s2641 = vpop.sfrf %2640
  %p2642 = scmp.eq.s32.totalorder %s2641, 0
  %p2643 = pneg %p2642
  %2645 = shalt.err (%p2643)
  %s2646 = scalar_lea.sflag [#allocation4], 4
  %2647 = vsyncmov %s2646
  %s2648 = vpop.sfrf %2647
  %p2649 = scmp.eq.s32.totalorder %s2648, 0
  %p2650 = pneg %p2649
  %2652 = shalt.err (%p2650)
  %s2653 = scalar_lea.sflag [#allocation4], 5
  %2654 = vsyncmov %s2653
  %s2655 = vpop.sfrf %2654
  %p2656 = scmp.eq.s32.totalorder %s2655, 0
  %p2657 = pneg %p2656
  %2659 = shalt.err (%p2657)
  %s2660 = scalar_lea.sflag [#allocation4], 6
  %2661 = vsyncmov %s2660
  %s2662 = vpop.sfrf %2661
  %p2663 = scmp.eq.s32.totalorder %s2662, 0
  %p2664 = pneg %p2663
  %2666 = shalt.err (%p2664)
  %s2667 = scalar_lea.sflag [#allocation4], 7
  %2668 = vsyncmov %s2667
  %s2669 = vpop.sfrf %2668
  %p2670 = scmp.eq.s32.totalorder %s2669, 0
  %p2671 = pneg %p2670
  %2673 = shalt.err (%p2671)
  %s2674 = scalar_lea.sflag [#allocation4], 8
  %2675 = vsyncmov %s2674
  %s2676 = vpop.sfrf %2675
  %p2677 = scmp.eq.s32.totalorder %s2676, 0
  %p2678 = pneg %p2677
  %2680 = shalt.err (%p2678)
  %s2681 = scalar_lea.sflag [#allocation4], 9
  %2682 = vsyncmov %s2681
  %s2683 = vpop.sfrf %2682
  %p2684 = scmp.eq.s32.totalorder %s2683, 0
  %p2685 = pneg %p2684
  %2687 = shalt.err (%p2685)
  %s2688 = scalar_lea.sflag [#allocation4], 10
  %2689 = vsyncmov %s2688
  %s2690 = vpop.sfrf %2689
  %p2691 = scmp.eq.s32.totalorder %s2690, 0
  %p2692 = pneg %p2691
  %2694 = shalt.err (%p2692)
  %s2695 = scalar_lea.sflag [#allocation4], 11
  %2696 = vsyncmov %s2695
  %s2697 = vpop.sfrf %2696
  %p2698 = scmp.eq.s32.totalorder %s2697, 0
  %p2699 = pneg %p2698
  %2701 = shalt.err (%p2699)
  %s2702 = scalar_lea.sflag [#allocation4], 12
  %2703 = vsyncmov %s2702
  %s2704 = vpop.sfrf %2703
  %p2705 = scmp.eq.s32.totalorder %s2704, 0
  %p2706 = pneg %p2705
  %2708 = shalt.err (%p2706)
  %s2709 = scalar_lea.sflag [#allocation4], 13
  %2710 = vsyncmov %s2709
  %s2711 = vpop.sfrf %2710
  %p2712 = scmp.eq.s32.totalorder %s2711, 0
  %p2713 = pneg %p2712
  %2715 = shalt.err (%p2713)
  %s2716 = scalar_lea.sflag [#allocation4], 14
  %2717 = vsyncmov %s2716
  %s2718 = vpop.sfrf %2717
  %p2719 = scmp.eq.s32.totalorder %s2718, 0
  %p2720 = pneg %p2719
  %2722 = shalt.err (%p2720)
  %s2723 = scalar_lea.sflag [#allocation4], 15
  %2724 = vsyncmov %s2723
  %s2725 = vpop.sfrf %2724
  %p2726 = scmp.eq.s32.totalorder %s2725, 0
  %p2727 = pneg %p2726
  %2729 = shalt.err (%p2727)
  %s2730 = scalar_lea.sflag [#allocation4], 16
  %2731 = vsyncmov %s2730
  %s2732 = vpop.sfrf %2731
  %p2733 = scmp.eq.s32.totalorder %s2732, 0
  %p2734 = pneg %p2733
  %2736 = shalt.err (%p2734)
  %s2737 = scalar_lea.sflag [#allocation4], 17
  %2738 = vsyncmov %s2737
  %s2739 = vpop.sfrf %2738
  %p2740 = scmp.eq.s32.totalorder %s2739, 0
  %p2741 = pneg %p2740
  %2743 = shalt.err (%p2741)
  %s2744 = scalar_lea.sflag [#allocation4], 18
  %2745 = vsyncmov %s2744
  %s2746 = vpop.sfrf %2745
  %p2747 = scmp.eq.s32.totalorder %s2746, 0
  %p2748 = pneg %p2747
  %2750 = shalt.err (%p2748)
  %s2751 = scalar_lea.sflag [#allocation4], 19
  %2752 = vsyncmov %s2751
  %s2753 = vpop.sfrf %2752
  %p2754 = scmp.eq.s32.totalorder %s2753, 0
  %p2755 = pneg %p2754
  %2757 = shalt.err (%p2755)
  %s2758 = scalar_lea.sflag [#allocation4], 20
  %2759 = vsyncmov %s2758
  %s2760 = vpop.sfrf %2759
  %p2761 = scmp.eq.s32.totalorder %s2760, 0
  %p2762 = pneg %p2761
  %2764 = shalt.err (%p2762)
  %s2765 = scalar_lea.sflag [#allocation4], 21
  %2766 = vsyncmov %s2765
  %s2767 = vpop.sfrf %2766
  %p2768 = scmp.eq.s32.totalorder %s2767, 0
  %p2769 = pneg %p2768
  %2771 = shalt.err (%p2769)
  %s2772 = scalar_lea.sflag [#allocation4], 22
  %2773 = vsyncmov %s2772
  %s2774 = vpop.sfrf %2773
  %p2775 = scmp.eq.s32.totalorder %s2774, 0
  %p2776 = pneg %p2775
  %2778 = shalt.err (%p2776)
  %s2779 = scalar_lea.sflag [#allocation4], 23
  %2780 = vsyncmov %s2779
  %s2781 = vpop.sfrf %2780
  %p2782 = scmp.eq.s32.totalorder %s2781, 0
  %p2783 = pneg %p2782
  %2785 = shalt.err (%p2783)
  %s2786 = scalar_lea.sflag [#allocation4], 24
  %2787 = vsyncmov %s2786
  %s2788 = vpop.sfrf %2787
  %p2789 = scmp.eq.s32.totalorder %s2788, 0
  %p2790 = pneg %p2789
  %2792 = shalt.err (%p2790)
  %s2793 = scalar_lea.sflag [#allocation4], 25
  %2794 = vsyncmov %s2793
  %s2795 = vpop.sfrf %2794
  %p2796 = scmp.eq.s32.totalorder %s2795, 0
  %p2797 = pneg %p2796
  %2799 = shalt.err (%p2797)
  %s2800 = scalar_lea.sflag [#allocation4], 26
  %2801 = vsyncmov %s2800
  %s2802 = vpop.sfrf %2801
  %p2803 = scmp.eq.s32.totalorder %s2802, 0
  %p2804 = pneg %p2803
  %2806 = shalt.err (%p2804)
  %s2807 = scalar_lea.sflag [#allocation4], 27
  %2808 = vsyncmov %s2807
  %s2809 = vpop.sfrf %2808
  %p2810 = scmp.eq.s32.totalorder %s2809, 0
  %p2811 = pneg %p2810
  %2813 = shalt.err (%p2811)
  %s2814 = scalar_lea.sflag [#allocation4], 28
  %2815 = vsyncmov %s2814
  %s2816 = vpop.sfrf %2815
  %p2817 = scmp.eq.s32.totalorder %s2816, 0
  %p2818 = pneg %p2817
  %2820 = shalt.err (%p2818)
  %s2821 = scalar_lea.sflag [#allocation4], 29
  %2822 = vsyncmov %s2821
  %s2823 = vpop.sfrf %2822
  %p2824 = scmp.eq.s32.totalorder %s2823, 0
  %p2825 = pneg %p2824
  %2827 = shalt.err (%p2825)
  %s2828 = scalar_lea.sflag [#allocation4], 30
  %2829 = vsyncmov %s2828
  %s2830 = vpop.sfrf %2829
  %p2831 = scmp.eq.s32.totalorder %s2830, 0
  %p2832 = pneg %p2831
  %2834 = shalt.err (%p2832)
  %s2835 = scalar_lea.sflag [#allocation4], 31
  %2836 = vsyncmov %s2835
  %s2837 = vpop.sfrf %2836
  %p2838 = scmp.eq.s32.totalorder %s2837, 0
  %p2839 = pneg %p2838
  %2841 = shalt.err (%p2839)
  %s2842 = scalar_lea.sflag [#allocation4], 32
  %2843 = vsyncmov %s2842
  %s2844 = vpop.sfrf %2843
  %p2845 = scmp.eq.s32.totalorder %s2844, 0
  %p2846 = pneg %p2845
  %2848 = shalt.err (%p2846)
  %s2849 = scalar_lea.sflag [#allocation4], 33
  %2850 = vsyncmov %s2849
  %s2851 = vpop.sfrf %2850
  %p2852 = scmp.eq.s32.totalorder %s2851, 0
  %p2853 = pneg %p2852
  %2855 = shalt.err (%p2853)
  %s2856 = scalar_lea.sflag [#allocation4], 34
  %2857 = vsyncmov %s2856
  %s2858 = vpop.sfrf %2857
  %p2859 = scmp.eq.s32.totalorder %s2858, 0
  %p2860 = pneg %p2859
  %2862 = shalt.err (%p2860)
  %s2863 = scalar_lea.sflag [#allocation4], 35
  %2864 = vsyncmov %s2863
  %s2865 = vpop.sfrf %2864
  %p2866 = scmp.eq.s32.totalorder %s2865, 0
  %p2867 = pneg %p2866
  %2869 = shalt.err (%p2867)
  %s2870 = scalar_lea.sflag [#allocation4], 36
  %2871 = vsyncmov %s2870
  %s2872 = vpop.sfrf %2871
  %p2873 = scmp.eq.s32.totalorder %s2872, 0
  %p2874 = pneg %p2873
  %2876 = shalt.err (%p2874)
  %s2877 = scalar_lea.sflag [#allocation4], 37
  %2878 = vsyncmov %s2877
  %s2879 = vpop.sfrf %2878
  %p2880 = scmp.eq.s32.totalorder %s2879, 0
  %p2881 = pneg %p2880
  %2883 = shalt.err (%p2881)
  %s2884 = scalar_lea.sflag [#allocation4], 38
  %2885 = vsyncmov %s2884
  %s2886 = vpop.sfrf %2885
  %p2887 = scmp.eq.s32.totalorder %s2886, 0
  %p2888 = pneg %p2887
  %2890 = shalt.err (%p2888)
  %s2891 = scalar_lea.sflag [#allocation4], 39
  %2892 = vsyncmov %s2891
  %s2893 = vpop.sfrf %2892
  %p2894 = scmp.eq.s32.totalorder %s2893, 0
  %p2895 = pneg %p2894
  %2897 = shalt.err (%p2895)
  %s2898 = scalar_lea.sflag [#allocation4], 40
  %2899 = vsyncmov %s2898
  %s2900 = vpop.sfrf %2899
  %p2901 = scmp.eq.s32.totalorder %s2900, 0
  %p2902 = pneg %p2901
  %2904 = shalt.err (%p2902)
  %s2905 = scalar_lea.sflag [#allocation4], 41
  %2906 = vsyncmov %s2905
  %s2907 = vpop.sfrf %2906
  %p2908 = scmp.eq.s32.totalorder %s2907, 0
  %p2909 = pneg %p2908
  %2911 = shalt.err (%p2909)
  %s2912 = scalar_lea.sflag [#allocation4], 42
  %2913 = vsyncmov %s2912
  %s2914 = vpop.sfrf %2913
  %p2915 = scmp.eq.s32.totalorder %s2914, 0
  %p2916 = pneg %p2915
  %2918 = shalt.err (%p2916)
  %s2919 = scalar_lea.sflag [#allocation4], 43
  %2920 = vsyncmov %s2919
  %s2921 = vpop.sfrf %2920
  %p2922 = scmp.eq.s32.totalorder %s2921, 0
  %p2923 = pneg %p2922
  %2925 = shalt.err (%p2923)
  %s2926 = scalar_lea.sflag [#allocation4], 44
  %2927 = vsyncmov %s2926
  %s2928 = vpop.sfrf %2927
  %p2929 = scmp.eq.s32.totalorder %s2928, 0
  %p2930 = pneg %p2929
  %2932 = shalt.err (%p2930)
  %s2933 = scalar_lea.sflag [#allocation4], 45
  %2934 = vsyncmov %s2933
  %s2935 = vpop.sfrf %2934
  %p2936 = scmp.eq.s32.totalorder %s2935, 0
  %p2937 = pneg %p2936
  %2939 = shalt.err (%p2937)
  %s2940 = scalar_lea.sflag [#allocation4], 46
  %2941 = vsyncmov %s2940
  %s2942 = vpop.sfrf %2941
  %p2943 = scmp.eq.s32.totalorder %s2942, 0
  %p2944 = pneg %p2943
  %2946 = shalt.err (%p2944)
  %s2947 = scalar_lea.sflag [#allocation4], 47
  %2948 = vsyncmov %s2947
  %s2949 = vpop.sfrf %2948
  %p2950 = scmp.eq.s32.totalorder %s2949, 0
  %p2951 = pneg %p2950
  %2953 = shalt.err (%p2951)

</llo_original>
